<compile_context>
chip_gen: v6e
topology: v6e:2x2x1
jax: 0.10.0
libtpu: 0.0.40
codegen_flags: <defaults>
</compile_context>

<pallas_src>
import functools

import jax
import jax.numpy as jnp
from jax.experimental import pallas as pl
from jax.experimental.pallas import tpu as pltpu

T = 1000
EMB_DIM = 128
CPAD = 128  # padded channel / contraction width (TPU lane dimension)


def _rows_per_chunk(H, W, target_flat_rows=128):
    """Largest divisor of H whose flat-row count (rows*W) is <= target."""
    rc_cap = max(1, target_flat_rows // W)
    rc = 1
    for cand in range(1, min(H, rc_cap) + 1):
        if H % cand == 0:
            rc = cand
    return rc


def _ddpm_kernel(x1_ref, w1_ref, b1_ref, w2_ref, b2_ref, w3_ref, b3_ref,
                 o_ref, actA_ref, actB_ref, *, H, W, CM):
    """One batch element: conv3x3 -> relu -> conv3x3 -> relu -> conv3x3.

    x1_ref:   (H*W, CPAD)  bf16   layer-1 im2col input (lanes 0..9*cin-1 valid)
    w1_ref:   (CPAD, CPAD) bf16   layer-1 packed weight
    wN_ref:   (9, CPAD, CPAD) bf16 per-tap weights, k = dy*3 + dx
    bN_ref:   (1, CPAD) f32       bias
    o_ref:    (H*W, CPAD) f32     output (first `channels` lanes valid)
    actA/B:   (3, (H+2)*W, CPAD) bf16 scratch: [left, center, right] activation
              copies with one padded spatial row (W flat rows) above/below.
    """
    C = CPAD
    HW = H * W
    NROWS = (H + 2) * W
    n_chunks = HW // CM

    # ---- x-edge masks for one chunk (chunk starts are multiples of W) -----
    ri = jax.lax.broadcasted_iota(jnp.int32, (CM, C), 0)
    if (W & (W - 1)) == 0:                  # power-of-two W (common case)
        xcol = jnp.bitwise_and(ri, W - 1)
    else:
        xcol = ri % W
    at_x_first = xcol == 0                  # left neighbour is zero padding
    at_x_last = xcol == (W - 1)             # right neighbour is zero padding

    # ---- zero only the halo rows of all 6 activation copies ---------------
    zhalo = jnp.zeros((W, C), jnp.bfloat16)
    for buf in (actA_ref, actB_ref):
        for v in range(3):
            buf[v, 0:W, :] = zhalo
            buf[v, W + HW:NROWS, :] = zhalo

    def store_act(buf, c0, h):
        """relu'd f32 chunk -> bf16 center/left/right copies in scratch.

        Rolls stay on f32 (32-bit sublane rotate) and wrap only at chunk
        boundaries, which coincide with spatial-row boundaries and are masked.
        """
        left = jnp.where(at_x_first, 0.0, pltpu.roll(h, shift=1, axis=0))
        right = jnp.where(at_x_last, 0.0, pltpu.roll(h, shift=CM - 1, axis=0))
        buf[1, W + c0:W + c0 + CM, :] = h.astype(jnp.bfloat16)      # dx = 1
        buf[0, W + c0:W + c0 + CM, :] = left.astype(jnp.bfloat16)   # dx = 0
        buf[2, W + c0:W + c0 + CM, :] = right.astype(jnp.bfloat16)  # dx = 2

    def conv3x3_chunk(buf, w_ref_, b_ref_, c0):
        """3x3 same-conv for output rows [c0, c0+CM): 9 aligned slice+dot."""
        acc = jnp.broadcast_to(b_ref_[...], (CM, C)).astype(jnp.float32)
        for dy in range(3):
            base = c0 + dy * W              # multiple of W -> tile-aligned
            for dx in range(3):
                acc = acc + jnp.dot(buf[dx, base:base + CM, :],
                                    w_ref_[dy * 3 + dx],
                                    preferred_element_type=jnp.float32)
        return acc

    # ---- layer 1: im2col matmul + bias + relu ------------------------------
    for c in range(n_chunks):
        c0 = c * CM
        h = jnp.dot(x1_ref[c0:c0 + CM, :], w1_ref[...],
                    preferred_element_type=jnp.float32)
        h = jnp.maximum(h + b1_ref[...], 0.0)
        store_act(actA_ref, c0, h)

    # ---- layer 2: conv3x3 + relu -------------------------------------------
    for c in range(n_chunks):
        c0 = c * CM
        h = jnp.maximum(conv3x3_chunk(actA_ref, w2_ref, b2_ref, c0), 0.0)
        store_act(actB_ref, c0, h)

    # ---- layer 3: conv3x3 (no relu) -> output -------------------------------
    for c in range(n_chunks):
        c0 = c * CM
        o_ref[c0:c0 + CM, :] = conv3x3_chunk(
            actB_ref, w3_ref, b3_ref, c0).astype(o_ref.dtype)


def _pack_conv1(w_oihw, b):
    """Layer-1 OIHW weight -> one (CPAD, CPAD) bf16 im2col matrix, bias f32."""
    cout, cin, kh, kw = w_oihw.shape
    wk = jnp.transpose(w_oihw, (2, 3, 1, 0)).reshape(kh * kw * cin, cout)
    wp = jnp.zeros((CPAD, CPAD), jnp.bfloat16)
    wp = wp.at[:kh * kw * cin, :cout].set(wk.astype(jnp.bfloat16))
    bp = jnp.zeros((1, CPAD), jnp.float32).at[0, :cout].set(b)
    return wp, bp


def _pack_conv(w_oihw, b):
    """OIHW conv weight -> (9, CPAD, CPAD) bf16 per-tap matrices, bias f32."""
    cout, cin, kh, kw = w_oihw.shape
    wk = jnp.transpose(w_oihw, (2, 3, 1, 0)).reshape(kh * kw, cin, cout)
    wp = jnp.zeros((kh * kw, CPAD, CPAD), jnp.bfloat16)
    wp = wp.at[:, :cin, :cout].set(wk.astype(jnp.bfloat16))
    bp = jnp.zeros((1, CPAD), jnp.float32).at[0, :cout].set(b)
    return wp, bp


def simple_ddpm_forward(x, t, params):
    """x: (B, channels, H, W) f32 (NCHW, like PyTorch), t: (B,) int32."""
    emb = params["embed"]
    convs = params["convs"]
    B, C, H, W = x.shape
    cin1 = C + 1
    cout_final = convs[-1][0].shape[0]

    # Layout preconditions (silent relayout / mis-packing guards).
    assert W % 8 == 0, "W must be a multiple of 8 (tile-aligned flat layout)"
    assert 9 * cin1 <= CPAD, "layer-1 im2col taps must fit in 128 lanes"

    # time channel: time_embed(t)[:, 0] broadcast over HxW as one extra channel
    t_val = emb[t, 0]                                               # (B,)
    t_channel = jnp.broadcast_to(t_val[:, None, None, None], (B, 1, H, W))
    x_in = jnp.concatenate([x, t_channel], axis=1)                  # (B, C+1, H, W)

    # layer-1 im2col in bf16: 9 taps x (C+1) channels packed into 128 lanes,
    # feature index k*(C+1) + ci with k = dy*3 + dx, single concat for padding.
    x_nhwc = jnp.transpose(x_in, (0, 2, 3, 1)).astype(jnp.bfloat16)
    x_pad = jnp.pad(x_nhwc, ((0, 0), (1, 1), (1, 1), (0, 0)))
    pieces = [x_pad[:, dy:dy + H, dx:dx + W, :]
              for dy in range(3) for dx in range(3)]
    pad_lanes = CPAD - 9 * cin1
    if pad_lanes:
        pieces.append(jnp.zeros((B, H, W, pad_lanes), jnp.bfloat16))
    im2col = jnp.concatenate(pieces, axis=-1).reshape(B, H * W, CPAD)

    (w1, b1), (w2, b2), (w3, b3) = convs
    w1p, b1p = _pack_conv1(w1, b1)
    w2p, b2p = _pack_conv(w2, b2)
    w3p, b3p = _pack_conv(w3, b3)

    CM = _rows_per_chunk(H, W) * W          # flat rows per M-chunk

    out = pl.pallas_call(
        functools.partial(_ddpm_kernel, H=H, W=W, CM=CM),
        out_shape=jax.ShapeDtypeStruct((B, H * W, CPAD), jnp.float32),
        grid=(B,),
        in_specs=[
            pl.BlockSpec((None, H * W, CPAD), lambda b: (b, 0, 0)),
            pl.BlockSpec((CPAD, CPAD), lambda b: (0, 0)),
            pl.BlockSpec((1, CPAD), lambda b: (0, 0)),
            pl.BlockSpec((9, CPAD, CPAD), lambda b: (0, 0, 0)),
            pl.BlockSpec((1, CPAD), lambda b: (0, 0)),
            pl.BlockSpec((9, CPAD, CPAD), lambda b: (0, 0, 0)),
            pl.BlockSpec((1, CPAD), lambda b: (0, 0)),
        ],
        out_specs=pl.BlockSpec((None, H * W, CPAD), lambda b: (b, 0, 0)),
        scratch_shapes=[
            pltpu.VMEM((3, (H + 2) * W, CPAD), jnp.bfloat16),   # layer-1 act
            pltpu.VMEM((3, (H + 2) * W, CPAD), jnp.bfloat16),   # layer-2 act
        ],
        compiler_params=pltpu.CompilerParams(
            dimension_semantics=("parallel",)),
    )(im2col, w1p, b1p, w2p, b2p, w3p, b3p)

    out = out.reshape(B, H, W, CPAD)[:, :, :, :cout_final]          # drop padding
    return jnp.transpose(out, (0, 3, 1, 2))                         # back to NCHW


def reference_forward(x, t, params):
    """Pure-JAX f32 reference with the same effective semantics (NCHW)."""
    emb = params["embed"]
    t_val = emb[t, 0]
    t_channel = jnp.broadcast_to(
        t_val[:, None, None, None], (x.shape[0], 1, x.shape[2], x.shape[3]))
    h = jnp.concatenate([x, t_channel], axis=1)

    def conv(h, w, b):
        y = jax.lax.conv_general_dilated(
            h, w, window_strides=(1, 1), padding=((1, 1), (1, 1)),
            dimension_numbers=("NCHW", "OIHW", "NCHW"),
            precision=jax.lax.Precision.HIGHEST)
        return y + b[None, :, None, None]

    (w1, b1), (w2, b2), (w3, b3) = params["convs"]
    h = jax.nn.relu(conv(h, w1, b1))
    h = jax.nn.relu(conv(h, w2, b2))
    return conv(h, w3, b3)


def init_params(key, channels=3):
    ks = jax.random.split(key, 7)
    emb = jax.random.normal(ks[0], (T, EMB_DIM), jnp.float32)

    def conv_init(kw, kb, cout, cin):
        bound = 1.0 / (cin * 9) ** 0.5
        w = jax.random.uniform(kw, (cout, cin, 3, 3), jnp.float32, -bound, bound)
        b = jax.random.uniform(kb, (cout,), jnp.float32, -bound, bound)
        return w, b

    convs = [
        conv_init(ks[1], ks[2], 64, channels + 1),
        conv_init(ks[3], ks[4], 64, 64),
        conv_init(ks[5], ks[6], channels, 64),
    ]
    return {"embed": emb, "convs": convs}


if __name__ == "__main__":
    key = jax.random.PRNGKey(0)
    channels, B, H, W = 3, 2, 16, 16

    pkey, xkey = jax.random.split(key)
    params = init_params(pkey, channels=channels)
    x = jax.random.normal(xkey, (B, channels, H, W), jnp.float32)
    t = jnp.array([17, 423], dtype=jnp.int32)

    fwd = jax.jit(simple_ddpm_forward)
    out = jax.block_until_ready(fwd(x, t, params))
    assert out.shape == (B, channels, H, W), out.shape

    ref = reference_forward(x, t, params)
    max_err = float(jnp.max(jnp.abs(out - ref)))
    # bf16 MXU operands with f32 accumulation: structural bugs give O(0.1+)
    # errors; rounding noise stays well under this bound for this network.
    if max_err > 5e-2:
        raise AssertionError(f"Pallas/reference mismatch: max abs err = {max_err}")

    print("KERNEL_OK")
</pallas_src>

<mosaic_0001>
module attributes {stable_mosaic.version = 11 : i64} {
  func.func @_ddpm_kernel(%arg0: i32, %arg1: memref<1x256x128xbf16, #tpu.memory_space<vmem>>, %arg2: memref<128x128xbf16, #tpu.memory_space<vmem>>, %arg3: memref<1x128xf32, #tpu.memory_space<vmem>>, %arg4: memref<9x128x128xbf16, #tpu.memory_space<vmem>>, %arg5: memref<1x128xf32, #tpu.memory_space<vmem>>, %arg6: memref<9x128x128xbf16, #tpu.memory_space<vmem>>, %arg7: memref<1x128xf32, #tpu.memory_space<vmem>>, %arg8: memref<1x256x128xf32, #tpu.memory_space<vmem>>, %arg9: memref<3x288x128xbf16, #tpu.memory_space<vmem>>, %arg10: memref<3x288x128xbf16, #tpu.memory_space<vmem>>) attributes {dimension_semantics = [#tpu.dimension_semantics<parallel>], iteration_bounds = array<i64: 2>, scalar_prefetch = 0 : i64, scratch_operands = 2 : i64, tpu.core_type = #tpu.core_type<tc>, window_params = [{transform_indices = @transform_0, window_bounds = array<i64: 1, 256, 128>}, {pipeline_mode = #tpu.pipeline_mode<synchronous>, transform_indices = @transform_1, window_bounds = array<i64: 128, 128>}, {pipeline_mode = #tpu.pipeline_mode<synchronous>, transform_indices = @transform_2, window_bounds = array<i64: 1, 128>}, {pipeline_mode = #tpu.pipeline_mode<synchronous>, transform_indices = @transform_3, window_bounds = array<i64: 9, 128, 128>}, {pipeline_mode = #tpu.pipeline_mode<synchronous>, transform_indices = @transform_4, window_bounds = array<i64: 1, 128>}, {pipeline_mode = #tpu.pipeline_mode<synchronous>, transform_indices = @transform_5, window_bounds = array<i64: 9, 128, 128>}, {pipeline_mode = #tpu.pipeline_mode<synchronous>, transform_indices = @transform_6, window_bounds = array<i64: 1, 128>}, {transform_indices = @transform_7, window_bounds = array<i64: 1, 256, 128>}]} {
    %0 = tpu.iota {dimensions = array<i32: 0>} : vector<128x128xi32>
    %c15_i32 = arith.constant 15 : i32
    %1 = vector.broadcast %c15_i32 : i32 to vector<128x128xi32>
    %2 = arith.andi %0, %1 : vector<128x128xi32>
    %c0_i32 = arith.constant 0 : i32
    %3 = vector.broadcast %c0_i32 : i32 to vector<128x128xi32>
    %4 = arith.cmpi eq, %2, %3 : vector<128x128xi32>
    %c15_i32_0 = arith.constant 15 : i32
    %5 = vector.broadcast %c15_i32_0 : i32 to vector<128x128xi32>
    %6 = arith.cmpi eq, %2, %5 : vector<128x128xi32>
    %cst = arith.constant 0.000000e+00 : bf16
    %7 = vector.broadcast %cst : bf16 to vector<16x128xbf16>
    %c0 = arith.constant 0 : index
    %c0_1 = arith.constant 0 : index
    %c0_2 = arith.constant 0 : index
    %8 = vector.load %arg9[%c0, %c0_1, %c0_2] : memref<3x288x128xbf16, #tpu.memory_space<vmem>>, vector<1x16x128xbf16>
    %9 = vector.shape_cast %8 : vector<1x16x128xbf16> to vector<16x128xbf16>
    %10 = vector.shape_cast %7 : vector<16x128xbf16> to vector<1x16x128xbf16>
    tpu.vector_store %arg9[%c0, %c0_1, %c0_2], %10 {strides = array<i32>} : memref<3x288x128xbf16, #tpu.memory_space<vmem>>, vector<1x16x128xbf16>,
    %c0_3 = arith.constant 0 : index
    %c272 = arith.constant 272 : index
    %c0_4 = arith.constant 0 : index
    %11 = vector.load %arg9[%c0_3, %c272, %c0_4] : memref<3x288x128xbf16, #tpu.memory_space<vmem>>, vector<1x16x128xbf16>
    %12 = vector.shape_cast %11 : vector<1x16x128xbf16> to vector<16x128xbf16>
    %13 = vector.shape_cast %7 : vector<16x128xbf16> to vector<1x16x128xbf16>
    tpu.vector_store %arg9[%c0_3, %c272, %c0_4], %13 {strides = array<i32>} : memref<3x288x128xbf16, #tpu.memory_space<vmem>>, vector<1x16x128xbf16>,
    %c1 = arith.constant 1 : index
    %c0_5 = arith.constant 0 : index
    %c0_6 = arith.constant 0 : index
    %14 = vector.load %arg9[%c1, %c0_5, %c0_6] : memref<3x288x128xbf16, #tpu.memory_space<vmem>>, vector<1x16x128xbf16>
    %15 = vector.shape_cast %14 : vector<1x16x128xbf16> to vector<16x128xbf16>
    %16 = vector.shape_cast %7 : vector<16x128xbf16> to vector<1x16x128xbf16>
    tpu.vector_store %arg9[%c1, %c0_5, %c0_6], %16 {strides = array<i32>} : memref<3x288x128xbf16, #tpu.memory_space<vmem>>, vector<1x16x128xbf16>,
    %c1_7 = arith.constant 1 : index
    %c272_8 = arith.constant 272 : index
    %c0_9 = arith.constant 0 : index
    %17 = vector.load %arg9[%c1_7, %c272_8, %c0_9] : memref<3x288x128xbf16, #tpu.memory_space<vmem>>, vector<1x16x128xbf16>
    %18 = vector.shape_cast %17 : vector<1x16x128xbf16> to vector<16x128xbf16>
    %19 = vector.shape_cast %7 : vector<16x128xbf16> to vector<1x16x128xbf16>
    tpu.vector_store %arg9[%c1_7, %c272_8, %c0_9], %19 {strides = array<i32>} : memref<3x288x128xbf16, #tpu.memory_space<vmem>>, vector<1x16x128xbf16>,
    %c2 = arith.constant 2 : index
    %c0_10 = arith.constant 0 : index
    %c0_11 = arith.constant 0 : index
    %20 = vector.load %arg9[%c2, %c0_10, %c0_11] : memref<3x288x128xbf16, #tpu.memory_space<vmem>>, vector<1x16x128xbf16>
    %21 = vector.shape_cast %20 : vector<1x16x128xbf16> to vector<16x128xbf16>
    %22 = vector.shape_cast %7 : vector<16x128xbf16> to vector<1x16x128xbf16>
    tpu.vector_store %arg9[%c2, %c0_10, %c0_11], %22 {strides = array<i32>} : memref<3x288x128xbf16, #tpu.memory_space<vmem>>, vector<1x16x128xbf16>,
    %c2_12 = arith.constant 2 : index
    %c272_13 = arith.constant 272 : index
    %c0_14 = arith.constant 0 : index
    %23 = vector.load %arg9[%c2_12, %c272_13, %c0_14] : memref<3x288x128xbf16, #tpu.memory_space<vmem>>, vector<1x16x128xbf16>
    %24 = vector.shape_cast %23 : vector<1x16x128xbf16> to vector<16x128xbf16>
    %25 = vector.shape_cast %7 : vector<16x128xbf16> to vector<1x16x128xbf16>
    tpu.vector_store %arg9[%c2_12, %c272_13, %c0_14], %25 {strides = array<i32>} : memref<3x288x128xbf16, #tpu.memory_space<vmem>>, vector<1x16x128xbf16>,
    %c0_15 = arith.constant 0 : index
    %c0_16 = arith.constant 0 : index
    %c0_17 = arith.constant 0 : index
    %26 = vector.load %arg10[%c0_15, %c0_16, %c0_17] : memref<3x288x128xbf16, #tpu.memory_space<vmem>>, vector<1x16x128xbf16>
    %27 = vector.shape_cast %26 : vector<1x16x128xbf16> to vector<16x128xbf16>
    %28 = vector.shape_cast %7 : vector<16x128xbf16> to vector<1x16x128xbf16>
    tpu.vector_store %arg10[%c0_15, %c0_16, %c0_17], %28 {strides = array<i32>} : memref<3x288x128xbf16, #tpu.memory_space<vmem>>, vector<1x16x128xbf16>,
    %c0_18 = arith.constant 0 : index
    %c272_19 = arith.constant 272 : index
    %c0_20 = arith.constant 0 : index
    %29 = vector.load %arg10[%c0_18, %c272_19, %c0_20] : memref<3x288x128xbf16, #tpu.memory_space<vmem>>, vector<1x16x128xbf16>
    %30 = vector.shape_cast %29 : vector<1x16x128xbf16> to vector<16x128xbf16>
    %31 = vector.shape_cast %7 : vector<16x128xbf16> to vector<1x16x128xbf16>
    tpu.vector_store %arg10[%c0_18, %c272_19, %c0_20], %31 {strides = array<i32>} : memref<3x288x128xbf16, #tpu.memory_space<vmem>>, vector<1x16x128xbf16>,
    %c1_21 = arith.constant 1 : index
    %c0_22 = arith.constant 0 : index
    %c0_23 = arith.constant 0 : index
    %32 = vector.load %arg10[%c1_21, %c0_22, %c0_23] : memref<3x288x128xbf16, #tpu.memory_space<vmem>>, vector<1x16x128xbf16>
    %33 = vector.shape_cast %32 : vector<1x16x128xbf16> to vector<16x128xbf16>
    %34 = vector.shape_cast %7 : vector<16x128xbf16> to vector<1x16x128xbf16>
    tpu.vector_store %arg10[%c1_21, %c0_22, %c0_23], %34 {strides = array<i32>} : memref<3x288x128xbf16, #tpu.memory_space<vmem>>, vector<1x16x128xbf16>,
    %c1_24 = arith.constant 1 : index
    %c272_25 = arith.constant 272 : index
    %c0_26 = arith.constant 0 : index
    %35 = vector.load %arg10[%c1_24, %c272_25, %c0_26] : memref<3x288x128xbf16, #tpu.memory_space<vmem>>, vector<1x16x128xbf16>
    %36 = vector.shape_cast %35 : vector<1x16x128xbf16> to vector<16x128xbf16>
    %37 = vector.shape_cast %7 : vector<16x128xbf16> to vector<1x16x128xbf16>
    tpu.vector_store %arg10[%c1_24, %c272_25, %c0_26], %37 {strides = array<i32>} : memref<3x288x128xbf16, #tpu.memory_space<vmem>>, vector<1x16x128xbf16>,
    %c2_27 = arith.constant 2 : index
    %c0_28 = arith.constant 0 : index
    %c0_29 = arith.constant 0 : index
    %38 = vector.load %arg10[%c2_27, %c0_28, %c0_29] : memref<3x288x128xbf16, #tpu.memory_space<vmem>>, vector<1x16x128xbf16>
    %39 = vector.shape_cast %38 : vector<1x16x128xbf16> to vector<16x128xbf16>
    %40 = vector.shape_cast %7 : vector<16x128xbf16> to vector<1x16x128xbf16>
    tpu.vector_store %arg10[%c2_27, %c0_28, %c0_29], %40 {strides = array<i32>} : memref<3x288x128xbf16, #tpu.memory_space<vmem>>, vector<1x16x128xbf16>,
    %c2_30 = arith.constant 2 : index
    %c272_31 = arith.constant 272 : index
    %c0_32 = arith.constant 0 : index
    %41 = vector.load %arg10[%c2_30, %c272_31, %c0_32] : memref<3x288x128xbf16, #tpu.memory_space<vmem>>, vector<1x16x128xbf16>
    %42 = vector.shape_cast %41 : vector<1x16x128xbf16> to vector<16x128xbf16>
    %43 = vector.shape_cast %7 : vector<16x128xbf16> to vector<1x16x128xbf16>
    tpu.vector_store %arg10[%c2_30, %c272_31, %c0_32], %43 {strides = array<i32>} : memref<3x288x128xbf16, #tpu.memory_space<vmem>>, vector<1x16x128xbf16>,
    %c0_33 = arith.constant 0 : index
    %c0_34 = arith.constant 0 : index
    %c0_35 = arith.constant 0 : index
    %44 = vector.load %arg1[%c0_33, %c0_34, %c0_35] : memref<1x256x128xbf16, #tpu.memory_space<vmem>>, vector<1x128x128xbf16>
    %45 = vector.shape_cast %44 : vector<1x128x128xbf16> to vector<128x128xbf16>
    %c0_36 = arith.constant 0 : index
    %c0_37 = arith.constant 0 : index
    %46 = vector.load %arg2[%c0_36, %c0_37] : memref<128x128xbf16, #tpu.memory_space<vmem>>, vector<128x128xbf16>
    %cst_38 = arith.constant dense<0.000000e+00> : vector<128x128xf32>
    %47 = tpu.matmul %45, %46, %cst_38 {dimension_numbers = #tpu.dot_dimension_numbers<[1], [0], [0], [1], [0, 0, 1, 1], [], []>} : vector<128x128xbf16>, vector<128x128xbf16>, vector<128x128xf32> -> vector<128x128xf32>
    %c0_39 = arith.constant 0 : index
    %c0_40 = arith.constant 0 : index
    %48 = vector.load %arg3[%c0_39, %c0_40] : memref<1x128xf32, #tpu.memory_space<vmem>>, vector<1x128xf32>
    %49 = vector.broadcast %48 : vector<1x128xf32> to vector<128x128xf32>
    %50 = arith.addf %47, %49 : vector<128x128xf32>
    %cst_41 = arith.constant 0.000000e+00 : f32
    %51 = vector.broadcast %cst_41 : f32 to vector<128x128xf32>
    %52 = arith.maximumf %50, %51 : vector<128x128xf32>
    %c1_i32 = arith.constant 1 : i32
    %53 = tpu.dynamic_rotate %52 by %c1_i32 dim 0 : vector<128x128xf32>, i32 -> vector<128x128xf32>
    %cst_42 = arith.constant 0.000000e+00 : f32
    %54 = vector.broadcast %cst_42 : f32 to vector<128x128xf32>
    %55 = arith.select %4, %54, %53 : vector<128x128xi1>, vector<128x128xf32>
    %c127_i32 = arith.constant 127 : i32
    %56 = tpu.dynamic_rotate %52 by %c127_i32 dim 0 : vector<128x128xf32>, i32 -> vector<128x128xf32>
    %cst_43 = arith.constant 0.000000e+00 : f32
    %57 = vector.broadcast %cst_43 : f32 to vector<128x128xf32>
    %58 = arith.select %6, %57, %56 : vector<128x128xi1>, vector<128x128xf32>
    %59 = arith.truncf %52 : vector<128x128xf32> to vector<128x128xbf16>
    %c1_44 = arith.constant 1 : index
    %c16 = arith.constant 16 : index
    %c0_45 = arith.constant 0 : index
    %60 = vector.load %arg9[%c1_44, %c16, %c0_45] : memref<3x288x128xbf16, #tpu.memory_space<vmem>>, vector<1x128x128xbf16>
    %61 = vector.shape_cast %60 : vector<1x128x128xbf16> to vector<128x128xbf16>
    %62 = vector.shape_cast %59 : vector<128x128xbf16> to vector<1x128x128xbf16>
    tpu.vector_store %arg9[%c1_44, %c16, %c0_45], %62 {strides = array<i32>} : memref<3x288x128xbf16, #tpu.memory_space<vmem>>, vector<1x128x128xbf16>,
    %63 = arith.truncf %55 : vector<128x128xf32> to vector<128x128xbf16>
    %c0_46 = arith.constant 0 : index
    %c16_47 = arith.constant 16 : index
    %c0_48 = arith.constant 0 : index
    %64 = vector.load %arg9[%c0_46, %c16_47, %c0_48] : memref<3x288x128xbf16, #tpu.memory_space<vmem>>, vector<1x128x128xbf16>
    %65 = vector.shape_cast %64 : vector<1x128x128xbf16> to vector<128x128xbf16>
    %66 = vector.shape_cast %63 : vector<128x128xbf16> to vector<1x128x128xbf16>
    tpu.vector_store %arg9[%c0_46, %c16_47, %c0_48], %66 {strides = array<i32>} : memref<3x288x128xbf16, #tpu.memory_space<vmem>>, vector<1x128x128xbf16>,
    %67 = arith.truncf %58 : vector<128x128xf32> to vector<128x128xbf16>
    %c2_49 = arith.constant 2 : index
    %c16_50 = arith.constant 16 : index
    %c0_51 = arith.constant 0 : index
    %68 = vector.load %arg9[%c2_49, %c16_50, %c0_51] : memref<3x288x128xbf16, #tpu.memory_space<vmem>>, vector<1x128x128xbf16>
    %69 = vector.shape_cast %68 : vector<1x128x128xbf16> to vector<128x128xbf16>
    %70 = vector.shape_cast %67 : vector<128x128xbf16> to vector<1x128x128xbf16>
    tpu.vector_store %arg9[%c2_49, %c16_50, %c0_51], %70 {strides = array<i32>} : memref<3x288x128xbf16, #tpu.memory_space<vmem>>, vector<1x128x128xbf16>,
    %c0_52 = arith.constant 0 : index
    %c128 = arith.constant 128 : index
    %c0_53 = arith.constant 0 : index
    %71 = vector.load %arg1[%c0_52, %c128, %c0_53] : memref<1x256x128xbf16, #tpu.memory_space<vmem>>, vector<1x128x128xbf16>
    %72 = vector.shape_cast %71 : vector<1x128x128xbf16> to vector<128x128xbf16>
    %c0_54 = arith.constant 0 : index
    %c0_55 = arith.constant 0 : index
    %73 = vector.load %arg2[%c0_54, %c0_55] : memref<128x128xbf16, #tpu.memory_space<vmem>>, vector<128x128xbf16>
    %cst_56 = arith.constant dense<0.000000e+00> : vector<128x128xf32>
    %74 = tpu.matmul %72, %73, %cst_56 {dimension_numbers = #tpu.dot_dimension_numbers<[1], [0], [0], [1], [0, 0, 1, 1], [], []>} : vector<128x128xbf16>, vector<128x128xbf16>, vector<128x128xf32> -> vector<128x128xf32>
    %c0_57 = arith.constant 0 : index
    %c0_58 = arith.constant 0 : index
    %75 = vector.load %arg3[%c0_57, %c0_58] : memref<1x128xf32, #tpu.memory_space<vmem>>, vector<1x128xf32>
    %76 = vector.broadcast %75 : vector<1x128xf32> to vector<128x128xf32>
    %77 = arith.addf %74, %76 : vector<128x128xf32>
    %cst_59 = arith.constant 0.000000e+00 : f32
    %78 = vector.broadcast %cst_59 : f32 to vector<128x128xf32>
    %79 = arith.maximumf %77, %78 : vector<128x128xf32>
    %c1_i32_60 = arith.constant 1 : i32
    %80 = tpu.dynamic_rotate %79 by %c1_i32_60 dim 0 : vector<128x128xf32>, i32 -> vector<128x128xf32>
    %cst_61 = arith.constant 0.000000e+00 : f32
    %81 = vector.broadcast %cst_61 : f32 to vector<128x128xf32>
    %82 = arith.select %4, %81, %80 : vector<128x128xi1>, vector<128x128xf32>
    %c127_i32_62 = arith.constant 127 : i32
    %83 = tpu.dynamic_rotate %79 by %c127_i32_62 dim 0 : vector<128x128xf32>, i32 -> vector<128x128xf32>
    %cst_63 = arith.constant 0.000000e+00 : f32
    %84 = vector.broadcast %cst_63 : f32 to vector<128x128xf32>
    %85 = arith.select %6, %84, %83 : vector<128x128xi1>, vector<128x128xf32>
    %86 = arith.truncf %79 : vector<128x128xf32> to vector<128x128xbf16>
    %c1_64 = arith.constant 1 : index
    %c144 = arith.constant 144 : index
    %c0_65 = arith.constant 0 : index
    %87 = vector.load %arg9[%c1_64, %c144, %c0_65] : memref<3x288x128xbf16, #tpu.memory_space<vmem>>, vector<1x128x128xbf16>
    %88 = vector.shape_cast %87 : vector<1x128x128xbf16> to vector<128x128xbf16>
    %89 = vector.shape_cast %86 : vector<128x128xbf16> to vector<1x128x128xbf16>
    tpu.vector_store %arg9[%c1_64, %c144, %c0_65], %89 {strides = array<i32>} : memref<3x288x128xbf16, #tpu.memory_space<vmem>>, vector<1x128x128xbf16>,
    %90 = arith.truncf %82 : vector<128x128xf32> to vector<128x128xbf16>
    %c0_66 = arith.constant 0 : index
    %c144_67 = arith.constant 144 : index
    %c0_68 = arith.constant 0 : index
    %91 = vector.load %arg9[%c0_66, %c144_67, %c0_68] : memref<3x288x128xbf16, #tpu.memory_space<vmem>>, vector<1x128x128xbf16>
    %92 = vector.shape_cast %91 : vector<1x128x128xbf16> to vector<128x128xbf16>
    %93 = vector.shape_cast %90 : vector<128x128xbf16> to vector<1x128x128xbf16>
    tpu.vector_store %arg9[%c0_66, %c144_67, %c0_68], %93 {strides = array<i32>} : memref<3x288x128xbf16, #tpu.memory_space<vmem>>, vector<1x128x128xbf16>,
    %94 = arith.truncf %85 : vector<128x128xf32> to vector<128x128xbf16>
    %c2_69 = arith.constant 2 : index
    %c144_70 = arith.constant 144 : index
    %c0_71 = arith.constant 0 : index
    %95 = vector.load %arg9[%c2_69, %c144_70, %c0_71] : memref<3x288x128xbf16, #tpu.memory_space<vmem>>, vector<1x128x128xbf16>
    %96 = vector.shape_cast %95 : vector<1x128x128xbf16> to vector<128x128xbf16>
    %97 = vector.shape_cast %94 : vector<128x128xbf16> to vector<1x128x128xbf16>
    tpu.vector_store %arg9[%c2_69, %c144_70, %c0_71], %97 {strides = array<i32>} : memref<3x288x128xbf16, #tpu.memory_space<vmem>>, vector<1x128x128xbf16>,
    %c0_72 = arith.constant 0 : index
    %c0_73 = arith.constant 0 : index
    %98 = vector.load %arg5[%c0_72, %c0_73] : memref<1x128xf32, #tpu.memory_space<vmem>>, vector<1x128xf32>
    %99 = vector.shape_cast %98 : vector<1x128xf32> to vector<1x128xf32>
    %100 = vector.broadcast %99 : vector<1x128xf32> to vector<128x128xf32>
    %c0_74 = arith.constant 0 : index
    %c0_75 = arith.constant 0 : index
    %c0_76 = arith.constant 0 : index
    %101 = vector.load %arg9[%c0_74, %c0_75, %c0_76] : memref<3x288x128xbf16, #tpu.memory_space<vmem>>, vector<1x128x128xbf16>
    %102 = vector.shape_cast %101 : vector<1x128x128xbf16> to vector<128x128xbf16>
    %c0_77 = arith.constant 0 : index
    %c0_78 = arith.constant 0 : index
    %c0_79 = arith.constant 0 : index
    %103 = vector.load %arg4[%c0_77, %c0_78, %c0_79] : memref<9x128x128xbf16, #tpu.memory_space<vmem>>, vector<1x128x128xbf16>
    %104 = vector.shape_cast %103 : vector<1x128x128xbf16> to vector<128x128xbf16>
    %cst_80 = arith.constant dense<0.000000e+00> : vector<128x128xf32>
    %105 = tpu.matmul %102, %104, %cst_80 {dimension_numbers = #tpu.dot_dimension_numbers<[1], [0], [0], [1], [0, 0, 1, 1], [], []>} : vector<128x128xbf16>, vector<128x128xbf16>, vector<128x128xf32> -> vector<128x128xf32>
    %106 = arith.addf %100, %105 : vector<128x128xf32>
    %c1_81 = arith.constant 1 : index
    %c0_82 = arith.constant 0 : index
    %c0_83 = arith.constant 0 : index
    %107 = vector.load %arg9[%c1_81, %c0_82, %c0_83] : memref<3x288x128xbf16, #tpu.memory_space<vmem>>, vector<1x128x128xbf16>
    %108 = vector.shape_cast %107 : vector<1x128x128xbf16> to vector<128x128xbf16>
    %c1_84 = arith.constant 1 : index
    %c0_85 = arith.constant 0 : index
    %c0_86 = arith.constant 0 : index
    %109 = vector.load %arg4[%c1_84, %c0_85, %c0_86] : memref<9x128x128xbf16, #tpu.memory_space<vmem>>, vector<1x128x128xbf16>
    %110 = vector.shape_cast %109 : vector<1x128x128xbf16> to vector<128x128xbf16>
    %cst_87 = arith.constant dense<0.000000e+00> : vector<128x128xf32>
    %111 = tpu.matmul %108, %110, %cst_87 {dimension_numbers = #tpu.dot_dimension_numbers<[1], [0], [0], [1], [0, 0, 1, 1], [], []>} : vector<128x128xbf16>, vector<128x128xbf16>, vector<128x128xf32> -> vector<128x128xf32>
    %112 = arith.addf %106, %111 : vector<128x128xf32>
    %c2_88 = arith.constant 2 : index
    %c0_89 = arith.constant 0 : index
    %c0_90 = arith.constant 0 : index
    %113 = vector.load %arg9[%c2_88, %c0_89, %c0_90] : memref<3x288x128xbf16, #tpu.memory_space<vmem>>, vector<1x128x128xbf16>
    %114 = vector.shape_cast %113 : vector<1x128x128xbf16> to vector<128x128xbf16>
    %c2_91 = arith.constant 2 : index
    %c0_92 = arith.constant 0 : index
    %c0_93 = arith.constant 0 : index
    %115 = vector.load %arg4[%c2_91, %c0_92, %c0_93] : memref<9x128x128xbf16, #tpu.memory_space<vmem>>, vector<1x128x128xbf16>
    %116 = vector.shape_cast %115 : vector<1x128x128xbf16> to vector<128x128xbf16>
    %cst_94 = arith.constant dense<0.000000e+00> : vector<128x128xf32>
    %117 = tpu.matmul %114, %116, %cst_94 {dimension_numbers = #tpu.dot_dimension_numbers<[1], [0], [0], [1], [0, 0, 1, 1], [], []>} : vector<128x128xbf16>, vector<128x128xbf16>, vector<128x128xf32> -> vector<128x128xf32>
    %118 = arith.addf %112, %117 : vector<128x128xf32>
    %c0_95 = arith.constant 0 : index
    %c16_96 = arith.constant 16 : index
    %c0_97 = arith.constant 0 : index
    %119 = vector.load %arg9[%c0_95, %c16_96, %c0_97] : memref<3x288x128xbf16, #tpu.memory_space<vmem>>, vector<1x128x128xbf16>
    %120 = vector.shape_cast %119 : vector<1x128x128xbf16> to vector<128x128xbf16>
    %c3 = arith.constant 3 : index
    %c0_98 = arith.constant 0 : index
    %c0_99 = arith.constant 0 : index
    %121 = vector.load %arg4[%c3, %c0_98, %c0_99] : memref<9x128x128xbf16, #tpu.memory_space<vmem>>, vector<1x128x128xbf16>
    %122 = vector.shape_cast %121 : vector<1x128x128xbf16> to vector<128x128xbf16>
    %cst_100 = arith.constant dense<0.000000e+00> : vector<128x128xf32>
    %123 = tpu.matmul %120, %122, %cst_100 {dimension_numbers = #tpu.dot_dimension_numbers<[1], [0], [0], [1], [0, 0, 1, 1], [], []>} : vector<128x128xbf16>, vector<128x128xbf16>, vector<128x128xf32> -> vector<128x128xf32>
    %124 = arith.addf %118, %123 : vector<128x128xf32>
    %c1_101 = arith.constant 1 : index
    %c16_102 = arith.constant 16 : index
    %c0_103 = arith.constant 0 : index
    %125 = vector.load %arg9[%c1_101, %c16_102, %c0_103] : memref<3x288x128xbf16, #tpu.memory_space<vmem>>, vector<1x128x128xbf16>
    %126 = vector.shape_cast %125 : vector<1x128x128xbf16> to vector<128x128xbf16>
    %c4 = arith.constant 4 : index
    %c0_104 = arith.constant 0 : index
    %c0_105 = arith.constant 0 : index
    %127 = vector.load %arg4[%c4, %c0_104, %c0_105] : memref<9x128x128xbf16, #tpu.memory_space<vmem>>, vector<1x128x128xbf16>
    %128 = vector.shape_cast %127 : vector<1x128x128xbf16> to vector<128x128xbf16>
    %cst_106 = arith.constant dense<0.000000e+00> : vector<128x128xf32>
    %129 = tpu.matmul %126, %128, %cst_106 {dimension_numbers = #tpu.dot_dimension_numbers<[1], [0], [0], [1], [0, 0, 1, 1], [], []>} : vector<128x128xbf16>, vector<128x128xbf16>, vector<128x128xf32> -> vector<128x128xf32>
    %130 = arith.addf %124, %129 : vector<128x128xf32>
    %c2_107 = arith.constant 2 : index
    %c16_108 = arith.constant 16 : index
    %c0_109 = arith.constant 0 : index
    %131 = vector.load %arg9[%c2_107, %c16_108, %c0_109] : memref<3x288x128xbf16, #tpu.memory_space<vmem>>, vector<1x128x128xbf16>
    %132 = vector.shape_cast %131 : vector<1x128x128xbf16> to vector<128x128xbf16>
    %c5 = arith.constant 5 : index
    %c0_110 = arith.constant 0 : index
    %c0_111 = arith.constant 0 : index
    %133 = vector.load %arg4[%c5, %c0_110, %c0_111] : memref<9x128x128xbf16, #tpu.memory_space<vmem>>, vector<1x128x128xbf16>
    %134 = vector.shape_cast %133 : vector<1x128x128xbf16> to vector<128x128xbf16>
    %cst_112 = arith.constant dense<0.000000e+00> : vector<128x128xf32>
    %135 = tpu.matmul %132, %134, %cst_112 {dimension_numbers = #tpu.dot_dimension_numbers<[1], [0], [0], [1], [0, 0, 1, 1], [], []>} : vector<128x128xbf16>, vector<128x128xbf16>, vector<128x128xf32> -> vector<128x128xf32>
    %136 = arith.addf %130, %135 : vector<128x128xf32>
    %c0_113 = arith.constant 0 : index
    %c32 = arith.constant 32 : index
    %c0_114 = arith.constant 0 : index
    %137 = vector.load %arg9[%c0_113, %c32, %c0_114] : memref<3x288x128xbf16, #tpu.memory_space<vmem>>, vector<1x128x128xbf16>
    %138 = vector.shape_cast %137 : vector<1x128x128xbf16> to vector<128x128xbf16>
    %c6 = arith.constant 6 : index
    %c0_115 = arith.constant 0 : index
    %c0_116 = arith.constant 0 : index
    %139 = vector.load %arg4[%c6, %c0_115, %c0_116] : memref<9x128x128xbf16, #tpu.memory_space<vmem>>, vector<1x128x128xbf16>
    %140 = vector.shape_cast %139 : vector<1x128x128xbf16> to vector<128x128xbf16>
    %cst_117 = arith.constant dense<0.000000e+00> : vector<128x128xf32>
    %141 = tpu.matmul %138, %140, %cst_117 {dimension_numbers = #tpu.dot_dimension_numbers<[1], [0], [0], [1], [0, 0, 1, 1], [], []>} : vector<128x128xbf16>, vector<128x128xbf16>, vector<128x128xf32> -> vector<128x128xf32>
    %142 = arith.addf %136, %141 : vector<128x128xf32>
    %c1_118 = arith.constant 1 : index
    %c32_119 = arith.constant 32 : index
    %c0_120 = arith.constant 0 : index
    %143 = vector.load %arg9[%c1_118, %c32_119, %c0_120] : memref<3x288x128xbf16, #tpu.memory_space<vmem>>, vector<1x128x128xbf16>
    %144 = vector.shape_cast %143 : vector<1x128x128xbf16> to vector<128x128xbf16>
    %c7 = arith.constant 7 : index
    %c0_121 = arith.constant 0 : index
    %c0_122 = arith.constant 0 : index
    %145 = vector.load %arg4[%c7, %c0_121, %c0_122] : memref<9x128x128xbf16, #tpu.memory_space<vmem>>, vector<1x128x128xbf16>
    %146 = vector.shape_cast %145 : vector<1x128x128xbf16> to vector<128x128xbf16>
    %cst_123 = arith.constant dense<0.000000e+00> : vector<128x128xf32>
    %147 = tpu.matmul %144, %146, %cst_123 {dimension_numbers = #tpu.dot_dimension_numbers<[1], [0], [0], [1], [0, 0, 1, 1], [], []>} : vector<128x128xbf16>, vector<128x128xbf16>, vector<128x128xf32> -> vector<128x128xf32>
    %148 = arith.addf %142, %147 : vector<128x128xf32>
    %c2_124 = arith.constant 2 : index
    %c32_125 = arith.constant 32 : index
    %c0_126 = arith.constant 0 : index
    %149 = vector.load %arg9[%c2_124, %c32_125, %c0_126] : memref<3x288x128xbf16, #tpu.memory_space<vmem>>, vector<1x128x128xbf16>
    %150 = vector.shape_cast %149 : vector<1x128x128xbf16> to vector<128x128xbf16>
    %c8 = arith.constant 8 : index
    %c0_127 = arith.constant 0 : index
    %c0_128 = arith.constant 0 : index
    %151 = vector.load %arg4[%c8, %c0_127, %c0_128] : memref<9x128x128xbf16, #tpu.memory_space<vmem>>, vector<1x128x128xbf16>
    %152 = vector.shape_cast %151 : vector<1x128x128xbf16> to vector<128x128xbf16>
    %cst_129 = arith.constant dense<0.000000e+00> : vector<128x128xf32>
    %153 = tpu.matmul %150, %152, %cst_129 {dimension_numbers = #tpu.dot_dimension_numbers<[1], [0], [0], [1], [0, 0, 1, 1], [], []>} : vector<128x128xbf16>, vector<128x128xbf16>, vector<128x128xf32> -> vector<128x128xf32>
    %154 = arith.addf %148, %153 : vector<128x128xf32>
    %cst_130 = arith.constant 0.000000e+00 : f32
    %155 = vector.broadcast %cst_130 : f32 to vector<128x128xf32>
    %156 = arith.maximumf %154, %155 : vector<128x128xf32>
    %c1_i32_131 = arith.constant 1 : i32
    %157 = tpu.dynamic_rotate %156 by %c1_i32_131 dim 0 : vector<128x128xf32>, i32 -> vector<128x128xf32>
    %cst_132 = arith.constant 0.000000e+00 : f32
    %158 = vector.broadcast %cst_132 : f32 to vector<128x128xf32>
    %159 = arith.select %4, %158, %157 : vector<128x128xi1>, vector<128x128xf32>
    %c127_i32_133 = arith.constant 127 : i32
    %160 = tpu.dynamic_rotate %156 by %c127_i32_133 dim 0 : vector<128x128xf32>, i32 -> vector<128x128xf32>
    %cst_134 = arith.constant 0.000000e+00 : f32
    %161 = vector.broadcast %cst_134 : f32 to vector<128x128xf32>
    %162 = arith.select %6, %161, %160 : vector<128x128xi1>, vector<128x128xf32>
    %163 = arith.truncf %156 : vector<128x128xf32> to vector<128x128xbf16>
    %c1_135 = arith.constant 1 : index
    %c16_136 = arith.constant 16 : index
    %c0_137 = arith.constant 0 : index
    %164 = vector.load %arg10[%c1_135, %c16_136, %c0_137] : memref<3x288x128xbf16, #tpu.memory_space<vmem>>, vector<1x128x128xbf16>
    %165 = vector.shape_cast %164 : vector<1x128x128xbf16> to vector<128x128xbf16>
    %166 = vector.shape_cast %163 : vector<128x128xbf16> to vector<1x128x128xbf16>
    tpu.vector_store %arg10[%c1_135, %c16_136, %c0_137], %166 {strides = array<i32>} : memref<3x288x128xbf16, #tpu.memory_space<vmem>>, vector<1x128x128xbf16>,
    %167 = arith.truncf %159 : vector<128x128xf32> to vector<128x128xbf16>
    %c0_138 = arith.constant 0 : index
    %c16_139 = arith.constant 16 : index
    %c0_140 = arith.constant 0 : index
    %168 = vector.load %arg10[%c0_138, %c16_139, %c0_140] : memref<3x288x128xbf16, #tpu.memory_space<vmem>>, vector<1x128x128xbf16>
    %169 = vector.shape_cast %168 : vector<1x128x128xbf16> to vector<128x128xbf16>
    %170 = vector.shape_cast %167 : vector<128x128xbf16> to vector<1x128x128xbf16>
    tpu.vector_store %arg10[%c0_138, %c16_139, %c0_140], %170 {strides = array<i32>} : memref<3x288x128xbf16, #tpu.memory_space<vmem>>, vector<1x128x128xbf16>,
    %171 = arith.truncf %162 : vector<128x128xf32> to vector<128x128xbf16>
    %c2_141 = arith.constant 2 : index
    %c16_142 = arith.constant 16 : index
    %c0_143 = arith.constant 0 : index
    %172 = vector.load %arg10[%c2_141, %c16_142, %c0_143] : memref<3x288x128xbf16, #tpu.memory_space<vmem>>, vector<1x128x128xbf16>
    %173 = vector.shape_cast %172 : vector<1x128x128xbf16> to vector<128x128xbf16>
    %174 = vector.shape_cast %171 : vector<128x128xbf16> to vector<1x128x128xbf16>
    tpu.vector_store %arg10[%c2_141, %c16_142, %c0_143], %174 {strides = array<i32>} : memref<3x288x128xbf16, #tpu.memory_space<vmem>>, vector<1x128x128xbf16>,
    %c0_144 = arith.constant 0 : index
    %c0_145 = arith.constant 0 : index
    %175 = vector.load %arg5[%c0_144, %c0_145] : memref<1x128xf32, #tpu.memory_space<vmem>>, vector<1x128xf32>
    %176 = vector.shape_cast %175 : vector<1x128xf32> to vector<1x128xf32>
    %177 = vector.broadcast %176 : vector<1x128xf32> to vector<128x128xf32>
    %c0_146 = arith.constant 0 : index
    %c128_147 = arith.constant 128 : index
    %c0_148 = arith.constant 0 : index
    %178 = vector.load %arg9[%c0_146, %c128_147, %c0_148] : memref<3x288x128xbf16, #tpu.memory_space<vmem>>, vector<1x128x128xbf16>
    %179 = vector.shape_cast %178 : vector<1x128x128xbf16> to vector<128x128xbf16>
    %c0_149 = arith.constant 0 : index
    %c0_150 = arith.constant 0 : index
    %c0_151 = arith.constant 0 : index
    %180 = vector.load %arg4[%c0_149, %c0_150, %c0_151] : memref<9x128x128xbf16, #tpu.memory_space<vmem>>, vector<1x128x128xbf16>
    %181 = vector.shape_cast %180 : vector<1x128x128xbf16> to vector<128x128xbf16>
    %cst_152 = arith.constant dense<0.000000e+00> : vector<128x128xf32>
    %182 = tpu.matmul %179, %181, %cst_152 {dimension_numbers = #tpu.dot_dimension_numbers<[1], [0], [0], [1], [0, 0, 1, 1], [], []>} : vector<128x128xbf16>, vector<128x128xbf16>, vector<128x128xf32> -> vector<128x128xf32>
    %183 = arith.addf %177, %182 : vector<128x128xf32>
    %c1_153 = arith.constant 1 : index
    %c128_154 = arith.constant 128 : index
    %c0_155 = arith.constant 0 : index
    %184 = vector.load %arg9[%c1_153, %c128_154, %c0_155] : memref<3x288x128xbf16, #tpu.memory_space<vmem>>, vector<1x128x128xbf16>
    %185 = vector.shape_cast %184 : vector<1x128x128xbf16> to vector<128x128xbf16>
    %c1_156 = arith.constant 1 : index
    %c0_157 = arith.constant 0 : index
    %c0_158 = arith.constant 0 : index
    %186 = vector.load %arg4[%c1_156, %c0_157, %c0_158] : memref<9x128x128xbf16, #tpu.memory_space<vmem>>, vector<1x128x128xbf16>
    %187 = vector.shape_cast %186 : vector<1x128x128xbf16> to vector<128x128xbf16>
    %cst_159 = arith.constant dense<0.000000e+00> : vector<128x128xf32>
    %188 = tpu.matmul %185, %187, %cst_159 {dimension_numbers = #tpu.dot_dimension_numbers<[1], [0], [0], [1], [0, 0, 1, 1], [], []>} : vector<128x128xbf16>, vector<128x128xbf16>, vector<128x128xf32> -> vector<128x128xf32>
    %189 = arith.addf %183, %188 : vector<128x128xf32>
    %c2_160 = arith.constant 2 : index
    %c128_161 = arith.constant 128 : index
    %c0_162 = arith.constant 0 : index
    %190 = vector.load %arg9[%c2_160, %c128_161, %c0_162] : memref<3x288x128xbf16, #tpu.memory_space<vmem>>, vector<1x128x128xbf16>
    %191 = vector.shape_cast %190 : vector<1x128x128xbf16> to vector<128x128xbf16>
    %c2_163 = arith.constant 2 : index
    %c0_164 = arith.constant 0 : index
    %c0_165 = arith.constant 0 : index
    %192 = vector.load %arg4[%c2_163, %c0_164, %c0_165] : memref<9x128x128xbf16, #tpu.memory_space<vmem>>, vector<1x128x128xbf16>
    %193 = vector.shape_cast %192 : vector<1x128x128xbf16> to vector<128x128xbf16>
    %cst_166 = arith.constant dense<0.000000e+00> : vector<128x128xf32>
    %194 = tpu.matmul %191, %193, %cst_166 {dimension_numbers = #tpu.dot_dimension_numbers<[1], [0], [0], [1], [0, 0, 1, 1], [], []>} : vector<128x128xbf16>, vector<128x128xbf16>, vector<128x128xf32> -> vector<128x128xf32>
    %195 = arith.addf %189, %194 : vector<128x128xf32>
    %c0_167 = arith.constant 0 : index
    %c144_168 = arith.constant 144 : index
    %c0_169 = arith.constant 0 : index
    %196 = vector.load %arg9[%c0_167, %c144_168, %c0_169] : memref<3x288x128xbf16, #tpu.memory_space<vmem>>, vector<1x128x128xbf16>
    %197 = vector.shape_cast %196 : vector<1x128x128xbf16> to vector<128x128xbf16>
    %c3_170 = arith.constant 3 : index
    %c0_171 = arith.constant 0 : index
    %c0_172 = arith.constant 0 : index
    %198 = vector.load %arg4[%c3_170, %c0_171, %c0_172] : memref<9x128x128xbf16, #tpu.memory_space<vmem>>, vector<1x128x128xbf16>
    %199 = vector.shape_cast %198 : vector<1x128x128xbf16> to vector<128x128xbf16>
    %cst_173 = arith.constant dense<0.000000e+00> : vector<128x128xf32>
    %200 = tpu.matmul %197, %199, %cst_173 {dimension_numbers = #tpu.dot_dimension_numbers<[1], [0], [0], [1], [0, 0, 1, 1], [], []>} : vector<128x128xbf16>, vector<128x128xbf16>, vector<128x128xf32> -> vector<128x128xf32>
    %201 = arith.addf %195, %200 : vector<128x128xf32>
    %c1_174 = arith.constant 1 : index
    %c144_175 = arith.constant 144 : index
    %c0_176 = arith.constant 0 : index
    %202 = vector.load %arg9[%c1_174, %c144_175, %c0_176] : memref<3x288x128xbf16, #tpu.memory_space<vmem>>, vector<1x128x128xbf16>
    %203 = vector.shape_cast %202 : vector<1x128x128xbf16> to vector<128x128xbf16>
    %c4_177 = arith.constant 4 : index
    %c0_178 = arith.constant 0 : index
    %c0_179 = arith.constant 0 : index
    %204 = vector.load %arg4[%c4_177, %c0_178, %c0_179] : memref<9x128x128xbf16, #tpu.memory_space<vmem>>, vector<1x128x128xbf16>
    %205 = vector.shape_cast %204 : vector<1x128x128xbf16> to vector<128x128xbf16>
    %cst_180 = arith.constant dense<0.000000e+00> : vector<128x128xf32>
    %206 = tpu.matmul %203, %205, %cst_180 {dimension_numbers = #tpu.dot_dimension_numbers<[1], [0], [0], [1], [0, 0, 1, 1], [], []>} : vector<128x128xbf16>, vector<128x128xbf16>, vector<128x128xf32> -> vector<128x128xf32>
    %207 = arith.addf %201, %206 : vector<128x128xf32>
    %c2_181 = arith.constant 2 : index
    %c144_182 = arith.constant 144 : index
    %c0_183 = arith.constant 0 : index
    %208 = vector.load %arg9[%c2_181, %c144_182, %c0_183] : memref<3x288x128xbf16, #tpu.memory_space<vmem>>, vector<1x128x128xbf16>
    %209 = vector.shape_cast %208 : vector<1x128x128xbf16> to vector<128x128xbf16>
    %c5_184 = arith.constant 5 : index
    %c0_185 = arith.constant 0 : index
    %c0_186 = arith.constant 0 : index
    %210 = vector.load %arg4[%c5_184, %c0_185, %c0_186] : memref<9x128x128xbf16, #tpu.memory_space<vmem>>, vector<1x128x128xbf16>
    %211 = vector.shape_cast %210 : vector<1x128x128xbf16> to vector<128x128xbf16>
    %cst_187 = arith.constant dense<0.000000e+00> : vector<128x128xf32>
    %212 = tpu.matmul %209, %211, %cst_187 {dimension_numbers = #tpu.dot_dimension_numbers<[1], [0], [0], [1], [0, 0, 1, 1], [], []>} : vector<128x128xbf16>, vector<128x128xbf16>, vector<128x128xf32> -> vector<128x128xf32>
    %213 = arith.addf %207, %212 : vector<128x128xf32>
    %c0_188 = arith.constant 0 : index
    %c160 = arith.constant 160 : index
    %c0_189 = arith.constant 0 : index
    %214 = vector.load %arg9[%c0_188, %c160, %c0_189] : memref<3x288x128xbf16, #tpu.memory_space<vmem>>, vector<1x128x128xbf16>
    %215 = vector.shape_cast %214 : vector<1x128x128xbf16> to vector<128x128xbf16>
    %c6_190 = arith.constant 6 : index
    %c0_191 = arith.constant 0 : index
    %c0_192 = arith.constant 0 : index
    %216 = vector.load %arg4[%c6_190, %c0_191, %c0_192] : memref<9x128x128xbf16, #tpu.memory_space<vmem>>, vector<1x128x128xbf16>
    %217 = vector.shape_cast %216 : vector<1x128x128xbf16> to vector<128x128xbf16>
    %cst_193 = arith.constant dense<0.000000e+00> : vector<128x128xf32>
    %218 = tpu.matmul %215, %217, %cst_193 {dimension_numbers = #tpu.dot_dimension_numbers<[1], [0], [0], [1], [0, 0, 1, 1], [], []>} : vector<128x128xbf16>, vector<128x128xbf16>, vector<128x128xf32> -> vector<128x128xf32>
    %219 = arith.addf %213, %218 : vector<128x128xf32>
    %c1_194 = arith.constant 1 : index
    %c160_195 = arith.constant 160 : index
    %c0_196 = arith.constant 0 : index
    %220 = vector.load %arg9[%c1_194, %c160_195, %c0_196] : memref<3x288x128xbf16, #tpu.memory_space<vmem>>, vector<1x128x128xbf16>
    %221 = vector.shape_cast %220 : vector<1x128x128xbf16> to vector<128x128xbf16>
    %c7_197 = arith.constant 7 : index
    %c0_198 = arith.constant 0 : index
    %c0_199 = arith.constant 0 : index
    %222 = vector.load %arg4[%c7_197, %c0_198, %c0_199] : memref<9x128x128xbf16, #tpu.memory_space<vmem>>, vector<1x128x128xbf16>
    %223 = vector.shape_cast %222 : vector<1x128x128xbf16> to vector<128x128xbf16>
    %cst_200 = arith.constant dense<0.000000e+00> : vector<128x128xf32>
    %224 = tpu.matmul %221, %223, %cst_200 {dimension_numbers = #tpu.dot_dimension_numbers<[1], [0], [0], [1], [0, 0, 1, 1], [], []>} : vector<128x128xbf16>, vector<128x128xbf16>, vector<128x128xf32> -> vector<128x128xf32>
    %225 = arith.addf %219, %224 : vector<128x128xf32>
    %c2_201 = arith.constant 2 : index
    %c160_202 = arith.constant 160 : index
    %c0_203 = arith.constant 0 : index
    %226 = vector.load %arg9[%c2_201, %c160_202, %c0_203] : memref<3x288x128xbf16, #tpu.memory_space<vmem>>, vector<1x128x128xbf16>
    %227 = vector.shape_cast %226 : vector<1x128x128xbf16> to vector<128x128xbf16>
    %c8_204 = arith.constant 8 : index
    %c0_205 = arith.constant 0 : index
    %c0_206 = arith.constant 0 : index
    %228 = vector.load %arg4[%c8_204, %c0_205, %c0_206] : memref<9x128x128xbf16, #tpu.memory_space<vmem>>, vector<1x128x128xbf16>
    %229 = vector.shape_cast %228 : vector<1x128x128xbf16> to vector<128x128xbf16>
    %cst_207 = arith.constant dense<0.000000e+00> : vector<128x128xf32>
    %230 = tpu.matmul %227, %229, %cst_207 {dimension_numbers = #tpu.dot_dimension_numbers<[1], [0], [0], [1], [0, 0, 1, 1], [], []>} : vector<128x128xbf16>, vector<128x128xbf16>, vector<128x128xf32> -> vector<128x128xf32>
    %231 = arith.addf %225, %230 : vector<128x128xf32>
    %cst_208 = arith.constant 0.000000e+00 : f32
    %232 = vector.broadcast %cst_208 : f32 to vector<128x128xf32>
    %233 = arith.maximumf %231, %232 : vector<128x128xf32>
    %c1_i32_209 = arith.constant 1 : i32
    %234 = tpu.dynamic_rotate %233 by %c1_i32_209 dim 0 : vector<128x128xf32>, i32 -> vector<128x128xf32>
    %cst_210 = arith.constant 0.000000e+00 : f32
    %235 = vector.broadcast %cst_210 : f32 to vector<128x128xf32>
    %236 = arith.select %4, %235, %234 : vector<128x128xi1>, vector<128x128xf32>
    %c127_i32_211 = arith.constant 127 : i32
    %237 = tpu.dynamic_rotate %233 by %c127_i32_211 dim 0 : vector<128x128xf32>, i32 -> vector<128x128xf32>
    %cst_212 = arith.constant 0.000000e+00 : f32
    %238 = vector.broadcast %cst_212 : f32 to vector<128x128xf32>
    %239 = arith.select %6, %238, %237 : vector<128x128xi1>, vector<128x128xf32>
    %240 = arith.truncf %233 : vector<128x128xf32> to vector<128x128xbf16>
    %c1_213 = arith.constant 1 : index
    %c144_214 = arith.constant 144 : index
    %c0_215 = arith.constant 0 : index
    %241 = vector.load %arg10[%c1_213, %c144_214, %c0_215] : memref<3x288x128xbf16, #tpu.memory_space<vmem>>, vector<1x128x128xbf16>
    %242 = vector.shape_cast %241 : vector<1x128x128xbf16> to vector<128x128xbf16>
    %243 = vector.shape_cast %240 : vector<128x128xbf16> to vector<1x128x128xbf16>
    tpu.vector_store %arg10[%c1_213, %c144_214, %c0_215], %243 {strides = array<i32>} : memref<3x288x128xbf16, #tpu.memory_space<vmem>>, vector<1x128x128xbf16>,
    %244 = arith.truncf %236 : vector<128x128xf32> to vector<128x128xbf16>
    %c0_216 = arith.constant 0 : index
    %c144_217 = arith.constant 144 : index
    %c0_218 = arith.constant 0 : index
    %245 = vector.load %arg10[%c0_216, %c144_217, %c0_218] : memref<3x288x128xbf16, #tpu.memory_space<vmem>>, vector<1x128x128xbf16>
    %246 = vector.shape_cast %245 : vector<1x128x128xbf16> to vector<128x128xbf16>
    %247 = vector.shape_cast %244 : vector<128x128xbf16> to vector<1x128x128xbf16>
    tpu.vector_store %arg10[%c0_216, %c144_217, %c0_218], %247 {strides = array<i32>} : memref<3x288x128xbf16, #tpu.memory_space<vmem>>, vector<1x128x128xbf16>,
    %248 = arith.truncf %239 : vector<128x128xf32> to vector<128x128xbf16>
    %c2_219 = arith.constant 2 : index
    %c144_220 = arith.constant 144 : index
    %c0_221 = arith.constant 0 : index
    %249 = vector.load %arg10[%c2_219, %c144_220, %c0_221] : memref<3x288x128xbf16, #tpu.memory_space<vmem>>, vector<1x128x128xbf16>
    %250 = vector.shape_cast %249 : vector<1x128x128xbf16> to vector<128x128xbf16>
    %251 = vector.shape_cast %248 : vector<128x128xbf16> to vector<1x128x128xbf16>
    tpu.vector_store %arg10[%c2_219, %c144_220, %c0_221], %251 {strides = array<i32>} : memref<3x288x128xbf16, #tpu.memory_space<vmem>>, vector<1x128x128xbf16>,
    %c0_222 = arith.constant 0 : index
    %c0_223 = arith.constant 0 : index
    %252 = vector.load %arg7[%c0_222, %c0_223] : memref<1x128xf32, #tpu.memory_space<vmem>>, vector<1x128xf32>
    %253 = vector.shape_cast %252 : vector<1x128xf32> to vector<1x128xf32>
    %254 = vector.broadcast %253 : vector<1x128xf32> to vector<128x128xf32>
    %c0_224 = arith.constant 0 : index
    %c0_225 = arith.constant 0 : index
    %c0_226 = arith.constant 0 : index
    %255 = vector.load %arg10[%c0_224, %c0_225, %c0_226] : memref<3x288x128xbf16, #tpu.memory_space<vmem>>, vector<1x128x128xbf16>
    %256 = vector.shape_cast %255 : vector<1x128x128xbf16> to vector<128x128xbf16>
    %c0_227 = arith.constant 0 : index
    %c0_228 = arith.constant 0 : index
    %c0_229 = arith.constant 0 : index
    %257 = vector.load %arg6[%c0_227, %c0_228, %c0_229] : memref<9x128x128xbf16, #tpu.memory_space<vmem>>, vector<1x128x128xbf16>
    %258 = vector.shape_cast %257 : vector<1x128x128xbf16> to vector<128x128xbf16>
    %cst_230 = arith.constant dense<0.000000e+00> : vector<128x128xf32>
    %259 = tpu.matmul %256, %258, %cst_230 {dimension_numbers = #tpu.dot_dimension_numbers<[1], [0], [0], [1], [0, 0, 1, 1], [], []>} : vector<128x128xbf16>, vector<128x128xbf16>, vector<128x128xf32> -> vector<128x128xf32>
    %260 = arith.addf %254, %259 : vector<128x128xf32>
    %c1_231 = arith.constant 1 : index
    %c0_232 = arith.constant 0 : index
    %c0_233 = arith.constant 0 : index
    %261 = vector.load %arg10[%c1_231, %c0_232, %c0_233] : memref<3x288x128xbf16, #tpu.memory_space<vmem>>, vector<1x128x128xbf16>
    %262 = vector.shape_cast %261 : vector<1x128x128xbf16> to vector<128x128xbf16>
    %c1_234 = arith.constant 1 : index
    %c0_235 = arith.constant 0 : index
    %c0_236 = arith.constant 0 : index
    %263 = vector.load %arg6[%c1_234, %c0_235, %c0_236] : memref<9x128x128xbf16, #tpu.memory_space<vmem>>, vector<1x128x128xbf16>
    %264 = vector.shape_cast %263 : vector<1x128x128xbf16> to vector<128x128xbf16>
    %cst_237 = arith.constant dense<0.000000e+00> : vector<128x128xf32>
    %265 = tpu.matmul %262, %264, %cst_237 {dimension_numbers = #tpu.dot_dimension_numbers<[1], [0], [0], [1], [0, 0, 1, 1], [], []>} : vector<128x128xbf16>, vector<128x128xbf16>, vector<128x128xf32> -> vector<128x128xf32>
    %266 = arith.addf %260, %265 : vector<128x128xf32>
    %c2_238 = arith.constant 2 : index
    %c0_239 = arith.constant 0 : index
    %c0_240 = arith.constant 0 : index
    %267 = vector.load %arg10[%c2_238, %c0_239, %c0_240] : memref<3x288x128xbf16, #tpu.memory_space<vmem>>, vector<1x128x128xbf16>
    %268 = vector.shape_cast %267 : vector<1x128x128xbf16> to vector<128x128xbf16>
    %c2_241 = arith.constant 2 : index
    %c0_242 = arith.constant 0 : index
    %c0_243 = arith.constant 0 : index
    %269 = vector.load %arg6[%c2_241, %c0_242, %c0_243] : memref<9x128x128xbf16, #tpu.memory_space<vmem>>, vector<1x128x128xbf16>
    %270 = vector.shape_cast %269 : vector<1x128x128xbf16> to vector<128x128xbf16>
    %cst_244 = arith.constant dense<0.000000e+00> : vector<128x128xf32>
    %271 = tpu.matmul %268, %270, %cst_244 {dimension_numbers = #tpu.dot_dimension_numbers<[1], [0], [0], [1], [0, 0, 1, 1], [], []>} : vector<128x128xbf16>, vector<128x128xbf16>, vector<128x128xf32> -> vector<128x128xf32>
    %272 = arith.addf %266, %271 : vector<128x128xf32>
    %c0_245 = arith.constant 0 : index
    %c16_246 = arith.constant 16 : index
    %c0_247 = arith.constant 0 : index
    %273 = vector.load %arg10[%c0_245, %c16_246, %c0_247] : memref<3x288x128xbf16, #tpu.memory_space<vmem>>, vector<1x128x128xbf16>
    %274 = vector.shape_cast %273 : vector<1x128x128xbf16> to vector<128x128xbf16>
    %c3_248 = arith.constant 3 : index
    %c0_249 = arith.constant 0 : index
    %c0_250 = arith.constant 0 : index
    %275 = vector.load %arg6[%c3_248, %c0_249, %c0_250] : memref<9x128x128xbf16, #tpu.memory_space<vmem>>, vector<1x128x128xbf16>
    %276 = vector.shape_cast %275 : vector<1x128x128xbf16> to vector<128x128xbf16>
    %cst_251 = arith.constant dense<0.000000e+00> : vector<128x128xf32>
    %277 = tpu.matmul %274, %276, %cst_251 {dimension_numbers = #tpu.dot_dimension_numbers<[1], [0], [0], [1], [0, 0, 1, 1], [], []>} : vector<128x128xbf16>, vector<128x128xbf16>, vector<128x128xf32> -> vector<128x128xf32>
    %278 = arith.addf %272, %277 : vector<128x128xf32>
    %c1_252 = arith.constant 1 : index
    %c16_253 = arith.constant 16 : index
    %c0_254 = arith.constant 0 : index
    %279 = vector.load %arg10[%c1_252, %c16_253, %c0_254] : memref<3x288x128xbf16, #tpu.memory_space<vmem>>, vector<1x128x128xbf16>
    %280 = vector.shape_cast %279 : vector<1x128x128xbf16> to vector<128x128xbf16>
    %c4_255 = arith.constant 4 : index
    %c0_256 = arith.constant 0 : index
    %c0_257 = arith.constant 0 : index
    %281 = vector.load %arg6[%c4_255, %c0_256, %c0_257] : memref<9x128x128xbf16, #tpu.memory_space<vmem>>, vector<1x128x128xbf16>
    %282 = vector.shape_cast %281 : vector<1x128x128xbf16> to vector<128x128xbf16>
    %cst_258 = arith.constant dense<0.000000e+00> : vector<128x128xf32>
    %283 = tpu.matmul %280, %282, %cst_258 {dimension_numbers = #tpu.dot_dimension_numbers<[1], [0], [0], [1], [0, 0, 1, 1], [], []>} : vector<128x128xbf16>, vector<128x128xbf16>, vector<128x128xf32> -> vector<128x128xf32>
    %284 = arith.addf %278, %283 : vector<128x128xf32>
    %c2_259 = arith.constant 2 : index
    %c16_260 = arith.constant 16 : index
    %c0_261 = arith.constant 0 : index
    %285 = vector.load %arg10[%c2_259, %c16_260, %c0_261] : memref<3x288x128xbf16, #tpu.memory_space<vmem>>, vector<1x128x128xbf16>
    %286 = vector.shape_cast %285 : vector<1x128x128xbf16> to vector<128x128xbf16>
    %c5_262 = arith.constant 5 : index
    %c0_263 = arith.constant 0 : index
    %c0_264 = arith.constant 0 : index
    %287 = vector.load %arg6[%c5_262, %c0_263, %c0_264] : memref<9x128x128xbf16, #tpu.memory_space<vmem>>, vector<1x128x128xbf16>
    %288 = vector.shape_cast %287 : vector<1x128x128xbf16> to vector<128x128xbf16>
    %cst_265 = arith.constant dense<0.000000e+00> : vector<128x128xf32>
    %289 = tpu.matmul %286, %288, %cst_265 {dimension_numbers = #tpu.dot_dimension_numbers<[1], [0], [0], [1], [0, 0, 1, 1], [], []>} : vector<128x128xbf16>, vector<128x128xbf16>, vector<128x128xf32> -> vector<128x128xf32>
    %290 = arith.addf %284, %289 : vector<128x128xf32>
    %c0_266 = arith.constant 0 : index
    %c32_267 = arith.constant 32 : index
    %c0_268 = arith.constant 0 : index
    %291 = vector.load %arg10[%c0_266, %c32_267, %c0_268] : memref<3x288x128xbf16, #tpu.memory_space<vmem>>, vector<1x128x128xbf16>
    %292 = vector.shape_cast %291 : vector<1x128x128xbf16> to vector<128x128xbf16>
    %c6_269 = arith.constant 6 : index
    %c0_270 = arith.constant 0 : index
    %c0_271 = arith.constant 0 : index
    %293 = vector.load %arg6[%c6_269, %c0_270, %c0_271] : memref<9x128x128xbf16, #tpu.memory_space<vmem>>, vector<1x128x128xbf16>
    %294 = vector.shape_cast %293 : vector<1x128x128xbf16> to vector<128x128xbf16>
    %cst_272 = arith.constant dense<0.000000e+00> : vector<128x128xf32>
    %295 = tpu.matmul %292, %294, %cst_272 {dimension_numbers = #tpu.dot_dimension_numbers<[1], [0], [0], [1], [0, 0, 1, 1], [], []>} : vector<128x128xbf16>, vector<128x128xbf16>, vector<128x128xf32> -> vector<128x128xf32>
    %296 = arith.addf %290, %295 : vector<128x128xf32>
    %c1_273 = arith.constant 1 : index
    %c32_274 = arith.constant 32 : index
    %c0_275 = arith.constant 0 : index
    %297 = vector.load %arg10[%c1_273, %c32_274, %c0_275] : memref<3x288x128xbf16, #tpu.memory_space<vmem>>, vector<1x128x128xbf16>
    %298 = vector.shape_cast %297 : vector<1x128x128xbf16> to vector<128x128xbf16>
    %c7_276 = arith.constant 7 : index
    %c0_277 = arith.constant 0 : index
    %c0_278 = arith.constant 0 : index
    %299 = vector.load %arg6[%c7_276, %c0_277, %c0_278] : memref<9x128x128xbf16, #tpu.memory_space<vmem>>, vector<1x128x128xbf16>
    %300 = vector.shape_cast %299 : vector<1x128x128xbf16> to vector<128x128xbf16>
    %cst_279 = arith.constant dense<0.000000e+00> : vector<128x128xf32>
    %301 = tpu.matmul %298, %300, %cst_279 {dimension_numbers = #tpu.dot_dimension_numbers<[1], [0], [0], [1], [0, 0, 1, 1], [], []>} : vector<128x128xbf16>, vector<128x128xbf16>, vector<128x128xf32> -> vector<128x128xf32>
    %302 = arith.addf %296, %301 : vector<128x128xf32>
    %c2_280 = arith.constant 2 : index
    %c32_281 = arith.constant 32 : index
    %c0_282 = arith.constant 0 : index
    %303 = vector.load %arg10[%c2_280, %c32_281, %c0_282] : memref<3x288x128xbf16, #tpu.memory_space<vmem>>, vector<1x128x128xbf16>
    %304 = vector.shape_cast %303 : vector<1x128x128xbf16> to vector<128x128xbf16>
    %c8_283 = arith.constant 8 : index
    %c0_284 = arith.constant 0 : index
    %c0_285 = arith.constant 0 : index
    %305 = vector.load %arg6[%c8_283, %c0_284, %c0_285] : memref<9x128x128xbf16, #tpu.memory_space<vmem>>, vector<1x128x128xbf16>
    %306 = vector.shape_cast %305 : vector<1x128x128xbf16> to vector<128x128xbf16>
    %cst_286 = arith.constant dense<0.000000e+00> : vector<128x128xf32>
    %307 = tpu.matmul %304, %306, %cst_286 {dimension_numbers = #tpu.dot_dimension_numbers<[1], [0], [0], [1], [0, 0, 1, 1], [], []>} : vector<128x128xbf16>, vector<128x128xbf16>, vector<128x128xf32> -> vector<128x128xf32>
    %308 = arith.addf %302, %307 : vector<128x128xf32>
    %c0_287 = arith.constant 0 : index
    %c0_288 = arith.constant 0 : index
    %c0_289 = arith.constant 0 : index
    %309 = vector.load %arg8[%c0_287, %c0_288, %c0_289] : memref<1x256x128xf32, #tpu.memory_space<vmem>>, vector<1x128x128xf32>
    %310 = vector.shape_cast %309 : vector<1x128x128xf32> to vector<128x128xf32>
    %311 = vector.shape_cast %308 : vector<128x128xf32> to vector<1x128x128xf32>
    tpu.vector_store %arg8[%c0_287, %c0_288, %c0_289], %311 {strides = array<i32>} : memref<1x256x128xf32, #tpu.memory_space<vmem>>, vector<1x128x128xf32>,
    %c0_290 = arith.constant 0 : index
    %c0_291 = arith.constant 0 : index
    %312 = vector.load %arg7[%c0_290, %c0_291] : memref<1x128xf32, #tpu.memory_space<vmem>>, vector<1x128xf32>
    %313 = vector.shape_cast %312 : vector<1x128xf32> to vector<1x128xf32>
    %314 = vector.broadcast %313 : vector<1x128xf32> to vector<128x128xf32>
    %c0_292 = arith.constant 0 : index
    %c128_293 = arith.constant 128 : index
    %c0_294 = arith.constant 0 : index
    %315 = vector.load %arg10[%c0_292, %c128_293, %c0_294] : memref<3x288x128xbf16, #tpu.memory_space<vmem>>, vector<1x128x128xbf16>
    %316 = vector.shape_cast %315 : vector<1x128x128xbf16> to vector<128x128xbf16>
    %c0_295 = arith.constant 0 : index
    %c0_296 = arith.constant 0 : index
    %c0_297 = arith.constant 0 : index
    %317 = vector.load %arg6[%c0_295, %c0_296, %c0_297] : memref<9x128x128xbf16, #tpu.memory_space<vmem>>, vector<1x128x128xbf16>
    %318 = vector.shape_cast %317 : vector<1x128x128xbf16> to vector<128x128xbf16>
    %cst_298 = arith.constant dense<0.000000e+00> : vector<128x128xf32>
    %319 = tpu.matmul %316, %318, %cst_298 {dimension_numbers = #tpu.dot_dimension_numbers<[1], [0], [0], [1], [0, 0, 1, 1], [], []>} : vector<128x128xbf16>, vector<128x128xbf16>, vector<128x128xf32> -> vector<128x128xf32>
    %320 = arith.addf %314, %319 : vector<128x128xf32>
    %c1_299 = arith.constant 1 : index
    %c128_300 = arith.constant 128 : index
    %c0_301 = arith.constant 0 : index
    %321 = vector.load %arg10[%c1_299, %c128_300, %c0_301] : memref<3x288x128xbf16, #tpu.memory_space<vmem>>, vector<1x128x128xbf16>
    %322 = vector.shape_cast %321 : vector<1x128x128xbf16> to vector<128x128xbf16>
    %c1_302 = arith.constant 1 : index
    %c0_303 = arith.constant 0 : index
    %c0_304 = arith.constant 0 : index
    %323 = vector.load %arg6[%c1_302, %c0_303, %c0_304] : memref<9x128x128xbf16, #tpu.memory_space<vmem>>, vector<1x128x128xbf16>
    %324 = vector.shape_cast %323 : vector<1x128x128xbf16> to vector<128x128xbf16>
    %cst_305 = arith.constant dense<0.000000e+00> : vector<128x128xf32>
    %325 = tpu.matmul %322, %324, %cst_305 {dimension_numbers = #tpu.dot_dimension_numbers<[1], [0], [0], [1], [0, 0, 1, 1], [], []>} : vector<128x128xbf16>, vector<128x128xbf16>, vector<128x128xf32> -> vector<128x128xf32>
    %326 = arith.addf %320, %325 : vector<128x128xf32>
    %c2_306 = arith.constant 2 : index
    %c128_307 = arith.constant 128 : index
    %c0_308 = arith.constant 0 : index
    %327 = vector.load %arg10[%c2_306, %c128_307, %c0_308] : memref<3x288x128xbf16, #tpu.memory_space<vmem>>, vector<1x128x128xbf16>
    %328 = vector.shape_cast %327 : vector<1x128x128xbf16> to vector<128x128xbf16>
    %c2_309 = arith.constant 2 : index
    %c0_310 = arith.constant 0 : index
    %c0_311 = arith.constant 0 : index
    %329 = vector.load %arg6[%c2_309, %c0_310, %c0_311] : memref<9x128x128xbf16, #tpu.memory_space<vmem>>, vector<1x128x128xbf16>
    %330 = vector.shape_cast %329 : vector<1x128x128xbf16> to vector<128x128xbf16>
    %cst_312 = arith.constant dense<0.000000e+00> : vector<128x128xf32>
    %331 = tpu.matmul %328, %330, %cst_312 {dimension_numbers = #tpu.dot_dimension_numbers<[1], [0], [0], [1], [0, 0, 1, 1], [], []>} : vector<128x128xbf16>, vector<128x128xbf16>, vector<128x128xf32> -> vector<128x128xf32>
    %332 = arith.addf %326, %331 : vector<128x128xf32>
    %c0_313 = arith.constant 0 : index
    %c144_314 = arith.constant 144 : index
    %c0_315 = arith.constant 0 : index
    %333 = vector.load %arg10[%c0_313, %c144_314, %c0_315] : memref<3x288x128xbf16, #tpu.memory_space<vmem>>, vector<1x128x128xbf16>
    %334 = vector.shape_cast %333 : vector<1x128x128xbf16> to vector<128x128xbf16>
    %c3_316 = arith.constant 3 : index
    %c0_317 = arith.constant 0 : index
    %c0_318 = arith.constant 0 : index
    %335 = vector.load %arg6[%c3_316, %c0_317, %c0_318] : memref<9x128x128xbf16, #tpu.memory_space<vmem>>, vector<1x128x128xbf16>
    %336 = vector.shape_cast %335 : vector<1x128x128xbf16> to vector<128x128xbf16>
    %cst_319 = arith.constant dense<0.000000e+00> : vector<128x128xf32>
    %337 = tpu.matmul %334, %336, %cst_319 {dimension_numbers = #tpu.dot_dimension_numbers<[1], [0], [0], [1], [0, 0, 1, 1], [], []>} : vector<128x128xbf16>, vector<128x128xbf16>, vector<128x128xf32> -> vector<128x128xf32>
    %338 = arith.addf %332, %337 : vector<128x128xf32>
    %c1_320 = arith.constant 1 : index
    %c144_321 = arith.constant 144 : index
    %c0_322 = arith.constant 0 : index
    %339 = vector.load %arg10[%c1_320, %c144_321, %c0_322] : memref<3x288x128xbf16, #tpu.memory_space<vmem>>, vector<1x128x128xbf16>
    %340 = vector.shape_cast %339 : vector<1x128x128xbf16> to vector<128x128xbf16>
    %c4_323 = arith.constant 4 : index
    %c0_324 = arith.constant 0 : index
    %c0_325 = arith.constant 0 : index
    %341 = vector.load %arg6[%c4_323, %c0_324, %c0_325] : memref<9x128x128xbf16, #tpu.memory_space<vmem>>, vector<1x128x128xbf16>
    %342 = vector.shape_cast %341 : vector<1x128x128xbf16> to vector<128x128xbf16>
    %cst_326 = arith.constant dense<0.000000e+00> : vector<128x128xf32>
    %343 = tpu.matmul %340, %342, %cst_326 {dimension_numbers = #tpu.dot_dimension_numbers<[1], [0], [0], [1], [0, 0, 1, 1], [], []>} : vector<128x128xbf16>, vector<128x128xbf16>, vector<128x128xf32> -> vector<128x128xf32>
    %344 = arith.addf %338, %343 : vector<128x128xf32>
    %c2_327 = arith.constant 2 : index
    %c144_328 = arith.constant 144 : index
    %c0_329 = arith.constant 0 : index
    %345 = vector.load %arg10[%c2_327, %c144_328, %c0_329] : memref<3x288x128xbf16, #tpu.memory_space<vmem>>, vector<1x128x128xbf16>
    %346 = vector.shape_cast %345 : vector<1x128x128xbf16> to vector<128x128xbf16>
    %c5_330 = arith.constant 5 : index
    %c0_331 = arith.constant 0 : index
    %c0_332 = arith.constant 0 : index
    %347 = vector.load %arg6[%c5_330, %c0_331, %c0_332] : memref<9x128x128xbf16, #tpu.memory_space<vmem>>, vector<1x128x128xbf16>
    %348 = vector.shape_cast %347 : vector<1x128x128xbf16> to vector<128x128xbf16>
    %cst_333 = arith.constant dense<0.000000e+00> : vector<128x128xf32>
    %349 = tpu.matmul %346, %348, %cst_333 {dimension_numbers = #tpu.dot_dimension_numbers<[1], [0], [0], [1], [0, 0, 1, 1], [], []>} : vector<128x128xbf16>, vector<128x128xbf16>, vector<128x128xf32> -> vector<128x128xf32>
    %350 = arith.addf %344, %349 : vector<128x128xf32>
    %c0_334 = arith.constant 0 : index
    %c160_335 = arith.constant 160 : index
    %c0_336 = arith.constant 0 : index
    %351 = vector.load %arg10[%c0_334, %c160_335, %c0_336] : memref<3x288x128xbf16, #tpu.memory_space<vmem>>, vector<1x128x128xbf16>
    %352 = vector.shape_cast %351 : vector<1x128x128xbf16> to vector<128x128xbf16>
    %c6_337 = arith.constant 6 : index
    %c0_338 = arith.constant 0 : index
    %c0_339 = arith.constant 0 : index
    %353 = vector.load %arg6[%c6_337, %c0_338, %c0_339] : memref<9x128x128xbf16, #tpu.memory_space<vmem>>, vector<1x128x128xbf16>
    %354 = vector.shape_cast %353 : vector<1x128x128xbf16> to vector<128x128xbf16>
    %cst_340 = arith.constant dense<0.000000e+00> : vector<128x128xf32>
    %355 = tpu.matmul %352, %354, %cst_340 {dimension_numbers = #tpu.dot_dimension_numbers<[1], [0], [0], [1], [0, 0, 1, 1], [], []>} : vector<128x128xbf16>, vector<128x128xbf16>, vector<128x128xf32> -> vector<128x128xf32>
    %356 = arith.addf %350, %355 : vector<128x128xf32>
    %c1_341 = arith.constant 1 : index
    %c160_342 = arith.constant 160 : index
    %c0_343 = arith.constant 0 : index
    %357 = vector.load %arg10[%c1_341, %c160_342, %c0_343] : memref<3x288x128xbf16, #tpu.memory_space<vmem>>, vector<1x128x128xbf16>
    %358 = vector.shape_cast %357 : vector<1x128x128xbf16> to vector<128x128xbf16>
    %c7_344 = arith.constant 7 : index
    %c0_345 = arith.constant 0 : index
    %c0_346 = arith.constant 0 : index
    %359 = vector.load %arg6[%c7_344, %c0_345, %c0_346] : memref<9x128x128xbf16, #tpu.memory_space<vmem>>, vector<1x128x128xbf16>
    %360 = vector.shape_cast %359 : vector<1x128x128xbf16> to vector<128x128xbf16>
    %cst_347 = arith.constant dense<0.000000e+00> : vector<128x128xf32>
    %361 = tpu.matmul %358, %360, %cst_347 {dimension_numbers = #tpu.dot_dimension_numbers<[1], [0], [0], [1], [0, 0, 1, 1], [], []>} : vector<128x128xbf16>, vector<128x128xbf16>, vector<128x128xf32> -> vector<128x128xf32>
    %362 = arith.addf %356, %361 : vector<128x128xf32>
    %c2_348 = arith.constant 2 : index
    %c160_349 = arith.constant 160 : index
    %c0_350 = arith.constant 0 : index
    %363 = vector.load %arg10[%c2_348, %c160_349, %c0_350] : memref<3x288x128xbf16, #tpu.memory_space<vmem>>, vector<1x128x128xbf16>
    %364 = vector.shape_cast %363 : vector<1x128x128xbf16> to vector<128x128xbf16>
    %c8_351 = arith.constant 8 : index
    %c0_352 = arith.constant 0 : index
    %c0_353 = arith.constant 0 : index
    %365 = vector.load %arg6[%c8_351, %c0_352, %c0_353] : memref<9x128x128xbf16, #tpu.memory_space<vmem>>, vector<1x128x128xbf16>
    %366 = vector.shape_cast %365 : vector<1x128x128xbf16> to vector<128x128xbf16>
    %cst_354 = arith.constant dense<0.000000e+00> : vector<128x128xf32>
    %367 = tpu.matmul %364, %366, %cst_354 {dimension_numbers = #tpu.dot_dimension_numbers<[1], [0], [0], [1], [0, 0, 1, 1], [], []>} : vector<128x128xbf16>, vector<128x128xbf16>, vector<128x128xf32> -> vector<128x128xf32>
    %368 = arith.addf %362, %367 : vector<128x128xf32>
    %c0_355 = arith.constant 0 : index
    %c128_356 = arith.constant 128 : index
    %c0_357 = arith.constant 0 : index
    %369 = vector.load %arg8[%c0_355, %c128_356, %c0_357] : memref<1x256x128xf32, #tpu.memory_space<vmem>>, vector<1x128x128xf32>
    %370 = vector.shape_cast %369 : vector<1x128x128xf32> to vector<128x128xf32>
    %371 = vector.shape_cast %368 : vector<128x128xf32> to vector<1x128x128xf32>
    tpu.vector_store %arg8[%c0_355, %c128_356, %c0_357], %371 {strides = array<i32>} : memref<1x256x128xf32, #tpu.memory_space<vmem>>, vector<1x128x128xf32>,
    return
  }
  func.func @transform_0(%arg0: i32) -> (i32, i32, i32) {
    %c0_i32 = arith.constant 0 : i32
    %c0_i32_0 = arith.constant 0 : i32
    %c0_i32_1 = arith.constant 0 : i32
    return %arg0, %c0_i32, %c0_i32_0 : i32, i32, i32
  }
  func.func @transform_1(%arg0: i32) -> (i32, i32) {
    %c0_i32 = arith.constant 0 : i32
    %c0_i32_0 = arith.constant 0 : i32
    %c0_i32_1 = arith.constant 0 : i32
    return %c0_i32, %c0_i32_0 : i32, i32
  }
  func.func @transform_2(%arg0: i32) -> (i32, i32) {
    %c0_i32 = arith.constant 0 : i32
    %c0_i32_0 = arith.constant 0 : i32
    %c0_i32_1 = arith.constant 0 : i32
    return %c0_i32, %c0_i32_0 : i32, i32
  }
  func.func @transform_3(%arg0: i32) -> (i32, i32, i32) {
    %c0_i32 = arith.constant 0 : i32
    %c0_i32_0 = arith.constant 0 : i32
    %c0_i32_1 = arith.constant 0 : i32
    %c0_i32_2 = arith.constant 0 : i32
    return %c0_i32, %c0_i32_0, %c0_i32_1 : i32, i32, i32
  }
  func.func @transform_4(%arg0: i32) -> (i32, i32) {
    %c0_i32 = arith.constant 0 : i32
    %c0_i32_0 = arith.constant 0 : i32
    %c0_i32_1 = arith.constant 0 : i32
    return %c0_i32, %c0_i32_0 : i32, i32
  }
  func.func @transform_5(%arg0: i32) -> (i32, i32, i32) {
    %c0_i32 = arith.constant 0 : i32
    %c0_i32_0 = arith.constant 0 : i32
    %c0_i32_1 = arith.constant 0 : i32
    %c0_i32_2 = arith.constant 0 : i32
    return %c0_i32, %c0_i32_0, %c0_i32_1 : i32, i32, i32
  }
  func.func @transform_6(%arg0: i32) -> (i32, i32) {
    %c0_i32 = arith.constant 0 : i32
    %c0_i32_0 = arith.constant 0 : i32
    %c0_i32_1 = arith.constant 0 : i32
    return %c0_i32, %c0_i32_0 : i32, i32
  }
  func.func @transform_7(%arg0: i32) -> (i32, i32, i32) {
    %c0_i32 = arith.constant 0 : i32
    %c0_i32_0 = arith.constant 0 : i32
    %c0_i32_1 = arith.constant 0 : i32
    return %arg0, %c0_i32, %c0_i32_0 : i32, i32, i32
  }
}

</mosaic_0001>

<llo_original>
// kernel: simple_ddpm_forward.1
$region0: #{simple_ddpm_forward.1}
  #allocation0 [shape = 'u32[]', space=smem, size = 0x4, offset = 0x4, fixed_abs, tag = 'smem constant byte address 0x4 - core index']
  #allocation1 [shape = 'u32[144,128]{1,0:T(1,128)}', space=vmem, size = 0x12000, scoped, tag = 'internal scratch']
  #allocation2 [shape = 'bf16[3,288,128]{2,1,0:T(8,128)(2,1)}', space=vmem, size = 0x36000, scoped, tag = 'scratch operand']
  #allocation3 [shape = 'bf16[3,288,128]{2,1,0:T(8,128)(2,1)}', space=vmem, size = 0x36000, scoped, tag = 'scratch operand']
  %s0 = inlined_call_operand.vmem [shape: bf16[2,256,128], index: 0, kind: input, shape index: {}]
  %s1 = inlined_call_operand.vmem [shape: bf16[128,128], index: 1, kind: input, shape index: {}]
  %s2 = inlined_call_operand.vmem [shape: f32[1,128], index: 2, kind: input, shape index: {}]
  %s3 = inlined_call_operand.vmem [shape: bf16[9,128,128], index: 3, kind: input, shape index: {}]
  %s4 = inlined_call_operand.vmem [shape: f32[1,128], index: 4, kind: input, shape index: {}]
  %s5 = inlined_call_operand.vmem [shape: bf16[9,128,128], index: 5, kind: input, shape index: {}]
  %s6 = inlined_call_operand.vmem [shape: f32[1,128], index: 6, kind: input, shape index: {}]
  %s7 = inlined_call_operand.vmem [shape: f32[2,256,128], index: 7, kind: output, shape index: {}]
  %s8 = sld [smem:[#allocation0]]
  $region61: #{simple_ddpm_forward.1} parent=0
    _
  %s10 = ssub.s32 1, %s8
  %s11 = scalar_select 0, %s10, %s8
  loop: start=0, step=1, limit=4
  $region2: #{simple_ddpm_forward.1} parent=0 // loop_pre_header
    _
  $region3: #{simple_ddpm_forward.1} parent=0 // loop_header
    %s13 = sphi 0, %s17
    %p14 = scmp.ge.s32.totalorder %s13, 4
    %s23 = sphi 0, %s25
    %s26 = sphi 0, %s23
    %s27 = sphi 0, %s26
    %s43 = sphi 0, %s27
    %s47 = sphi 0, %s47
    %s49 = sphi 0, %s47
    %s50 = sphi 0, %s49
    %s64 = sphi 0, %s50
    %s68 = sphi 0, %s68
    %s70 = sphi 0, %s68
    %s71 = sphi 0, %s70
    %s85 = sphi 0, %s71
    %s89 = sphi 0, %s89
    %s91 = sphi 0, %s89
    %s92 = sphi 0, %s91
    %s106 = sphi 0, %s92
    %s110 = sphi 0, %s110
    %s112 = sphi 0, %s110
    %s113 = sphi 0, %s112
    %s127 = sphi 0, %s113
    %s131 = sphi 0, %s131
    %s133 = sphi 0, %s131
    %s134 = sphi 0, %s133
    %s148 = sphi 0, %s134
    %s152 = sphi 0, %s152
    %s154 = sphi 0, %s152
    %s155 = sphi 0, %s154
    %s169 = sphi 0, %s155
    %s175 = sphi 0, %s177
    %s178 = sphi 0, %s175
    %s179 = sphi 0, %s178
    %s195 = sphi 0, %s179
  $region4: #{simple_ddpm_forward.1} parent=0 // loop_header_branch
    %16 = sbr.rel (%p14) target = $region8
  $region5: #{simple_ddpm_forward.1} parent=0 // loop_body
    %s18 = ssub.s32 %s13, 1
    %s19 = ssub.s32 %s13, 2
    %s20 = sadd.s32 %s13, 1
    %s21 = ssub.s32 %s13, %s20
    %p22 = scmp.eq.s32.totalorder %s21, 0
    %s24 = sadd.s32 %s23, 1
    %s25 = scalar_select %p22, %s23, %s24
    %p28 = pneg %p22
    %p29 = scmp.eq.s32.totalorder %s13, 1
    %p30 = por %p28, %p29
    %p31 = scmp.ne.s32.totalorder %s23, %s26
    %p32 = scmp.eq.s32.totalorder %s13, 0
    %p33 = por %p31, %p32
    %p34 = scmp.ne.s32.totalorder %s23, %s26
    %p35 = scmp.eq.s32.totalorder %s18, 1
    %p36 = por %p34, %p35
    %p37 = scmp.ne.s32.totalorder %s26, %s27
    %p38 = scmp.eq.s32.totalorder %s18, 0
    %p39 = por %p37, %p38
    %p40 = scmp.ne.s32.totalorder %s26, %s27
    %p41 = scmp.eq.s32.totalorder %s19, 1
    %p42 = por %p40, %p41
    %p44 = scmp.ne.s32.totalorder %s27, %s43
    %p45 = scmp.eq.s32.totalorder %s19, 0
    %p46 = por %p44, %p45
    %s48 = sadd.s32 %s47, 1
    %p51 = scmp.eq.s32.totalorder %s13, 1
    %p52 = scmp.ne.s32.totalorder %s47, %s49
    %p53 = scmp.eq.s32.totalorder %s13, 0
    %p54 = por %p52, %p53
    %p55 = scmp.ne.s32.totalorder %s47, %s49
    %p56 = scmp.eq.s32.totalorder %s18, 1
    %p57 = por %p55, %p56
    %p58 = scmp.ne.s32.totalorder %s49, %s50
    %p59 = scmp.eq.s32.totalorder %s18, 0
    %p60 = por %p58, %p59
    %p61 = scmp.ne.s32.totalorder %s49, %s50
    %p62 = scmp.eq.s32.totalorder %s19, 1
    %p63 = por %p61, %p62
    %p65 = scmp.ne.s32.totalorder %s50, %s64
    %p66 = scmp.eq.s32.totalorder %s19, 0
    %p67 = por %p65, %p66
    %s69 = sadd.s32 %s68, 1
    %p72 = scmp.eq.s32.totalorder %s13, 1
    %p73 = scmp.ne.s32.totalorder %s68, %s70
    %p74 = scmp.eq.s32.totalorder %s13, 0
    %p75 = por %p73, %p74
    %p76 = scmp.ne.s32.totalorder %s68, %s70
    %p77 = scmp.eq.s32.totalorder %s18, 1
    %p78 = por %p76, %p77
    %p79 = scmp.ne.s32.totalorder %s70, %s71
    %p80 = scmp.eq.s32.totalorder %s18, 0
    %p81 = por %p79, %p80
    %p82 = scmp.ne.s32.totalorder %s70, %s71
    %p83 = scmp.eq.s32.totalorder %s19, 1
    %p84 = por %p82, %p83
    %p86 = scmp.ne.s32.totalorder %s71, %s85
    %p87 = scmp.eq.s32.totalorder %s19, 0
    %p88 = por %p86, %p87
    %s90 = sadd.s32 %s89, 1
    %p93 = scmp.eq.s32.totalorder %s13, 1
    %p94 = scmp.ne.s32.totalorder %s89, %s91
    %p95 = scmp.eq.s32.totalorder %s13, 0
    %p96 = por %p94, %p95
    %p97 = scmp.ne.s32.totalorder %s89, %s91
    %p98 = scmp.eq.s32.totalorder %s18, 1
    %p99 = por %p97, %p98
    %p100 = scmp.ne.s32.totalorder %s91, %s92
    %p101 = scmp.eq.s32.totalorder %s18, 0
    %p102 = por %p100, %p101
    %p103 = scmp.ne.s32.totalorder %s91, %s92
    %p104 = scmp.eq.s32.totalorder %s19, 1
    %p105 = por %p103, %p104
    %p107 = scmp.ne.s32.totalorder %s92, %s106
    %p108 = scmp.eq.s32.totalorder %s19, 0
    %p109 = por %p107, %p108
    %s111 = sadd.s32 %s110, 1
    %p114 = scmp.eq.s32.totalorder %s13, 1
    %p115 = scmp.ne.s32.totalorder %s110, %s112
    %p116 = scmp.eq.s32.totalorder %s13, 0
    %p117 = por %p115, %p116
    %p118 = scmp.ne.s32.totalorder %s110, %s112
    %p119 = scmp.eq.s32.totalorder %s18, 1
    %p120 = por %p118, %p119
    %p121 = scmp.ne.s32.totalorder %s112, %s113
    %p122 = scmp.eq.s32.totalorder %s18, 0
    %p123 = por %p121, %p122
    %p124 = scmp.ne.s32.totalorder %s112, %s113
    %p125 = scmp.eq.s32.totalorder %s19, 1
    %p126 = por %p124, %p125
    %p128 = scmp.ne.s32.totalorder %s113, %s127
    %p129 = scmp.eq.s32.totalorder %s19, 0
    %p130 = por %p128, %p129
    %s132 = sadd.s32 %s131, 1
    %p135 = scmp.eq.s32.totalorder %s13, 1
    %p136 = scmp.ne.s32.totalorder %s131, %s133
    %p137 = scmp.eq.s32.totalorder %s13, 0
    %p138 = por %p136, %p137
    %p139 = scmp.ne.s32.totalorder %s131, %s133
    %p140 = scmp.eq.s32.totalorder %s18, 1
    %p141 = por %p139, %p140
    %p142 = scmp.ne.s32.totalorder %s133, %s134
    %p143 = scmp.eq.s32.totalorder %s18, 0
    %p144 = por %p142, %p143
    %p145 = scmp.ne.s32.totalorder %s133, %s134
    %p146 = scmp.eq.s32.totalorder %s19, 1
    %p147 = por %p145, %p146
    %p149 = scmp.ne.s32.totalorder %s134, %s148
    %p150 = scmp.eq.s32.totalorder %s19, 0
    %p151 = por %p149, %p150
    %s153 = sadd.s32 %s152, 1
    %p156 = scmp.eq.s32.totalorder %s13, 1
    %p157 = scmp.ne.s32.totalorder %s152, %s154
    %p158 = scmp.eq.s32.totalorder %s13, 0
    %p159 = por %p157, %p158
    %p160 = scmp.ne.s32.totalorder %s152, %s154
    %p161 = scmp.eq.s32.totalorder %s18, 1
    %p162 = por %p160, %p161
    %p163 = scmp.ne.s32.totalorder %s154, %s155
    %p164 = scmp.eq.s32.totalorder %s18, 0
    %p165 = por %p163, %p164
    %p166 = scmp.ne.s32.totalorder %s154, %s155
    %p167 = scmp.eq.s32.totalorder %s19, 1
    %p168 = por %p166, %p167
    %p170 = scmp.ne.s32.totalorder %s155, %s169
    %p171 = scmp.eq.s32.totalorder %s19, 0
    %p172 = por %p170, %p171
    %s173 = ssub.s32 %s13, %s20
    %p174 = scmp.eq.s32.totalorder %s173, 0
    %s176 = sadd.s32 %s175, 1
    %s177 = scalar_select %p174, %s175, %s176
    %p180 = pneg %p174
    %p181 = scmp.eq.s32.totalorder %s13, 1
    %p182 = por %p180, %p181
    %p183 = scmp.ne.s32.totalorder %s175, %s178
    %p184 = scmp.eq.s32.totalorder %s13, 0
    %p185 = por %p183, %p184
    %p186 = scmp.ne.s32.totalorder %s175, %s178
    %p187 = scmp.eq.s32.totalorder %s18, 1
    %p188 = por %p186, %p187
    %p189 = scmp.ne.s32.totalorder %s178, %s179
    %p190 = scmp.eq.s32.totalorder %s18, 0
    %p191 = por %p189, %p190
    %p192 = scmp.ne.s32.totalorder %s178, %s179
    %p193 = scmp.eq.s32.totalorder %s19, 1
    %p194 = por %p192, %p193
    %p196 = scmp.ne.s32.totalorder %s179, %s195
    %p197 = scmp.eq.s32.totalorder %s19, 0
    %p198 = por %p196, %p197
    %p199 = scmp.le.s32.totalorder 1, %s13
    %p200 = scmp.lt.s32.totalorder %s13, 3
    %p201 = pnand %p199, %p200
    %p202 = pneg %p201
    // Predicated region
    $region9: #{simple_ddpm_forward.1} parent=5 // pred_check
      _
    $region10: #{simple_ddpm_forward.1} parent=5 // pred_check_branch
      %204 = sbr.rel (%p201) target = $region12
    $region11: #{simple_ddpm_forward.1} parent=5 // pred_region
      %s205 = ssub.s32 %s13, 1
      // Predicated region
      $region13: #{simple_ddpm_forward.1} parent=11 // pred_check
        %p206 = pneg %p60
      $region14: #{simple_ddpm_forward.1} parent=11 // pred_check_branch
        %208 = sbr.rel (%p206) target = $region16
      $region15: #{simple_ddpm_forward.1} parent=11 // pred_region
        _
      $region16: #{simple_ddpm_forward.1} parent=11 // pred_fallthru
        _
      // Predicated region
      $region17: #{simple_ddpm_forward.1} parent=11 // pred_check
        %p209 = pneg %p81
      $region18: #{simple_ddpm_forward.1} parent=11 // pred_check_branch
        %211 = sbr.rel (%p209) target = $region20
      $region19: #{simple_ddpm_forward.1} parent=11 // pred_region
        _
      $region20: #{simple_ddpm_forward.1} parent=11 // pred_fallthru
        _
      // Predicated region
      $region21: #{simple_ddpm_forward.1} parent=11 // pred_check
        %p212 = pneg %p102
      $region22: #{simple_ddpm_forward.1} parent=11 // pred_check_branch
        %214 = sbr.rel (%p212) target = $region24
      $region23: #{simple_ddpm_forward.1} parent=11 // pred_region
        _
      $region24: #{simple_ddpm_forward.1} parent=11 // pred_fallthru
        _
      // Predicated region
      $region25: #{simple_ddpm_forward.1} parent=11 // pred_check
        %p215 = pneg %p123
      $region26: #{simple_ddpm_forward.1} parent=11 // pred_check_branch
        %217 = sbr.rel (%p215) target = $region28
      $region27: #{simple_ddpm_forward.1} parent=11 // pred_region
        _
      $region28: #{simple_ddpm_forward.1} parent=11 // pred_fallthru
        _
      // Predicated region
      $region29: #{simple_ddpm_forward.1} parent=11 // pred_check
        %p218 = pneg %p144
      $region30: #{simple_ddpm_forward.1} parent=11 // pred_check_branch
        %220 = sbr.rel (%p218) target = $region32
      $region31: #{simple_ddpm_forward.1} parent=11 // pred_region
        _
      $region32: #{simple_ddpm_forward.1} parent=11 // pred_fallthru
        _
      // Predicated region
      $region33: #{simple_ddpm_forward.1} parent=11 // pred_check
        %p221 = pneg %p165
      $region34: #{simple_ddpm_forward.1} parent=11 // pred_check_branch
        %223 = sbr.rel (%p221) target = $region36
      $region35: #{simple_ddpm_forward.1} parent=11 // pred_region
        _
      $region36: #{simple_ddpm_forward.1} parent=11 // pred_fallthru
        _
    $region12: #{simple_ddpm_forward.1} parent=5 // pred_fallthru
      _
    %p224 = scmp.lt.s32.totalorder %s13, 2
    // Predicated region
    $region37: #{simple_ddpm_forward.1} parent=5 // pred_check
      %p225 = pneg %p224
    $region38: #{simple_ddpm_forward.1} parent=5 // pred_check_branch
      %227 = sbr.rel (%p225) target = $region40
    $region39: #{simple_ddpm_forward.1} parent=5 // pred_region
      // Predicated region
      $region41: #{simple_ddpm_forward.1} parent=39 // pred_check
        %p228 = pneg %p33
      $region42: #{simple_ddpm_forward.1} parent=39 // pred_check_branch
        %230 = sbr.rel (%p228) target = $region44
      $region43: #{simple_ddpm_forward.1} parent=39 // pred_region
        %p231 = scmp.lt.s32.totalorder %s13, 1
        %s232 = scalar_select %p231, %s13, 1
        %s233 = smul.addr %s232, 32
        %s234 = smul.addr %s233, 4
        %s235 = scalar_lea.vmem %s0, %s234
      $region44: #{simple_ddpm_forward.1} parent=39 // pred_fallthru
        _
    $region40: #{simple_ddpm_forward.1} parent=5 // pred_fallthru
      _
    %p236 = scmp.le.s32.totalorder 1, %s13
    %p237 = scmp.lt.s32.totalorder %s13, 3
    %p238 = pnand %p236, %p237
    %p239 = pneg %p238
    // Predicated region
    $region45: #{simple_ddpm_forward.1} parent=5 // pred_check
      _
    $region46: #{simple_ddpm_forward.1} parent=5 // pred_check_branch
      %241 = sbr.rel (%p238) target = $region48
    $region47: #{simple_ddpm_forward.1} parent=5 // pred_region
      %s242 = ssub.s32 %s13, 1
      %p243 = scmp.lt.s32.totalorder %s18, 1
      %s244 = scalar_select %p243, %s18, 1
      %s245 = smul.addr %s244, 32
      %s246 = smul.addr %s245, 4
      %s247 = scalar_lea.vmem %s0, %s246
      %p248 = pneg %p39
      %p249 = pneg %p36
      %p250 = pneg %p60
      %p251 = pneg %p57
      %p252 = pneg %p81
      %p253 = pneg %p78
      %p254 = pneg %p102
      %p255 = pneg %p99
      %p256 = pneg %p123
      %p257 = pneg %p120
      %p258 = pneg %p144
      %p259 = pneg %p141
      %p260 = pneg %p165
      %p261 = pneg %p162
      %p262 = pneg %p191
      %p263 = pneg %p188
      %p264 = scmp.lt.s32.totalorder %s18, 1
      %s265 = scalar_select %p264, %s18, 1
      %s266 = smul.addr %s265, 32
      %s267 = smul.addr %s266, 8
      %s268 = scalar_lea.vmem %s7, %s267
      %p269 = scmp.lt.s32.totalorder %s18, 1
      %s270 = scalar_select %p269, %s18, 1
      %s271 = smul.addr %s270, 32
      %s272 = smul.addr %s271, 4
      %s273 = scalar_lea.vmem %s0, %s272
      %p274 = scmp.lt.s32.totalorder %s18, 1
      %s275 = scalar_select %p274, %s18, 1
      %s276 = smul.addr %s275, 32
      %s277 = smul.addr %s276, 8
      %s278 = scalar_lea.vmem %s7, %s277
      %v280 = vlaneseq
      %v281 = vshrl.u32 %v280, 7
      %v282 = vadd.s32 %v281, 8
      %v283 = vadd.s32 %v281, 16
      %v284 = vadd.s32 %v281, 24
      %v285 = vadd.s32 %v281, 32
      %v286 = vadd.s32 %v281, 40
      %v287 = vadd.s32 %v281, 48
      %v288 = vadd.s32 %v281, 56
      %v289 = vadd.s32 %v281, 64
      %v290 = vadd.s32 %v281, 72
      %v291 = vadd.s32 %v281, 80
      %v292 = vadd.s32 %v281, 88
      %v293 = vadd.s32 %v281, 96
      %v294 = vadd.s32 %v281, 104
      %v295 = vadd.s32 %v281, 112
      %v296 = vadd.s32 %v281, 120
      %v297 = vand.u32 %v281, 15
      %v298 = vand.u32 %v282, 15
      %v299 = vand.u32 %v283, 15
      %v300 = vand.u32 %v284, 15
      %v301 = vand.u32 %v285, 15
      %v302 = vand.u32 %v286, 15
      %v303 = vand.u32 %v287, 15
      %v304 = vand.u32 %v288, 15
      %v305 = vand.u32 %v289, 15
      %v306 = vand.u32 %v290, 15
      %v307 = vand.u32 %v291, 15
      %v308 = vand.u32 %v292, 15
      %v309 = vand.u32 %v293, 15
      %v310 = vand.u32 %v294, 15
      %v311 = vand.u32 %v295, 15
      %v312 = vand.u32 %v296, 15
      %vm313 = vcmp.eq.s32.totalorder %v297, 0
      %vm314 = vcmp.eq.s32.totalorder %v298, 0
      %vm315 = vcmp.eq.s32.totalorder %v299, 0
      %vm316 = vcmp.eq.s32.totalorder %v300, 0
      %vm317 = vcmp.eq.s32.totalorder %v301, 0
      %vm318 = vcmp.eq.s32.totalorder %v302, 0
      %vm319 = vcmp.eq.s32.totalorder %v303, 0
      %vm320 = vcmp.eq.s32.totalorder %v304, 0
      %vm321 = vcmp.eq.s32.totalorder %v305, 0
      %vm322 = vcmp.eq.s32.totalorder %v306, 0
      %vm323 = vcmp.eq.s32.totalorder %v307, 0
      %vm324 = vcmp.eq.s32.totalorder %v308, 0
      %vm325 = vcmp.eq.s32.totalorder %v309, 0
      %vm326 = vcmp.eq.s32.totalorder %v310, 0
      %vm327 = vcmp.eq.s32.totalorder %v311, 0
      %vm328 = vcmp.eq.s32.totalorder %v312, 0
      %vm329 = vcmp.eq.s32.totalorder %v297, 15
      %vm330 = vcmp.eq.s32.totalorder %v298, 15
      %vm331 = vcmp.eq.s32.totalorder %v299, 15
      %vm332 = vcmp.eq.s32.totalorder %v300, 15
      %vm333 = vcmp.eq.s32.totalorder %v301, 15
      %vm334 = vcmp.eq.s32.totalorder %v302, 15
      %vm335 = vcmp.eq.s32.totalorder %v303, 15
      %vm336 = vcmp.eq.s32.totalorder %v304, 15
      %vm337 = vcmp.eq.s32.totalorder %v305, 15
      %vm338 = vcmp.eq.s32.totalorder %v306, 15
      %vm339 = vcmp.eq.s32.totalorder %v307, 15
      %vm340 = vcmp.eq.s32.totalorder %v308, 15
      %vm341 = vcmp.eq.s32.totalorder %v309, 15
      %vm342 = vcmp.eq.s32.totalorder %v310, 15
      %vm343 = vcmp.eq.s32.totalorder %v311, 15
      %vm344 = vcmp.eq.s32.totalorder %v312, 15
      %345 = vst [vmem:[#allocation2] sm:$0xf] 0
      %346 = vst [vmem:[#allocation2 + $0x4] sm:$0xf] 0
      %347 = vst [vmem:[#allocation2 + $0x88] sm:$0xf] 0
      %348 = vst [vmem:[#allocation2 + $0x8c] sm:$0xf] 0
      %s349 = scalar_lea.vmem [#allocation2], 144
      %350 = vst [vmem:[%s349] sm:$0xf] 0
      %351 = vst [vmem:[%s349 + $0x4] sm:$0xf] 0
      %352 = vst [vmem:[%s349 + $0x88] sm:$0xf] 0
      %353 = vst [vmem:[%s349 + $0x8c] sm:$0xf] 0
      %s354 = scalar_lea.vmem [#allocation2], 288
      %355 = vst [vmem:[%s354] sm:$0xf] 0
      %356 = vst [vmem:[%s354 + $0x4] sm:$0xf] 0
      %357 = vst [vmem:[%s354 + $0x88] sm:$0xf] 0
      %358 = vst [vmem:[%s354 + $0x8c] sm:$0xf] 0
      %359 = vst [vmem:[#allocation3] sm:$0xf] 0
      %360 = vst [vmem:[#allocation3 + $0x4] sm:$0xf] 0
      %361 = vst [vmem:[#allocation3 + $0x88] sm:$0xf] 0
      %362 = vst [vmem:[#allocation3 + $0x8c] sm:$0xf] 0
      %s363 = scalar_lea.vmem [#allocation3], 144
      %364 = vst [vmem:[%s363] sm:$0xf] 0
      %365 = vst [vmem:[%s363 + $0x4] sm:$0xf] 0
      %366 = vst [vmem:[%s363 + $0x88] sm:$0xf] 0
      %367 = vst [vmem:[%s363 + $0x8c] sm:$0xf] 0
      %s368 = scalar_lea.vmem [#allocation3], 288
      %369 = vst [vmem:[%s368] sm:$0xf] 0
      %370 = vst [vmem:[%s368 + $0x4] sm:$0xf] 0
      %371 = vst [vmem:[%s368 + $0x88] sm:$0xf] 0
      %372 = vst [vmem:[%s368 + $0x8c] sm:$0xf] 0
      %v373 = vld [vmem:[%s273] sm:$0xf]
      %v374 = vld [vmem:[%s273 + $0x4] sm:$0xf]
      %v375 = vld [vmem:[%s273 + $0x8] sm:$0xf]
      %v376 = vld [vmem:[%s273 + $0xc] sm:$0xf]
      %v377 = vld [vmem:[%s273 + $0x10] sm:$0xf]
      %v378 = vld [vmem:[%s273 + $0x14] sm:$0xf]
      %v379 = vld [vmem:[%s273 + $0x18] sm:$0xf]
      %v380 = vld [vmem:[%s273 + $0x1c] sm:$0xf]
      %v381 = vld [vmem:[%s273 + $0x20] sm:$0xf]
      %v382 = vld [vmem:[%s273 + $0x24] sm:$0xf]
      %v383 = vld [vmem:[%s273 + $0x28] sm:$0xf]
      %v384 = vld [vmem:[%s273 + $0x2c] sm:$0xf]
      %v385 = vld [vmem:[%s273 + $0x30] sm:$0xf]
      %v386 = vld [vmem:[%s273 + $0x34] sm:$0xf]
      %v387 = vld [vmem:[%s273 + $0x38] sm:$0xf]
      %v388 = vld [vmem:[%s273 + $0x3c] sm:$0xf]
      %v389 = vld [vmem:[%s1] sm:$0xf]
      %v390 = vld [vmem:[%s1 + $0x4] sm:$0xf]
      %v391 = vld [vmem:[%s1 + $0x8] sm:$0xf]
      %v392 = vld [vmem:[%s1 + $0xc] sm:$0xf]
      %v393 = vld [vmem:[%s1 + $0x10] sm:$0xf]
      %v394 = vld [vmem:[%s1 + $0x14] sm:$0xf]
      %v395 = vld [vmem:[%s1 + $0x18] sm:$0xf]
      %v396 = vld [vmem:[%s1 + $0x1c] sm:$0xf]
      %v397 = vld [vmem:[%s1 + $0x20] sm:$0xf]
      %v398 = vld [vmem:[%s1 + $0x24] sm:$0xf]
      %v399 = vld [vmem:[%s1 + $0x28] sm:$0xf]
      %v400 = vld [vmem:[%s1 + $0x2c] sm:$0xf]
      %v401 = vld [vmem:[%s1 + $0x30] sm:$0xf]
      %v402 = vld [vmem:[%s1 + $0x34] sm:$0xf]
      %v403 = vld [vmem:[%s1 + $0x38] sm:$0xf]
      %v404 = vld [vmem:[%s1 + $0x3c] sm:$0xf]
      %v405 = vld [vmem:[%s2] sm:$0x1]
      %v407 = vlaneseq
      %v408 = vshrl.u32 %v407, 7
      %v409 = vsub.s32 0, %v408
      %v410 = vrot.slane %v405, %v409
      %v428 = vunpack.c.l.b16 %v373
      %v429 = vunpack.c.l.b16 %v374
      %v430 = vunpack.c.l.b16 %v375
      %v431 = vunpack.c.l.b16 %v376
      %v432 = vunpack.c.l.b16 %v377
      %v433 = vunpack.c.l.b16 %v378
      %v434 = vunpack.c.l.b16 %v379
      %v435 = vunpack.c.l.b16 %v380
      %v436 = vunpack.c.l.b16 %v381
      %v437 = vunpack.c.l.b16 %v382
      %v438 = vunpack.c.l.b16 %v383
      %v439 = vunpack.c.l.b16 %v384
      %v440 = vunpack.c.l.b16 %v385
      %v441 = vunpack.c.l.b16 %v386
      %v442 = vunpack.c.l.b16 %v387
      %v443 = vunpack.c.l.b16 %v388
      %v444 = vpack.c.b16 %v429, %v428
      %v445 = vpack.c.b16 %v431, %v430
      %v446 = vpack.c.b16 %v433, %v432
      %v447 = vpack.c.b16 %v435, %v434
      %v448 = vpack.c.b16 %v437, %v436
      %v449 = vpack.c.b16 %v439, %v438
      %v450 = vpack.c.b16 %v441, %v440
      %v451 = vpack.c.b16 %v443, %v442
      %v476 = vunpack.c.l.b16 %v389
      %v477 = vunpack.c.l.b16 %v390
      %v478 = vunpack.c.l.b16 %v391
      %v479 = vunpack.c.l.b16 %v392
      %v480 = vunpack.c.l.b16 %v393
      %v481 = vunpack.c.l.b16 %v394
      %v482 = vunpack.c.l.b16 %v395
      %v483 = vunpack.c.l.b16 %v396
      %v484 = vunpack.c.l.b16 %v397
      %v485 = vunpack.c.l.b16 %v398
      %v486 = vunpack.c.l.b16 %v399
      %v487 = vunpack.c.l.b16 %v400
      %v488 = vunpack.c.l.b16 %v401
      %v489 = vunpack.c.l.b16 %v402
      %v490 = vunpack.c.l.b16 %v403
      %v491 = vunpack.c.l.b16 %v404
      %v492 = vpack.c.b16 %v477, %v476
      %v493 = vpack.c.b16 %v479, %v478
      %v494 = vpack.c.b16 %v481, %v480
      %v495 = vpack.c.b16 %v483, %v482
      %v496 = vpack.c.b16 %v485, %v484
      %v497 = vpack.c.b16 %v487, %v486
      %v498 = vpack.c.b16 %v489, %v488
      %v499 = vpack.c.b16 %v491, %v490
      %508 = vmatprep.subr.bf16.mxu0 0
      %509 = vmatpush1.bf16.msra.mxu0 %v499
      %510 = vmatprep.subr.bf16.mxu0 0
      %511 = vmatpush1.bf16.msra.mxu0 %v498
      %512 = vmatprep.subr.bf16.mxu0 0
      %513 = vmatpush1.bf16.msra.mxu0 %v497
      %514 = vmatprep.subr.bf16.mxu0 0
      %515 = vmatpush1.bf16.msra.mxu0 %v496
      %516 = vmatprep.subr.bf16.mxu0 0
      %517 = vmatpush1.bf16.msra.mxu0 %v495
      %518 = vmatprep.subr.bf16.mxu0 0
      %519 = vmatpush1.bf16.msra.mxu0 %v494
      %520 = vmatprep.subr.bf16.mxu0 0
      %521 = vmatpush1.bf16.msra.mxu0 %v493
      %522 = vmatprep.subr.bf16.mxu0 0
      %523 = vmatpush1.bf16.msra.mxu0 %v492
      %524 = vmatprep.subr.bf16.mxu0 0
      %525 = vmatpush2.bf16.msra.mxu0 0
      %526 = vmatprep.subr.bf16.mxu0 0
      %527 = vmatpush2.bf16.msra.mxu0 0
      %528 = vmatprep.subr.bf16.mxu0 0
      %529 = vmatpush2.bf16.msra.mxu0 0
      %530 = vmatprep.subr.bf16.mxu0 0
      %531 = vmatpush2.bf16.msra.mxu0 0
      %532 = vmatprep.subr.bf16.mxu0 0
      %533 = vmatpush2.bf16.msra.mxu0 0
      %534 = vmatprep.subr.bf16.mxu0 0
      %535 = vmatpush2.bf16.msra.mxu0 0
      %536 = vmatprep.subr.bf16.mxu0 0
      %537 = vmatpush2.bf16.msra.mxu0 0
      %538 = vmatprep.subr.bf16.mxu0 0
      %539 = vmatpush2.bf16.msra.mxu0 0
      %540 = vmatprep.mubr.bf16.mxu0 0
      %541 = vmatmul.mubr.bf16.gmra.mxu0 %v444
      %v542 = vpop.f32.mrf.mxu0
      %v543 = vadd.f32 %v410, %v542
      %v544 = vpop.f32.mrf.mxu0
      %v545 = vpop.f32.mrf.mxu0
      %v546 = vadd.f32 %v410, %v545
      %v547 = vpop.f32.mrf.mxu0
      %548 = vmatprep.mubr.bf16.mxu0 0
      %549 = vmatmul.mubr.bf16.gmra.mxu0 %v445
      %v550 = vpop.f32.mrf.mxu0
      %v551 = vadd.f32 %v410, %v550
      %v552 = vpop.f32.mrf.mxu0
      %v553 = vpop.f32.mrf.mxu0
      %v554 = vadd.f32 %v410, %v553
      %v555 = vpop.f32.mrf.mxu0
      %556 = vmatprep.mubr.bf16.mxu0 0
      %557 = vmatmul.mubr.bf16.gmra.mxu0 %v446
      %v558 = vpop.f32.mrf.mxu0
      %v559 = vadd.f32 %v410, %v558
      %v560 = vpop.f32.mrf.mxu0
      %v561 = vpop.f32.mrf.mxu0
      %v562 = vadd.f32 %v410, %v561
      %v563 = vpop.f32.mrf.mxu0
      %564 = vmatprep.mubr.bf16.mxu0 0
      %565 = vmatmul.mubr.bf16.gmra.mxu0 %v447
      %v566 = vpop.f32.mrf.mxu0
      %v567 = vadd.f32 %v410, %v566
      %v568 = vpop.f32.mrf.mxu0
      %v569 = vpop.f32.mrf.mxu0
      %v570 = vadd.f32 %v410, %v569
      %v571 = vpop.f32.mrf.mxu0
      %572 = vmatprep.mubr.bf16.mxu0 0
      %573 = vmatmul.mubr.bf16.gmra.mxu0 %v448
      %v574 = vpop.f32.mrf.mxu0
      %v575 = vadd.f32 %v410, %v574
      %v576 = vpop.f32.mrf.mxu0
      %v577 = vpop.f32.mrf.mxu0
      %v578 = vadd.f32 %v410, %v577
      %v579 = vpop.f32.mrf.mxu0
      %580 = vmatprep.mubr.bf16.mxu0 0
      %581 = vmatmul.mubr.bf16.gmra.mxu0 %v449
      %v582 = vpop.f32.mrf.mxu0
      %v583 = vadd.f32 %v410, %v582
      %v584 = vpop.f32.mrf.mxu0
      %v585 = vpop.f32.mrf.mxu0
      %v586 = vadd.f32 %v410, %v585
      %v587 = vpop.f32.mrf.mxu0
      %588 = vmatprep.mubr.bf16.mxu0 0
      %589 = vmatmul.mubr.bf16.gmra.mxu0 %v450
      %v590 = vpop.f32.mrf.mxu0
      %v591 = vadd.f32 %v410, %v590
      %v592 = vpop.f32.mrf.mxu0
      %v593 = vpop.f32.mrf.mxu0
      %v594 = vadd.f32 %v410, %v593
      %v595 = vpop.f32.mrf.mxu0
      %596 = vmatprep.mubr.bf16.mxu0 0
      %597 = vmatmul.mubr.bf16.gmra.mxu0 %v451
      %v598 = vpop.f32.mrf.mxu0
      %v599 = vadd.f32 %v410, %v598
      %v600 = vpop.f32.mrf.mxu0
      %v601 = vpop.f32.mrf.mxu0
      %v602 = vadd.f32 %v410, %v601
      %v603 = vpop.f32.mrf.mxu0
      %604 = vdwg.mxu0
      %v605 = vmax.f32 %v543, 0.0
      %v606 = vmax.f32 %v546, 0.0
      %v607 = vmax.f32 %v551, 0.0
      %v608 = vmax.f32 %v554, 0.0
      %v609 = vmax.f32 %v559, 0.0
      %v610 = vmax.f32 %v562, 0.0
      %v611 = vmax.f32 %v567, 0.0
      %v612 = vmax.f32 %v570, 0.0
      %v613 = vmax.f32 %v575, 0.0
      %v614 = vmax.f32 %v578, 0.0
      %v615 = vmax.f32 %v583, 0.0
      %v616 = vmax.f32 %v586, 0.0
      %v617 = vmax.f32 %v591, 0.0
      %v618 = vmax.f32 %v594, 0.0
      %v619 = vmax.f32 %v599, 0.0
      %v620 = vmax.f32 %v602, 0.0
      %v621 = vrot.slane %v605, 7
      %v622 = vrot.slane %v606, 7
      %v623 = vrot.slane %v607, 7
      %v624 = vrot.slane %v608, 7
      %v625 = vrot.slane %v609, 7
      %v626 = vrot.slane %v610, 7
      %v627 = vrot.slane %v611, 7
      %v628 = vrot.slane %v612, 7
      %v629 = vrot.slane %v613, 7
      %v630 = vrot.slane %v614, 7
      %v631 = vrot.slane %v615, 7
      %v632 = vrot.slane %v616, 7
      %v633 = vrot.slane %v617, 7
      %v634 = vrot.slane %v618, 7
      %v635 = vrot.slane %v619, 7
      %v636 = vrot.slane %v620, 7
      %vm637 = vcmp.lt.s32.totalorder %v281, 1
      %v638 = vsel %vm637, %v635, %v636
      %v639 = vsel %vm637, %v634, %v635
      %v640 = vsel %vm637, %v633, %v634
      %v641 = vsel %vm637, %v632, %v633
      %v642 = vsel %vm637, %v631, %v632
      %v643 = vsel %vm637, %v630, %v631
      %v644 = vsel %vm637, %v629, %v630
      %v645 = vsel %vm637, %v628, %v629
      %v646 = vsel %vm637, %v627, %v628
      %v647 = vsel %vm637, %v626, %v627
      %v648 = vsel %vm637, %v625, %v626
      %v649 = vsel %vm637, %v624, %v625
      %v650 = vsel %vm637, %v623, %v624
      %v651 = vsel %vm637, %v622, %v623
      %v652 = vsel %vm637, %v621, %v622
      %v653 = vsel %vm637, %v636, %v621
      %v654 = vsel %vm313, 0.0, %v653
      %v655 = vsel %vm314, 0.0, %v652
      %v656 = vsel %vm315, 0.0, %v651
      %v657 = vsel %vm316, 0.0, %v650
      %v658 = vsel %vm317, 0.0, %v649
      %v659 = vsel %vm318, 0.0, %v648
      %v660 = vsel %vm319, 0.0, %v647
      %v661 = vsel %vm320, 0.0, %v646
      %v662 = vsel %vm321, 0.0, %v645
      %v663 = vsel %vm322, 0.0, %v644
      %v664 = vsel %vm323, 0.0, %v643
      %v665 = vsel %vm324, 0.0, %v642
      %v666 = vsel %vm325, 0.0, %v641
      %v667 = vsel %vm326, 0.0, %v640
      %v668 = vsel %vm327, 0.0, %v639
      %v669 = vsel %vm328, 0.0, %v638
      %v670 = vrot.slane %v605, 1
      %v671 = vrot.slane %v606, 1
      %v672 = vrot.slane %v607, 1
      %v673 = vrot.slane %v608, 1
      %v674 = vrot.slane %v609, 1
      %v675 = vrot.slane %v610, 1
      %v676 = vrot.slane %v611, 1
      %v677 = vrot.slane %v612, 1
      %v678 = vrot.slane %v613, 1
      %v679 = vrot.slane %v614, 1
      %v680 = vrot.slane %v615, 1
      %v681 = vrot.slane %v616, 1
      %v682 = vrot.slane %v617, 1
      %v683 = vrot.slane %v618, 1
      %v684 = vrot.slane %v619, 1
      %v685 = vrot.slane %v620, 1
      %vm686 = vcmp.lt.s32.totalorder %v281, 7
      %v687 = vsel %vm686, %v684, %v685
      %v688 = vsel %vm686, %v683, %v684
      %v689 = vsel %vm686, %v682, %v683
      %v690 = vsel %vm686, %v681, %v682
      %v691 = vsel %vm686, %v680, %v681
      %v692 = vsel %vm686, %v679, %v680
      %v693 = vsel %vm686, %v678, %v679
      %v694 = vsel %vm686, %v677, %v678
      %v695 = vsel %vm686, %v676, %v677
      %v696 = vsel %vm686, %v675, %v676
      %v697 = vsel %vm686, %v674, %v675
      %v698 = vsel %vm686, %v673, %v674
      %v699 = vsel %vm686, %v672, %v673
      %v700 = vsel %vm686, %v671, %v672
      %v701 = vsel %vm686, %v670, %v671
      %v702 = vsel %vm686, %v685, %v670
      %v703 = vsel %vm329, 0.0, %v701
      %v704 = vsel %vm330, 0.0, %v700
      %v705 = vsel %vm331, 0.0, %v699
      %v706 = vsel %vm332, 0.0, %v698
      %v707 = vsel %vm333, 0.0, %v697
      %v708 = vsel %vm334, 0.0, %v696
      %v709 = vsel %vm335, 0.0, %v695
      %v710 = vsel %vm336, 0.0, %v694
      %v711 = vsel %vm337, 0.0, %v693
      %v712 = vsel %vm338, 0.0, %v692
      %v713 = vsel %vm339, 0.0, %v691
      %v714 = vsel %vm340, 0.0, %v690
      %v715 = vsel %vm341, 0.0, %v689
      %v716 = vsel %vm342, 0.0, %v688
      %v717 = vsel %vm343, 0.0, %v687
      %v718 = vsel %vm344, 0.0, %v702
      %v719 = vpack.c.bf16 %v606, %v605
      %v720 = vpack.c.bf16 %v608, %v607
      %v721 = vpack.c.bf16 %v610, %v609
      %v722 = vpack.c.bf16 %v612, %v611
      %v723 = vpack.c.bf16 %v614, %v613
      %v724 = vpack.c.bf16 %v616, %v615
      %v725 = vpack.c.bf16 %v618, %v617
      %v726 = vpack.c.bf16 %v620, %v619
      %v735 = vunpack.c.l.b16 %v719
      %v736 = vunpack.c.h.b16 %v719
      %v737 = vunpack.c.l.b16 %v720
      %v738 = vunpack.c.h.b16 %v720
      %v739 = vunpack.c.l.b16 %v721
      %v740 = vunpack.c.h.b16 %v721
      %v741 = vunpack.c.l.b16 %v722
      %v742 = vunpack.c.h.b16 %v722
      %v743 = vunpack.c.l.b16 %v723
      %v744 = vunpack.c.h.b16 %v723
      %v745 = vunpack.c.l.b16 %v724
      %v746 = vunpack.c.h.b16 %v724
      %v747 = vunpack.c.l.b16 %v725
      %v748 = vunpack.c.h.b16 %v725
      %v749 = vunpack.c.l.b16 %v726
      %v750 = vunpack.c.h.b16 %v726
      %v751 = vpack.c.b16 %v735, %v735
      %v752 = vpack.c.b16 %v736, %v736
      %v753 = vpack.c.b16 %v737, %v737
      %v754 = vpack.c.b16 %v738, %v738
      %v755 = vpack.c.b16 %v739, %v739
      %v756 = vpack.c.b16 %v740, %v740
      %v757 = vpack.c.b16 %v741, %v741
      %v758 = vpack.c.b16 %v742, %v742
      %v759 = vpack.c.b16 %v743, %v743
      %v760 = vpack.c.b16 %v744, %v744
      %v761 = vpack.c.b16 %v745, %v745
      %v762 = vpack.c.b16 %v746, %v746
      %v763 = vpack.c.b16 %v747, %v747
      %v764 = vpack.c.b16 %v748, %v748
      %v765 = vpack.c.b16 %v749, %v749
      %v766 = vpack.c.b16 %v750, %v750
      %783 = vst [vmem:[%s349 + $0x8] sm:$0xf] %v751
      %784 = vst [vmem:[%s349 + $0xc] sm:$0xf] %v752
      %785 = vst [vmem:[%s349 + $0x10] sm:$0xf] %v753
      %786 = vst [vmem:[%s349 + $0x14] sm:$0xf] %v754
      %787 = vst [vmem:[%s349 + $0x18] sm:$0xf] %v755
      %788 = vst [vmem:[%s349 + $0x1c] sm:$0xf] %v756
      %789 = vst [vmem:[%s349 + $0x20] sm:$0xf] %v757
      %790 = vst [vmem:[%s349 + $0x24] sm:$0xf] %v758
      %791 = vst [vmem:[%s349 + $0x28] sm:$0xf] %v759
      %792 = vst [vmem:[%s349 + $0x2c] sm:$0xf] %v760
      %793 = vst [vmem:[%s349 + $0x30] sm:$0xf] %v761
      %794 = vst [vmem:[%s349 + $0x34] sm:$0xf] %v762
      %795 = vst [vmem:[%s349 + $0x38] sm:$0xf] %v763
      %796 = vst [vmem:[%s349 + $0x3c] sm:$0xf] %v764
      %797 = vst [vmem:[%s349 + $0x40] sm:$0xf] %v765
      %798 = vst [vmem:[%s349 + $0x44] sm:$0xf] %v766
      %v799 = vpack.c.bf16 %v655, %v654
      %v800 = vpack.c.bf16 %v657, %v656
      %v801 = vpack.c.bf16 %v659, %v658
      %v802 = vpack.c.bf16 %v661, %v660
      %v803 = vpack.c.bf16 %v663, %v662
      %v804 = vpack.c.bf16 %v665, %v664
      %v805 = vpack.c.bf16 %v667, %v666
      %v806 = vpack.c.bf16 %v669, %v668
      %v815 = vunpack.c.l.b16 %v799
      %v816 = vunpack.c.h.b16 %v799
      %v817 = vunpack.c.l.b16 %v800
      %v818 = vunpack.c.h.b16 %v800
      %v819 = vunpack.c.l.b16 %v801
      %v820 = vunpack.c.h.b16 %v801
      %v821 = vunpack.c.l.b16 %v802
      %v822 = vunpack.c.h.b16 %v802
      %v823 = vunpack.c.l.b16 %v803
      %v824 = vunpack.c.h.b16 %v803
      %v825 = vunpack.c.l.b16 %v804
      %v826 = vunpack.c.h.b16 %v804
      %v827 = vunpack.c.l.b16 %v805
      %v828 = vunpack.c.h.b16 %v805
      %v829 = vunpack.c.l.b16 %v806
      %v830 = vunpack.c.h.b16 %v806
      %v831 = vpack.c.b16 %v815, %v815
      %v832 = vpack.c.b16 %v816, %v816
      %v833 = vpack.c.b16 %v817, %v817
      %v834 = vpack.c.b16 %v818, %v818
      %v835 = vpack.c.b16 %v819, %v819
      %v836 = vpack.c.b16 %v820, %v820
      %v837 = vpack.c.b16 %v821, %v821
      %v838 = vpack.c.b16 %v822, %v822
      %v839 = vpack.c.b16 %v823, %v823
      %v840 = vpack.c.b16 %v824, %v824
      %v841 = vpack.c.b16 %v825, %v825
      %v842 = vpack.c.b16 %v826, %v826
      %v843 = vpack.c.b16 %v827, %v827
      %v844 = vpack.c.b16 %v828, %v828
      %v845 = vpack.c.b16 %v829, %v829
      %v846 = vpack.c.b16 %v830, %v830
      %863 = vst [vmem:[#allocation2 + $0x8] sm:$0xf] %v831
      %864 = vst [vmem:[#allocation2 + $0xc] sm:$0xf] %v832
      %865 = vst [vmem:[#allocation2 + $0x10] sm:$0xf] %v833
      %866 = vst [vmem:[#allocation2 + $0x14] sm:$0xf] %v834
      %867 = vst [vmem:[#allocation2 + $0x18] sm:$0xf] %v835
      %868 = vst [vmem:[#allocation2 + $0x1c] sm:$0xf] %v836
      %869 = vst [vmem:[#allocation2 + $0x20] sm:$0xf] %v837
      %870 = vst [vmem:[#allocation2 + $0x24] sm:$0xf] %v838
      %871 = vst [vmem:[#allocation2 + $0x28] sm:$0xf] %v839
      %872 = vst [vmem:[#allocation2 + $0x2c] sm:$0xf] %v840
      %873 = vst [vmem:[#allocation2 + $0x30] sm:$0xf] %v841
      %874 = vst [vmem:[#allocation2 + $0x34] sm:$0xf] %v842
      %875 = vst [vmem:[#allocation2 + $0x38] sm:$0xf] %v843
      %876 = vst [vmem:[#allocation2 + $0x3c] sm:$0xf] %v844
      %877 = vst [vmem:[#allocation2 + $0x40] sm:$0xf] %v845
      %878 = vst [vmem:[#allocation2 + $0x44] sm:$0xf] %v846
      %v879 = vpack.c.bf16 %v704, %v703
      %v880 = vpack.c.bf16 %v706, %v705
      %v881 = vpack.c.bf16 %v708, %v707
      %v882 = vpack.c.bf16 %v710, %v709
      %v883 = vpack.c.bf16 %v712, %v711
      %v884 = vpack.c.bf16 %v714, %v713
      %v885 = vpack.c.bf16 %v716, %v715
      %v886 = vpack.c.bf16 %v718, %v717
      %v895 = vunpack.c.l.b16 %v879
      %v896 = vunpack.c.h.b16 %v879
      %v897 = vunpack.c.l.b16 %v880
      %v898 = vunpack.c.h.b16 %v880
      %v899 = vunpack.c.l.b16 %v881
      %v900 = vunpack.c.h.b16 %v881
      %v901 = vunpack.c.l.b16 %v882
      %v902 = vunpack.c.h.b16 %v882
      %v903 = vunpack.c.l.b16 %v883
      %v904 = vunpack.c.h.b16 %v883
      %v905 = vunpack.c.l.b16 %v884
      %v906 = vunpack.c.h.b16 %v884
      %v907 = vunpack.c.l.b16 %v885
      %v908 = vunpack.c.h.b16 %v885
      %v909 = vunpack.c.l.b16 %v886
      %v910 = vunpack.c.h.b16 %v886
      %v911 = vpack.c.b16 %v895, %v895
      %v912 = vpack.c.b16 %v896, %v896
      %v913 = vpack.c.b16 %v897, %v897
      %v914 = vpack.c.b16 %v898, %v898
      %v915 = vpack.c.b16 %v899, %v899
      %v916 = vpack.c.b16 %v900, %v900
      %v917 = vpack.c.b16 %v901, %v901
      %v918 = vpack.c.b16 %v902, %v902
      %v919 = vpack.c.b16 %v903, %v903
      %v920 = vpack.c.b16 %v904, %v904
      %v921 = vpack.c.b16 %v905, %v905
      %v922 = vpack.c.b16 %v906, %v906
      %v923 = vpack.c.b16 %v907, %v907
      %v924 = vpack.c.b16 %v908, %v908
      %v925 = vpack.c.b16 %v909, %v909
      %v926 = vpack.c.b16 %v910, %v910
      %943 = vst [vmem:[%s354 + $0x8] sm:$0xf] %v911
      %944 = vst [vmem:[%s354 + $0xc] sm:$0xf] %v912
      %945 = vst [vmem:[%s354 + $0x10] sm:$0xf] %v913
      %946 = vst [vmem:[%s354 + $0x14] sm:$0xf] %v914
      %947 = vst [vmem:[%s354 + $0x18] sm:$0xf] %v915
      %948 = vst [vmem:[%s354 + $0x1c] sm:$0xf] %v916
      %949 = vst [vmem:[%s354 + $0x20] sm:$0xf] %v917
      %950 = vst [vmem:[%s354 + $0x24] sm:$0xf] %v918
      %951 = vst [vmem:[%s354 + $0x28] sm:$0xf] %v919
      %952 = vst [vmem:[%s354 + $0x2c] sm:$0xf] %v920
      %953 = vst [vmem:[%s354 + $0x30] sm:$0xf] %v921
      %954 = vst [vmem:[%s354 + $0x34] sm:$0xf] %v922
      %955 = vst [vmem:[%s354 + $0x38] sm:$0xf] %v923
      %956 = vst [vmem:[%s354 + $0x3c] sm:$0xf] %v924
      %957 = vst [vmem:[%s354 + $0x40] sm:$0xf] %v925
      %958 = vst [vmem:[%s354 + $0x44] sm:$0xf] %v926
      %v959 = vld [vmem:[%s273 + $0x40] sm:$0xf]
      %v960 = vld [vmem:[%s273 + $0x44] sm:$0xf]
      %v961 = vld [vmem:[%s273 + $0x48] sm:$0xf]
      %v962 = vld [vmem:[%s273 + $0x4c] sm:$0xf]
      %v963 = vld [vmem:[%s273 + $0x50] sm:$0xf]
      %v964 = vld [vmem:[%s273 + $0x54] sm:$0xf]
      %v965 = vld [vmem:[%s273 + $0x58] sm:$0xf]
      %v966 = vld [vmem:[%s273 + $0x5c] sm:$0xf]
      %v967 = vld [vmem:[%s273 + $0x60] sm:$0xf]
      %v968 = vld [vmem:[%s273 + $0x64] sm:$0xf]
      %v969 = vld [vmem:[%s273 + $0x68] sm:$0xf]
      %v970 = vld [vmem:[%s273 + $0x6c] sm:$0xf]
      %v971 = vld [vmem:[%s273 + $0x70] sm:$0xf]
      %v972 = vld [vmem:[%s273 + $0x74] sm:$0xf]
      %v973 = vld [vmem:[%s273 + $0x78] sm:$0xf]
      %v974 = vld [vmem:[%s273 + $0x7c] sm:$0xf]
      %v975 = vld [vmem:[%s1] sm:$0xf]
      %v976 = vld [vmem:[%s1 + $0x4] sm:$0xf]
      %v977 = vld [vmem:[%s1 + $0x8] sm:$0xf]
      %v978 = vld [vmem:[%s1 + $0xc] sm:$0xf]
      %v979 = vld [vmem:[%s1 + $0x10] sm:$0xf]
      %v980 = vld [vmem:[%s1 + $0x14] sm:$0xf]
      %v981 = vld [vmem:[%s1 + $0x18] sm:$0xf]
      %v982 = vld [vmem:[%s1 + $0x1c] sm:$0xf]
      %v983 = vld [vmem:[%s1 + $0x20] sm:$0xf]
      %v984 = vld [vmem:[%s1 + $0x24] sm:$0xf]
      %v985 = vld [vmem:[%s1 + $0x28] sm:$0xf]
      %v986 = vld [vmem:[%s1 + $0x2c] sm:$0xf]
      %v987 = vld [vmem:[%s1 + $0x30] sm:$0xf]
      %v988 = vld [vmem:[%s1 + $0x34] sm:$0xf]
      %v989 = vld [vmem:[%s1 + $0x38] sm:$0xf]
      %v990 = vld [vmem:[%s1 + $0x3c] sm:$0xf]
      %v991 = vld [vmem:[%s2] sm:$0x1]
      %v993 = vlaneseq
      %v994 = vshrl.u32 %v993, 7
      %v995 = vsub.s32 0, %v994
      %v996 = vrot.slane %v991, %v995
      %v1014 = vunpack.c.l.b16 %v959
      %v1015 = vunpack.c.l.b16 %v960
      %v1016 = vunpack.c.l.b16 %v961
      %v1017 = vunpack.c.l.b16 %v962
      %v1018 = vunpack.c.l.b16 %v963
      %v1019 = vunpack.c.l.b16 %v964
      %v1020 = vunpack.c.l.b16 %v965
      %v1021 = vunpack.c.l.b16 %v966
      %v1022 = vunpack.c.l.b16 %v967
      %v1023 = vunpack.c.l.b16 %v968
      %v1024 = vunpack.c.l.b16 %v969
      %v1025 = vunpack.c.l.b16 %v970
      %v1026 = vunpack.c.l.b16 %v971
      %v1027 = vunpack.c.l.b16 %v972
      %v1028 = vunpack.c.l.b16 %v973
      %v1029 = vunpack.c.l.b16 %v974
      %v1030 = vpack.c.b16 %v1015, %v1014
      %v1031 = vpack.c.b16 %v1017, %v1016
      %v1032 = vpack.c.b16 %v1019, %v1018
      %v1033 = vpack.c.b16 %v1021, %v1020
      %v1034 = vpack.c.b16 %v1023, %v1022
      %v1035 = vpack.c.b16 %v1025, %v1024
      %v1036 = vpack.c.b16 %v1027, %v1026
      %v1037 = vpack.c.b16 %v1029, %v1028
      %v1062 = vunpack.c.l.b16 %v975
      %v1063 = vunpack.c.l.b16 %v976
      %v1064 = vunpack.c.l.b16 %v977
      %v1065 = vunpack.c.l.b16 %v978
      %v1066 = vunpack.c.l.b16 %v979
      %v1067 = vunpack.c.l.b16 %v980
      %v1068 = vunpack.c.l.b16 %v981
      %v1069 = vunpack.c.l.b16 %v982
      %v1070 = vunpack.c.l.b16 %v983
      %v1071 = vunpack.c.l.b16 %v984
      %v1072 = vunpack.c.l.b16 %v985
      %v1073 = vunpack.c.l.b16 %v986
      %v1074 = vunpack.c.l.b16 %v987
      %v1075 = vunpack.c.l.b16 %v988
      %v1076 = vunpack.c.l.b16 %v989
      %v1077 = vunpack.c.l.b16 %v990
      %v1078 = vpack.c.b16 %v1063, %v1062
      %v1079 = vpack.c.b16 %v1065, %v1064
      %v1080 = vpack.c.b16 %v1067, %v1066
      %v1081 = vpack.c.b16 %v1069, %v1068
      %v1082 = vpack.c.b16 %v1071, %v1070
      %v1083 = vpack.c.b16 %v1073, %v1072
      %v1084 = vpack.c.b16 %v1075, %v1074
      %v1085 = vpack.c.b16 %v1077, %v1076
      %1094 = vmatprep.subr.bf16.mxu0 0
      %1095 = vmatpush1.bf16.msra.mxu0 %v1085
      %1096 = vmatprep.subr.bf16.mxu0 0
      %1097 = vmatpush1.bf16.msra.mxu0 %v1084
      %1098 = vmatprep.subr.bf16.mxu0 0
      %1099 = vmatpush1.bf16.msra.mxu0 %v1083
      %1100 = vmatprep.subr.bf16.mxu0 0
      %1101 = vmatpush1.bf16.msra.mxu0 %v1082
      %1102 = vmatprep.subr.bf16.mxu0 0
      %1103 = vmatpush1.bf16.msra.mxu0 %v1081
      %1104 = vmatprep.subr.bf16.mxu0 0
      %1105 = vmatpush1.bf16.msra.mxu0 %v1080
      %1106 = vmatprep.subr.bf16.mxu0 0
      %1107 = vmatpush1.bf16.msra.mxu0 %v1079
      %1108 = vmatprep.subr.bf16.mxu0 0
      %1109 = vmatpush1.bf16.msra.mxu0 %v1078
      %1110 = vmatprep.subr.bf16.mxu0 0
      %1111 = vmatpush2.bf16.msra.mxu0 0
      %1112 = vmatprep.subr.bf16.mxu0 0
      %1113 = vmatpush2.bf16.msra.mxu0 0
      %1114 = vmatprep.subr.bf16.mxu0 0
      %1115 = vmatpush2.bf16.msra.mxu0 0
      %1116 = vmatprep.subr.bf16.mxu0 0
      %1117 = vmatpush2.bf16.msra.mxu0 0
      %1118 = vmatprep.subr.bf16.mxu0 0
      %1119 = vmatpush2.bf16.msra.mxu0 0
      %1120 = vmatprep.subr.bf16.mxu0 0
      %1121 = vmatpush2.bf16.msra.mxu0 0
      %1122 = vmatprep.subr.bf16.mxu0 0
      %1123 = vmatpush2.bf16.msra.mxu0 0
      %1124 = vmatprep.subr.bf16.mxu0 0
      %1125 = vmatpush2.bf16.msra.mxu0 0
      %1126 = vmatprep.mubr.bf16.mxu0 0
      %1127 = vmatmul.mubr.bf16.gmra.mxu0 %v1030
      %v1128 = vpop.f32.mrf.mxu0
      %v1129 = vadd.f32 %v996, %v1128
      %v1130 = vpop.f32.mrf.mxu0
      %v1131 = vpop.f32.mrf.mxu0
      %v1132 = vadd.f32 %v996, %v1131
      %v1133 = vpop.f32.mrf.mxu0
      %1134 = vmatprep.mubr.bf16.mxu0 0
      %1135 = vmatmul.mubr.bf16.gmra.mxu0 %v1031
      %v1136 = vpop.f32.mrf.mxu0
      %v1137 = vadd.f32 %v996, %v1136
      %v1138 = vpop.f32.mrf.mxu0
      %v1139 = vpop.f32.mrf.mxu0
      %v1140 = vadd.f32 %v996, %v1139
      %v1141 = vpop.f32.mrf.mxu0
      %1142 = vmatprep.mubr.bf16.mxu0 0
      %1143 = vmatmul.mubr.bf16.gmra.mxu0 %v1032
      %v1144 = vpop.f32.mrf.mxu0
      %v1145 = vadd.f32 %v996, %v1144
      %v1146 = vpop.f32.mrf.mxu0
      %v1147 = vpop.f32.mrf.mxu0
      %v1148 = vadd.f32 %v996, %v1147
      %v1149 = vpop.f32.mrf.mxu0
      %1150 = vmatprep.mubr.bf16.mxu0 0
      %1151 = vmatmul.mubr.bf16.gmra.mxu0 %v1033
      %v1152 = vpop.f32.mrf.mxu0
      %v1153 = vadd.f32 %v996, %v1152
      %v1154 = vpop.f32.mrf.mxu0
      %v1155 = vpop.f32.mrf.mxu0
      %v1156 = vadd.f32 %v996, %v1155
      %v1157 = vpop.f32.mrf.mxu0
      %1158 = vmatprep.mubr.bf16.mxu0 0
      %1159 = vmatmul.mubr.bf16.gmra.mxu0 %v1034
      %v1160 = vpop.f32.mrf.mxu0
      %v1161 = vadd.f32 %v996, %v1160
      %v1162 = vpop.f32.mrf.mxu0
      %v1163 = vpop.f32.mrf.mxu0
      %v1164 = vadd.f32 %v996, %v1163
      %v1165 = vpop.f32.mrf.mxu0
      %1166 = vmatprep.mubr.bf16.mxu0 0
      %1167 = vmatmul.mubr.bf16.gmra.mxu0 %v1035
      %v1168 = vpop.f32.mrf.mxu0
      %v1169 = vadd.f32 %v996, %v1168
      %v1170 = vpop.f32.mrf.mxu0
      %v1171 = vpop.f32.mrf.mxu0
      %v1172 = vadd.f32 %v996, %v1171
      %v1173 = vpop.f32.mrf.mxu0
      %1174 = vmatprep.mubr.bf16.mxu0 0
      %1175 = vmatmul.mubr.bf16.gmra.mxu0 %v1036
      %v1176 = vpop.f32.mrf.mxu0
      %v1177 = vadd.f32 %v996, %v1176
      %v1178 = vpop.f32.mrf.mxu0
      %v1179 = vpop.f32.mrf.mxu0
      %v1180 = vadd.f32 %v996, %v1179
      %v1181 = vpop.f32.mrf.mxu0
      %1182 = vmatprep.mubr.bf16.mxu0 0
      %1183 = vmatmul.mubr.bf16.gmra.mxu0 %v1037
      %v1184 = vpop.f32.mrf.mxu0
      %v1185 = vadd.f32 %v996, %v1184
      %v1186 = vpop.f32.mrf.mxu0
      %v1187 = vpop.f32.mrf.mxu0
      %v1188 = vadd.f32 %v996, %v1187
      %v1189 = vpop.f32.mrf.mxu0
      %1190 = vdwg.mxu0
      %v1191 = vmax.f32 %v1129, 0.0
      %v1192 = vmax.f32 %v1132, 0.0
      %v1193 = vmax.f32 %v1137, 0.0
      %v1194 = vmax.f32 %v1140, 0.0
      %v1195 = vmax.f32 %v1145, 0.0
      %v1196 = vmax.f32 %v1148, 0.0
      %v1197 = vmax.f32 %v1153, 0.0
      %v1198 = vmax.f32 %v1156, 0.0
      %v1199 = vmax.f32 %v1161, 0.0
      %v1200 = vmax.f32 %v1164, 0.0
      %v1201 = vmax.f32 %v1169, 0.0
      %v1202 = vmax.f32 %v1172, 0.0
      %v1203 = vmax.f32 %v1177, 0.0
      %v1204 = vmax.f32 %v1180, 0.0
      %v1205 = vmax.f32 %v1185, 0.0
      %v1206 = vmax.f32 %v1188, 0.0
      %v1207 = vrot.slane %v1191, 7
      %v1208 = vrot.slane %v1192, 7
      %v1209 = vrot.slane %v1193, 7
      %v1210 = vrot.slane %v1194, 7
      %v1211 = vrot.slane %v1195, 7
      %v1212 = vrot.slane %v1196, 7
      %v1213 = vrot.slane %v1197, 7
      %v1214 = vrot.slane %v1198, 7
      %v1215 = vrot.slane %v1199, 7
      %v1216 = vrot.slane %v1200, 7
      %v1217 = vrot.slane %v1201, 7
      %v1218 = vrot.slane %v1202, 7
      %v1219 = vrot.slane %v1203, 7
      %v1220 = vrot.slane %v1204, 7
      %v1221 = vrot.slane %v1205, 7
      %v1222 = vrot.slane %v1206, 7
      %v1223 = vsel %vm637, %v1221, %v1222
      %v1224 = vsel %vm637, %v1220, %v1221
      %v1225 = vsel %vm637, %v1219, %v1220
      %v1226 = vsel %vm637, %v1218, %v1219
      %v1227 = vsel %vm637, %v1217, %v1218
      %v1228 = vsel %vm637, %v1216, %v1217
      %v1229 = vsel %vm637, %v1215, %v1216
      %v1230 = vsel %vm637, %v1214, %v1215
      %v1231 = vsel %vm637, %v1213, %v1214
      %v1232 = vsel %vm637, %v1212, %v1213
      %v1233 = vsel %vm637, %v1211, %v1212
      %v1234 = vsel %vm637, %v1210, %v1211
      %v1235 = vsel %vm637, %v1209, %v1210
      %v1236 = vsel %vm637, %v1208, %v1209
      %v1237 = vsel %vm637, %v1207, %v1208
      %v1238 = vsel %vm637, %v1222, %v1207
      %v1239 = vsel %vm313, 0.0, %v1238
      %v1240 = vsel %vm314, 0.0, %v1237
      %v1241 = vsel %vm315, 0.0, %v1236
      %v1242 = vsel %vm316, 0.0, %v1235
      %v1243 = vsel %vm317, 0.0, %v1234
      %v1244 = vsel %vm318, 0.0, %v1233
      %v1245 = vsel %vm319, 0.0, %v1232
      %v1246 = vsel %vm320, 0.0, %v1231
      %v1247 = vsel %vm321, 0.0, %v1230
      %v1248 = vsel %vm322, 0.0, %v1229
      %v1249 = vsel %vm323, 0.0, %v1228
      %v1250 = vsel %vm324, 0.0, %v1227
      %v1251 = vsel %vm325, 0.0, %v1226
      %v1252 = vsel %vm326, 0.0, %v1225
      %v1253 = vsel %vm327, 0.0, %v1224
      %v1254 = vsel %vm328, 0.0, %v1223
      %v1255 = vrot.slane %v1191, 1
      %v1256 = vrot.slane %v1192, 1
      %v1257 = vrot.slane %v1193, 1
      %v1258 = vrot.slane %v1194, 1
      %v1259 = vrot.slane %v1195, 1
      %v1260 = vrot.slane %v1196, 1
      %v1261 = vrot.slane %v1197, 1
      %v1262 = vrot.slane %v1198, 1
      %v1263 = vrot.slane %v1199, 1
      %v1264 = vrot.slane %v1200, 1
      %v1265 = vrot.slane %v1201, 1
      %v1266 = vrot.slane %v1202, 1
      %v1267 = vrot.slane %v1203, 1
      %v1268 = vrot.slane %v1204, 1
      %v1269 = vrot.slane %v1205, 1
      %v1270 = vrot.slane %v1206, 1
      %v1271 = vsel %vm686, %v1269, %v1270
      %v1272 = vsel %vm686, %v1268, %v1269
      %v1273 = vsel %vm686, %v1267, %v1268
      %v1274 = vsel %vm686, %v1266, %v1267
      %v1275 = vsel %vm686, %v1265, %v1266
      %v1276 = vsel %vm686, %v1264, %v1265
      %v1277 = vsel %vm686, %v1263, %v1264
      %v1278 = vsel %vm686, %v1262, %v1263
      %v1279 = vsel %vm686, %v1261, %v1262
      %v1280 = vsel %vm686, %v1260, %v1261
      %v1281 = vsel %vm686, %v1259, %v1260
      %v1282 = vsel %vm686, %v1258, %v1259
      %v1283 = vsel %vm686, %v1257, %v1258
      %v1284 = vsel %vm686, %v1256, %v1257
      %v1285 = vsel %vm686, %v1255, %v1256
      %v1286 = vsel %vm686, %v1270, %v1255
      %v1287 = vsel %vm329, 0.0, %v1285
      %v1288 = vsel %vm330, 0.0, %v1284
      %v1289 = vsel %vm331, 0.0, %v1283
      %v1290 = vsel %vm332, 0.0, %v1282
      %v1291 = vsel %vm333, 0.0, %v1281
      %v1292 = vsel %vm334, 0.0, %v1280
      %v1293 = vsel %vm335, 0.0, %v1279
      %v1294 = vsel %vm336, 0.0, %v1278
      %v1295 = vsel %vm337, 0.0, %v1277
      %v1296 = vsel %vm338, 0.0, %v1276
      %v1297 = vsel %vm339, 0.0, %v1275
      %v1298 = vsel %vm340, 0.0, %v1274
      %v1299 = vsel %vm341, 0.0, %v1273
      %v1300 = vsel %vm342, 0.0, %v1272
      %v1301 = vsel %vm343, 0.0, %v1271
      %v1302 = vsel %vm344, 0.0, %v1286
      %v1303 = vpack.c.bf16 %v1192, %v1191
      %v1304 = vpack.c.bf16 %v1194, %v1193
      %v1305 = vpack.c.bf16 %v1196, %v1195
      %v1306 = vpack.c.bf16 %v1198, %v1197
      %v1307 = vpack.c.bf16 %v1200, %v1199
      %v1308 = vpack.c.bf16 %v1202, %v1201
      %v1309 = vpack.c.bf16 %v1204, %v1203
      %v1310 = vpack.c.bf16 %v1206, %v1205
      %v1319 = vunpack.c.l.b16 %v1303
      %v1320 = vunpack.c.h.b16 %v1303
      %v1321 = vunpack.c.l.b16 %v1304
      %v1322 = vunpack.c.h.b16 %v1304
      %v1323 = vunpack.c.l.b16 %v1305
      %v1324 = vunpack.c.h.b16 %v1305
      %v1325 = vunpack.c.l.b16 %v1306
      %v1326 = vunpack.c.h.b16 %v1306
      %v1327 = vunpack.c.l.b16 %v1307
      %v1328 = vunpack.c.h.b16 %v1307
      %v1329 = vunpack.c.l.b16 %v1308
      %v1330 = vunpack.c.h.b16 %v1308
      %v1331 = vunpack.c.l.b16 %v1309
      %v1332 = vunpack.c.h.b16 %v1309
      %v1333 = vunpack.c.l.b16 %v1310
      %v1334 = vunpack.c.h.b16 %v1310
      %v1335 = vpack.c.b16 %v1319, %v1319
      %v1336 = vpack.c.b16 %v1320, %v1320
      %v1337 = vpack.c.b16 %v1321, %v1321
      %v1338 = vpack.c.b16 %v1322, %v1322
      %v1339 = vpack.c.b16 %v1323, %v1323
      %v1340 = vpack.c.b16 %v1324, %v1324
      %v1341 = vpack.c.b16 %v1325, %v1325
      %v1342 = vpack.c.b16 %v1326, %v1326
      %v1343 = vpack.c.b16 %v1327, %v1327
      %v1344 = vpack.c.b16 %v1328, %v1328
      %v1345 = vpack.c.b16 %v1329, %v1329
      %v1346 = vpack.c.b16 %v1330, %v1330
      %v1347 = vpack.c.b16 %v1331, %v1331
      %v1348 = vpack.c.b16 %v1332, %v1332
      %v1349 = vpack.c.b16 %v1333, %v1333
      %v1350 = vpack.c.b16 %v1334, %v1334
      %1367 = vst [vmem:[%s349 + $0x48] sm:$0xf] %v1335
      %1368 = vst [vmem:[%s349 + $0x4c] sm:$0xf] %v1336
      %1369 = vst [vmem:[%s349 + $0x50] sm:$0xf] %v1337
      %1370 = vst [vmem:[%s349 + $0x54] sm:$0xf] %v1338
      %1371 = vst [vmem:[%s349 + $0x58] sm:$0xf] %v1339
      %1372 = vst [vmem:[%s349 + $0x5c] sm:$0xf] %v1340
      %1373 = vst [vmem:[%s349 + $0x60] sm:$0xf] %v1341
      %1374 = vst [vmem:[%s349 + $0x64] sm:$0xf] %v1342
      %1375 = vst [vmem:[%s349 + $0x68] sm:$0xf] %v1343
      %1376 = vst [vmem:[%s349 + $0x6c] sm:$0xf] %v1344
      %1377 = vst [vmem:[%s349 + $0x70] sm:$0xf] %v1345
      %1378 = vst [vmem:[%s349 + $0x74] sm:$0xf] %v1346
      %1379 = vst [vmem:[%s349 + $0x78] sm:$0xf] %v1347
      %1380 = vst [vmem:[%s349 + $0x7c] sm:$0xf] %v1348
      %1381 = vst [vmem:[%s349 + $0x80] sm:$0xf] %v1349
      %1382 = vst [vmem:[%s349 + $0x84] sm:$0xf] %v1350
      %v1383 = vpack.c.bf16 %v1240, %v1239
      %v1384 = vpack.c.bf16 %v1242, %v1241
      %v1385 = vpack.c.bf16 %v1244, %v1243
      %v1386 = vpack.c.bf16 %v1246, %v1245
      %v1387 = vpack.c.bf16 %v1248, %v1247
      %v1388 = vpack.c.bf16 %v1250, %v1249
      %v1389 = vpack.c.bf16 %v1252, %v1251
      %v1390 = vpack.c.bf16 %v1254, %v1253
      %v1399 = vunpack.c.l.b16 %v1383
      %v1400 = vunpack.c.h.b16 %v1383
      %v1401 = vunpack.c.l.b16 %v1384
      %v1402 = vunpack.c.h.b16 %v1384
      %v1403 = vunpack.c.l.b16 %v1385
      %v1404 = vunpack.c.h.b16 %v1385
      %v1405 = vunpack.c.l.b16 %v1386
      %v1406 = vunpack.c.h.b16 %v1386
      %v1407 = vunpack.c.l.b16 %v1387
      %v1408 = vunpack.c.h.b16 %v1387
      %v1409 = vunpack.c.l.b16 %v1388
      %v1410 = vunpack.c.h.b16 %v1388
      %v1411 = vunpack.c.l.b16 %v1389
      %v1412 = vunpack.c.h.b16 %v1389
      %v1413 = vunpack.c.l.b16 %v1390
      %v1414 = vunpack.c.h.b16 %v1390
      %v1415 = vpack.c.b16 %v1399, %v1399
      %v1416 = vpack.c.b16 %v1400, %v1400
      %v1417 = vpack.c.b16 %v1401, %v1401
      %v1418 = vpack.c.b16 %v1402, %v1402
      %v1419 = vpack.c.b16 %v1403, %v1403
      %v1420 = vpack.c.b16 %v1404, %v1404
      %v1421 = vpack.c.b16 %v1405, %v1405
      %v1422 = vpack.c.b16 %v1406, %v1406
      %v1423 = vpack.c.b16 %v1407, %v1407
      %v1424 = vpack.c.b16 %v1408, %v1408
      %v1425 = vpack.c.b16 %v1409, %v1409
      %v1426 = vpack.c.b16 %v1410, %v1410
      %v1427 = vpack.c.b16 %v1411, %v1411
      %v1428 = vpack.c.b16 %v1412, %v1412
      %v1429 = vpack.c.b16 %v1413, %v1413
      %v1430 = vpack.c.b16 %v1414, %v1414
      %1447 = vst [vmem:[#allocation2 + $0x48] sm:$0xf] %v1415
      %1448 = vst [vmem:[#allocation2 + $0x4c] sm:$0xf] %v1416
      %1449 = vst [vmem:[#allocation2 + $0x50] sm:$0xf] %v1417
      %1450 = vst [vmem:[#allocation2 + $0x54] sm:$0xf] %v1418
      %1451 = vst [vmem:[#allocation2 + $0x58] sm:$0xf] %v1419
      %1452 = vst [vmem:[#allocation2 + $0x5c] sm:$0xf] %v1420
      %1453 = vst [vmem:[#allocation2 + $0x60] sm:$0xf] %v1421
      %1454 = vst [vmem:[#allocation2 + $0x64] sm:$0xf] %v1422
      %1455 = vst [vmem:[#allocation2 + $0x68] sm:$0xf] %v1423
      %1456 = vst [vmem:[#allocation2 + $0x6c] sm:$0xf] %v1424
      %1457 = vst [vmem:[#allocation2 + $0x70] sm:$0xf] %v1425
      %1458 = vst [vmem:[#allocation2 + $0x74] sm:$0xf] %v1426
      %1459 = vst [vmem:[#allocation2 + $0x78] sm:$0xf] %v1427
      %1460 = vst [vmem:[#allocation2 + $0x7c] sm:$0xf] %v1428
      %1461 = vst [vmem:[#allocation2 + $0x80] sm:$0xf] %v1429
      %1462 = vst [vmem:[#allocation2 + $0x84] sm:$0xf] %v1430
      %v1463 = vpack.c.bf16 %v1288, %v1287
      %v1464 = vpack.c.bf16 %v1290, %v1289
      %v1465 = vpack.c.bf16 %v1292, %v1291
      %v1466 = vpack.c.bf16 %v1294, %v1293
      %v1467 = vpack.c.bf16 %v1296, %v1295
      %v1468 = vpack.c.bf16 %v1298, %v1297
      %v1469 = vpack.c.bf16 %v1300, %v1299
      %v1470 = vpack.c.bf16 %v1302, %v1301
      %v1479 = vunpack.c.l.b16 %v1463
      %v1480 = vunpack.c.h.b16 %v1463
      %v1481 = vunpack.c.l.b16 %v1464
      %v1482 = vunpack.c.h.b16 %v1464
      %v1483 = vunpack.c.l.b16 %v1465
      %v1484 = vunpack.c.h.b16 %v1465
      %v1485 = vunpack.c.l.b16 %v1466
      %v1486 = vunpack.c.h.b16 %v1466
      %v1487 = vunpack.c.l.b16 %v1467
      %v1488 = vunpack.c.h.b16 %v1467
      %v1489 = vunpack.c.l.b16 %v1468
      %v1490 = vunpack.c.h.b16 %v1468
      %v1491 = vunpack.c.l.b16 %v1469
      %v1492 = vunpack.c.h.b16 %v1469
      %v1493 = vunpack.c.l.b16 %v1470
      %v1494 = vunpack.c.h.b16 %v1470
      %v1495 = vpack.c.b16 %v1479, %v1479
      %v1496 = vpack.c.b16 %v1480, %v1480
      %v1497 = vpack.c.b16 %v1481, %v1481
      %v1498 = vpack.c.b16 %v1482, %v1482
      %v1499 = vpack.c.b16 %v1483, %v1483
      %v1500 = vpack.c.b16 %v1484, %v1484
      %v1501 = vpack.c.b16 %v1485, %v1485
      %v1502 = vpack.c.b16 %v1486, %v1486
      %v1503 = vpack.c.b16 %v1487, %v1487
      %v1504 = vpack.c.b16 %v1488, %v1488
      %v1505 = vpack.c.b16 %v1489, %v1489
      %v1506 = vpack.c.b16 %v1490, %v1490
      %v1507 = vpack.c.b16 %v1491, %v1491
      %v1508 = vpack.c.b16 %v1492, %v1492
      %v1509 = vpack.c.b16 %v1493, %v1493
      %v1510 = vpack.c.b16 %v1494, %v1494
      %1527 = vst [vmem:[%s354 + $0x48] sm:$0xf] %v1495
      %1528 = vst [vmem:[%s354 + $0x4c] sm:$0xf] %v1496
      %1529 = vst [vmem:[%s354 + $0x50] sm:$0xf] %v1497
      %1530 = vst [vmem:[%s354 + $0x54] sm:$0xf] %v1498
      %1531 = vst [vmem:[%s354 + $0x58] sm:$0xf] %v1499
      %1532 = vst [vmem:[%s354 + $0x5c] sm:$0xf] %v1500
      %1533 = vst [vmem:[%s354 + $0x60] sm:$0xf] %v1501
      %1534 = vst [vmem:[%s354 + $0x64] sm:$0xf] %v1502
      %1535 = vst [vmem:[%s354 + $0x68] sm:$0xf] %v1503
      %1536 = vst [vmem:[%s354 + $0x6c] sm:$0xf] %v1504
      %1537 = vst [vmem:[%s354 + $0x70] sm:$0xf] %v1505
      %1538 = vst [vmem:[%s354 + $0x74] sm:$0xf] %v1506
      %1539 = vst [vmem:[%s354 + $0x78] sm:$0xf] %v1507
      %1540 = vst [vmem:[%s354 + $0x7c] sm:$0xf] %v1508
      %1541 = vst [vmem:[%s354 + $0x80] sm:$0xf] %v1509
      %1542 = vst [vmem:[%s354 + $0x84] sm:$0xf] %v1510
      %v1543 = vld [vmem:[%s4] sm:$0x1]
      %v1545 = vlaneseq
      %v1546 = vshrl.u32 %v1545, 7
      %v1547 = vsub.s32 0, %v1546
      %v1548 = vrot.slane %v1543, %v1547
      %v1550 = vld [vmem:[#allocation2] sm:$0xf]
      %v1551 = vld [vmem:[#allocation2 + $0x4] sm:$0xf]
      %v1552 = vld [vmem:[#allocation2 + $0x8] sm:$0xf]
      %v1553 = vld [vmem:[#allocation2 + $0xc] sm:$0xf]
      %v1554 = vld [vmem:[#allocation2 + $0x10] sm:$0xf]
      %v1555 = vld [vmem:[#allocation2 + $0x14] sm:$0xf]
      %v1556 = vld [vmem:[#allocation2 + $0x18] sm:$0xf]
      %v1557 = vld [vmem:[#allocation2 + $0x1c] sm:$0xf]
      %v1558 = vld [vmem:[#allocation2 + $0x20] sm:$0xf]
      %v1559 = vld [vmem:[#allocation2 + $0x24] sm:$0xf]
      %v1560 = vld [vmem:[#allocation2 + $0x28] sm:$0xf]
      %v1561 = vld [vmem:[#allocation2 + $0x2c] sm:$0xf]
      %v1562 = vld [vmem:[#allocation2 + $0x30] sm:$0xf]
      %v1563 = vld [vmem:[#allocation2 + $0x34] sm:$0xf]
      %v1564 = vld [vmem:[#allocation2 + $0x38] sm:$0xf]
      %v1565 = vld [vmem:[#allocation2 + $0x3c] sm:$0xf]
      %v1566 = vld [vmem:[%s3] sm:$0xf]
      %v1567 = vld [vmem:[%s3 + $0x4] sm:$0xf]
      %v1568 = vld [vmem:[%s3 + $0x8] sm:$0xf]
      %v1569 = vld [vmem:[%s3 + $0xc] sm:$0xf]
      %v1570 = vld [vmem:[%s3 + $0x10] sm:$0xf]
      %v1571 = vld [vmem:[%s3 + $0x14] sm:$0xf]
      %v1572 = vld [vmem:[%s3 + $0x18] sm:$0xf]
      %v1573 = vld [vmem:[%s3 + $0x1c] sm:$0xf]
      %v1574 = vld [vmem:[%s3 + $0x20] sm:$0xf]
      %v1575 = vld [vmem:[%s3 + $0x24] sm:$0xf]
      %v1576 = vld [vmem:[%s3 + $0x28] sm:$0xf]
      %v1577 = vld [vmem:[%s3 + $0x2c] sm:$0xf]
      %v1578 = vld [vmem:[%s3 + $0x30] sm:$0xf]
      %v1579 = vld [vmem:[%s3 + $0x34] sm:$0xf]
      %v1580 = vld [vmem:[%s3 + $0x38] sm:$0xf]
      %v1581 = vld [vmem:[%s3 + $0x3c] sm:$0xf]
      %v1598 = vunpack.c.l.b16 %v1550
      %v1599 = vunpack.c.l.b16 %v1551
      %v1600 = vunpack.c.l.b16 %v1552
      %v1601 = vunpack.c.l.b16 %v1553
      %v1602 = vunpack.c.l.b16 %v1554
      %v1603 = vunpack.c.l.b16 %v1555
      %v1604 = vunpack.c.l.b16 %v1556
      %v1605 = vunpack.c.l.b16 %v1557
      %v1606 = vunpack.c.l.b16 %v1558
      %v1607 = vunpack.c.l.b16 %v1559
      %v1608 = vunpack.c.l.b16 %v1560
      %v1609 = vunpack.c.l.b16 %v1561
      %v1610 = vunpack.c.l.b16 %v1562
      %v1611 = vunpack.c.l.b16 %v1563
      %v1612 = vunpack.c.l.b16 %v1564
      %v1613 = vunpack.c.l.b16 %v1565
      %v1614 = vpack.c.b16 %v1599, %v1598
      %v1615 = vpack.c.b16 %v1601, %v1600
      %v1616 = vpack.c.b16 %v1603, %v1602
      %v1617 = vpack.c.b16 %v1605, %v1604
      %v1618 = vpack.c.b16 %v1607, %v1606
      %v1619 = vpack.c.b16 %v1609, %v1608
      %v1620 = vpack.c.b16 %v1611, %v1610
      %v1621 = vpack.c.b16 %v1613, %v1612
      %v1646 = vunpack.c.l.b16 %v1566
      %v1647 = vunpack.c.l.b16 %v1567
      %v1648 = vunpack.c.l.b16 %v1568
      %v1649 = vunpack.c.l.b16 %v1569
      %v1650 = vunpack.c.l.b16 %v1570
      %v1651 = vunpack.c.l.b16 %v1571
      %v1652 = vunpack.c.l.b16 %v1572
      %v1653 = vunpack.c.l.b16 %v1573
      %v1654 = vunpack.c.l.b16 %v1574
      %v1655 = vunpack.c.l.b16 %v1575
      %v1656 = vunpack.c.l.b16 %v1576
      %v1657 = vunpack.c.l.b16 %v1577
      %v1658 = vunpack.c.l.b16 %v1578
      %v1659 = vunpack.c.l.b16 %v1579
      %v1660 = vunpack.c.l.b16 %v1580
      %v1661 = vunpack.c.l.b16 %v1581
      %v1662 = vpack.c.b16 %v1647, %v1646
      %v1663 = vpack.c.b16 %v1649, %v1648
      %v1664 = vpack.c.b16 %v1651, %v1650
      %v1665 = vpack.c.b16 %v1653, %v1652
      %v1666 = vpack.c.b16 %v1655, %v1654
      %v1667 = vpack.c.b16 %v1657, %v1656
      %v1668 = vpack.c.b16 %v1659, %v1658
      %v1669 = vpack.c.b16 %v1661, %v1660
      %1678 = vmatprep.subr.bf16.mxu0 0
      %1679 = vmatpush1.bf16.msra.mxu0 %v1669
      %1680 = vmatprep.subr.bf16.mxu0 0
      %1681 = vmatpush1.bf16.msra.mxu0 %v1668
      %1682 = vmatprep.subr.bf16.mxu0 0
      %1683 = vmatpush1.bf16.msra.mxu0 %v1667
      %1684 = vmatprep.subr.bf16.mxu0 0
      %1685 = vmatpush1.bf16.msra.mxu0 %v1666
      %1686 = vmatprep.subr.bf16.mxu0 0
      %1687 = vmatpush1.bf16.msra.mxu0 %v1665
      %1688 = vmatprep.subr.bf16.mxu0 0
      %1689 = vmatpush1.bf16.msra.mxu0 %v1664
      %1690 = vmatprep.subr.bf16.mxu0 0
      %1691 = vmatpush1.bf16.msra.mxu0 %v1663
      %1692 = vmatprep.subr.bf16.mxu0 0
      %1693 = vmatpush1.bf16.msra.mxu0 %v1662
      %1694 = vmatprep.subr.bf16.mxu0 0
      %1695 = vmatpush2.bf16.msra.mxu0 0
      %1696 = vmatprep.subr.bf16.mxu0 0
      %1697 = vmatpush2.bf16.msra.mxu0 0
      %1698 = vmatprep.subr.bf16.mxu0 0
      %1699 = vmatpush2.bf16.msra.mxu0 0
      %1700 = vmatprep.subr.bf16.mxu0 0
      %1701 = vmatpush2.bf16.msra.mxu0 0
      %1702 = vmatprep.subr.bf16.mxu0 0
      %1703 = vmatpush2.bf16.msra.mxu0 0
      %1704 = vmatprep.subr.bf16.mxu0 0
      %1705 = vmatpush2.bf16.msra.mxu0 0
      %1706 = vmatprep.subr.bf16.mxu0 0
      %1707 = vmatpush2.bf16.msra.mxu0 0
      %1708 = vmatprep.subr.bf16.mxu0 0
      %1709 = vmatpush2.bf16.msra.mxu0 0
      %1710 = vmatprep.mubr.bf16.mxu0 0
      %1711 = vmatmul.mubr.bf16.gmra.mxu0 %v1614
      %v1712 = vpop.f32.mrf.mxu0
      %v1713 = vadd.f32 0.0, %v1712
      %v1714 = vpop.f32.mrf.mxu0
      %v1715 = vpop.f32.mrf.mxu0
      %v1716 = vadd.f32 0.0, %v1715
      %v1717 = vpop.f32.mrf.mxu0
      %1718 = vmatprep.mubr.bf16.mxu0 0
      %1719 = vmatmul.mubr.bf16.gmra.mxu0 %v1615
      %v1720 = vpop.f32.mrf.mxu0
      %v1721 = vadd.f32 0.0, %v1720
      %v1722 = vpop.f32.mrf.mxu0
      %v1723 = vpop.f32.mrf.mxu0
      %v1724 = vadd.f32 0.0, %v1723
      %v1725 = vpop.f32.mrf.mxu0
      %1726 = vmatprep.mubr.bf16.mxu0 0
      %1727 = vmatmul.mubr.bf16.gmra.mxu0 %v1616
      %v1728 = vpop.f32.mrf.mxu0
      %v1729 = vadd.f32 0.0, %v1728
      %v1730 = vpop.f32.mrf.mxu0
      %v1731 = vpop.f32.mrf.mxu0
      %v1732 = vadd.f32 0.0, %v1731
      %v1733 = vpop.f32.mrf.mxu0
      %1734 = vmatprep.mubr.bf16.mxu0 0
      %1735 = vmatmul.mubr.bf16.gmra.mxu0 %v1617
      %v1736 = vpop.f32.mrf.mxu0
      %v1737 = vadd.f32 0.0, %v1736
      %v1738 = vpop.f32.mrf.mxu0
      %v1739 = vpop.f32.mrf.mxu0
      %v1740 = vadd.f32 0.0, %v1739
      %v1741 = vpop.f32.mrf.mxu0
      %1742 = vmatprep.mubr.bf16.mxu0 0
      %1743 = vmatmul.mubr.bf16.gmra.mxu0 %v1618
      %v1744 = vpop.f32.mrf.mxu0
      %v1745 = vadd.f32 0.0, %v1744
      %v1746 = vpop.f32.mrf.mxu0
      %v1747 = vpop.f32.mrf.mxu0
      %v1748 = vadd.f32 0.0, %v1747
      %v1749 = vpop.f32.mrf.mxu0
      %1750 = vmatprep.mubr.bf16.mxu0 0
      %1751 = vmatmul.mubr.bf16.gmra.mxu0 %v1619
      %v1752 = vpop.f32.mrf.mxu0
      %v1753 = vadd.f32 0.0, %v1752
      %v1754 = vpop.f32.mrf.mxu0
      %v1755 = vpop.f32.mrf.mxu0
      %v1756 = vadd.f32 0.0, %v1755
      %v1757 = vpop.f32.mrf.mxu0
      %1758 = vmatprep.mubr.bf16.mxu0 0
      %1759 = vmatmul.mubr.bf16.gmra.mxu0 %v1620
      %v1760 = vpop.f32.mrf.mxu0
      %v1761 = vadd.f32 0.0, %v1760
      %v1762 = vpop.f32.mrf.mxu0
      %v1763 = vpop.f32.mrf.mxu0
      %v1764 = vadd.f32 0.0, %v1763
      %v1765 = vpop.f32.mrf.mxu0
      %1766 = vmatprep.mubr.bf16.mxu0 0
      %1767 = vmatmul.mubr.bf16.gmra.mxu0 %v1621
      %v1768 = vpop.f32.mrf.mxu0
      %v1769 = vadd.f32 0.0, %v1768
      %v1770 = vpop.f32.mrf.mxu0
      %v1771 = vpop.f32.mrf.mxu0
      %v1772 = vadd.f32 0.0, %v1771
      %v1773 = vpop.f32.mrf.mxu0
      %1774 = vdwg.mxu0
      %v1775 = vadd.f32 %v1548, %v1713
      %v1776 = vadd.f32 %v1548, %v1716
      %v1777 = vadd.f32 %v1548, %v1721
      %v1778 = vadd.f32 %v1548, %v1724
      %v1779 = vadd.f32 %v1548, %v1729
      %v1780 = vadd.f32 %v1548, %v1732
      %v1781 = vadd.f32 %v1548, %v1737
      %v1782 = vadd.f32 %v1548, %v1740
      %v1783 = vadd.f32 %v1548, %v1745
      %v1784 = vadd.f32 %v1548, %v1748
      %v1785 = vadd.f32 %v1548, %v1753
      %v1786 = vadd.f32 %v1548, %v1756
      %v1787 = vadd.f32 %v1548, %v1761
      %v1788 = vadd.f32 %v1548, %v1764
      %v1789 = vadd.f32 %v1548, %v1769
      %v1790 = vadd.f32 %v1548, %v1772
      %v1791 = vld [vmem:[%s349] sm:$0xf]
      %v1792 = vld [vmem:[%s349 + $0x4] sm:$0xf]
      %v1793 = vld [vmem:[%s349 + $0x8] sm:$0xf]
      %v1794 = vld [vmem:[%s349 + $0xc] sm:$0xf]
      %v1795 = vld [vmem:[%s349 + $0x10] sm:$0xf]
      %v1796 = vld [vmem:[%s349 + $0x14] sm:$0xf]
      %v1797 = vld [vmem:[%s349 + $0x18] sm:$0xf]
      %v1798 = vld [vmem:[%s349 + $0x1c] sm:$0xf]
      %v1799 = vld [vmem:[%s349 + $0x20] sm:$0xf]
      %v1800 = vld [vmem:[%s349 + $0x24] sm:$0xf]
      %v1801 = vld [vmem:[%s349 + $0x28] sm:$0xf]
      %v1802 = vld [vmem:[%s349 + $0x2c] sm:$0xf]
      %v1803 = vld [vmem:[%s349 + $0x30] sm:$0xf]
      %v1804 = vld [vmem:[%s349 + $0x34] sm:$0xf]
      %v1805 = vld [vmem:[%s349 + $0x38] sm:$0xf]
      %v1806 = vld [vmem:[%s349 + $0x3c] sm:$0xf]
      %s1807 = scalar_lea.vmem %s3, 64
      %v1808 = vld [vmem:[%s1807] sm:$0xf]
      %v1809 = vld [vmem:[%s1807 + $0x4] sm:$0xf]
      %v1810 = vld [vmem:[%s1807 + $0x8] sm:$0xf]
      %v1811 = vld [vmem:[%s1807 + $0xc] sm:$0xf]
      %v1812 = vld [vmem:[%s1807 + $0x10] sm:$0xf]
      %v1813 = vld [vmem:[%s1807 + $0x14] sm:$0xf]
      %v1814 = vld [vmem:[%s1807 + $0x18] sm:$0xf]
      %v1815 = vld [vmem:[%s1807 + $0x1c] sm:$0xf]
      %v1816 = vld [vmem:[%s1807 + $0x20] sm:$0xf]
      %v1817 = vld [vmem:[%s1807 + $0x24] sm:$0xf]
      %v1818 = vld [vmem:[%s1807 + $0x28] sm:$0xf]
      %v1819 = vld [vmem:[%s1807 + $0x2c] sm:$0xf]
      %v1820 = vld [vmem:[%s1807 + $0x30] sm:$0xf]
      %v1821 = vld [vmem:[%s1807 + $0x34] sm:$0xf]
      %v1822 = vld [vmem:[%s1807 + $0x38] sm:$0xf]
      %v1823 = vld [vmem:[%s1807 + $0x3c] sm:$0xf]
      %v1840 = vunpack.c.l.b16 %v1791
      %v1841 = vunpack.c.l.b16 %v1792
      %v1842 = vunpack.c.l.b16 %v1793
      %v1843 = vunpack.c.l.b16 %v1794
      %v1844 = vunpack.c.l.b16 %v1795
      %v1845 = vunpack.c.l.b16 %v1796
      %v1846 = vunpack.c.l.b16 %v1797
      %v1847 = vunpack.c.l.b16 %v1798
      %v1848 = vunpack.c.l.b16 %v1799
      %v1849 = vunpack.c.l.b16 %v1800
      %v1850 = vunpack.c.l.b16 %v1801
      %v1851 = vunpack.c.l.b16 %v1802
      %v1852 = vunpack.c.l.b16 %v1803
      %v1853 = vunpack.c.l.b16 %v1804
      %v1854 = vunpack.c.l.b16 %v1805
      %v1855 = vunpack.c.l.b16 %v1806
      %v1856 = vpack.c.b16 %v1841, %v1840
      %v1857 = vpack.c.b16 %v1843, %v1842
      %v1858 = vpack.c.b16 %v1845, %v1844
      %v1859 = vpack.c.b16 %v1847, %v1846
      %v1860 = vpack.c.b16 %v1849, %v1848
      %v1861 = vpack.c.b16 %v1851, %v1850
      %v1862 = vpack.c.b16 %v1853, %v1852
      %v1863 = vpack.c.b16 %v1855, %v1854
      %v1888 = vunpack.c.l.b16 %v1808
      %v1889 = vunpack.c.l.b16 %v1809
      %v1890 = vunpack.c.l.b16 %v1810
      %v1891 = vunpack.c.l.b16 %v1811
      %v1892 = vunpack.c.l.b16 %v1812
      %v1893 = vunpack.c.l.b16 %v1813
      %v1894 = vunpack.c.l.b16 %v1814
      %v1895 = vunpack.c.l.b16 %v1815
      %v1896 = vunpack.c.l.b16 %v1816
      %v1897 = vunpack.c.l.b16 %v1817
      %v1898 = vunpack.c.l.b16 %v1818
      %v1899 = vunpack.c.l.b16 %v1819
      %v1900 = vunpack.c.l.b16 %v1820
      %v1901 = vunpack.c.l.b16 %v1821
      %v1902 = vunpack.c.l.b16 %v1822
      %v1903 = vunpack.c.l.b16 %v1823
      %v1904 = vpack.c.b16 %v1889, %v1888
      %v1905 = vpack.c.b16 %v1891, %v1890
      %v1906 = vpack.c.b16 %v1893, %v1892
      %v1907 = vpack.c.b16 %v1895, %v1894
      %v1908 = vpack.c.b16 %v1897, %v1896
      %v1909 = vpack.c.b16 %v1899, %v1898
      %v1910 = vpack.c.b16 %v1901, %v1900
      %v1911 = vpack.c.b16 %v1903, %v1902
      %1920 = vmatprep.subr.bf16.mxu0 0
      %1921 = vmatpush1.bf16.msra.mxu0 %v1911
      %1922 = vmatprep.subr.bf16.mxu0 0
      %1923 = vmatpush1.bf16.msra.mxu0 %v1910
      %1924 = vmatprep.subr.bf16.mxu0 0
      %1925 = vmatpush1.bf16.msra.mxu0 %v1909
      %1926 = vmatprep.subr.bf16.mxu0 0
      %1927 = vmatpush1.bf16.msra.mxu0 %v1908
      %1928 = vmatprep.subr.bf16.mxu0 0
      %1929 = vmatpush1.bf16.msra.mxu0 %v1907
      %1930 = vmatprep.subr.bf16.mxu0 0
      %1931 = vmatpush1.bf16.msra.mxu0 %v1906
      %1932 = vmatprep.subr.bf16.mxu0 0
      %1933 = vmatpush1.bf16.msra.mxu0 %v1905
      %1934 = vmatprep.subr.bf16.mxu0 0
      %1935 = vmatpush1.bf16.msra.mxu0 %v1904
      %1936 = vmatprep.subr.bf16.mxu0 0
      %1937 = vmatpush2.bf16.msra.mxu0 0
      %1938 = vmatprep.subr.bf16.mxu0 0
      %1939 = vmatpush2.bf16.msra.mxu0 0
      %1940 = vmatprep.subr.bf16.mxu0 0
      %1941 = vmatpush2.bf16.msra.mxu0 0
      %1942 = vmatprep.subr.bf16.mxu0 0
      %1943 = vmatpush2.bf16.msra.mxu0 0
      %1944 = vmatprep.subr.bf16.mxu0 0
      %1945 = vmatpush2.bf16.msra.mxu0 0
      %1946 = vmatprep.subr.bf16.mxu0 0
      %1947 = vmatpush2.bf16.msra.mxu0 0
      %1948 = vmatprep.subr.bf16.mxu0 0
      %1949 = vmatpush2.bf16.msra.mxu0 0
      %1950 = vmatprep.subr.bf16.mxu0 0
      %1951 = vmatpush2.bf16.msra.mxu0 0
      %1952 = vmatprep.mubr.bf16.mxu0 0
      %1953 = vmatmul.mubr.bf16.gmra.mxu0 %v1856
      %v1954 = vpop.f32.mrf.mxu0
      %v1955 = vadd.f32 0.0, %v1954
      %v1956 = vpop.f32.mrf.mxu0
      %v1957 = vpop.f32.mrf.mxu0
      %v1958 = vadd.f32 0.0, %v1957
      %v1959 = vpop.f32.mrf.mxu0
      %1960 = vmatprep.mubr.bf16.mxu0 0
      %1961 = vmatmul.mubr.bf16.gmra.mxu0 %v1857
      %v1962 = vpop.f32.mrf.mxu0
      %v1963 = vadd.f32 0.0, %v1962
      %v1964 = vpop.f32.mrf.mxu0
      %v1965 = vpop.f32.mrf.mxu0
      %v1966 = vadd.f32 0.0, %v1965
      %v1967 = vpop.f32.mrf.mxu0
      %1968 = vmatprep.mubr.bf16.mxu0 0
      %1969 = vmatmul.mubr.bf16.gmra.mxu0 %v1858
      %v1970 = vpop.f32.mrf.mxu0
      %v1971 = vadd.f32 0.0, %v1970
      %v1972 = vpop.f32.mrf.mxu0
      %v1973 = vpop.f32.mrf.mxu0
      %v1974 = vadd.f32 0.0, %v1973
      %v1975 = vpop.f32.mrf.mxu0
      %1976 = vmatprep.mubr.bf16.mxu0 0
      %1977 = vmatmul.mubr.bf16.gmra.mxu0 %v1859
      %v1978 = vpop.f32.mrf.mxu0
      %v1979 = vadd.f32 0.0, %v1978
      %v1980 = vpop.f32.mrf.mxu0
      %v1981 = vpop.f32.mrf.mxu0
      %v1982 = vadd.f32 0.0, %v1981
      %v1983 = vpop.f32.mrf.mxu0
      %1984 = vmatprep.mubr.bf16.mxu0 0
      %1985 = vmatmul.mubr.bf16.gmra.mxu0 %v1860
      %v1986 = vpop.f32.mrf.mxu0
      %v1987 = vadd.f32 0.0, %v1986
      %v1988 = vpop.f32.mrf.mxu0
      %v1989 = vpop.f32.mrf.mxu0
      %v1990 = vadd.f32 0.0, %v1989
      %v1991 = vpop.f32.mrf.mxu0
      %1992 = vmatprep.mubr.bf16.mxu0 0
      %1993 = vmatmul.mubr.bf16.gmra.mxu0 %v1861
      %v1994 = vpop.f32.mrf.mxu0
      %v1995 = vadd.f32 0.0, %v1994
      %v1996 = vpop.f32.mrf.mxu0
      %v1997 = vpop.f32.mrf.mxu0
      %v1998 = vadd.f32 0.0, %v1997
      %v1999 = vpop.f32.mrf.mxu0
      %2000 = vmatprep.mubr.bf16.mxu0 0
      %2001 = vmatmul.mubr.bf16.gmra.mxu0 %v1862
      %v2002 = vpop.f32.mrf.mxu0
      %v2003 = vadd.f32 0.0, %v2002
      %v2004 = vpop.f32.mrf.mxu0
      %v2005 = vpop.f32.mrf.mxu0
      %v2006 = vadd.f32 0.0, %v2005
      %v2007 = vpop.f32.mrf.mxu0
      %2008 = vmatprep.mubr.bf16.mxu0 0
      %2009 = vmatmul.mubr.bf16.gmra.mxu0 %v1863
      %v2010 = vpop.f32.mrf.mxu0
      %v2011 = vadd.f32 0.0, %v2010
      %v2012 = vpop.f32.mrf.mxu0
      %v2013 = vpop.f32.mrf.mxu0
      %v2014 = vadd.f32 0.0, %v2013
      %v2015 = vpop.f32.mrf.mxu0
      %2016 = vdwg.mxu0
      %v2017 = vadd.f32 %v1775, %v1955
      %v2018 = vadd.f32 %v1776, %v1958
      %v2019 = vadd.f32 %v1777, %v1963
      %v2020 = vadd.f32 %v1778, %v1966
      %v2021 = vadd.f32 %v1779, %v1971
      %v2022 = vadd.f32 %v1780, %v1974
      %v2023 = vadd.f32 %v1781, %v1979
      %v2024 = vadd.f32 %v1782, %v1982
      %v2025 = vadd.f32 %v1783, %v1987
      %v2026 = vadd.f32 %v1784, %v1990
      %v2027 = vadd.f32 %v1785, %v1995
      %v2028 = vadd.f32 %v1786, %v1998
      %v2029 = vadd.f32 %v1787, %v2003
      %v2030 = vadd.f32 %v1788, %v2006
      %v2031 = vadd.f32 %v1789, %v2011
      %v2032 = vadd.f32 %v1790, %v2014
      %v2033 = vld [vmem:[%s354] sm:$0xf]
      %v2034 = vld [vmem:[%s354 + $0x4] sm:$0xf]
      %v2035 = vld [vmem:[%s354 + $0x8] sm:$0xf]
      %v2036 = vld [vmem:[%s354 + $0xc] sm:$0xf]
      %v2037 = vld [vmem:[%s354 + $0x10] sm:$0xf]
      %v2038 = vld [vmem:[%s354 + $0x14] sm:$0xf]
      %v2039 = vld [vmem:[%s354 + $0x18] sm:$0xf]
      %v2040 = vld [vmem:[%s354 + $0x1c] sm:$0xf]
      %v2041 = vld [vmem:[%s354 + $0x20] sm:$0xf]
      %v2042 = vld [vmem:[%s354 + $0x24] sm:$0xf]
      %v2043 = vld [vmem:[%s354 + $0x28] sm:$0xf]
      %v2044 = vld [vmem:[%s354 + $0x2c] sm:$0xf]
      %v2045 = vld [vmem:[%s354 + $0x30] sm:$0xf]
      %v2046 = vld [vmem:[%s354 + $0x34] sm:$0xf]
      %v2047 = vld [vmem:[%s354 + $0x38] sm:$0xf]
      %v2048 = vld [vmem:[%s354 + $0x3c] sm:$0xf]
      %s2049 = scalar_lea.vmem %s3, 128
      %v2050 = vld [vmem:[%s2049] sm:$0xf]
      %v2051 = vld [vmem:[%s2049 + $0x4] sm:$0xf]
      %v2052 = vld [vmem:[%s2049 + $0x8] sm:$0xf]
      %v2053 = vld [vmem:[%s2049 + $0xc] sm:$0xf]
      %v2054 = vld [vmem:[%s2049 + $0x10] sm:$0xf]
      %v2055 = vld [vmem:[%s2049 + $0x14] sm:$0xf]
      %v2056 = vld [vmem:[%s2049 + $0x18] sm:$0xf]
      %v2057 = vld [vmem:[%s2049 + $0x1c] sm:$0xf]
      %v2058 = vld [vmem:[%s2049 + $0x20] sm:$0xf]
      %v2059 = vld [vmem:[%s2049 + $0x24] sm:$0xf]
      %v2060 = vld [vmem:[%s2049 + $0x28] sm:$0xf]
      %v2061 = vld [vmem:[%s2049 + $0x2c] sm:$0xf]
      %v2062 = vld [vmem:[%s2049 + $0x30] sm:$0xf]
      %v2063 = vld [vmem:[%s2049 + $0x34] sm:$0xf]
      %v2064 = vld [vmem:[%s2049 + $0x38] sm:$0xf]
      %v2065 = vld [vmem:[%s2049 + $0x3c] sm:$0xf]
      %v2082 = vunpack.c.l.b16 %v2033
      %v2083 = vunpack.c.l.b16 %v2034
      %v2084 = vunpack.c.l.b16 %v2035
      %v2085 = vunpack.c.l.b16 %v2036
      %v2086 = vunpack.c.l.b16 %v2037
      %v2087 = vunpack.c.l.b16 %v2038
      %v2088 = vunpack.c.l.b16 %v2039
      %v2089 = vunpack.c.l.b16 %v2040
      %v2090 = vunpack.c.l.b16 %v2041
      %v2091 = vunpack.c.l.b16 %v2042
      %v2092 = vunpack.c.l.b16 %v2043
      %v2093 = vunpack.c.l.b16 %v2044
      %v2094 = vunpack.c.l.b16 %v2045
      %v2095 = vunpack.c.l.b16 %v2046
      %v2096 = vunpack.c.l.b16 %v2047
      %v2097 = vunpack.c.l.b16 %v2048
      %v2098 = vpack.c.b16 %v2083, %v2082
      %v2099 = vpack.c.b16 %v2085, %v2084
      %v2100 = vpack.c.b16 %v2087, %v2086
      %v2101 = vpack.c.b16 %v2089, %v2088
      %v2102 = vpack.c.b16 %v2091, %v2090
      %v2103 = vpack.c.b16 %v2093, %v2092
      %v2104 = vpack.c.b16 %v2095, %v2094
      %v2105 = vpack.c.b16 %v2097, %v2096
      %v2130 = vunpack.c.l.b16 %v2050
      %v2131 = vunpack.c.l.b16 %v2051
      %v2132 = vunpack.c.l.b16 %v2052
      %v2133 = vunpack.c.l.b16 %v2053
      %v2134 = vunpack.c.l.b16 %v2054
      %v2135 = vunpack.c.l.b16 %v2055
      %v2136 = vunpack.c.l.b16 %v2056
      %v2137 = vunpack.c.l.b16 %v2057
      %v2138 = vunpack.c.l.b16 %v2058
      %v2139 = vunpack.c.l.b16 %v2059
      %v2140 = vunpack.c.l.b16 %v2060
      %v2141 = vunpack.c.l.b16 %v2061
      %v2142 = vunpack.c.l.b16 %v2062
      %v2143 = vunpack.c.l.b16 %v2063
      %v2144 = vunpack.c.l.b16 %v2064
      %v2145 = vunpack.c.l.b16 %v2065
      %v2146 = vpack.c.b16 %v2131, %v2130
      %v2147 = vpack.c.b16 %v2133, %v2132
      %v2148 = vpack.c.b16 %v2135, %v2134
      %v2149 = vpack.c.b16 %v2137, %v2136
      %v2150 = vpack.c.b16 %v2139, %v2138
      %v2151 = vpack.c.b16 %v2141, %v2140
      %v2152 = vpack.c.b16 %v2143, %v2142
      %v2153 = vpack.c.b16 %v2145, %v2144
      %2162 = vmatprep.subr.bf16.mxu0 0
      %2163 = vmatpush1.bf16.msra.mxu0 %v2153
      %2164 = vmatprep.subr.bf16.mxu0 0
      %2165 = vmatpush1.bf16.msra.mxu0 %v2152
      %2166 = vmatprep.subr.bf16.mxu0 0
      %2167 = vmatpush1.bf16.msra.mxu0 %v2151
      %2168 = vmatprep.subr.bf16.mxu0 0
      %2169 = vmatpush1.bf16.msra.mxu0 %v2150
      %2170 = vmatprep.subr.bf16.mxu0 0
      %2171 = vmatpush1.bf16.msra.mxu0 %v2149
      %2172 = vmatprep.subr.bf16.mxu0 0
      %2173 = vmatpush1.bf16.msra.mxu0 %v2148
      %2174 = vmatprep.subr.bf16.mxu0 0
      %2175 = vmatpush1.bf16.msra.mxu0 %v2147
      %2176 = vmatprep.subr.bf16.mxu0 0
      %2177 = vmatpush1.bf16.msra.mxu0 %v2146
      %2178 = vmatprep.subr.bf16.mxu0 0
      %2179 = vmatpush2.bf16.msra.mxu0 0
      %2180 = vmatprep.subr.bf16.mxu0 0
      %2181 = vmatpush2.bf16.msra.mxu0 0
      %2182 = vmatprep.subr.bf16.mxu0 0
      %2183 = vmatpush2.bf16.msra.mxu0 0
      %2184 = vmatprep.subr.bf16.mxu0 0
      %2185 = vmatpush2.bf16.msra.mxu0 0
      %2186 = vmatprep.subr.bf16.mxu0 0
      %2187 = vmatpush2.bf16.msra.mxu0 0
      %2188 = vmatprep.subr.bf16.mxu0 0
      %2189 = vmatpush2.bf16.msra.mxu0 0
      %2190 = vmatprep.subr.bf16.mxu0 0
      %2191 = vmatpush2.bf16.msra.mxu0 0
      %2192 = vmatprep.subr.bf16.mxu0 0
      %2193 = vmatpush2.bf16.msra.mxu0 0
      %2194 = vmatprep.mubr.bf16.mxu0 0
      %2195 = vmatmul.mubr.bf16.gmra.mxu0 %v2098
      %v2196 = vpop.f32.mrf.mxu0
      %v2197 = vadd.f32 0.0, %v2196
      %v2198 = vpop.f32.mrf.mxu0
      %v2199 = vpop.f32.mrf.mxu0
      %v2200 = vadd.f32 0.0, %v2199
      %v2201 = vpop.f32.mrf.mxu0
      %2202 = vmatprep.mubr.bf16.mxu0 0
      %2203 = vmatmul.mubr.bf16.gmra.mxu0 %v2099
      %v2204 = vpop.f32.mrf.mxu0
      %v2205 = vadd.f32 0.0, %v2204
      %v2206 = vpop.f32.mrf.mxu0
      %v2207 = vpop.f32.mrf.mxu0
      %v2208 = vadd.f32 0.0, %v2207
      %v2209 = vpop.f32.mrf.mxu0
      %2210 = vmatprep.mubr.bf16.mxu0 0
      %2211 = vmatmul.mubr.bf16.gmra.mxu0 %v2100
      %v2212 = vpop.f32.mrf.mxu0
      %v2213 = vadd.f32 0.0, %v2212
      %v2214 = vpop.f32.mrf.mxu0
      %v2215 = vpop.f32.mrf.mxu0
      %v2216 = vadd.f32 0.0, %v2215
      %v2217 = vpop.f32.mrf.mxu0
      %2218 = vmatprep.mubr.bf16.mxu0 0
      %2219 = vmatmul.mubr.bf16.gmra.mxu0 %v2101
      %v2220 = vpop.f32.mrf.mxu0
      %v2221 = vadd.f32 0.0, %v2220
      %v2222 = vpop.f32.mrf.mxu0
      %v2223 = vpop.f32.mrf.mxu0
      %v2224 = vadd.f32 0.0, %v2223
      %v2225 = vpop.f32.mrf.mxu0
      %2226 = vmatprep.mubr.bf16.mxu0 0
      %2227 = vmatmul.mubr.bf16.gmra.mxu0 %v2102
      %v2228 = vpop.f32.mrf.mxu0
      %v2229 = vadd.f32 0.0, %v2228
      %v2230 = vpop.f32.mrf.mxu0
      %v2231 = vpop.f32.mrf.mxu0
      %v2232 = vadd.f32 0.0, %v2231
      %v2233 = vpop.f32.mrf.mxu0
      %2234 = vmatprep.mubr.bf16.mxu0 0
      %2235 = vmatmul.mubr.bf16.gmra.mxu0 %v2103
      %v2236 = vpop.f32.mrf.mxu0
      %v2237 = vadd.f32 0.0, %v2236
      %v2238 = vpop.f32.mrf.mxu0
      %v2239 = vpop.f32.mrf.mxu0
      %v2240 = vadd.f32 0.0, %v2239
      %v2241 = vpop.f32.mrf.mxu0
      %2242 = vmatprep.mubr.bf16.mxu0 0
      %2243 = vmatmul.mubr.bf16.gmra.mxu0 %v2104
      %v2244 = vpop.f32.mrf.mxu0
      %v2245 = vadd.f32 0.0, %v2244
      %v2246 = vpop.f32.mrf.mxu0
      %v2247 = vpop.f32.mrf.mxu0
      %v2248 = vadd.f32 0.0, %v2247
      %v2249 = vpop.f32.mrf.mxu0
      %2250 = vmatprep.mubr.bf16.mxu0 0
      %2251 = vmatmul.mubr.bf16.gmra.mxu0 %v2105
      %v2252 = vpop.f32.mrf.mxu0
      %v2253 = vadd.f32 0.0, %v2252
      %v2254 = vpop.f32.mrf.mxu0
      %v2255 = vpop.f32.mrf.mxu0
      %v2256 = vadd.f32 0.0, %v2255
      %v2257 = vpop.f32.mrf.mxu0
      %2258 = vdwg.mxu0
      %v2259 = vadd.f32 %v2017, %v2197
      %v2260 = vadd.f32 %v2018, %v2200
      %v2261 = vadd.f32 %v2019, %v2205
      %v2262 = vadd.f32 %v2020, %v2208
      %v2263 = vadd.f32 %v2021, %v2213
      %v2264 = vadd.f32 %v2022, %v2216
      %v2265 = vadd.f32 %v2023, %v2221
      %v2266 = vadd.f32 %v2024, %v2224
      %v2267 = vadd.f32 %v2025, %v2229
      %v2268 = vadd.f32 %v2026, %v2232
      %v2269 = vadd.f32 %v2027, %v2237
      %v2270 = vadd.f32 %v2028, %v2240
      %v2271 = vadd.f32 %v2029, %v2245
      %v2272 = vadd.f32 %v2030, %v2248
      %v2273 = vadd.f32 %v2031, %v2253
      %v2274 = vadd.f32 %v2032, %v2256
      %v2275 = vld [vmem:[#allocation2 + $0x8] sm:$0xf]
      %v2276 = vld [vmem:[#allocation2 + $0xc] sm:$0xf]
      %v2277 = vld [vmem:[#allocation2 + $0x10] sm:$0xf]
      %v2278 = vld [vmem:[#allocation2 + $0x14] sm:$0xf]
      %v2279 = vld [vmem:[#allocation2 + $0x18] sm:$0xf]
      %v2280 = vld [vmem:[#allocation2 + $0x1c] sm:$0xf]
      %v2281 = vld [vmem:[#allocation2 + $0x20] sm:$0xf]
      %v2282 = vld [vmem:[#allocation2 + $0x24] sm:$0xf]
      %v2283 = vld [vmem:[#allocation2 + $0x28] sm:$0xf]
      %v2284 = vld [vmem:[#allocation2 + $0x2c] sm:$0xf]
      %v2285 = vld [vmem:[#allocation2 + $0x30] sm:$0xf]
      %v2286 = vld [vmem:[#allocation2 + $0x34] sm:$0xf]
      %v2287 = vld [vmem:[#allocation2 + $0x38] sm:$0xf]
      %v2288 = vld [vmem:[#allocation2 + $0x3c] sm:$0xf]
      %v2289 = vld [vmem:[#allocation2 + $0x40] sm:$0xf]
      %v2290 = vld [vmem:[#allocation2 + $0x44] sm:$0xf]
      %s2291 = scalar_lea.vmem %s3, 192
      %v2292 = vld [vmem:[%s2291] sm:$0xf]
      %v2293 = vld [vmem:[%s2291 + $0x4] sm:$0xf]
      %v2294 = vld [vmem:[%s2291 + $0x8] sm:$0xf]
      %v2295 = vld [vmem:[%s2291 + $0xc] sm:$0xf]
      %v2296 = vld [vmem:[%s2291 + $0x10] sm:$0xf]
      %v2297 = vld [vmem:[%s2291 + $0x14] sm:$0xf]
      %v2298 = vld [vmem:[%s2291 + $0x18] sm:$0xf]
      %v2299 = vld [vmem:[%s2291 + $0x1c] sm:$0xf]
      %v2300 = vld [vmem:[%s2291 + $0x20] sm:$0xf]
      %v2301 = vld [vmem:[%s2291 + $0x24] sm:$0xf]
      %v2302 = vld [vmem:[%s2291 + $0x28] sm:$0xf]
      %v2303 = vld [vmem:[%s2291 + $0x2c] sm:$0xf]
      %v2304 = vld [vmem:[%s2291 + $0x30] sm:$0xf]
      %v2305 = vld [vmem:[%s2291 + $0x34] sm:$0xf]
      %v2306 = vld [vmem:[%s2291 + $0x38] sm:$0xf]
      %v2307 = vld [vmem:[%s2291 + $0x3c] sm:$0xf]
      %v2324 = vunpack.c.l.b16 %v2275
      %v2325 = vunpack.c.l.b16 %v2276
      %v2326 = vunpack.c.l.b16 %v2277
      %v2327 = vunpack.c.l.b16 %v2278
      %v2328 = vunpack.c.l.b16 %v2279
      %v2329 = vunpack.c.l.b16 %v2280
      %v2330 = vunpack.c.l.b16 %v2281
      %v2331 = vunpack.c.l.b16 %v2282
      %v2332 = vunpack.c.l.b16 %v2283
      %v2333 = vunpack.c.l.b16 %v2284
      %v2334 = vunpack.c.l.b16 %v2285
      %v2335 = vunpack.c.l.b16 %v2286
      %v2336 = vunpack.c.l.b16 %v2287
      %v2337 = vunpack.c.l.b16 %v2288
      %v2338 = vunpack.c.l.b16 %v2289
      %v2339 = vunpack.c.l.b16 %v2290
      %v2340 = vpack.c.b16 %v2325, %v2324
      %v2341 = vpack.c.b16 %v2327, %v2326
      %v2342 = vpack.c.b16 %v2329, %v2328
      %v2343 = vpack.c.b16 %v2331, %v2330
      %v2344 = vpack.c.b16 %v2333, %v2332
      %v2345 = vpack.c.b16 %v2335, %v2334
      %v2346 = vpack.c.b16 %v2337, %v2336
      %v2347 = vpack.c.b16 %v2339, %v2338
      %v2372 = vunpack.c.l.b16 %v2292
      %v2373 = vunpack.c.l.b16 %v2293
      %v2374 = vunpack.c.l.b16 %v2294
      %v2375 = vunpack.c.l.b16 %v2295
      %v2376 = vunpack.c.l.b16 %v2296
      %v2377 = vunpack.c.l.b16 %v2297
      %v2378 = vunpack.c.l.b16 %v2298
      %v2379 = vunpack.c.l.b16 %v2299
      %v2380 = vunpack.c.l.b16 %v2300
      %v2381 = vunpack.c.l.b16 %v2301
      %v2382 = vunpack.c.l.b16 %v2302
      %v2383 = vunpack.c.l.b16 %v2303
      %v2384 = vunpack.c.l.b16 %v2304
      %v2385 = vunpack.c.l.b16 %v2305
      %v2386 = vunpack.c.l.b16 %v2306
      %v2387 = vunpack.c.l.b16 %v2307
      %v2388 = vpack.c.b16 %v2373, %v2372
      %v2389 = vpack.c.b16 %v2375, %v2374
      %v2390 = vpack.c.b16 %v2377, %v2376
      %v2391 = vpack.c.b16 %v2379, %v2378
      %v2392 = vpack.c.b16 %v2381, %v2380
      %v2393 = vpack.c.b16 %v2383, %v2382
      %v2394 = vpack.c.b16 %v2385, %v2384
      %v2395 = vpack.c.b16 %v2387, %v2386
      %2404 = vmatprep.subr.bf16.mxu0 0
      %2405 = vmatpush1.bf16.msra.mxu0 %v2395
      %2406 = vmatprep.subr.bf16.mxu0 0
      %2407 = vmatpush1.bf16.msra.mxu0 %v2394
      %2408 = vmatprep.subr.bf16.mxu0 0
      %2409 = vmatpush1.bf16.msra.mxu0 %v2393
      %2410 = vmatprep.subr.bf16.mxu0 0
      %2411 = vmatpush1.bf16.msra.mxu0 %v2392
      %2412 = vmatprep.subr.bf16.mxu0 0
      %2413 = vmatpush1.bf16.msra.mxu0 %v2391
      %2414 = vmatprep.subr.bf16.mxu0 0
      %2415 = vmatpush1.bf16.msra.mxu0 %v2390
      %2416 = vmatprep.subr.bf16.mxu0 0
      %2417 = vmatpush1.bf16.msra.mxu0 %v2389
      %2418 = vmatprep.subr.bf16.mxu0 0
      %2419 = vmatpush1.bf16.msra.mxu0 %v2388
      %2420 = vmatprep.subr.bf16.mxu0 0
      %2421 = vmatpush2.bf16.msra.mxu0 0
      %2422 = vmatprep.subr.bf16.mxu0 0
      %2423 = vmatpush2.bf16.msra.mxu0 0
      %2424 = vmatprep.subr.bf16.mxu0 0
      %2425 = vmatpush2.bf16.msra.mxu0 0
      %2426 = vmatprep.subr.bf16.mxu0 0
      %2427 = vmatpush2.bf16.msra.mxu0 0
      %2428 = vmatprep.subr.bf16.mxu0 0
      %2429 = vmatpush2.bf16.msra.mxu0 0
      %2430 = vmatprep.subr.bf16.mxu0 0
      %2431 = vmatpush2.bf16.msra.mxu0 0
      %2432 = vmatprep.subr.bf16.mxu0 0
      %2433 = vmatpush2.bf16.msra.mxu0 0
      %2434 = vmatprep.subr.bf16.mxu0 0
      %2435 = vmatpush2.bf16.msra.mxu0 0
      %2436 = vmatprep.mubr.bf16.mxu0 0
      %2437 = vmatmul.mubr.bf16.gmra.mxu0 %v2340
      %v2438 = vpop.f32.mrf.mxu0
      %v2439 = vadd.f32 0.0, %v2438
      %v2440 = vpop.f32.mrf.mxu0
      %v2441 = vpop.f32.mrf.mxu0
      %v2442 = vadd.f32 0.0, %v2441
      %v2443 = vpop.f32.mrf.mxu0
      %2444 = vmatprep.mubr.bf16.mxu0 0
      %2445 = vmatmul.mubr.bf16.gmra.mxu0 %v2341
      %v2446 = vpop.f32.mrf.mxu0
      %v2447 = vadd.f32 0.0, %v2446
      %v2448 = vpop.f32.mrf.mxu0
      %v2449 = vpop.f32.mrf.mxu0
      %v2450 = vadd.f32 0.0, %v2449
      %v2451 = vpop.f32.mrf.mxu0
      %2452 = vmatprep.mubr.bf16.mxu0 0
      %2453 = vmatmul.mubr.bf16.gmra.mxu0 %v2342
      %v2454 = vpop.f32.mrf.mxu0
      %v2455 = vadd.f32 0.0, %v2454
      %v2456 = vpop.f32.mrf.mxu0
      %v2457 = vpop.f32.mrf.mxu0
      %v2458 = vadd.f32 0.0, %v2457
      %v2459 = vpop.f32.mrf.mxu0
      %2460 = vmatprep.mubr.bf16.mxu0 0
      %2461 = vmatmul.mubr.bf16.gmra.mxu0 %v2343
      %v2462 = vpop.f32.mrf.mxu0
      %v2463 = vadd.f32 0.0, %v2462
      %v2464 = vpop.f32.mrf.mxu0
      %v2465 = vpop.f32.mrf.mxu0
      %v2466 = vadd.f32 0.0, %v2465
      %v2467 = vpop.f32.mrf.mxu0
      %2468 = vmatprep.mubr.bf16.mxu0 0
      %2469 = vmatmul.mubr.bf16.gmra.mxu0 %v2344
      %v2470 = vpop.f32.mrf.mxu0
      %v2471 = vadd.f32 0.0, %v2470
      %v2472 = vpop.f32.mrf.mxu0
      %v2473 = vpop.f32.mrf.mxu0
      %v2474 = vadd.f32 0.0, %v2473
      %v2475 = vpop.f32.mrf.mxu0
      %2476 = vmatprep.mubr.bf16.mxu0 0
      %2477 = vmatmul.mubr.bf16.gmra.mxu0 %v2345
      %v2478 = vpop.f32.mrf.mxu0
      %v2479 = vadd.f32 0.0, %v2478
      %v2480 = vpop.f32.mrf.mxu0
      %v2481 = vpop.f32.mrf.mxu0
      %v2482 = vadd.f32 0.0, %v2481
      %v2483 = vpop.f32.mrf.mxu0
      %2484 = vmatprep.mubr.bf16.mxu0 0
      %2485 = vmatmul.mubr.bf16.gmra.mxu0 %v2346
      %v2486 = vpop.f32.mrf.mxu0
      %v2487 = vadd.f32 0.0, %v2486
      %v2488 = vpop.f32.mrf.mxu0
      %v2489 = vpop.f32.mrf.mxu0
      %v2490 = vadd.f32 0.0, %v2489
      %v2491 = vpop.f32.mrf.mxu0
      %2492 = vmatprep.mubr.bf16.mxu0 0
      %2493 = vmatmul.mubr.bf16.gmra.mxu0 %v2347
      %v2494 = vpop.f32.mrf.mxu0
      %v2495 = vadd.f32 0.0, %v2494
      %v2496 = vpop.f32.mrf.mxu0
      %v2497 = vpop.f32.mrf.mxu0
      %v2498 = vadd.f32 0.0, %v2497
      %v2499 = vpop.f32.mrf.mxu0
      %2500 = vdwg.mxu0
      %v2501 = vadd.f32 %v2259, %v2439
      %v2502 = vadd.f32 %v2260, %v2442
      %v2503 = vadd.f32 %v2261, %v2447
      %v2504 = vadd.f32 %v2262, %v2450
      %v2505 = vadd.f32 %v2263, %v2455
      %v2506 = vadd.f32 %v2264, %v2458
      %v2507 = vadd.f32 %v2265, %v2463
      %v2508 = vadd.f32 %v2266, %v2466
      %v2509 = vadd.f32 %v2267, %v2471
      %v2510 = vadd.f32 %v2268, %v2474
      %v2511 = vadd.f32 %v2269, %v2479
      %v2512 = vadd.f32 %v2270, %v2482
      %v2513 = vadd.f32 %v2271, %v2487
      %v2514 = vadd.f32 %v2272, %v2490
      %v2515 = vadd.f32 %v2273, %v2495
      %v2516 = vadd.f32 %v2274, %v2498
      %v2517 = vld [vmem:[%s349 + $0x8] sm:$0xf]
      %v2518 = vld [vmem:[%s349 + $0xc] sm:$0xf]
      %v2519 = vld [vmem:[%s349 + $0x10] sm:$0xf]
      %v2520 = vld [vmem:[%s349 + $0x14] sm:$0xf]
      %v2521 = vld [vmem:[%s349 + $0x18] sm:$0xf]
      %v2522 = vld [vmem:[%s349 + $0x1c] sm:$0xf]
      %v2523 = vld [vmem:[%s349 + $0x20] sm:$0xf]
      %v2524 = vld [vmem:[%s349 + $0x24] sm:$0xf]
      %v2525 = vld [vmem:[%s349 + $0x28] sm:$0xf]
      %v2526 = vld [vmem:[%s349 + $0x2c] sm:$0xf]
      %v2527 = vld [vmem:[%s349 + $0x30] sm:$0xf]
      %v2528 = vld [vmem:[%s349 + $0x34] sm:$0xf]
      %v2529 = vld [vmem:[%s349 + $0x38] sm:$0xf]
      %v2530 = vld [vmem:[%s349 + $0x3c] sm:$0xf]
      %v2531 = vld [vmem:[%s349 + $0x40] sm:$0xf]
      %v2532 = vld [vmem:[%s349 + $0x44] sm:$0xf]
      %s2533 = scalar_lea.vmem %s3, 256
      %v2534 = vld [vmem:[%s2533] sm:$0xf]
      %v2535 = vld [vmem:[%s2533 + $0x4] sm:$0xf]
      %v2536 = vld [vmem:[%s2533 + $0x8] sm:$0xf]
      %v2537 = vld [vmem:[%s2533 + $0xc] sm:$0xf]
      %v2538 = vld [vmem:[%s2533 + $0x10] sm:$0xf]
      %v2539 = vld [vmem:[%s2533 + $0x14] sm:$0xf]
      %v2540 = vld [vmem:[%s2533 + $0x18] sm:$0xf]
      %v2541 = vld [vmem:[%s2533 + $0x1c] sm:$0xf]
      %v2542 = vld [vmem:[%s2533 + $0x20] sm:$0xf]
      %v2543 = vld [vmem:[%s2533 + $0x24] sm:$0xf]
      %v2544 = vld [vmem:[%s2533 + $0x28] sm:$0xf]
      %v2545 = vld [vmem:[%s2533 + $0x2c] sm:$0xf]
      %v2546 = vld [vmem:[%s2533 + $0x30] sm:$0xf]
      %v2547 = vld [vmem:[%s2533 + $0x34] sm:$0xf]
      %v2548 = vld [vmem:[%s2533 + $0x38] sm:$0xf]
      %v2549 = vld [vmem:[%s2533 + $0x3c] sm:$0xf]
      %v2566 = vunpack.c.l.b16 %v2517
      %v2567 = vunpack.c.l.b16 %v2518
      %v2568 = vunpack.c.l.b16 %v2519
      %v2569 = vunpack.c.l.b16 %v2520
      %v2570 = vunpack.c.l.b16 %v2521
      %v2571 = vunpack.c.l.b16 %v2522
      %v2572 = vunpack.c.l.b16 %v2523
      %v2573 = vunpack.c.l.b16 %v2524
      %v2574 = vunpack.c.l.b16 %v2525
      %v2575 = vunpack.c.l.b16 %v2526
      %v2576 = vunpack.c.l.b16 %v2527
      %v2577 = vunpack.c.l.b16 %v2528
      %v2578 = vunpack.c.l.b16 %v2529
      %v2579 = vunpack.c.l.b16 %v2530
      %v2580 = vunpack.c.l.b16 %v2531
      %v2581 = vunpack.c.l.b16 %v2532
      %v2582 = vpack.c.b16 %v2567, %v2566
      %v2583 = vpack.c.b16 %v2569, %v2568
      %v2584 = vpack.c.b16 %v2571, %v2570
      %v2585 = vpack.c.b16 %v2573, %v2572
      %v2586 = vpack.c.b16 %v2575, %v2574
      %v2587 = vpack.c.b16 %v2577, %v2576
      %v2588 = vpack.c.b16 %v2579, %v2578
      %v2589 = vpack.c.b16 %v2581, %v2580
      %v2614 = vunpack.c.l.b16 %v2534
      %v2615 = vunpack.c.l.b16 %v2535
      %v2616 = vunpack.c.l.b16 %v2536
      %v2617 = vunpack.c.l.b16 %v2537
      %v2618 = vunpack.c.l.b16 %v2538
      %v2619 = vunpack.c.l.b16 %v2539
      %v2620 = vunpack.c.l.b16 %v2540
      %v2621 = vunpack.c.l.b16 %v2541
      %v2622 = vunpack.c.l.b16 %v2542
      %v2623 = vunpack.c.l.b16 %v2543
      %v2624 = vunpack.c.l.b16 %v2544
      %v2625 = vunpack.c.l.b16 %v2545
      %v2626 = vunpack.c.l.b16 %v2546
      %v2627 = vunpack.c.l.b16 %v2547
      %v2628 = vunpack.c.l.b16 %v2548
      %v2629 = vunpack.c.l.b16 %v2549
      %v2630 = vpack.c.b16 %v2615, %v2614
      %v2631 = vpack.c.b16 %v2617, %v2616
      %v2632 = vpack.c.b16 %v2619, %v2618
      %v2633 = vpack.c.b16 %v2621, %v2620
      %v2634 = vpack.c.b16 %v2623, %v2622
      %v2635 = vpack.c.b16 %v2625, %v2624
      %v2636 = vpack.c.b16 %v2627, %v2626
      %v2637 = vpack.c.b16 %v2629, %v2628
      %2646 = vmatprep.subr.bf16.mxu0 0
      %2647 = vmatpush1.bf16.msra.mxu0 %v2637
      %2648 = vmatprep.subr.bf16.mxu0 0
      %2649 = vmatpush1.bf16.msra.mxu0 %v2636
      %2650 = vmatprep.subr.bf16.mxu0 0
      %2651 = vmatpush1.bf16.msra.mxu0 %v2635
      %2652 = vmatprep.subr.bf16.mxu0 0
      %2653 = vmatpush1.bf16.msra.mxu0 %v2634
      %2654 = vmatprep.subr.bf16.mxu0 0
      %2655 = vmatpush1.bf16.msra.mxu0 %v2633
      %2656 = vmatprep.subr.bf16.mxu0 0
      %2657 = vmatpush1.bf16.msra.mxu0 %v2632
      %2658 = vmatprep.subr.bf16.mxu0 0
      %2659 = vmatpush1.bf16.msra.mxu0 %v2631
      %2660 = vmatprep.subr.bf16.mxu0 0
      %2661 = vmatpush1.bf16.msra.mxu0 %v2630
      %2662 = vmatprep.subr.bf16.mxu0 0
      %2663 = vmatpush2.bf16.msra.mxu0 0
      %2664 = vmatprep.subr.bf16.mxu0 0
      %2665 = vmatpush2.bf16.msra.mxu0 0
      %2666 = vmatprep.subr.bf16.mxu0 0
      %2667 = vmatpush2.bf16.msra.mxu0 0
      %2668 = vmatprep.subr.bf16.mxu0 0
      %2669 = vmatpush2.bf16.msra.mxu0 0
      %2670 = vmatprep.subr.bf16.mxu0 0
      %2671 = vmatpush2.bf16.msra.mxu0 0
      %2672 = vmatprep.subr.bf16.mxu0 0
      %2673 = vmatpush2.bf16.msra.mxu0 0
      %2674 = vmatprep.subr.bf16.mxu0 0
      %2675 = vmatpush2.bf16.msra.mxu0 0
      %2676 = vmatprep.subr.bf16.mxu0 0
      %2677 = vmatpush2.bf16.msra.mxu0 0
      %2678 = vmatprep.mubr.bf16.mxu0 0
      %2679 = vmatmul.mubr.bf16.gmra.mxu0 %v2582
      %v2680 = vpop.f32.mrf.mxu0
      %v2681 = vadd.f32 0.0, %v2680
      %v2682 = vpop.f32.mrf.mxu0
      %v2683 = vpop.f32.mrf.mxu0
      %v2684 = vadd.f32 0.0, %v2683
      %v2685 = vpop.f32.mrf.mxu0
      %2686 = vmatprep.mubr.bf16.mxu0 0
      %2687 = vmatmul.mubr.bf16.gmra.mxu0 %v2583
      %v2688 = vpop.f32.mrf.mxu0
      %v2689 = vadd.f32 0.0, %v2688
      %v2690 = vpop.f32.mrf.mxu0
      %v2691 = vpop.f32.mrf.mxu0
      %v2692 = vadd.f32 0.0, %v2691
      %v2693 = vpop.f32.mrf.mxu0
      %2694 = vmatprep.mubr.bf16.mxu0 0
      %2695 = vmatmul.mubr.bf16.gmra.mxu0 %v2584
      %v2696 = vpop.f32.mrf.mxu0
      %v2697 = vadd.f32 0.0, %v2696
      %v2698 = vpop.f32.mrf.mxu0
      %v2699 = vpop.f32.mrf.mxu0
      %v2700 = vadd.f32 0.0, %v2699
      %v2701 = vpop.f32.mrf.mxu0
      %2702 = vmatprep.mubr.bf16.mxu0 0
      %2703 = vmatmul.mubr.bf16.gmra.mxu0 %v2585
      %v2704 = vpop.f32.mrf.mxu0
      %v2705 = vadd.f32 0.0, %v2704
      %v2706 = vpop.f32.mrf.mxu0
      %v2707 = vpop.f32.mrf.mxu0
      %v2708 = vadd.f32 0.0, %v2707
      %v2709 = vpop.f32.mrf.mxu0
      %2710 = vmatprep.mubr.bf16.mxu0 0
      %2711 = vmatmul.mubr.bf16.gmra.mxu0 %v2586
      %v2712 = vpop.f32.mrf.mxu0
      %v2713 = vadd.f32 0.0, %v2712
      %v2714 = vpop.f32.mrf.mxu0
      %v2715 = vpop.f32.mrf.mxu0
      %v2716 = vadd.f32 0.0, %v2715
      %v2717 = vpop.f32.mrf.mxu0
      %2718 = vmatprep.mubr.bf16.mxu0 0
      %2719 = vmatmul.mubr.bf16.gmra.mxu0 %v2587
      %v2720 = vpop.f32.mrf.mxu0
      %v2721 = vadd.f32 0.0, %v2720
      %v2722 = vpop.f32.mrf.mxu0
      %v2723 = vpop.f32.mrf.mxu0
      %v2724 = vadd.f32 0.0, %v2723
      %v2725 = vpop.f32.mrf.mxu0
      %2726 = vmatprep.mubr.bf16.mxu0 0
      %2727 = vmatmul.mubr.bf16.gmra.mxu0 %v2588
      %v2728 = vpop.f32.mrf.mxu0
      %v2729 = vadd.f32 0.0, %v2728
      %v2730 = vpop.f32.mrf.mxu0
      %v2731 = vpop.f32.mrf.mxu0
      %v2732 = vadd.f32 0.0, %v2731
      %v2733 = vpop.f32.mrf.mxu0
      %2734 = vmatprep.mubr.bf16.mxu0 0
      %2735 = vmatmul.mubr.bf16.gmra.mxu0 %v2589
      %v2736 = vpop.f32.mrf.mxu0
      %v2737 = vadd.f32 0.0, %v2736
      %v2738 = vpop.f32.mrf.mxu0
      %v2739 = vpop.f32.mrf.mxu0
      %v2740 = vadd.f32 0.0, %v2739
      %v2741 = vpop.f32.mrf.mxu0
      %2742 = vdwg.mxu0
      %v2743 = vadd.f32 %v2501, %v2681
      %v2744 = vadd.f32 %v2502, %v2684
      %v2745 = vadd.f32 %v2503, %v2689
      %v2746 = vadd.f32 %v2504, %v2692
      %v2747 = vadd.f32 %v2505, %v2697
      %v2748 = vadd.f32 %v2506, %v2700
      %v2749 = vadd.f32 %v2507, %v2705
      %v2750 = vadd.f32 %v2508, %v2708
      %v2751 = vadd.f32 %v2509, %v2713
      %v2752 = vadd.f32 %v2510, %v2716
      %v2753 = vadd.f32 %v2511, %v2721
      %v2754 = vadd.f32 %v2512, %v2724
      %v2755 = vadd.f32 %v2513, %v2729
      %v2756 = vadd.f32 %v2514, %v2732
      %v2757 = vadd.f32 %v2515, %v2737
      %v2758 = vadd.f32 %v2516, %v2740
      %v2759 = vld [vmem:[%s354 + $0x8] sm:$0xf]
      %v2760 = vld [vmem:[%s354 + $0xc] sm:$0xf]
      %v2761 = vld [vmem:[%s354 + $0x10] sm:$0xf]
      %v2762 = vld [vmem:[%s354 + $0x14] sm:$0xf]
      %v2763 = vld [vmem:[%s354 + $0x18] sm:$0xf]
      %v2764 = vld [vmem:[%s354 + $0x1c] sm:$0xf]
      %v2765 = vld [vmem:[%s354 + $0x20] sm:$0xf]
      %v2766 = vld [vmem:[%s354 + $0x24] sm:$0xf]
      %v2767 = vld [vmem:[%s354 + $0x28] sm:$0xf]
      %v2768 = vld [vmem:[%s354 + $0x2c] sm:$0xf]
      %v2769 = vld [vmem:[%s354 + $0x30] sm:$0xf]
      %v2770 = vld [vmem:[%s354 + $0x34] sm:$0xf]
      %v2771 = vld [vmem:[%s354 + $0x38] sm:$0xf]
      %v2772 = vld [vmem:[%s354 + $0x3c] sm:$0xf]
      %v2773 = vld [vmem:[%s354 + $0x40] sm:$0xf]
      %v2774 = vld [vmem:[%s354 + $0x44] sm:$0xf]
      %s2775 = scalar_lea.vmem %s3, 320
      %v2776 = vld [vmem:[%s2775] sm:$0xf]
      %v2777 = vld [vmem:[%s2775 + $0x4] sm:$0xf]
      %v2778 = vld [vmem:[%s2775 + $0x8] sm:$0xf]
      %v2779 = vld [vmem:[%s2775 + $0xc] sm:$0xf]
      %v2780 = vld [vmem:[%s2775 + $0x10] sm:$0xf]
      %v2781 = vld [vmem:[%s2775 + $0x14] sm:$0xf]
      %v2782 = vld [vmem:[%s2775 + $0x18] sm:$0xf]
      %v2783 = vld [vmem:[%s2775 + $0x1c] sm:$0xf]
      %v2784 = vld [vmem:[%s2775 + $0x20] sm:$0xf]
      %v2785 = vld [vmem:[%s2775 + $0x24] sm:$0xf]
      %v2786 = vld [vmem:[%s2775 + $0x28] sm:$0xf]
      %v2787 = vld [vmem:[%s2775 + $0x2c] sm:$0xf]
      %v2788 = vld [vmem:[%s2775 + $0x30] sm:$0xf]
      %v2789 = vld [vmem:[%s2775 + $0x34] sm:$0xf]
      %v2790 = vld [vmem:[%s2775 + $0x38] sm:$0xf]
      %v2791 = vld [vmem:[%s2775 + $0x3c] sm:$0xf]
      %v2808 = vunpack.c.l.b16 %v2759
      %v2809 = vunpack.c.l.b16 %v2760
      %v2810 = vunpack.c.l.b16 %v2761
      %v2811 = vunpack.c.l.b16 %v2762
      %v2812 = vunpack.c.l.b16 %v2763
      %v2813 = vunpack.c.l.b16 %v2764
      %v2814 = vunpack.c.l.b16 %v2765
      %v2815 = vunpack.c.l.b16 %v2766
      %v2816 = vunpack.c.l.b16 %v2767
      %v2817 = vunpack.c.l.b16 %v2768
      %v2818 = vunpack.c.l.b16 %v2769
      %v2819 = vunpack.c.l.b16 %v2770
      %v2820 = vunpack.c.l.b16 %v2771
      %v2821 = vunpack.c.l.b16 %v2772
      %v2822 = vunpack.c.l.b16 %v2773
      %v2823 = vunpack.c.l.b16 %v2774
      %v2824 = vpack.c.b16 %v2809, %v2808
      %v2825 = vpack.c.b16 %v2811, %v2810
      %v2826 = vpack.c.b16 %v2813, %v2812
      %v2827 = vpack.c.b16 %v2815, %v2814
      %v2828 = vpack.c.b16 %v2817, %v2816
      %v2829 = vpack.c.b16 %v2819, %v2818
      %v2830 = vpack.c.b16 %v2821, %v2820
      %v2831 = vpack.c.b16 %v2823, %v2822
      %v2856 = vunpack.c.l.b16 %v2776
      %v2857 = vunpack.c.l.b16 %v2777
      %v2858 = vunpack.c.l.b16 %v2778
      %v2859 = vunpack.c.l.b16 %v2779
      %v2860 = vunpack.c.l.b16 %v2780
      %v2861 = vunpack.c.l.b16 %v2781
      %v2862 = vunpack.c.l.b16 %v2782
      %v2863 = vunpack.c.l.b16 %v2783
      %v2864 = vunpack.c.l.b16 %v2784
      %v2865 = vunpack.c.l.b16 %v2785
      %v2866 = vunpack.c.l.b16 %v2786
      %v2867 = vunpack.c.l.b16 %v2787
      %v2868 = vunpack.c.l.b16 %v2788
      %v2869 = vunpack.c.l.b16 %v2789
      %v2870 = vunpack.c.l.b16 %v2790
      %v2871 = vunpack.c.l.b16 %v2791
      %v2872 = vpack.c.b16 %v2857, %v2856
      %v2873 = vpack.c.b16 %v2859, %v2858
      %v2874 = vpack.c.b16 %v2861, %v2860
      %v2875 = vpack.c.b16 %v2863, %v2862
      %v2876 = vpack.c.b16 %v2865, %v2864
      %v2877 = vpack.c.b16 %v2867, %v2866
      %v2878 = vpack.c.b16 %v2869, %v2868
      %v2879 = vpack.c.b16 %v2871, %v2870
      %2888 = vmatprep.subr.bf16.mxu0 0
      %2889 = vmatpush1.bf16.msra.mxu0 %v2879
      %2890 = vmatprep.subr.bf16.mxu0 0
      %2891 = vmatpush1.bf16.msra.mxu0 %v2878
      %2892 = vmatprep.subr.bf16.mxu0 0
      %2893 = vmatpush1.bf16.msra.mxu0 %v2877
      %2894 = vmatprep.subr.bf16.mxu0 0
      %2895 = vmatpush1.bf16.msra.mxu0 %v2876
      %2896 = vmatprep.subr.bf16.mxu0 0
      %2897 = vmatpush1.bf16.msra.mxu0 %v2875
      %2898 = vmatprep.subr.bf16.mxu0 0
      %2899 = vmatpush1.bf16.msra.mxu0 %v2874
      %2900 = vmatprep.subr.bf16.mxu0 0
      %2901 = vmatpush1.bf16.msra.mxu0 %v2873
      %2902 = vmatprep.subr.bf16.mxu0 0
      %2903 = vmatpush1.bf16.msra.mxu0 %v2872
      %2904 = vmatprep.subr.bf16.mxu0 0
      %2905 = vmatpush2.bf16.msra.mxu0 0
      %2906 = vmatprep.subr.bf16.mxu0 0
      %2907 = vmatpush2.bf16.msra.mxu0 0
      %2908 = vmatprep.subr.bf16.mxu0 0
      %2909 = vmatpush2.bf16.msra.mxu0 0
      %2910 = vmatprep.subr.bf16.mxu0 0
      %2911 = vmatpush2.bf16.msra.mxu0 0
      %2912 = vmatprep.subr.bf16.mxu0 0
      %2913 = vmatpush2.bf16.msra.mxu0 0
      %2914 = vmatprep.subr.bf16.mxu0 0
      %2915 = vmatpush2.bf16.msra.mxu0 0
      %2916 = vmatprep.subr.bf16.mxu0 0
      %2917 = vmatpush2.bf16.msra.mxu0 0
      %2918 = vmatprep.subr.bf16.mxu0 0
      %2919 = vmatpush2.bf16.msra.mxu0 0
      %2920 = vmatprep.mubr.bf16.mxu0 0
      %2921 = vmatmul.mubr.bf16.gmra.mxu0 %v2824
      %v2922 = vpop.f32.mrf.mxu0
      %v2923 = vadd.f32 0.0, %v2922
      %v2924 = vpop.f32.mrf.mxu0
      %v2925 = vpop.f32.mrf.mxu0
      %v2926 = vadd.f32 0.0, %v2925
      %v2927 = vpop.f32.mrf.mxu0
      %2928 = vmatprep.mubr.bf16.mxu0 0
      %2929 = vmatmul.mubr.bf16.gmra.mxu0 %v2825
      %v2930 = vpop.f32.mrf.mxu0
      %v2931 = vadd.f32 0.0, %v2930
      %v2932 = vpop.f32.mrf.mxu0
      %v2933 = vpop.f32.mrf.mxu0
      %v2934 = vadd.f32 0.0, %v2933
      %v2935 = vpop.f32.mrf.mxu0
      %2936 = vmatprep.mubr.bf16.mxu0 0
      %2937 = vmatmul.mubr.bf16.gmra.mxu0 %v2826
      %v2938 = vpop.f32.mrf.mxu0
      %v2939 = vadd.f32 0.0, %v2938
      %v2940 = vpop.f32.mrf.mxu0
      %v2941 = vpop.f32.mrf.mxu0
      %v2942 = vadd.f32 0.0, %v2941
      %v2943 = vpop.f32.mrf.mxu0
      %2944 = vmatprep.mubr.bf16.mxu0 0
      %2945 = vmatmul.mubr.bf16.gmra.mxu0 %v2827
      %v2946 = vpop.f32.mrf.mxu0
      %v2947 = vadd.f32 0.0, %v2946
      %v2948 = vpop.f32.mrf.mxu0
      %v2949 = vpop.f32.mrf.mxu0
      %v2950 = vadd.f32 0.0, %v2949
      %v2951 = vpop.f32.mrf.mxu0
      %2952 = vmatprep.mubr.bf16.mxu0 0
      %2953 = vmatmul.mubr.bf16.gmra.mxu0 %v2828
      %v2954 = vpop.f32.mrf.mxu0
      %v2955 = vadd.f32 0.0, %v2954
      %v2956 = vpop.f32.mrf.mxu0
      %v2957 = vpop.f32.mrf.mxu0
      %v2958 = vadd.f32 0.0, %v2957
      %v2959 = vpop.f32.mrf.mxu0
      %2960 = vmatprep.mubr.bf16.mxu0 0
      %2961 = vmatmul.mubr.bf16.gmra.mxu0 %v2829
      %v2962 = vpop.f32.mrf.mxu0
      %v2963 = vadd.f32 0.0, %v2962
      %v2964 = vpop.f32.mrf.mxu0
      %v2965 = vpop.f32.mrf.mxu0
      %v2966 = vadd.f32 0.0, %v2965
      %v2967 = vpop.f32.mrf.mxu0
      %2968 = vmatprep.mubr.bf16.mxu0 0
      %2969 = vmatmul.mubr.bf16.gmra.mxu0 %v2830
      %v2970 = vpop.f32.mrf.mxu0
      %v2971 = vadd.f32 0.0, %v2970
      %v2972 = vpop.f32.mrf.mxu0
      %v2973 = vpop.f32.mrf.mxu0
      %v2974 = vadd.f32 0.0, %v2973
      %v2975 = vpop.f32.mrf.mxu0
      %2976 = vmatprep.mubr.bf16.mxu0 0
      %2977 = vmatmul.mubr.bf16.gmra.mxu0 %v2831
      %v2978 = vpop.f32.mrf.mxu0
      %v2979 = vadd.f32 0.0, %v2978
      %v2980 = vpop.f32.mrf.mxu0
      %v2981 = vpop.f32.mrf.mxu0
      %v2982 = vadd.f32 0.0, %v2981
      %v2983 = vpop.f32.mrf.mxu0
      %2984 = vdwg.mxu0
      %v2985 = vadd.f32 %v2743, %v2923
      %v2986 = vadd.f32 %v2744, %v2926
      %v2987 = vadd.f32 %v2745, %v2931
      %v2988 = vadd.f32 %v2746, %v2934
      %v2989 = vadd.f32 %v2747, %v2939
      %v2990 = vadd.f32 %v2748, %v2942
      %v2991 = vadd.f32 %v2749, %v2947
      %v2992 = vadd.f32 %v2750, %v2950
      %v2993 = vadd.f32 %v2751, %v2955
      %v2994 = vadd.f32 %v2752, %v2958
      %v2995 = vadd.f32 %v2753, %v2963
      %v2996 = vadd.f32 %v2754, %v2966
      %v2997 = vadd.f32 %v2755, %v2971
      %v2998 = vadd.f32 %v2756, %v2974
      %v2999 = vadd.f32 %v2757, %v2979
      %v3000 = vadd.f32 %v2758, %v2982
      %v3001 = vld [vmem:[#allocation2 + $0x10] sm:$0xf]
      %v3002 = vld [vmem:[#allocation2 + $0x14] sm:$0xf]
      %v3003 = vld [vmem:[#allocation2 + $0x18] sm:$0xf]
      %v3004 = vld [vmem:[#allocation2 + $0x1c] sm:$0xf]
      %v3005 = vld [vmem:[#allocation2 + $0x20] sm:$0xf]
      %v3006 = vld [vmem:[#allocation2 + $0x24] sm:$0xf]
      %v3007 = vld [vmem:[#allocation2 + $0x28] sm:$0xf]
      %v3008 = vld [vmem:[#allocation2 + $0x2c] sm:$0xf]
      %v3009 = vld [vmem:[#allocation2 + $0x30] sm:$0xf]
      %v3010 = vld [vmem:[#allocation2 + $0x34] sm:$0xf]
      %v3011 = vld [vmem:[#allocation2 + $0x38] sm:$0xf]
      %v3012 = vld [vmem:[#allocation2 + $0x3c] sm:$0xf]
      %v3013 = vld [vmem:[#allocation2 + $0x40] sm:$0xf]
      %v3014 = vld [vmem:[#allocation2 + $0x44] sm:$0xf]
      %v3015 = vld [vmem:[#allocation2 + $0x48] sm:$0xf]
      %v3016 = vld [vmem:[#allocation2 + $0x4c] sm:$0xf]
      %s3017 = scalar_lea.vmem %s3, 384
      %v3018 = vld [vmem:[%s3017] sm:$0xf]
      %v3019 = vld [vmem:[%s3017 + $0x4] sm:$0xf]
      %v3020 = vld [vmem:[%s3017 + $0x8] sm:$0xf]
      %v3021 = vld [vmem:[%s3017 + $0xc] sm:$0xf]
      %v3022 = vld [vmem:[%s3017 + $0x10] sm:$0xf]
      %v3023 = vld [vmem:[%s3017 + $0x14] sm:$0xf]
      %v3024 = vld [vmem:[%s3017 + $0x18] sm:$0xf]
      %v3025 = vld [vmem:[%s3017 + $0x1c] sm:$0xf]
      %v3026 = vld [vmem:[%s3017 + $0x20] sm:$0xf]
      %v3027 = vld [vmem:[%s3017 + $0x24] sm:$0xf]
      %v3028 = vld [vmem:[%s3017 + $0x28] sm:$0xf]
      %v3029 = vld [vmem:[%s3017 + $0x2c] sm:$0xf]
      %v3030 = vld [vmem:[%s3017 + $0x30] sm:$0xf]
      %v3031 = vld [vmem:[%s3017 + $0x34] sm:$0xf]
      %v3032 = vld [vmem:[%s3017 + $0x38] sm:$0xf]
      %v3033 = vld [vmem:[%s3017 + $0x3c] sm:$0xf]
      %v3050 = vunpack.c.l.b16 %v3001
      %v3051 = vunpack.c.l.b16 %v3002
      %v3052 = vunpack.c.l.b16 %v3003
      %v3053 = vunpack.c.l.b16 %v3004
      %v3054 = vunpack.c.l.b16 %v3005
      %v3055 = vunpack.c.l.b16 %v3006
      %v3056 = vunpack.c.l.b16 %v3007
      %v3057 = vunpack.c.l.b16 %v3008
      %v3058 = vunpack.c.l.b16 %v3009
      %v3059 = vunpack.c.l.b16 %v3010
      %v3060 = vunpack.c.l.b16 %v3011
      %v3061 = vunpack.c.l.b16 %v3012
      %v3062 = vunpack.c.l.b16 %v3013
      %v3063 = vunpack.c.l.b16 %v3014
      %v3064 = vunpack.c.l.b16 %v3015
      %v3065 = vunpack.c.l.b16 %v3016
      %v3066 = vpack.c.b16 %v3051, %v3050
      %v3067 = vpack.c.b16 %v3053, %v3052
      %v3068 = vpack.c.b16 %v3055, %v3054
      %v3069 = vpack.c.b16 %v3057, %v3056
      %v3070 = vpack.c.b16 %v3059, %v3058
      %v3071 = vpack.c.b16 %v3061, %v3060
      %v3072 = vpack.c.b16 %v3063, %v3062
      %v3073 = vpack.c.b16 %v3065, %v3064
      %v3098 = vunpack.c.l.b16 %v3018
      %v3099 = vunpack.c.l.b16 %v3019
      %v3100 = vunpack.c.l.b16 %v3020
      %v3101 = vunpack.c.l.b16 %v3021
      %v3102 = vunpack.c.l.b16 %v3022
      %v3103 = vunpack.c.l.b16 %v3023
      %v3104 = vunpack.c.l.b16 %v3024
      %v3105 = vunpack.c.l.b16 %v3025
      %v3106 = vunpack.c.l.b16 %v3026
      %v3107 = vunpack.c.l.b16 %v3027
      %v3108 = vunpack.c.l.b16 %v3028
      %v3109 = vunpack.c.l.b16 %v3029
      %v3110 = vunpack.c.l.b16 %v3030
      %v3111 = vunpack.c.l.b16 %v3031
      %v3112 = vunpack.c.l.b16 %v3032
      %v3113 = vunpack.c.l.b16 %v3033
      %v3114 = vpack.c.b16 %v3099, %v3098
      %v3115 = vpack.c.b16 %v3101, %v3100
      %v3116 = vpack.c.b16 %v3103, %v3102
      %v3117 = vpack.c.b16 %v3105, %v3104
      %v3118 = vpack.c.b16 %v3107, %v3106
      %v3119 = vpack.c.b16 %v3109, %v3108
      %v3120 = vpack.c.b16 %v3111, %v3110
      %v3121 = vpack.c.b16 %v3113, %v3112
      %3130 = vmatprep.subr.bf16.mxu0 0
      %3131 = vmatpush1.bf16.msra.mxu0 %v3121
      %3132 = vmatprep.subr.bf16.mxu0 0
      %3133 = vmatpush1.bf16.msra.mxu0 %v3120
      %3134 = vmatprep.subr.bf16.mxu0 0
      %3135 = vmatpush1.bf16.msra.mxu0 %v3119
      %3136 = vmatprep.subr.bf16.mxu0 0
      %3137 = vmatpush1.bf16.msra.mxu0 %v3118
      %3138 = vmatprep.subr.bf16.mxu0 0
      %3139 = vmatpush1.bf16.msra.mxu0 %v3117
      %3140 = vmatprep.subr.bf16.mxu0 0
      %3141 = vmatpush1.bf16.msra.mxu0 %v3116
      %3142 = vmatprep.subr.bf16.mxu0 0
      %3143 = vmatpush1.bf16.msra.mxu0 %v3115
      %3144 = vmatprep.subr.bf16.mxu0 0
      %3145 = vmatpush1.bf16.msra.mxu0 %v3114
      %3146 = vmatprep.subr.bf16.mxu0 0
      %3147 = vmatpush2.bf16.msra.mxu0 0
      %3148 = vmatprep.subr.bf16.mxu0 0
      %3149 = vmatpush2.bf16.msra.mxu0 0
      %3150 = vmatprep.subr.bf16.mxu0 0
      %3151 = vmatpush2.bf16.msra.mxu0 0
      %3152 = vmatprep.subr.bf16.mxu0 0
      %3153 = vmatpush2.bf16.msra.mxu0 0
      %3154 = vmatprep.subr.bf16.mxu0 0
      %3155 = vmatpush2.bf16.msra.mxu0 0
      %3156 = vmatprep.subr.bf16.mxu0 0
      %3157 = vmatpush2.bf16.msra.mxu0 0
      %3158 = vmatprep.subr.bf16.mxu0 0
      %3159 = vmatpush2.bf16.msra.mxu0 0
      %3160 = vmatprep.subr.bf16.mxu0 0
      %3161 = vmatpush2.bf16.msra.mxu0 0
      %3162 = vmatprep.mubr.bf16.mxu0 0
      %3163 = vmatmul.mubr.bf16.gmra.mxu0 %v3066
      %v3164 = vpop.f32.mrf.mxu0
      %v3165 = vadd.f32 0.0, %v3164
      %v3166 = vpop.f32.mrf.mxu0
      %v3167 = vpop.f32.mrf.mxu0
      %v3168 = vadd.f32 0.0, %v3167
      %v3169 = vpop.f32.mrf.mxu0
      %3170 = vmatprep.mubr.bf16.mxu0 0
      %3171 = vmatmul.mubr.bf16.gmra.mxu0 %v3067
      %v3172 = vpop.f32.mrf.mxu0
      %v3173 = vadd.f32 0.0, %v3172
      %v3174 = vpop.f32.mrf.mxu0
      %v3175 = vpop.f32.mrf.mxu0
      %v3176 = vadd.f32 0.0, %v3175
      %v3177 = vpop.f32.mrf.mxu0
      %3178 = vmatprep.mubr.bf16.mxu0 0
      %3179 = vmatmul.mubr.bf16.gmra.mxu0 %v3068
      %v3180 = vpop.f32.mrf.mxu0
      %v3181 = vadd.f32 0.0, %v3180
      %v3182 = vpop.f32.mrf.mxu0
      %v3183 = vpop.f32.mrf.mxu0
      %v3184 = vadd.f32 0.0, %v3183
      %v3185 = vpop.f32.mrf.mxu0
      %3186 = vmatprep.mubr.bf16.mxu0 0
      %3187 = vmatmul.mubr.bf16.gmra.mxu0 %v3069
      %v3188 = vpop.f32.mrf.mxu0
      %v3189 = vadd.f32 0.0, %v3188
      %v3190 = vpop.f32.mrf.mxu0
      %v3191 = vpop.f32.mrf.mxu0
      %v3192 = vadd.f32 0.0, %v3191
      %v3193 = vpop.f32.mrf.mxu0
      %3194 = vmatprep.mubr.bf16.mxu0 0
      %3195 = vmatmul.mubr.bf16.gmra.mxu0 %v3070
      %v3196 = vpop.f32.mrf.mxu0
      %v3197 = vadd.f32 0.0, %v3196
      %v3198 = vpop.f32.mrf.mxu0
      %v3199 = vpop.f32.mrf.mxu0
      %v3200 = vadd.f32 0.0, %v3199
      %v3201 = vpop.f32.mrf.mxu0
      %3202 = vmatprep.mubr.bf16.mxu0 0
      %3203 = vmatmul.mubr.bf16.gmra.mxu0 %v3071
      %v3204 = vpop.f32.mrf.mxu0
      %v3205 = vadd.f32 0.0, %v3204
      %v3206 = vpop.f32.mrf.mxu0
      %v3207 = vpop.f32.mrf.mxu0
      %v3208 = vadd.f32 0.0, %v3207
      %v3209 = vpop.f32.mrf.mxu0
      %3210 = vmatprep.mubr.bf16.mxu0 0
      %3211 = vmatmul.mubr.bf16.gmra.mxu0 %v3072
      %v3212 = vpop.f32.mrf.mxu0
      %v3213 = vadd.f32 0.0, %v3212
      %v3214 = vpop.f32.mrf.mxu0
      %v3215 = vpop.f32.mrf.mxu0
      %v3216 = vadd.f32 0.0, %v3215
      %v3217 = vpop.f32.mrf.mxu0
      %3218 = vmatprep.mubr.bf16.mxu0 0
      %3219 = vmatmul.mubr.bf16.gmra.mxu0 %v3073
      %v3220 = vpop.f32.mrf.mxu0
      %v3221 = vadd.f32 0.0, %v3220
      %v3222 = vpop.f32.mrf.mxu0
      %v3223 = vpop.f32.mrf.mxu0
      %v3224 = vadd.f32 0.0, %v3223
      %v3225 = vpop.f32.mrf.mxu0
      %3226 = vdwg.mxu0
      %v3227 = vadd.f32 %v2985, %v3165
      %v3228 = vadd.f32 %v2986, %v3168
      %v3229 = vadd.f32 %v2987, %v3173
      %v3230 = vadd.f32 %v2988, %v3176
      %v3231 = vadd.f32 %v2989, %v3181
      %v3232 = vadd.f32 %v2990, %v3184
      %v3233 = vadd.f32 %v2991, %v3189
      %v3234 = vadd.f32 %v2992, %v3192
      %v3235 = vadd.f32 %v2993, %v3197
      %v3236 = vadd.f32 %v2994, %v3200
      %v3237 = vadd.f32 %v2995, %v3205
      %v3238 = vadd.f32 %v2996, %v3208
      %v3239 = vadd.f32 %v2997, %v3213
      %v3240 = vadd.f32 %v2998, %v3216
      %v3241 = vadd.f32 %v2999, %v3221
      %v3242 = vadd.f32 %v3000, %v3224
      %v3243 = vld [vmem:[%s349 + $0x10] sm:$0xf]
      %v3244 = vld [vmem:[%s349 + $0x14] sm:$0xf]
      %v3245 = vld [vmem:[%s349 + $0x18] sm:$0xf]
      %v3246 = vld [vmem:[%s349 + $0x1c] sm:$0xf]
      %v3247 = vld [vmem:[%s349 + $0x20] sm:$0xf]
      %v3248 = vld [vmem:[%s349 + $0x24] sm:$0xf]
      %v3249 = vld [vmem:[%s349 + $0x28] sm:$0xf]
      %v3250 = vld [vmem:[%s349 + $0x2c] sm:$0xf]
      %v3251 = vld [vmem:[%s349 + $0x30] sm:$0xf]
      %v3252 = vld [vmem:[%s349 + $0x34] sm:$0xf]
      %v3253 = vld [vmem:[%s349 + $0x38] sm:$0xf]
      %v3254 = vld [vmem:[%s349 + $0x3c] sm:$0xf]
      %v3255 = vld [vmem:[%s349 + $0x40] sm:$0xf]
      %v3256 = vld [vmem:[%s349 + $0x44] sm:$0xf]
      %v3257 = vld [vmem:[%s349 + $0x48] sm:$0xf]
      %v3258 = vld [vmem:[%s349 + $0x4c] sm:$0xf]
      %s3259 = scalar_lea.vmem %s3, 448
      %v3260 = vld [vmem:[%s3259] sm:$0xf]
      %v3261 = vld [vmem:[%s3259 + $0x4] sm:$0xf]
      %v3262 = vld [vmem:[%s3259 + $0x8] sm:$0xf]
      %v3263 = vld [vmem:[%s3259 + $0xc] sm:$0xf]
      %v3264 = vld [vmem:[%s3259 + $0x10] sm:$0xf]
      %v3265 = vld [vmem:[%s3259 + $0x14] sm:$0xf]
      %v3266 = vld [vmem:[%s3259 + $0x18] sm:$0xf]
      %v3267 = vld [vmem:[%s3259 + $0x1c] sm:$0xf]
      %v3268 = vld [vmem:[%s3259 + $0x20] sm:$0xf]
      %v3269 = vld [vmem:[%s3259 + $0x24] sm:$0xf]
      %v3270 = vld [vmem:[%s3259 + $0x28] sm:$0xf]
      %v3271 = vld [vmem:[%s3259 + $0x2c] sm:$0xf]
      %v3272 = vld [vmem:[%s3259 + $0x30] sm:$0xf]
      %v3273 = vld [vmem:[%s3259 + $0x34] sm:$0xf]
      %v3274 = vld [vmem:[%s3259 + $0x38] sm:$0xf]
      %v3275 = vld [vmem:[%s3259 + $0x3c] sm:$0xf]
      %v3292 = vunpack.c.l.b16 %v3243
      %v3293 = vunpack.c.l.b16 %v3244
      %v3294 = vunpack.c.l.b16 %v3245
      %v3295 = vunpack.c.l.b16 %v3246
      %v3296 = vunpack.c.l.b16 %v3247
      %v3297 = vunpack.c.l.b16 %v3248
      %v3298 = vunpack.c.l.b16 %v3249
      %v3299 = vunpack.c.l.b16 %v3250
      %v3300 = vunpack.c.l.b16 %v3251
      %v3301 = vunpack.c.l.b16 %v3252
      %v3302 = vunpack.c.l.b16 %v3253
      %v3303 = vunpack.c.l.b16 %v3254
      %v3304 = vunpack.c.l.b16 %v3255
      %v3305 = vunpack.c.l.b16 %v3256
      %v3306 = vunpack.c.l.b16 %v3257
      %v3307 = vunpack.c.l.b16 %v3258
      %v3308 = vpack.c.b16 %v3293, %v3292
      %v3309 = vpack.c.b16 %v3295, %v3294
      %v3310 = vpack.c.b16 %v3297, %v3296
      %v3311 = vpack.c.b16 %v3299, %v3298
      %v3312 = vpack.c.b16 %v3301, %v3300
      %v3313 = vpack.c.b16 %v3303, %v3302
      %v3314 = vpack.c.b16 %v3305, %v3304
      %v3315 = vpack.c.b16 %v3307, %v3306
      %v3340 = vunpack.c.l.b16 %v3260
      %v3341 = vunpack.c.l.b16 %v3261
      %v3342 = vunpack.c.l.b16 %v3262
      %v3343 = vunpack.c.l.b16 %v3263
      %v3344 = vunpack.c.l.b16 %v3264
      %v3345 = vunpack.c.l.b16 %v3265
      %v3346 = vunpack.c.l.b16 %v3266
      %v3347 = vunpack.c.l.b16 %v3267
      %v3348 = vunpack.c.l.b16 %v3268
      %v3349 = vunpack.c.l.b16 %v3269
      %v3350 = vunpack.c.l.b16 %v3270
      %v3351 = vunpack.c.l.b16 %v3271
      %v3352 = vunpack.c.l.b16 %v3272
      %v3353 = vunpack.c.l.b16 %v3273
      %v3354 = vunpack.c.l.b16 %v3274
      %v3355 = vunpack.c.l.b16 %v3275
      %v3356 = vpack.c.b16 %v3341, %v3340
      %v3357 = vpack.c.b16 %v3343, %v3342
      %v3358 = vpack.c.b16 %v3345, %v3344
      %v3359 = vpack.c.b16 %v3347, %v3346
      %v3360 = vpack.c.b16 %v3349, %v3348
      %v3361 = vpack.c.b16 %v3351, %v3350
      %v3362 = vpack.c.b16 %v3353, %v3352
      %v3363 = vpack.c.b16 %v3355, %v3354
      %3372 = vmatprep.subr.bf16.mxu0 0
      %3373 = vmatpush1.bf16.msra.mxu0 %v3363
      %3374 = vmatprep.subr.bf16.mxu0 0
      %3375 = vmatpush1.bf16.msra.mxu0 %v3362
      %3376 = vmatprep.subr.bf16.mxu0 0
      %3377 = vmatpush1.bf16.msra.mxu0 %v3361
      %3378 = vmatprep.subr.bf16.mxu0 0
      %3379 = vmatpush1.bf16.msra.mxu0 %v3360
      %3380 = vmatprep.subr.bf16.mxu0 0
      %3381 = vmatpush1.bf16.msra.mxu0 %v3359
      %3382 = vmatprep.subr.bf16.mxu0 0
      %3383 = vmatpush1.bf16.msra.mxu0 %v3358
      %3384 = vmatprep.subr.bf16.mxu0 0
      %3385 = vmatpush1.bf16.msra.mxu0 %v3357
      %3386 = vmatprep.subr.bf16.mxu0 0
      %3387 = vmatpush1.bf16.msra.mxu0 %v3356
      %3388 = vmatprep.subr.bf16.mxu0 0
      %3389 = vmatpush2.bf16.msra.mxu0 0
      %3390 = vmatprep.subr.bf16.mxu0 0
      %3391 = vmatpush2.bf16.msra.mxu0 0
      %3392 = vmatprep.subr.bf16.mxu0 0
      %3393 = vmatpush2.bf16.msra.mxu0 0
      %3394 = vmatprep.subr.bf16.mxu0 0
      %3395 = vmatpush2.bf16.msra.mxu0 0
      %3396 = vmatprep.subr.bf16.mxu0 0
      %3397 = vmatpush2.bf16.msra.mxu0 0
      %3398 = vmatprep.subr.bf16.mxu0 0
      %3399 = vmatpush2.bf16.msra.mxu0 0
      %3400 = vmatprep.subr.bf16.mxu0 0
      %3401 = vmatpush2.bf16.msra.mxu0 0
      %3402 = vmatprep.subr.bf16.mxu0 0
      %3403 = vmatpush2.bf16.msra.mxu0 0
      %3404 = vmatprep.mubr.bf16.mxu0 0
      %3405 = vmatmul.mubr.bf16.gmra.mxu0 %v3308
      %v3406 = vpop.f32.mrf.mxu0
      %v3407 = vadd.f32 0.0, %v3406
      %v3408 = vpop.f32.mrf.mxu0
      %v3409 = vpop.f32.mrf.mxu0
      %v3410 = vadd.f32 0.0, %v3409
      %v3411 = vpop.f32.mrf.mxu0
      %3412 = vmatprep.mubr.bf16.mxu0 0
      %3413 = vmatmul.mubr.bf16.gmra.mxu0 %v3309
      %v3414 = vpop.f32.mrf.mxu0
      %v3415 = vadd.f32 0.0, %v3414
      %v3416 = vpop.f32.mrf.mxu0
      %v3417 = vpop.f32.mrf.mxu0
      %v3418 = vadd.f32 0.0, %v3417
      %v3419 = vpop.f32.mrf.mxu0
      %3420 = vmatprep.mubr.bf16.mxu0 0
      %3421 = vmatmul.mubr.bf16.gmra.mxu0 %v3310
      %v3422 = vpop.f32.mrf.mxu0
      %v3423 = vadd.f32 0.0, %v3422
      %v3424 = vpop.f32.mrf.mxu0
      %v3425 = vpop.f32.mrf.mxu0
      %v3426 = vadd.f32 0.0, %v3425
      %v3427 = vpop.f32.mrf.mxu0
      %3428 = vmatprep.mubr.bf16.mxu0 0
      %3429 = vmatmul.mubr.bf16.gmra.mxu0 %v3311
      %v3430 = vpop.f32.mrf.mxu0
      %v3431 = vadd.f32 0.0, %v3430
      %v3432 = vpop.f32.mrf.mxu0
      %v3433 = vpop.f32.mrf.mxu0
      %v3434 = vadd.f32 0.0, %v3433
      %v3435 = vpop.f32.mrf.mxu0
      %3436 = vmatprep.mubr.bf16.mxu0 0
      %3437 = vmatmul.mubr.bf16.gmra.mxu0 %v3312
      %v3438 = vpop.f32.mrf.mxu0
      %v3439 = vadd.f32 0.0, %v3438
      %v3440 = vpop.f32.mrf.mxu0
      %v3441 = vpop.f32.mrf.mxu0
      %v3442 = vadd.f32 0.0, %v3441
      %v3443 = vpop.f32.mrf.mxu0
      %3444 = vmatprep.mubr.bf16.mxu0 0
      %3445 = vmatmul.mubr.bf16.gmra.mxu0 %v3313
      %v3446 = vpop.f32.mrf.mxu0
      %v3447 = vadd.f32 0.0, %v3446
      %v3448 = vpop.f32.mrf.mxu0
      %v3449 = vpop.f32.mrf.mxu0
      %v3450 = vadd.f32 0.0, %v3449
      %v3451 = vpop.f32.mrf.mxu0
      %3452 = vmatprep.mubr.bf16.mxu0 0
      %3453 = vmatmul.mubr.bf16.gmra.mxu0 %v3314
      %v3454 = vpop.f32.mrf.mxu0
      %v3455 = vadd.f32 0.0, %v3454
      %v3456 = vpop.f32.mrf.mxu0
      %v3457 = vpop.f32.mrf.mxu0
      %v3458 = vadd.f32 0.0, %v3457
      %v3459 = vpop.f32.mrf.mxu0
      %3460 = vmatprep.mubr.bf16.mxu0 0
      %3461 = vmatmul.mubr.bf16.gmra.mxu0 %v3315
      %v3462 = vpop.f32.mrf.mxu0
      %v3463 = vadd.f32 0.0, %v3462
      %v3464 = vpop.f32.mrf.mxu0
      %v3465 = vpop.f32.mrf.mxu0
      %v3466 = vadd.f32 0.0, %v3465
      %v3467 = vpop.f32.mrf.mxu0
      %3468 = vdwg.mxu0
      %v3469 = vadd.f32 %v3227, %v3407
      %v3470 = vadd.f32 %v3228, %v3410
      %v3471 = vadd.f32 %v3229, %v3415
      %v3472 = vadd.f32 %v3230, %v3418
      %v3473 = vadd.f32 %v3231, %v3423
      %v3474 = vadd.f32 %v3232, %v3426
      %v3475 = vadd.f32 %v3233, %v3431
      %v3476 = vadd.f32 %v3234, %v3434
      %v3477 = vadd.f32 %v3235, %v3439
      %v3478 = vadd.f32 %v3236, %v3442
      %v3479 = vadd.f32 %v3237, %v3447
      %v3480 = vadd.f32 %v3238, %v3450
      %v3481 = vadd.f32 %v3239, %v3455
      %v3482 = vadd.f32 %v3240, %v3458
      %v3483 = vadd.f32 %v3241, %v3463
      %v3484 = vadd.f32 %v3242, %v3466
      %v3485 = vld [vmem:[%s354 + $0x10] sm:$0xf]
      %v3486 = vld [vmem:[%s354 + $0x14] sm:$0xf]
      %v3487 = vld [vmem:[%s354 + $0x18] sm:$0xf]
      %v3488 = vld [vmem:[%s354 + $0x1c] sm:$0xf]
      %v3489 = vld [vmem:[%s354 + $0x20] sm:$0xf]
      %v3490 = vld [vmem:[%s354 + $0x24] sm:$0xf]
      %v3491 = vld [vmem:[%s354 + $0x28] sm:$0xf]
      %v3492 = vld [vmem:[%s354 + $0x2c] sm:$0xf]
      %v3493 = vld [vmem:[%s354 + $0x30] sm:$0xf]
      %v3494 = vld [vmem:[%s354 + $0x34] sm:$0xf]
      %v3495 = vld [vmem:[%s354 + $0x38] sm:$0xf]
      %v3496 = vld [vmem:[%s354 + $0x3c] sm:$0xf]
      %v3497 = vld [vmem:[%s354 + $0x40] sm:$0xf]
      %v3498 = vld [vmem:[%s354 + $0x44] sm:$0xf]
      %v3499 = vld [vmem:[%s354 + $0x48] sm:$0xf]
      %v3500 = vld [vmem:[%s354 + $0x4c] sm:$0xf]
      %s3501 = scalar_lea.vmem %s3, 512
      %v3502 = vld [vmem:[%s3501] sm:$0xf]
      %v3503 = vld [vmem:[%s3501 + $0x4] sm:$0xf]
      %v3504 = vld [vmem:[%s3501 + $0x8] sm:$0xf]
      %v3505 = vld [vmem:[%s3501 + $0xc] sm:$0xf]
      %v3506 = vld [vmem:[%s3501 + $0x10] sm:$0xf]
      %v3507 = vld [vmem:[%s3501 + $0x14] sm:$0xf]
      %v3508 = vld [vmem:[%s3501 + $0x18] sm:$0xf]
      %v3509 = vld [vmem:[%s3501 + $0x1c] sm:$0xf]
      %v3510 = vld [vmem:[%s3501 + $0x20] sm:$0xf]
      %v3511 = vld [vmem:[%s3501 + $0x24] sm:$0xf]
      %v3512 = vld [vmem:[%s3501 + $0x28] sm:$0xf]
      %v3513 = vld [vmem:[%s3501 + $0x2c] sm:$0xf]
      %v3514 = vld [vmem:[%s3501 + $0x30] sm:$0xf]
      %v3515 = vld [vmem:[%s3501 + $0x34] sm:$0xf]
      %v3516 = vld [vmem:[%s3501 + $0x38] sm:$0xf]
      %v3517 = vld [vmem:[%s3501 + $0x3c] sm:$0xf]
      %v3534 = vunpack.c.l.b16 %v3485
      %v3535 = vunpack.c.l.b16 %v3486
      %v3536 = vunpack.c.l.b16 %v3487
      %v3537 = vunpack.c.l.b16 %v3488
      %v3538 = vunpack.c.l.b16 %v3489
      %v3539 = vunpack.c.l.b16 %v3490
      %v3540 = vunpack.c.l.b16 %v3491
      %v3541 = vunpack.c.l.b16 %v3492
      %v3542 = vunpack.c.l.b16 %v3493
      %v3543 = vunpack.c.l.b16 %v3494
      %v3544 = vunpack.c.l.b16 %v3495
      %v3545 = vunpack.c.l.b16 %v3496
      %v3546 = vunpack.c.l.b16 %v3497
      %v3547 = vunpack.c.l.b16 %v3498
      %v3548 = vunpack.c.l.b16 %v3499
      %v3549 = vunpack.c.l.b16 %v3500
      %v3550 = vpack.c.b16 %v3535, %v3534
      %v3551 = vpack.c.b16 %v3537, %v3536
      %v3552 = vpack.c.b16 %v3539, %v3538
      %v3553 = vpack.c.b16 %v3541, %v3540
      %v3554 = vpack.c.b16 %v3543, %v3542
      %v3555 = vpack.c.b16 %v3545, %v3544
      %v3556 = vpack.c.b16 %v3547, %v3546
      %v3557 = vpack.c.b16 %v3549, %v3548
      %v3582 = vunpack.c.l.b16 %v3502
      %v3583 = vunpack.c.l.b16 %v3503
      %v3584 = vunpack.c.l.b16 %v3504
      %v3585 = vunpack.c.l.b16 %v3505
      %v3586 = vunpack.c.l.b16 %v3506
      %v3587 = vunpack.c.l.b16 %v3507
      %v3588 = vunpack.c.l.b16 %v3508
      %v3589 = vunpack.c.l.b16 %v3509
      %v3590 = vunpack.c.l.b16 %v3510
      %v3591 = vunpack.c.l.b16 %v3511
      %v3592 = vunpack.c.l.b16 %v3512
      %v3593 = vunpack.c.l.b16 %v3513
      %v3594 = vunpack.c.l.b16 %v3514
      %v3595 = vunpack.c.l.b16 %v3515
      %v3596 = vunpack.c.l.b16 %v3516
      %v3597 = vunpack.c.l.b16 %v3517
      %v3598 = vpack.c.b16 %v3583, %v3582
      %v3599 = vpack.c.b16 %v3585, %v3584
      %v3600 = vpack.c.b16 %v3587, %v3586
      %v3601 = vpack.c.b16 %v3589, %v3588
      %v3602 = vpack.c.b16 %v3591, %v3590
      %v3603 = vpack.c.b16 %v3593, %v3592
      %v3604 = vpack.c.b16 %v3595, %v3594
      %v3605 = vpack.c.b16 %v3597, %v3596
      %3614 = vmatprep.subr.bf16.mxu0 0
      %3615 = vmatpush1.bf16.msra.mxu0 %v3605
      %3616 = vmatprep.subr.bf16.mxu0 0
      %3617 = vmatpush1.bf16.msra.mxu0 %v3604
      %3618 = vmatprep.subr.bf16.mxu0 0
      %3619 = vmatpush1.bf16.msra.mxu0 %v3603
      %3620 = vmatprep.subr.bf16.mxu0 0
      %3621 = vmatpush1.bf16.msra.mxu0 %v3602
      %3622 = vmatprep.subr.bf16.mxu0 0
      %3623 = vmatpush1.bf16.msra.mxu0 %v3601
      %3624 = vmatprep.subr.bf16.mxu0 0
      %3625 = vmatpush1.bf16.msra.mxu0 %v3600
      %3626 = vmatprep.subr.bf16.mxu0 0
      %3627 = vmatpush1.bf16.msra.mxu0 %v3599
      %3628 = vmatprep.subr.bf16.mxu0 0
      %3629 = vmatpush1.bf16.msra.mxu0 %v3598
      %3630 = vmatprep.subr.bf16.mxu0 0
      %3631 = vmatpush2.bf16.msra.mxu0 0
      %3632 = vmatprep.subr.bf16.mxu0 0
      %3633 = vmatpush2.bf16.msra.mxu0 0
      %3634 = vmatprep.subr.bf16.mxu0 0
      %3635 = vmatpush2.bf16.msra.mxu0 0
      %3636 = vmatprep.subr.bf16.mxu0 0
      %3637 = vmatpush2.bf16.msra.mxu0 0
      %3638 = vmatprep.subr.bf16.mxu0 0
      %3639 = vmatpush2.bf16.msra.mxu0 0
      %3640 = vmatprep.subr.bf16.mxu0 0
      %3641 = vmatpush2.bf16.msra.mxu0 0
      %3642 = vmatprep.subr.bf16.mxu0 0
      %3643 = vmatpush2.bf16.msra.mxu0 0
      %3644 = vmatprep.subr.bf16.mxu0 0
      %3645 = vmatpush2.bf16.msra.mxu0 0
      %3646 = vmatprep.mubr.bf16.mxu0 0
      %3647 = vmatmul.mubr.bf16.gmra.mxu0 %v3550
      %v3648 = vpop.f32.mrf.mxu0
      %v3649 = vadd.f32 0.0, %v3648
      %v3650 = vpop.f32.mrf.mxu0
      %v3651 = vpop.f32.mrf.mxu0
      %v3652 = vadd.f32 0.0, %v3651
      %v3653 = vpop.f32.mrf.mxu0
      %3654 = vmatprep.mubr.bf16.mxu0 0
      %3655 = vmatmul.mubr.bf16.gmra.mxu0 %v3551
      %v3656 = vpop.f32.mrf.mxu0
      %v3657 = vadd.f32 0.0, %v3656
      %v3658 = vpop.f32.mrf.mxu0
      %v3659 = vpop.f32.mrf.mxu0
      %v3660 = vadd.f32 0.0, %v3659
      %v3661 = vpop.f32.mrf.mxu0
      %3662 = vmatprep.mubr.bf16.mxu0 0
      %3663 = vmatmul.mubr.bf16.gmra.mxu0 %v3552
      %v3664 = vpop.f32.mrf.mxu0
      %v3665 = vadd.f32 0.0, %v3664
      %v3666 = vpop.f32.mrf.mxu0
      %v3667 = vpop.f32.mrf.mxu0
      %v3668 = vadd.f32 0.0, %v3667
      %v3669 = vpop.f32.mrf.mxu0
      %3670 = vmatprep.mubr.bf16.mxu0 0
      %3671 = vmatmul.mubr.bf16.gmra.mxu0 %v3553
      %v3672 = vpop.f32.mrf.mxu0
      %v3673 = vadd.f32 0.0, %v3672
      %v3674 = vpop.f32.mrf.mxu0
      %v3675 = vpop.f32.mrf.mxu0
      %v3676 = vadd.f32 0.0, %v3675
      %v3677 = vpop.f32.mrf.mxu0
      %3678 = vmatprep.mubr.bf16.mxu0 0
      %3679 = vmatmul.mubr.bf16.gmra.mxu0 %v3554
      %v3680 = vpop.f32.mrf.mxu0
      %v3681 = vadd.f32 0.0, %v3680
      %v3682 = vpop.f32.mrf.mxu0
      %v3683 = vpop.f32.mrf.mxu0
      %v3684 = vadd.f32 0.0, %v3683
      %v3685 = vpop.f32.mrf.mxu0
      %3686 = vmatprep.mubr.bf16.mxu0 0
      %3687 = vmatmul.mubr.bf16.gmra.mxu0 %v3555
      %v3688 = vpop.f32.mrf.mxu0
      %v3689 = vadd.f32 0.0, %v3688
      %v3690 = vpop.f32.mrf.mxu0
      %v3691 = vpop.f32.mrf.mxu0
      %v3692 = vadd.f32 0.0, %v3691
      %v3693 = vpop.f32.mrf.mxu0
      %3694 = vmatprep.mubr.bf16.mxu0 0
      %3695 = vmatmul.mubr.bf16.gmra.mxu0 %v3556
      %v3696 = vpop.f32.mrf.mxu0
      %v3697 = vadd.f32 0.0, %v3696
      %v3698 = vpop.f32.mrf.mxu0
      %v3699 = vpop.f32.mrf.mxu0
      %v3700 = vadd.f32 0.0, %v3699
      %v3701 = vpop.f32.mrf.mxu0
      %3702 = vmatprep.mubr.bf16.mxu0 0
      %3703 = vmatmul.mubr.bf16.gmra.mxu0 %v3557
      %v3704 = vpop.f32.mrf.mxu0
      %v3705 = vadd.f32 0.0, %v3704
      %v3706 = vpop.f32.mrf.mxu0
      %v3707 = vpop.f32.mrf.mxu0
      %v3708 = vadd.f32 0.0, %v3707
      %v3709 = vpop.f32.mrf.mxu0
      %3710 = vdwg.mxu0
      %v3711 = vadd.f32 %v3469, %v3649
      %v3712 = vadd.f32 %v3470, %v3652
      %v3713 = vadd.f32 %v3471, %v3657
      %v3714 = vadd.f32 %v3472, %v3660
      %v3715 = vadd.f32 %v3473, %v3665
      %v3716 = vadd.f32 %v3474, %v3668
      %v3717 = vadd.f32 %v3475, %v3673
      %v3718 = vadd.f32 %v3476, %v3676
      %v3719 = vadd.f32 %v3477, %v3681
      %v3720 = vadd.f32 %v3478, %v3684
      %v3721 = vadd.f32 %v3479, %v3689
      %v3722 = vadd.f32 %v3480, %v3692
      %v3723 = vadd.f32 %v3481, %v3697
      %v3724 = vadd.f32 %v3482, %v3700
      %v3725 = vadd.f32 %v3483, %v3705
      %v3726 = vadd.f32 %v3484, %v3708
      %v3727 = vmax.f32 %v3711, 0.0
      %v3728 = vmax.f32 %v3712, 0.0
      %v3729 = vmax.f32 %v3713, 0.0
      %v3730 = vmax.f32 %v3714, 0.0
      %v3731 = vmax.f32 %v3715, 0.0
      %v3732 = vmax.f32 %v3716, 0.0
      %v3733 = vmax.f32 %v3717, 0.0
      %v3734 = vmax.f32 %v3718, 0.0
      %v3735 = vmax.f32 %v3719, 0.0
      %v3736 = vmax.f32 %v3720, 0.0
      %v3737 = vmax.f32 %v3721, 0.0
      %v3738 = vmax.f32 %v3722, 0.0
      %v3739 = vmax.f32 %v3723, 0.0
      %v3740 = vmax.f32 %v3724, 0.0
      %v3741 = vmax.f32 %v3725, 0.0
      %v3742 = vmax.f32 %v3726, 0.0
      %v3743 = vrot.slane %v3727, 7
      %v3744 = vrot.slane %v3728, 7
      %v3745 = vrot.slane %v3729, 7
      %v3746 = vrot.slane %v3730, 7
      %v3747 = vrot.slane %v3731, 7
      %v3748 = vrot.slane %v3732, 7
      %v3749 = vrot.slane %v3733, 7
      %v3750 = vrot.slane %v3734, 7
      %v3751 = vrot.slane %v3735, 7
      %v3752 = vrot.slane %v3736, 7
      %v3753 = vrot.slane %v3737, 7
      %v3754 = vrot.slane %v3738, 7
      %v3755 = vrot.slane %v3739, 7
      %v3756 = vrot.slane %v3740, 7
      %v3757 = vrot.slane %v3741, 7
      %v3758 = vrot.slane %v3742, 7
      %v3759 = vsel %vm637, %v3757, %v3758
      %v3760 = vsel %vm637, %v3756, %v3757
      %v3761 = vsel %vm637, %v3755, %v3756
      %v3762 = vsel %vm637, %v3754, %v3755
      %v3763 = vsel %vm637, %v3753, %v3754
      %v3764 = vsel %vm637, %v3752, %v3753
      %v3765 = vsel %vm637, %v3751, %v3752
      %v3766 = vsel %vm637, %v3750, %v3751
      %v3767 = vsel %vm637, %v3749, %v3750
      %v3768 = vsel %vm637, %v3748, %v3749
      %v3769 = vsel %vm637, %v3747, %v3748
      %v3770 = vsel %vm637, %v3746, %v3747
      %v3771 = vsel %vm637, %v3745, %v3746
      %v3772 = vsel %vm637, %v3744, %v3745
      %v3773 = vsel %vm637, %v3743, %v3744
      %v3774 = vsel %vm637, %v3758, %v3743
      %v3775 = vsel %vm313, 0.0, %v3774
      %v3776 = vsel %vm314, 0.0, %v3773
      %v3777 = vsel %vm315, 0.0, %v3772
      %v3778 = vsel %vm316, 0.0, %v3771
      %v3779 = vsel %vm317, 0.0, %v3770
      %v3780 = vsel %vm318, 0.0, %v3769
      %v3781 = vsel %vm319, 0.0, %v3768
      %v3782 = vsel %vm320, 0.0, %v3767
      %v3783 = vsel %vm321, 0.0, %v3766
      %v3784 = vsel %vm322, 0.0, %v3765
      %v3785 = vsel %vm323, 0.0, %v3764
      %v3786 = vsel %vm324, 0.0, %v3763
      %v3787 = vsel %vm325, 0.0, %v3762
      %v3788 = vsel %vm326, 0.0, %v3761
      %v3789 = vsel %vm327, 0.0, %v3760
      %v3790 = vsel %vm328, 0.0, %v3759
      %v3791 = vrot.slane %v3727, 1
      %v3792 = vrot.slane %v3728, 1
      %v3793 = vrot.slane %v3729, 1
      %v3794 = vrot.slane %v3730, 1
      %v3795 = vrot.slane %v3731, 1
      %v3796 = vrot.slane %v3732, 1
      %v3797 = vrot.slane %v3733, 1
      %v3798 = vrot.slane %v3734, 1
      %v3799 = vrot.slane %v3735, 1
      %v3800 = vrot.slane %v3736, 1
      %v3801 = vrot.slane %v3737, 1
      %v3802 = vrot.slane %v3738, 1
      %v3803 = vrot.slane %v3739, 1
      %v3804 = vrot.slane %v3740, 1
      %v3805 = vrot.slane %v3741, 1
      %v3806 = vrot.slane %v3742, 1
      %v3807 = vsel %vm686, %v3805, %v3806
      %v3808 = vsel %vm686, %v3804, %v3805
      %v3809 = vsel %vm686, %v3803, %v3804
      %v3810 = vsel %vm686, %v3802, %v3803
      %v3811 = vsel %vm686, %v3801, %v3802
      %v3812 = vsel %vm686, %v3800, %v3801
      %v3813 = vsel %vm686, %v3799, %v3800
      %v3814 = vsel %vm686, %v3798, %v3799
      %v3815 = vsel %vm686, %v3797, %v3798
      %v3816 = vsel %vm686, %v3796, %v3797
      %v3817 = vsel %vm686, %v3795, %v3796
      %v3818 = vsel %vm686, %v3794, %v3795
      %v3819 = vsel %vm686, %v3793, %v3794
      %v3820 = vsel %vm686, %v3792, %v3793
      %v3821 = vsel %vm686, %v3791, %v3792
      %v3822 = vsel %vm686, %v3806, %v3791
      %v3823 = vsel %vm329, 0.0, %v3821
      %v3824 = vsel %vm330, 0.0, %v3820
      %v3825 = vsel %vm331, 0.0, %v3819
      %v3826 = vsel %vm332, 0.0, %v3818
      %v3827 = vsel %vm333, 0.0, %v3817
      %v3828 = vsel %vm334, 0.0, %v3816
      %v3829 = vsel %vm335, 0.0, %v3815
      %v3830 = vsel %vm336, 0.0, %v3814
      %v3831 = vsel %vm337, 0.0, %v3813
      %v3832 = vsel %vm338, 0.0, %v3812
      %v3833 = vsel %vm339, 0.0, %v3811
      %v3834 = vsel %vm340, 0.0, %v3810
      %v3835 = vsel %vm341, 0.0, %v3809
      %v3836 = vsel %vm342, 0.0, %v3808
      %v3837 = vsel %vm343, 0.0, %v3807
      %v3838 = vsel %vm344, 0.0, %v3822
      %v3839 = vpack.c.bf16 %v3728, %v3727
      %v3840 = vpack.c.bf16 %v3730, %v3729
      %v3841 = vpack.c.bf16 %v3732, %v3731
      %v3842 = vpack.c.bf16 %v3734, %v3733
      %v3843 = vpack.c.bf16 %v3736, %v3735
      %v3844 = vpack.c.bf16 %v3738, %v3737
      %v3845 = vpack.c.bf16 %v3740, %v3739
      %v3846 = vpack.c.bf16 %v3742, %v3741
      %v3855 = vunpack.c.l.b16 %v3839
      %v3856 = vunpack.c.h.b16 %v3839
      %v3857 = vunpack.c.l.b16 %v3840
      %v3858 = vunpack.c.h.b16 %v3840
      %v3859 = vunpack.c.l.b16 %v3841
      %v3860 = vunpack.c.h.b16 %v3841
      %v3861 = vunpack.c.l.b16 %v3842
      %v3862 = vunpack.c.h.b16 %v3842
      %v3863 = vunpack.c.l.b16 %v3843
      %v3864 = vunpack.c.h.b16 %v3843
      %v3865 = vunpack.c.l.b16 %v3844
      %v3866 = vunpack.c.h.b16 %v3844
      %v3867 = vunpack.c.l.b16 %v3845
      %v3868 = vunpack.c.h.b16 %v3845
      %v3869 = vunpack.c.l.b16 %v3846
      %v3870 = vunpack.c.h.b16 %v3846
      %v3871 = vpack.c.b16 %v3855, %v3855
      %v3872 = vpack.c.b16 %v3856, %v3856
      %v3873 = vpack.c.b16 %v3857, %v3857
      %v3874 = vpack.c.b16 %v3858, %v3858
      %v3875 = vpack.c.b16 %v3859, %v3859
      %v3876 = vpack.c.b16 %v3860, %v3860
      %v3877 = vpack.c.b16 %v3861, %v3861
      %v3878 = vpack.c.b16 %v3862, %v3862
      %v3879 = vpack.c.b16 %v3863, %v3863
      %v3880 = vpack.c.b16 %v3864, %v3864
      %v3881 = vpack.c.b16 %v3865, %v3865
      %v3882 = vpack.c.b16 %v3866, %v3866
      %v3883 = vpack.c.b16 %v3867, %v3867
      %v3884 = vpack.c.b16 %v3868, %v3868
      %v3885 = vpack.c.b16 %v3869, %v3869
      %v3886 = vpack.c.b16 %v3870, %v3870
      %3903 = vst [vmem:[%s363 + $0x8] sm:$0xf] %v3871
      %3904 = vst [vmem:[%s363 + $0xc] sm:$0xf] %v3872
      %3905 = vst [vmem:[%s363 + $0x10] sm:$0xf] %v3873
      %3906 = vst [vmem:[%s363 + $0x14] sm:$0xf] %v3874
      %3907 = vst [vmem:[%s363 + $0x18] sm:$0xf] %v3875
      %3908 = vst [vmem:[%s363 + $0x1c] sm:$0xf] %v3876
      %3909 = vst [vmem:[%s363 + $0x20] sm:$0xf] %v3877
      %3910 = vst [vmem:[%s363 + $0x24] sm:$0xf] %v3878
      %3911 = vst [vmem:[%s363 + $0x28] sm:$0xf] %v3879
      %3912 = vst [vmem:[%s363 + $0x2c] sm:$0xf] %v3880
      %3913 = vst [vmem:[%s363 + $0x30] sm:$0xf] %v3881
      %3914 = vst [vmem:[%s363 + $0x34] sm:$0xf] %v3882
      %3915 = vst [vmem:[%s363 + $0x38] sm:$0xf] %v3883
      %3916 = vst [vmem:[%s363 + $0x3c] sm:$0xf] %v3884
      %3917 = vst [vmem:[%s363 + $0x40] sm:$0xf] %v3885
      %3918 = vst [vmem:[%s363 + $0x44] sm:$0xf] %v3886
      %v3919 = vpack.c.bf16 %v3776, %v3775
      %v3920 = vpack.c.bf16 %v3778, %v3777
      %v3921 = vpack.c.bf16 %v3780, %v3779
      %v3922 = vpack.c.bf16 %v3782, %v3781
      %v3923 = vpack.c.bf16 %v3784, %v3783
      %v3924 = vpack.c.bf16 %v3786, %v3785
      %v3925 = vpack.c.bf16 %v3788, %v3787
      %v3926 = vpack.c.bf16 %v3790, %v3789
      %v3935 = vunpack.c.l.b16 %v3919
      %v3936 = vunpack.c.h.b16 %v3919
      %v3937 = vunpack.c.l.b16 %v3920
      %v3938 = vunpack.c.h.b16 %v3920
      %v3939 = vunpack.c.l.b16 %v3921
      %v3940 = vunpack.c.h.b16 %v3921
      %v3941 = vunpack.c.l.b16 %v3922
      %v3942 = vunpack.c.h.b16 %v3922
      %v3943 = vunpack.c.l.b16 %v3923
      %v3944 = vunpack.c.h.b16 %v3923
      %v3945 = vunpack.c.l.b16 %v3924
      %v3946 = vunpack.c.h.b16 %v3924
      %v3947 = vunpack.c.l.b16 %v3925
      %v3948 = vunpack.c.h.b16 %v3925
      %v3949 = vunpack.c.l.b16 %v3926
      %v3950 = vunpack.c.h.b16 %v3926
      %v3951 = vpack.c.b16 %v3935, %v3935
      %v3952 = vpack.c.b16 %v3936, %v3936
      %v3953 = vpack.c.b16 %v3937, %v3937
      %v3954 = vpack.c.b16 %v3938, %v3938
      %v3955 = vpack.c.b16 %v3939, %v3939
      %v3956 = vpack.c.b16 %v3940, %v3940
      %v3957 = vpack.c.b16 %v3941, %v3941
      %v3958 = vpack.c.b16 %v3942, %v3942
      %v3959 = vpack.c.b16 %v3943, %v3943
      %v3960 = vpack.c.b16 %v3944, %v3944
      %v3961 = vpack.c.b16 %v3945, %v3945
      %v3962 = vpack.c.b16 %v3946, %v3946
      %v3963 = vpack.c.b16 %v3947, %v3947
      %v3964 = vpack.c.b16 %v3948, %v3948
      %v3965 = vpack.c.b16 %v3949, %v3949
      %v3966 = vpack.c.b16 %v3950, %v3950
      %3983 = vst [vmem:[#allocation3 + $0x8] sm:$0xf] %v3951
      %3984 = vst [vmem:[#allocation3 + $0xc] sm:$0xf] %v3952
      %3985 = vst [vmem:[#allocation3 + $0x10] sm:$0xf] %v3953
      %3986 = vst [vmem:[#allocation3 + $0x14] sm:$0xf] %v3954
      %3987 = vst [vmem:[#allocation3 + $0x18] sm:$0xf] %v3955
      %3988 = vst [vmem:[#allocation3 + $0x1c] sm:$0xf] %v3956
      %3989 = vst [vmem:[#allocation3 + $0x20] sm:$0xf] %v3957
      %3990 = vst [vmem:[#allocation3 + $0x24] sm:$0xf] %v3958
      %3991 = vst [vmem:[#allocation3 + $0x28] sm:$0xf] %v3959
      %3992 = vst [vmem:[#allocation3 + $0x2c] sm:$0xf] %v3960
      %3993 = vst [vmem:[#allocation3 + $0x30] sm:$0xf] %v3961
      %3994 = vst [vmem:[#allocation3 + $0x34] sm:$0xf] %v3962
      %3995 = vst [vmem:[#allocation3 + $0x38] sm:$0xf] %v3963
      %3996 = vst [vmem:[#allocation3 + $0x3c] sm:$0xf] %v3964
      %3997 = vst [vmem:[#allocation3 + $0x40] sm:$0xf] %v3965
      %3998 = vst [vmem:[#allocation3 + $0x44] sm:$0xf] %v3966
      %v3999 = vpack.c.bf16 %v3824, %v3823
      %v4000 = vpack.c.bf16 %v3826, %v3825
      %v4001 = vpack.c.bf16 %v3828, %v3827
      %v4002 = vpack.c.bf16 %v3830, %v3829
      %v4003 = vpack.c.bf16 %v3832, %v3831
      %v4004 = vpack.c.bf16 %v3834, %v3833
      %v4005 = vpack.c.bf16 %v3836, %v3835
      %v4006 = vpack.c.bf16 %v3838, %v3837
      %v4015 = vunpack.c.l.b16 %v3999
      %v4016 = vunpack.c.h.b16 %v3999
      %v4017 = vunpack.c.l.b16 %v4000
      %v4018 = vunpack.c.h.b16 %v4000
      %v4019 = vunpack.c.l.b16 %v4001
      %v4020 = vunpack.c.h.b16 %v4001
      %v4021 = vunpack.c.l.b16 %v4002
      %v4022 = vunpack.c.h.b16 %v4002
      %v4023 = vunpack.c.l.b16 %v4003
      %v4024 = vunpack.c.h.b16 %v4003
      %v4025 = vunpack.c.l.b16 %v4004
      %v4026 = vunpack.c.h.b16 %v4004
      %v4027 = vunpack.c.l.b16 %v4005
      %v4028 = vunpack.c.h.b16 %v4005
      %v4029 = vunpack.c.l.b16 %v4006
      %v4030 = vunpack.c.h.b16 %v4006
      %v4031 = vpack.c.b16 %v4015, %v4015
      %v4032 = vpack.c.b16 %v4016, %v4016
      %v4033 = vpack.c.b16 %v4017, %v4017
      %v4034 = vpack.c.b16 %v4018, %v4018
      %v4035 = vpack.c.b16 %v4019, %v4019
      %v4036 = vpack.c.b16 %v4020, %v4020
      %v4037 = vpack.c.b16 %v4021, %v4021
      %v4038 = vpack.c.b16 %v4022, %v4022
      %v4039 = vpack.c.b16 %v4023, %v4023
      %v4040 = vpack.c.b16 %v4024, %v4024
      %v4041 = vpack.c.b16 %v4025, %v4025
      %v4042 = vpack.c.b16 %v4026, %v4026
      %v4043 = vpack.c.b16 %v4027, %v4027
      %v4044 = vpack.c.b16 %v4028, %v4028
      %v4045 = vpack.c.b16 %v4029, %v4029
      %v4046 = vpack.c.b16 %v4030, %v4030
      %4063 = vst [vmem:[%s368 + $0x8] sm:$0xf] %v4031
      %4064 = vst [vmem:[%s368 + $0xc] sm:$0xf] %v4032
      %4065 = vst [vmem:[%s368 + $0x10] sm:$0xf] %v4033
      %4066 = vst [vmem:[%s368 + $0x14] sm:$0xf] %v4034
      %4067 = vst [vmem:[%s368 + $0x18] sm:$0xf] %v4035
      %4068 = vst [vmem:[%s368 + $0x1c] sm:$0xf] %v4036
      %4069 = vst [vmem:[%s368 + $0x20] sm:$0xf] %v4037
      %4070 = vst [vmem:[%s368 + $0x24] sm:$0xf] %v4038
      %4071 = vst [vmem:[%s368 + $0x28] sm:$0xf] %v4039
      %4072 = vst [vmem:[%s368 + $0x2c] sm:$0xf] %v4040
      %4073 = vst [vmem:[%s368 + $0x30] sm:$0xf] %v4041
      %4074 = vst [vmem:[%s368 + $0x34] sm:$0xf] %v4042
      %4075 = vst [vmem:[%s368 + $0x38] sm:$0xf] %v4043
      %4076 = vst [vmem:[%s368 + $0x3c] sm:$0xf] %v4044
      %4077 = vst [vmem:[%s368 + $0x40] sm:$0xf] %v4045
      %4078 = vst [vmem:[%s368 + $0x44] sm:$0xf] %v4046
      %v4079 = vld [vmem:[%s4] sm:$0x1]
      %v4081 = vlaneseq
      %v4082 = vshrl.u32 %v4081, 7
      %v4083 = vsub.s32 0, %v4082
      %v4084 = vrot.slane %v4079, %v4083
      %v4086 = vld [vmem:[#allocation2 + $0x40] sm:$0xf]
      %v4087 = vld [vmem:[#allocation2 + $0x44] sm:$0xf]
      %v4088 = vld [vmem:[#allocation2 + $0x48] sm:$0xf]
      %v4089 = vld [vmem:[#allocation2 + $0x4c] sm:$0xf]
      %v4090 = vld [vmem:[#allocation2 + $0x50] sm:$0xf]
      %v4091 = vld [vmem:[#allocation2 + $0x54] sm:$0xf]
      %v4092 = vld [vmem:[#allocation2 + $0x58] sm:$0xf]
      %v4093 = vld [vmem:[#allocation2 + $0x5c] sm:$0xf]
      %v4094 = vld [vmem:[#allocation2 + $0x60] sm:$0xf]
      %v4095 = vld [vmem:[#allocation2 + $0x64] sm:$0xf]
      %v4096 = vld [vmem:[#allocation2 + $0x68] sm:$0xf]
      %v4097 = vld [vmem:[#allocation2 + $0x6c] sm:$0xf]
      %v4098 = vld [vmem:[#allocation2 + $0x70] sm:$0xf]
      %v4099 = vld [vmem:[#allocation2 + $0x74] sm:$0xf]
      %v4100 = vld [vmem:[#allocation2 + $0x78] sm:$0xf]
      %v4101 = vld [vmem:[#allocation2 + $0x7c] sm:$0xf]
      %v4102 = vld [vmem:[%s3] sm:$0xf]
      %v4103 = vld [vmem:[%s3 + $0x4] sm:$0xf]
      %v4104 = vld [vmem:[%s3 + $0x8] sm:$0xf]
      %v4105 = vld [vmem:[%s3 + $0xc] sm:$0xf]
      %v4106 = vld [vmem:[%s3 + $0x10] sm:$0xf]
      %v4107 = vld [vmem:[%s3 + $0x14] sm:$0xf]
      %v4108 = vld [vmem:[%s3 + $0x18] sm:$0xf]
      %v4109 = vld [vmem:[%s3 + $0x1c] sm:$0xf]
      %v4110 = vld [vmem:[%s3 + $0x20] sm:$0xf]
      %v4111 = vld [vmem:[%s3 + $0x24] sm:$0xf]
      %v4112 = vld [vmem:[%s3 + $0x28] sm:$0xf]
      %v4113 = vld [vmem:[%s3 + $0x2c] sm:$0xf]
      %v4114 = vld [vmem:[%s3 + $0x30] sm:$0xf]
      %v4115 = vld [vmem:[%s3 + $0x34] sm:$0xf]
      %v4116 = vld [vmem:[%s3 + $0x38] sm:$0xf]
      %v4117 = vld [vmem:[%s3 + $0x3c] sm:$0xf]
      %v4134 = vunpack.c.l.b16 %v4086
      %v4135 = vunpack.c.l.b16 %v4087
      %v4136 = vunpack.c.l.b16 %v4088
      %v4137 = vunpack.c.l.b16 %v4089
      %v4138 = vunpack.c.l.b16 %v4090
      %v4139 = vunpack.c.l.b16 %v4091
      %v4140 = vunpack.c.l.b16 %v4092
      %v4141 = vunpack.c.l.b16 %v4093
      %v4142 = vunpack.c.l.b16 %v4094
      %v4143 = vunpack.c.l.b16 %v4095
      %v4144 = vunpack.c.l.b16 %v4096
      %v4145 = vunpack.c.l.b16 %v4097
      %v4146 = vunpack.c.l.b16 %v4098
      %v4147 = vunpack.c.l.b16 %v4099
      %v4148 = vunpack.c.l.b16 %v4100
      %v4149 = vunpack.c.l.b16 %v4101
      %v4150 = vpack.c.b16 %v4135, %v4134
      %v4151 = vpack.c.b16 %v4137, %v4136
      %v4152 = vpack.c.b16 %v4139, %v4138
      %v4153 = vpack.c.b16 %v4141, %v4140
      %v4154 = vpack.c.b16 %v4143, %v4142
      %v4155 = vpack.c.b16 %v4145, %v4144
      %v4156 = vpack.c.b16 %v4147, %v4146
      %v4157 = vpack.c.b16 %v4149, %v4148
      %v4182 = vunpack.c.l.b16 %v4102
      %v4183 = vunpack.c.l.b16 %v4103
      %v4184 = vunpack.c.l.b16 %v4104
      %v4185 = vunpack.c.l.b16 %v4105
      %v4186 = vunpack.c.l.b16 %v4106
      %v4187 = vunpack.c.l.b16 %v4107
      %v4188 = vunpack.c.l.b16 %v4108
      %v4189 = vunpack.c.l.b16 %v4109
      %v4190 = vunpack.c.l.b16 %v4110
      %v4191 = vunpack.c.l.b16 %v4111
      %v4192 = vunpack.c.l.b16 %v4112
      %v4193 = vunpack.c.l.b16 %v4113
      %v4194 = vunpack.c.l.b16 %v4114
      %v4195 = vunpack.c.l.b16 %v4115
      %v4196 = vunpack.c.l.b16 %v4116
      %v4197 = vunpack.c.l.b16 %v4117
      %v4198 = vpack.c.b16 %v4183, %v4182
      %v4199 = vpack.c.b16 %v4185, %v4184
      %v4200 = vpack.c.b16 %v4187, %v4186
      %v4201 = vpack.c.b16 %v4189, %v4188
      %v4202 = vpack.c.b16 %v4191, %v4190
      %v4203 = vpack.c.b16 %v4193, %v4192
      %v4204 = vpack.c.b16 %v4195, %v4194
      %v4205 = vpack.c.b16 %v4197, %v4196
      %4214 = vmatprep.subr.bf16.mxu0 0
      %4215 = vmatpush1.bf16.msra.mxu0 %v4205
      %4216 = vmatprep.subr.bf16.mxu0 0
      %4217 = vmatpush1.bf16.msra.mxu0 %v4204
      %4218 = vmatprep.subr.bf16.mxu0 0
      %4219 = vmatpush1.bf16.msra.mxu0 %v4203
      %4220 = vmatprep.subr.bf16.mxu0 0
      %4221 = vmatpush1.bf16.msra.mxu0 %v4202
      %4222 = vmatprep.subr.bf16.mxu0 0
      %4223 = vmatpush1.bf16.msra.mxu0 %v4201
      %4224 = vmatprep.subr.bf16.mxu0 0
      %4225 = vmatpush1.bf16.msra.mxu0 %v4200
      %4226 = vmatprep.subr.bf16.mxu0 0
      %4227 = vmatpush1.bf16.msra.mxu0 %v4199
      %4228 = vmatprep.subr.bf16.mxu0 0
      %4229 = vmatpush1.bf16.msra.mxu0 %v4198
      %4230 = vmatprep.subr.bf16.mxu0 0
      %4231 = vmatpush2.bf16.msra.mxu0 0
      %4232 = vmatprep.subr.bf16.mxu0 0
      %4233 = vmatpush2.bf16.msra.mxu0 0
      %4234 = vmatprep.subr.bf16.mxu0 0
      %4235 = vmatpush2.bf16.msra.mxu0 0
      %4236 = vmatprep.subr.bf16.mxu0 0
      %4237 = vmatpush2.bf16.msra.mxu0 0
      %4238 = vmatprep.subr.bf16.mxu0 0
      %4239 = vmatpush2.bf16.msra.mxu0 0
      %4240 = vmatprep.subr.bf16.mxu0 0
      %4241 = vmatpush2.bf16.msra.mxu0 0
      %4242 = vmatprep.subr.bf16.mxu0 0
      %4243 = vmatpush2.bf16.msra.mxu0 0
      %4244 = vmatprep.subr.bf16.mxu0 0
      %4245 = vmatpush2.bf16.msra.mxu0 0
      %4246 = vmatprep.mubr.bf16.mxu0 0
      %4247 = vmatmul.mubr.bf16.gmra.mxu0 %v4150
      %v4248 = vpop.f32.mrf.mxu0
      %v4249 = vadd.f32 0.0, %v4248
      %v4250 = vpop.f32.mrf.mxu0
      %v4251 = vpop.f32.mrf.mxu0
      %v4252 = vadd.f32 0.0, %v4251
      %v4253 = vpop.f32.mrf.mxu0
      %4254 = vmatprep.mubr.bf16.mxu0 0
      %4255 = vmatmul.mubr.bf16.gmra.mxu0 %v4151
      %v4256 = vpop.f32.mrf.mxu0
      %v4257 = vadd.f32 0.0, %v4256
      %v4258 = vpop.f32.mrf.mxu0
      %v4259 = vpop.f32.mrf.mxu0
      %v4260 = vadd.f32 0.0, %v4259
      %v4261 = vpop.f32.mrf.mxu0
      %4262 = vmatprep.mubr.bf16.mxu0 0
      %4263 = vmatmul.mubr.bf16.gmra.mxu0 %v4152
      %v4264 = vpop.f32.mrf.mxu0
      %v4265 = vadd.f32 0.0, %v4264
      %v4266 = vpop.f32.mrf.mxu0
      %v4267 = vpop.f32.mrf.mxu0
      %v4268 = vadd.f32 0.0, %v4267
      %v4269 = vpop.f32.mrf.mxu0
      %4270 = vmatprep.mubr.bf16.mxu0 0
      %4271 = vmatmul.mubr.bf16.gmra.mxu0 %v4153
      %v4272 = vpop.f32.mrf.mxu0
      %v4273 = vadd.f32 0.0, %v4272
      %v4274 = vpop.f32.mrf.mxu0
      %v4275 = vpop.f32.mrf.mxu0
      %v4276 = vadd.f32 0.0, %v4275
      %v4277 = vpop.f32.mrf.mxu0
      %4278 = vmatprep.mubr.bf16.mxu0 0
      %4279 = vmatmul.mubr.bf16.gmra.mxu0 %v4154
      %v4280 = vpop.f32.mrf.mxu0
      %v4281 = vadd.f32 0.0, %v4280
      %v4282 = vpop.f32.mrf.mxu0
      %v4283 = vpop.f32.mrf.mxu0
      %v4284 = vadd.f32 0.0, %v4283
      %v4285 = vpop.f32.mrf.mxu0
      %4286 = vmatprep.mubr.bf16.mxu0 0
      %4287 = vmatmul.mubr.bf16.gmra.mxu0 %v4155
      %v4288 = vpop.f32.mrf.mxu0
      %v4289 = vadd.f32 0.0, %v4288
      %v4290 = vpop.f32.mrf.mxu0
      %v4291 = vpop.f32.mrf.mxu0
      %v4292 = vadd.f32 0.0, %v4291
      %v4293 = vpop.f32.mrf.mxu0
      %4294 = vmatprep.mubr.bf16.mxu0 0
      %4295 = vmatmul.mubr.bf16.gmra.mxu0 %v4156
      %v4296 = vpop.f32.mrf.mxu0
      %v4297 = vadd.f32 0.0, %v4296
      %v4298 = vpop.f32.mrf.mxu0
      %v4299 = vpop.f32.mrf.mxu0
      %v4300 = vadd.f32 0.0, %v4299
      %v4301 = vpop.f32.mrf.mxu0
      %4302 = vmatprep.mubr.bf16.mxu0 0
      %4303 = vmatmul.mubr.bf16.gmra.mxu0 %v4157
      %v4304 = vpop.f32.mrf.mxu0
      %v4305 = vadd.f32 0.0, %v4304
      %v4306 = vpop.f32.mrf.mxu0
      %v4307 = vpop.f32.mrf.mxu0
      %v4308 = vadd.f32 0.0, %v4307
      %v4309 = vpop.f32.mrf.mxu0
      %4310 = vdwg.mxu0
      %v4311 = vadd.f32 %v4084, %v4249
      %v4312 = vadd.f32 %v4084, %v4252
      %v4313 = vadd.f32 %v4084, %v4257
      %v4314 = vadd.f32 %v4084, %v4260
      %v4315 = vadd.f32 %v4084, %v4265
      %v4316 = vadd.f32 %v4084, %v4268
      %v4317 = vadd.f32 %v4084, %v4273
      %v4318 = vadd.f32 %v4084, %v4276
      %v4319 = vadd.f32 %v4084, %v4281
      %v4320 = vadd.f32 %v4084, %v4284
      %v4321 = vadd.f32 %v4084, %v4289
      %v4322 = vadd.f32 %v4084, %v4292
      %v4323 = vadd.f32 %v4084, %v4297
      %v4324 = vadd.f32 %v4084, %v4300
      %v4325 = vadd.f32 %v4084, %v4305
      %v4326 = vadd.f32 %v4084, %v4308
      %v4327 = vld [vmem:[%s349 + $0x40] sm:$0xf]
      %v4328 = vld [vmem:[%s349 + $0x44] sm:$0xf]
      %v4329 = vld [vmem:[%s349 + $0x48] sm:$0xf]
      %v4330 = vld [vmem:[%s349 + $0x4c] sm:$0xf]
      %v4331 = vld [vmem:[%s349 + $0x50] sm:$0xf]
      %v4332 = vld [vmem:[%s349 + $0x54] sm:$0xf]
      %v4333 = vld [vmem:[%s349 + $0x58] sm:$0xf]
      %v4334 = vld [vmem:[%s349 + $0x5c] sm:$0xf]
      %v4335 = vld [vmem:[%s349 + $0x60] sm:$0xf]
      %v4336 = vld [vmem:[%s349 + $0x64] sm:$0xf]
      %v4337 = vld [vmem:[%s349 + $0x68] sm:$0xf]
      %v4338 = vld [vmem:[%s349 + $0x6c] sm:$0xf]
      %v4339 = vld [vmem:[%s349 + $0x70] sm:$0xf]
      %v4340 = vld [vmem:[%s349 + $0x74] sm:$0xf]
      %v4341 = vld [vmem:[%s349 + $0x78] sm:$0xf]
      %v4342 = vld [vmem:[%s349 + $0x7c] sm:$0xf]
      %v4343 = vld [vmem:[%s1807] sm:$0xf]
      %v4344 = vld [vmem:[%s1807 + $0x4] sm:$0xf]
      %v4345 = vld [vmem:[%s1807 + $0x8] sm:$0xf]
      %v4346 = vld [vmem:[%s1807 + $0xc] sm:$0xf]
      %v4347 = vld [vmem:[%s1807 + $0x10] sm:$0xf]
      %v4348 = vld [vmem:[%s1807 + $0x14] sm:$0xf]
      %v4349 = vld [vmem:[%s1807 + $0x18] sm:$0xf]
      %v4350 = vld [vmem:[%s1807 + $0x1c] sm:$0xf]
      %v4351 = vld [vmem:[%s1807 + $0x20] sm:$0xf]
      %v4352 = vld [vmem:[%s1807 + $0x24] sm:$0xf]
      %v4353 = vld [vmem:[%s1807 + $0x28] sm:$0xf]
      %v4354 = vld [vmem:[%s1807 + $0x2c] sm:$0xf]
      %v4355 = vld [vmem:[%s1807 + $0x30] sm:$0xf]
      %v4356 = vld [vmem:[%s1807 + $0x34] sm:$0xf]
      %v4357 = vld [vmem:[%s1807 + $0x38] sm:$0xf]
      %v4358 = vld [vmem:[%s1807 + $0x3c] sm:$0xf]
      %v4375 = vunpack.c.l.b16 %v4327
      %v4376 = vunpack.c.l.b16 %v4328
      %v4377 = vunpack.c.l.b16 %v4329
      %v4378 = vunpack.c.l.b16 %v4330
      %v4379 = vunpack.c.l.b16 %v4331
      %v4380 = vunpack.c.l.b16 %v4332
      %v4381 = vunpack.c.l.b16 %v4333
      %v4382 = vunpack.c.l.b16 %v4334
      %v4383 = vunpack.c.l.b16 %v4335
      %v4384 = vunpack.c.l.b16 %v4336
      %v4385 = vunpack.c.l.b16 %v4337
      %v4386 = vunpack.c.l.b16 %v4338
      %v4387 = vunpack.c.l.b16 %v4339
      %v4388 = vunpack.c.l.b16 %v4340
      %v4389 = vunpack.c.l.b16 %v4341
      %v4390 = vunpack.c.l.b16 %v4342
      %v4391 = vpack.c.b16 %v4376, %v4375
      %v4392 = vpack.c.b16 %v4378, %v4377
      %v4393 = vpack.c.b16 %v4380, %v4379
      %v4394 = vpack.c.b16 %v4382, %v4381
      %v4395 = vpack.c.b16 %v4384, %v4383
      %v4396 = vpack.c.b16 %v4386, %v4385
      %v4397 = vpack.c.b16 %v4388, %v4387
      %v4398 = vpack.c.b16 %v4390, %v4389
      %v4423 = vunpack.c.l.b16 %v4343
      %v4424 = vunpack.c.l.b16 %v4344
      %v4425 = vunpack.c.l.b16 %v4345
      %v4426 = vunpack.c.l.b16 %v4346
      %v4427 = vunpack.c.l.b16 %v4347
      %v4428 = vunpack.c.l.b16 %v4348
      %v4429 = vunpack.c.l.b16 %v4349
      %v4430 = vunpack.c.l.b16 %v4350
      %v4431 = vunpack.c.l.b16 %v4351
      %v4432 = vunpack.c.l.b16 %v4352
      %v4433 = vunpack.c.l.b16 %v4353
      %v4434 = vunpack.c.l.b16 %v4354
      %v4435 = vunpack.c.l.b16 %v4355
      %v4436 = vunpack.c.l.b16 %v4356
      %v4437 = vunpack.c.l.b16 %v4357
      %v4438 = vunpack.c.l.b16 %v4358
      %v4439 = vpack.c.b16 %v4424, %v4423
      %v4440 = vpack.c.b16 %v4426, %v4425
      %v4441 = vpack.c.b16 %v4428, %v4427
      %v4442 = vpack.c.b16 %v4430, %v4429
      %v4443 = vpack.c.b16 %v4432, %v4431
      %v4444 = vpack.c.b16 %v4434, %v4433
      %v4445 = vpack.c.b16 %v4436, %v4435
      %v4446 = vpack.c.b16 %v4438, %v4437
      %4455 = vmatprep.subr.bf16.mxu0 0
      %4456 = vmatpush1.bf16.msra.mxu0 %v4446
      %4457 = vmatprep.subr.bf16.mxu0 0
      %4458 = vmatpush1.bf16.msra.mxu0 %v4445
      %4459 = vmatprep.subr.bf16.mxu0 0
      %4460 = vmatpush1.bf16.msra.mxu0 %v4444
      %4461 = vmatprep.subr.bf16.mxu0 0
      %4462 = vmatpush1.bf16.msra.mxu0 %v4443
      %4463 = vmatprep.subr.bf16.mxu0 0
      %4464 = vmatpush1.bf16.msra.mxu0 %v4442
      %4465 = vmatprep.subr.bf16.mxu0 0
      %4466 = vmatpush1.bf16.msra.mxu0 %v4441
      %4467 = vmatprep.subr.bf16.mxu0 0
      %4468 = vmatpush1.bf16.msra.mxu0 %v4440
      %4469 = vmatprep.subr.bf16.mxu0 0
      %4470 = vmatpush1.bf16.msra.mxu0 %v4439
      %4471 = vmatprep.subr.bf16.mxu0 0
      %4472 = vmatpush2.bf16.msra.mxu0 0
      %4473 = vmatprep.subr.bf16.mxu0 0
      %4474 = vmatpush2.bf16.msra.mxu0 0
      %4475 = vmatprep.subr.bf16.mxu0 0
      %4476 = vmatpush2.bf16.msra.mxu0 0
      %4477 = vmatprep.subr.bf16.mxu0 0
      %4478 = vmatpush2.bf16.msra.mxu0 0
      %4479 = vmatprep.subr.bf16.mxu0 0
      %4480 = vmatpush2.bf16.msra.mxu0 0
      %4481 = vmatprep.subr.bf16.mxu0 0
      %4482 = vmatpush2.bf16.msra.mxu0 0
      %4483 = vmatprep.subr.bf16.mxu0 0
      %4484 = vmatpush2.bf16.msra.mxu0 0
      %4485 = vmatprep.subr.bf16.mxu0 0
      %4486 = vmatpush2.bf16.msra.mxu0 0
      %4487 = vmatprep.mubr.bf16.mxu0 0
      %4488 = vmatmul.mubr.bf16.gmra.mxu0 %v4391
      %v4489 = vpop.f32.mrf.mxu0
      %v4490 = vadd.f32 0.0, %v4489
      %v4491 = vpop.f32.mrf.mxu0
      %v4492 = vpop.f32.mrf.mxu0
      %v4493 = vadd.f32 0.0, %v4492
      %v4494 = vpop.f32.mrf.mxu0
      %4495 = vmatprep.mubr.bf16.mxu0 0
      %4496 = vmatmul.mubr.bf16.gmra.mxu0 %v4392
      %v4497 = vpop.f32.mrf.mxu0
      %v4498 = vadd.f32 0.0, %v4497
      %v4499 = vpop.f32.mrf.mxu0
      %v4500 = vpop.f32.mrf.mxu0
      %v4501 = vadd.f32 0.0, %v4500
      %v4502 = vpop.f32.mrf.mxu0
      %4503 = vmatprep.mubr.bf16.mxu0 0
      %4504 = vmatmul.mubr.bf16.gmra.mxu0 %v4393
      %v4505 = vpop.f32.mrf.mxu0
      %v4506 = vadd.f32 0.0, %v4505
      %v4507 = vpop.f32.mrf.mxu0
      %v4508 = vpop.f32.mrf.mxu0
      %v4509 = vadd.f32 0.0, %v4508
      %v4510 = vpop.f32.mrf.mxu0
      %4511 = vmatprep.mubr.bf16.mxu0 0
      %4512 = vmatmul.mubr.bf16.gmra.mxu0 %v4394
      %v4513 = vpop.f32.mrf.mxu0
      %v4514 = vadd.f32 0.0, %v4513
      %v4515 = vpop.f32.mrf.mxu0
      %v4516 = vpop.f32.mrf.mxu0
      %v4517 = vadd.f32 0.0, %v4516
      %v4518 = vpop.f32.mrf.mxu0
      %4519 = vmatprep.mubr.bf16.mxu0 0
      %4520 = vmatmul.mubr.bf16.gmra.mxu0 %v4395
      %v4521 = vpop.f32.mrf.mxu0
      %v4522 = vadd.f32 0.0, %v4521
      %v4523 = vpop.f32.mrf.mxu0
      %v4524 = vpop.f32.mrf.mxu0
      %v4525 = vadd.f32 0.0, %v4524
      %v4526 = vpop.f32.mrf.mxu0
      %4527 = vmatprep.mubr.bf16.mxu0 0
      %4528 = vmatmul.mubr.bf16.gmra.mxu0 %v4396
      %v4529 = vpop.f32.mrf.mxu0
      %v4530 = vadd.f32 0.0, %v4529
      %v4531 = vpop.f32.mrf.mxu0
      %v4532 = vpop.f32.mrf.mxu0
      %v4533 = vadd.f32 0.0, %v4532
      %v4534 = vpop.f32.mrf.mxu0
      %4535 = vmatprep.mubr.bf16.mxu0 0
      %4536 = vmatmul.mubr.bf16.gmra.mxu0 %v4397
      %v4537 = vpop.f32.mrf.mxu0
      %v4538 = vadd.f32 0.0, %v4537
      %v4539 = vpop.f32.mrf.mxu0
      %v4540 = vpop.f32.mrf.mxu0
      %v4541 = vadd.f32 0.0, %v4540
      %v4542 = vpop.f32.mrf.mxu0
      %4543 = vmatprep.mubr.bf16.mxu0 0
      %4544 = vmatmul.mubr.bf16.gmra.mxu0 %v4398
      %v4545 = vpop.f32.mrf.mxu0
      %v4546 = vadd.f32 0.0, %v4545
      %v4547 = vpop.f32.mrf.mxu0
      %v4548 = vpop.f32.mrf.mxu0
      %v4549 = vadd.f32 0.0, %v4548
      %v4550 = vpop.f32.mrf.mxu0
      %4551 = vdwg.mxu0
      %v4552 = vadd.f32 %v4311, %v4490
      %v4553 = vadd.f32 %v4312, %v4493
      %v4554 = vadd.f32 %v4313, %v4498
      %v4555 = vadd.f32 %v4314, %v4501
      %v4556 = vadd.f32 %v4315, %v4506
      %v4557 = vadd.f32 %v4316, %v4509
      %v4558 = vadd.f32 %v4317, %v4514
      %v4559 = vadd.f32 %v4318, %v4517
      %v4560 = vadd.f32 %v4319, %v4522
      %v4561 = vadd.f32 %v4320, %v4525
      %v4562 = vadd.f32 %v4321, %v4530
      %v4563 = vadd.f32 %v4322, %v4533
      %v4564 = vadd.f32 %v4323, %v4538
      %v4565 = vadd.f32 %v4324, %v4541
      %v4566 = vadd.f32 %v4325, %v4546
      %v4567 = vadd.f32 %v4326, %v4549
      %v4568 = vld [vmem:[%s354 + $0x40] sm:$0xf]
      %v4569 = vld [vmem:[%s354 + $0x44] sm:$0xf]
      %v4570 = vld [vmem:[%s354 + $0x48] sm:$0xf]
      %v4571 = vld [vmem:[%s354 + $0x4c] sm:$0xf]
      %v4572 = vld [vmem:[%s354 + $0x50] sm:$0xf]
      %v4573 = vld [vmem:[%s354 + $0x54] sm:$0xf]
      %v4574 = vld [vmem:[%s354 + $0x58] sm:$0xf]
      %v4575 = vld [vmem:[%s354 + $0x5c] sm:$0xf]
      %v4576 = vld [vmem:[%s354 + $0x60] sm:$0xf]
      %v4577 = vld [vmem:[%s354 + $0x64] sm:$0xf]
      %v4578 = vld [vmem:[%s354 + $0x68] sm:$0xf]
      %v4579 = vld [vmem:[%s354 + $0x6c] sm:$0xf]
      %v4580 = vld [vmem:[%s354 + $0x70] sm:$0xf]
      %v4581 = vld [vmem:[%s354 + $0x74] sm:$0xf]
      %v4582 = vld [vmem:[%s354 + $0x78] sm:$0xf]
      %v4583 = vld [vmem:[%s354 + $0x7c] sm:$0xf]
      %v4584 = vld [vmem:[%s2049] sm:$0xf]
      %v4585 = vld [vmem:[%s2049 + $0x4] sm:$0xf]
      %v4586 = vld [vmem:[%s2049 + $0x8] sm:$0xf]
      %v4587 = vld [vmem:[%s2049 + $0xc] sm:$0xf]
      %v4588 = vld [vmem:[%s2049 + $0x10] sm:$0xf]
      %v4589 = vld [vmem:[%s2049 + $0x14] sm:$0xf]
      %v4590 = vld [vmem:[%s2049 + $0x18] sm:$0xf]
      %v4591 = vld [vmem:[%s2049 + $0x1c] sm:$0xf]
      %v4592 = vld [vmem:[%s2049 + $0x20] sm:$0xf]
      %v4593 = vld [vmem:[%s2049 + $0x24] sm:$0xf]
      %v4594 = vld [vmem:[%s2049 + $0x28] sm:$0xf]
      %v4595 = vld [vmem:[%s2049 + $0x2c] sm:$0xf]
      %v4596 = vld [vmem:[%s2049 + $0x30] sm:$0xf]
      %v4597 = vld [vmem:[%s2049 + $0x34] sm:$0xf]
      %v4598 = vld [vmem:[%s2049 + $0x38] sm:$0xf]
      %v4599 = vld [vmem:[%s2049 + $0x3c] sm:$0xf]
      %v4616 = vunpack.c.l.b16 %v4568
      %v4617 = vunpack.c.l.b16 %v4569
      %v4618 = vunpack.c.l.b16 %v4570
      %v4619 = vunpack.c.l.b16 %v4571
      %v4620 = vunpack.c.l.b16 %v4572
      %v4621 = vunpack.c.l.b16 %v4573
      %v4622 = vunpack.c.l.b16 %v4574
      %v4623 = vunpack.c.l.b16 %v4575
      %v4624 = vunpack.c.l.b16 %v4576
      %v4625 = vunpack.c.l.b16 %v4577
      %v4626 = vunpack.c.l.b16 %v4578
      %v4627 = vunpack.c.l.b16 %v4579
      %v4628 = vunpack.c.l.b16 %v4580
      %v4629 = vunpack.c.l.b16 %v4581
      %v4630 = vunpack.c.l.b16 %v4582
      %v4631 = vunpack.c.l.b16 %v4583
      %v4632 = vpack.c.b16 %v4617, %v4616
      %v4633 = vpack.c.b16 %v4619, %v4618
      %v4634 = vpack.c.b16 %v4621, %v4620
      %v4635 = vpack.c.b16 %v4623, %v4622
      %v4636 = vpack.c.b16 %v4625, %v4624
      %v4637 = vpack.c.b16 %v4627, %v4626
      %v4638 = vpack.c.b16 %v4629, %v4628
      %v4639 = vpack.c.b16 %v4631, %v4630
      %v4664 = vunpack.c.l.b16 %v4584
      %v4665 = vunpack.c.l.b16 %v4585
      %v4666 = vunpack.c.l.b16 %v4586
      %v4667 = vunpack.c.l.b16 %v4587
      %v4668 = vunpack.c.l.b16 %v4588
      %v4669 = vunpack.c.l.b16 %v4589
      %v4670 = vunpack.c.l.b16 %v4590
      %v4671 = vunpack.c.l.b16 %v4591
      %v4672 = vunpack.c.l.b16 %v4592
      %v4673 = vunpack.c.l.b16 %v4593
      %v4674 = vunpack.c.l.b16 %v4594
      %v4675 = vunpack.c.l.b16 %v4595
      %v4676 = vunpack.c.l.b16 %v4596
      %v4677 = vunpack.c.l.b16 %v4597
      %v4678 = vunpack.c.l.b16 %v4598
      %v4679 = vunpack.c.l.b16 %v4599
      %v4680 = vpack.c.b16 %v4665, %v4664
      %v4681 = vpack.c.b16 %v4667, %v4666
      %v4682 = vpack.c.b16 %v4669, %v4668
      %v4683 = vpack.c.b16 %v4671, %v4670
      %v4684 = vpack.c.b16 %v4673, %v4672
      %v4685 = vpack.c.b16 %v4675, %v4674
      %v4686 = vpack.c.b16 %v4677, %v4676
      %v4687 = vpack.c.b16 %v4679, %v4678
      %4696 = vmatprep.subr.bf16.mxu0 0
      %4697 = vmatpush1.bf16.msra.mxu0 %v4687
      %4698 = vmatprep.subr.bf16.mxu0 0
      %4699 = vmatpush1.bf16.msra.mxu0 %v4686
      %4700 = vmatprep.subr.bf16.mxu0 0
      %4701 = vmatpush1.bf16.msra.mxu0 %v4685
      %4702 = vmatprep.subr.bf16.mxu0 0
      %4703 = vmatpush1.bf16.msra.mxu0 %v4684
      %4704 = vmatprep.subr.bf16.mxu0 0
      %4705 = vmatpush1.bf16.msra.mxu0 %v4683
      %4706 = vmatprep.subr.bf16.mxu0 0
      %4707 = vmatpush1.bf16.msra.mxu0 %v4682
      %4708 = vmatprep.subr.bf16.mxu0 0
      %4709 = vmatpush1.bf16.msra.mxu0 %v4681
      %4710 = vmatprep.subr.bf16.mxu0 0
      %4711 = vmatpush1.bf16.msra.mxu0 %v4680
      %4712 = vmatprep.subr.bf16.mxu0 0
      %4713 = vmatpush2.bf16.msra.mxu0 0
      %4714 = vmatprep.subr.bf16.mxu0 0
      %4715 = vmatpush2.bf16.msra.mxu0 0
      %4716 = vmatprep.subr.bf16.mxu0 0
      %4717 = vmatpush2.bf16.msra.mxu0 0
      %4718 = vmatprep.subr.bf16.mxu0 0
      %4719 = vmatpush2.bf16.msra.mxu0 0
      %4720 = vmatprep.subr.bf16.mxu0 0
      %4721 = vmatpush2.bf16.msra.mxu0 0
      %4722 = vmatprep.subr.bf16.mxu0 0
      %4723 = vmatpush2.bf16.msra.mxu0 0
      %4724 = vmatprep.subr.bf16.mxu0 0
      %4725 = vmatpush2.bf16.msra.mxu0 0
      %4726 = vmatprep.subr.bf16.mxu0 0
      %4727 = vmatpush2.bf16.msra.mxu0 0
      %4728 = vmatprep.mubr.bf16.mxu0 0
      %4729 = vmatmul.mubr.bf16.gmra.mxu0 %v4632
      %v4730 = vpop.f32.mrf.mxu0
      %v4731 = vadd.f32 0.0, %v4730
      %v4732 = vpop.f32.mrf.mxu0
      %v4733 = vpop.f32.mrf.mxu0
      %v4734 = vadd.f32 0.0, %v4733
      %v4735 = vpop.f32.mrf.mxu0
      %4736 = vmatprep.mubr.bf16.mxu0 0
      %4737 = vmatmul.mubr.bf16.gmra.mxu0 %v4633
      %v4738 = vpop.f32.mrf.mxu0
      %v4739 = vadd.f32 0.0, %v4738
      %v4740 = vpop.f32.mrf.mxu0
      %v4741 = vpop.f32.mrf.mxu0
      %v4742 = vadd.f32 0.0, %v4741
      %v4743 = vpop.f32.mrf.mxu0
      %4744 = vmatprep.mubr.bf16.mxu0 0
      %4745 = vmatmul.mubr.bf16.gmra.mxu0 %v4634
      %v4746 = vpop.f32.mrf.mxu0
      %v4747 = vadd.f32 0.0, %v4746
      %v4748 = vpop.f32.mrf.mxu0
      %v4749 = vpop.f32.mrf.mxu0
      %v4750 = vadd.f32 0.0, %v4749
      %v4751 = vpop.f32.mrf.mxu0
      %4752 = vmatprep.mubr.bf16.mxu0 0
      %4753 = vmatmul.mubr.bf16.gmra.mxu0 %v4635
      %v4754 = vpop.f32.mrf.mxu0
      %v4755 = vadd.f32 0.0, %v4754
      %v4756 = vpop.f32.mrf.mxu0
      %v4757 = vpop.f32.mrf.mxu0
      %v4758 = vadd.f32 0.0, %v4757
      %v4759 = vpop.f32.mrf.mxu0
      %4760 = vmatprep.mubr.bf16.mxu0 0
      %4761 = vmatmul.mubr.bf16.gmra.mxu0 %v4636
      %v4762 = vpop.f32.mrf.mxu0
      %v4763 = vadd.f32 0.0, %v4762
      %v4764 = vpop.f32.mrf.mxu0
      %v4765 = vpop.f32.mrf.mxu0
      %v4766 = vadd.f32 0.0, %v4765
      %v4767 = vpop.f32.mrf.mxu0
      %4768 = vmatprep.mubr.bf16.mxu0 0
      %4769 = vmatmul.mubr.bf16.gmra.mxu0 %v4637
      %v4770 = vpop.f32.mrf.mxu0
      %v4771 = vadd.f32 0.0, %v4770
      %v4772 = vpop.f32.mrf.mxu0
      %v4773 = vpop.f32.mrf.mxu0
      %v4774 = vadd.f32 0.0, %v4773
      %v4775 = vpop.f32.mrf.mxu0
      %4776 = vmatprep.mubr.bf16.mxu0 0
      %4777 = vmatmul.mubr.bf16.gmra.mxu0 %v4638
      %v4778 = vpop.f32.mrf.mxu0
      %v4779 = vadd.f32 0.0, %v4778
      %v4780 = vpop.f32.mrf.mxu0
      %v4781 = vpop.f32.mrf.mxu0
      %v4782 = vadd.f32 0.0, %v4781
      %v4783 = vpop.f32.mrf.mxu0
      %4784 = vmatprep.mubr.bf16.mxu0 0
      %4785 = vmatmul.mubr.bf16.gmra.mxu0 %v4639
      %v4786 = vpop.f32.mrf.mxu0
      %v4787 = vadd.f32 0.0, %v4786
      %v4788 = vpop.f32.mrf.mxu0
      %v4789 = vpop.f32.mrf.mxu0
      %v4790 = vadd.f32 0.0, %v4789
      %v4791 = vpop.f32.mrf.mxu0
      %4792 = vdwg.mxu0
      %v4793 = vadd.f32 %v4552, %v4731
      %v4794 = vadd.f32 %v4553, %v4734
      %v4795 = vadd.f32 %v4554, %v4739
      %v4796 = vadd.f32 %v4555, %v4742
      %v4797 = vadd.f32 %v4556, %v4747
      %v4798 = vadd.f32 %v4557, %v4750
      %v4799 = vadd.f32 %v4558, %v4755
      %v4800 = vadd.f32 %v4559, %v4758
      %v4801 = vadd.f32 %v4560, %v4763
      %v4802 = vadd.f32 %v4561, %v4766
      %v4803 = vadd.f32 %v4562, %v4771
      %v4804 = vadd.f32 %v4563, %v4774
      %v4805 = vadd.f32 %v4564, %v4779
      %v4806 = vadd.f32 %v4565, %v4782
      %v4807 = vadd.f32 %v4566, %v4787
      %v4808 = vadd.f32 %v4567, %v4790
      %v4809 = vld [vmem:[#allocation2 + $0x48] sm:$0xf]
      %v4810 = vld [vmem:[#allocation2 + $0x4c] sm:$0xf]
      %v4811 = vld [vmem:[#allocation2 + $0x50] sm:$0xf]
      %v4812 = vld [vmem:[#allocation2 + $0x54] sm:$0xf]
      %v4813 = vld [vmem:[#allocation2 + $0x58] sm:$0xf]
      %v4814 = vld [vmem:[#allocation2 + $0x5c] sm:$0xf]
      %v4815 = vld [vmem:[#allocation2 + $0x60] sm:$0xf]
      %v4816 = vld [vmem:[#allocation2 + $0x64] sm:$0xf]
      %v4817 = vld [vmem:[#allocation2 + $0x68] sm:$0xf]
      %v4818 = vld [vmem:[#allocation2 + $0x6c] sm:$0xf]
      %v4819 = vld [vmem:[#allocation2 + $0x70] sm:$0xf]
      %v4820 = vld [vmem:[#allocation2 + $0x74] sm:$0xf]
      %v4821 = vld [vmem:[#allocation2 + $0x78] sm:$0xf]
      %v4822 = vld [vmem:[#allocation2 + $0x7c] sm:$0xf]
      %v4823 = vld [vmem:[#allocation2 + $0x80] sm:$0xf]
      %v4824 = vld [vmem:[#allocation2 + $0x84] sm:$0xf]
      %v4825 = vld [vmem:[%s2291] sm:$0xf]
      %v4826 = vld [vmem:[%s2291 + $0x4] sm:$0xf]
      %v4827 = vld [vmem:[%s2291 + $0x8] sm:$0xf]
      %v4828 = vld [vmem:[%s2291 + $0xc] sm:$0xf]
      %v4829 = vld [vmem:[%s2291 + $0x10] sm:$0xf]
      %v4830 = vld [vmem:[%s2291 + $0x14] sm:$0xf]
      %v4831 = vld [vmem:[%s2291 + $0x18] sm:$0xf]
      %v4832 = vld [vmem:[%s2291 + $0x1c] sm:$0xf]
      %v4833 = vld [vmem:[%s2291 + $0x20] sm:$0xf]
      %v4834 = vld [vmem:[%s2291 + $0x24] sm:$0xf]
      %v4835 = vld [vmem:[%s2291 + $0x28] sm:$0xf]
      %v4836 = vld [vmem:[%s2291 + $0x2c] sm:$0xf]
      %v4837 = vld [vmem:[%s2291 + $0x30] sm:$0xf]
      %v4838 = vld [vmem:[%s2291 + $0x34] sm:$0xf]
      %v4839 = vld [vmem:[%s2291 + $0x38] sm:$0xf]
      %v4840 = vld [vmem:[%s2291 + $0x3c] sm:$0xf]
      %v4857 = vunpack.c.l.b16 %v4809
      %v4858 = vunpack.c.l.b16 %v4810
      %v4859 = vunpack.c.l.b16 %v4811
      %v4860 = vunpack.c.l.b16 %v4812
      %v4861 = vunpack.c.l.b16 %v4813
      %v4862 = vunpack.c.l.b16 %v4814
      %v4863 = vunpack.c.l.b16 %v4815
      %v4864 = vunpack.c.l.b16 %v4816
      %v4865 = vunpack.c.l.b16 %v4817
      %v4866 = vunpack.c.l.b16 %v4818
      %v4867 = vunpack.c.l.b16 %v4819
      %v4868 = vunpack.c.l.b16 %v4820
      %v4869 = vunpack.c.l.b16 %v4821
      %v4870 = vunpack.c.l.b16 %v4822
      %v4871 = vunpack.c.l.b16 %v4823
      %v4872 = vunpack.c.l.b16 %v4824
      %v4873 = vpack.c.b16 %v4858, %v4857
      %v4874 = vpack.c.b16 %v4860, %v4859
      %v4875 = vpack.c.b16 %v4862, %v4861
      %v4876 = vpack.c.b16 %v4864, %v4863
      %v4877 = vpack.c.b16 %v4866, %v4865
      %v4878 = vpack.c.b16 %v4868, %v4867
      %v4879 = vpack.c.b16 %v4870, %v4869
      %v4880 = vpack.c.b16 %v4872, %v4871
      %v4905 = vunpack.c.l.b16 %v4825
      %v4906 = vunpack.c.l.b16 %v4826
      %v4907 = vunpack.c.l.b16 %v4827
      %v4908 = vunpack.c.l.b16 %v4828
      %v4909 = vunpack.c.l.b16 %v4829
      %v4910 = vunpack.c.l.b16 %v4830
      %v4911 = vunpack.c.l.b16 %v4831
      %v4912 = vunpack.c.l.b16 %v4832
      %v4913 = vunpack.c.l.b16 %v4833
      %v4914 = vunpack.c.l.b16 %v4834
      %v4915 = vunpack.c.l.b16 %v4835
      %v4916 = vunpack.c.l.b16 %v4836
      %v4917 = vunpack.c.l.b16 %v4837
      %v4918 = vunpack.c.l.b16 %v4838
      %v4919 = vunpack.c.l.b16 %v4839
      %v4920 = vunpack.c.l.b16 %v4840
      %v4921 = vpack.c.b16 %v4906, %v4905
      %v4922 = vpack.c.b16 %v4908, %v4907
      %v4923 = vpack.c.b16 %v4910, %v4909
      %v4924 = vpack.c.b16 %v4912, %v4911
      %v4925 = vpack.c.b16 %v4914, %v4913
      %v4926 = vpack.c.b16 %v4916, %v4915
      %v4927 = vpack.c.b16 %v4918, %v4917
      %v4928 = vpack.c.b16 %v4920, %v4919
      %4937 = vmatprep.subr.bf16.mxu0 0
      %4938 = vmatpush1.bf16.msra.mxu0 %v4928
      %4939 = vmatprep.subr.bf16.mxu0 0
      %4940 = vmatpush1.bf16.msra.mxu0 %v4927
      %4941 = vmatprep.subr.bf16.mxu0 0
      %4942 = vmatpush1.bf16.msra.mxu0 %v4926
      %4943 = vmatprep.subr.bf16.mxu0 0
      %4944 = vmatpush1.bf16.msra.mxu0 %v4925
      %4945 = vmatprep.subr.bf16.mxu0 0
      %4946 = vmatpush1.bf16.msra.mxu0 %v4924
      %4947 = vmatprep.subr.bf16.mxu0 0
      %4948 = vmatpush1.bf16.msra.mxu0 %v4923
      %4949 = vmatprep.subr.bf16.mxu0 0
      %4950 = vmatpush1.bf16.msra.mxu0 %v4922
      %4951 = vmatprep.subr.bf16.mxu0 0
      %4952 = vmatpush1.bf16.msra.mxu0 %v4921
      %4953 = vmatprep.subr.bf16.mxu0 0
      %4954 = vmatpush2.bf16.msra.mxu0 0
      %4955 = vmatprep.subr.bf16.mxu0 0
      %4956 = vmatpush2.bf16.msra.mxu0 0
      %4957 = vmatprep.subr.bf16.mxu0 0
      %4958 = vmatpush2.bf16.msra.mxu0 0
      %4959 = vmatprep.subr.bf16.mxu0 0
      %4960 = vmatpush2.bf16.msra.mxu0 0
      %4961 = vmatprep.subr.bf16.mxu0 0
      %4962 = vmatpush2.bf16.msra.mxu0 0
      %4963 = vmatprep.subr.bf16.mxu0 0
      %4964 = vmatpush2.bf16.msra.mxu0 0
      %4965 = vmatprep.subr.bf16.mxu0 0
      %4966 = vmatpush2.bf16.msra.mxu0 0
      %4967 = vmatprep.subr.bf16.mxu0 0
      %4968 = vmatpush2.bf16.msra.mxu0 0
      %4969 = vmatprep.mubr.bf16.mxu0 0
      %4970 = vmatmul.mubr.bf16.gmra.mxu0 %v4873
      %v4971 = vpop.f32.mrf.mxu0
      %v4972 = vadd.f32 0.0, %v4971
      %v4973 = vpop.f32.mrf.mxu0
      %v4974 = vpop.f32.mrf.mxu0
      %v4975 = vadd.f32 0.0, %v4974
      %v4976 = vpop.f32.mrf.mxu0
      %4977 = vmatprep.mubr.bf16.mxu0 0
      %4978 = vmatmul.mubr.bf16.gmra.mxu0 %v4874
      %v4979 = vpop.f32.mrf.mxu0
      %v4980 = vadd.f32 0.0, %v4979
      %v4981 = vpop.f32.mrf.mxu0
      %v4982 = vpop.f32.mrf.mxu0
      %v4983 = vadd.f32 0.0, %v4982
      %v4984 = vpop.f32.mrf.mxu0
      %4985 = vmatprep.mubr.bf16.mxu0 0
      %4986 = vmatmul.mubr.bf16.gmra.mxu0 %v4875
      %v4987 = vpop.f32.mrf.mxu0
      %v4988 = vadd.f32 0.0, %v4987
      %v4989 = vpop.f32.mrf.mxu0
      %v4990 = vpop.f32.mrf.mxu0
      %v4991 = vadd.f32 0.0, %v4990
      %v4992 = vpop.f32.mrf.mxu0
      %4993 = vmatprep.mubr.bf16.mxu0 0
      %4994 = vmatmul.mubr.bf16.gmra.mxu0 %v4876
      %v4995 = vpop.f32.mrf.mxu0
      %v4996 = vadd.f32 0.0, %v4995
      %v4997 = vpop.f32.mrf.mxu0
      %v4998 = vpop.f32.mrf.mxu0
      %v4999 = vadd.f32 0.0, %v4998
      %v5000 = vpop.f32.mrf.mxu0
      %5001 = vmatprep.mubr.bf16.mxu0 0
      %5002 = vmatmul.mubr.bf16.gmra.mxu0 %v4877
      %v5003 = vpop.f32.mrf.mxu0
      %v5004 = vadd.f32 0.0, %v5003
      %v5005 = vpop.f32.mrf.mxu0
      %v5006 = vpop.f32.mrf.mxu0
      %v5007 = vadd.f32 0.0, %v5006
      %v5008 = vpop.f32.mrf.mxu0
      %5009 = vmatprep.mubr.bf16.mxu0 0
      %5010 = vmatmul.mubr.bf16.gmra.mxu0 %v4878
      %v5011 = vpop.f32.mrf.mxu0
      %v5012 = vadd.f32 0.0, %v5011
      %v5013 = vpop.f32.mrf.mxu0
      %v5014 = vpop.f32.mrf.mxu0
      %v5015 = vadd.f32 0.0, %v5014
      %v5016 = vpop.f32.mrf.mxu0
      %5017 = vmatprep.mubr.bf16.mxu0 0
      %5018 = vmatmul.mubr.bf16.gmra.mxu0 %v4879
      %v5019 = vpop.f32.mrf.mxu0
      %v5020 = vadd.f32 0.0, %v5019
      %v5021 = vpop.f32.mrf.mxu0
      %v5022 = vpop.f32.mrf.mxu0
      %v5023 = vadd.f32 0.0, %v5022
      %v5024 = vpop.f32.mrf.mxu0
      %5025 = vmatprep.mubr.bf16.mxu0 0
      %5026 = vmatmul.mubr.bf16.gmra.mxu0 %v4880
      %v5027 = vpop.f32.mrf.mxu0
      %v5028 = vadd.f32 0.0, %v5027
      %v5029 = vpop.f32.mrf.mxu0
      %v5030 = vpop.f32.mrf.mxu0
      %v5031 = vadd.f32 0.0, %v5030
      %v5032 = vpop.f32.mrf.mxu0
      %5033 = vdwg.mxu0
      %v5034 = vadd.f32 %v4793, %v4972
      %v5035 = vadd.f32 %v4794, %v4975
      %v5036 = vadd.f32 %v4795, %v4980
      %v5037 = vadd.f32 %v4796, %v4983
      %v5038 = vadd.f32 %v4797, %v4988
      %v5039 = vadd.f32 %v4798, %v4991
      %v5040 = vadd.f32 %v4799, %v4996
      %v5041 = vadd.f32 %v4800, %v4999
      %v5042 = vadd.f32 %v4801, %v5004
      %v5043 = vadd.f32 %v4802, %v5007
      %v5044 = vadd.f32 %v4803, %v5012
      %v5045 = vadd.f32 %v4804, %v5015
      %v5046 = vadd.f32 %v4805, %v5020
      %v5047 = vadd.f32 %v4806, %v5023
      %v5048 = vadd.f32 %v4807, %v5028
      %v5049 = vadd.f32 %v4808, %v5031
      %v5050 = vld [vmem:[%s349 + $0x48] sm:$0xf]
      %v5051 = vld [vmem:[%s349 + $0x4c] sm:$0xf]
      %v5052 = vld [vmem:[%s349 + $0x50] sm:$0xf]
      %v5053 = vld [vmem:[%s349 + $0x54] sm:$0xf]
      %v5054 = vld [vmem:[%s349 + $0x58] sm:$0xf]
      %v5055 = vld [vmem:[%s349 + $0x5c] sm:$0xf]
      %v5056 = vld [vmem:[%s349 + $0x60] sm:$0xf]
      %v5057 = vld [vmem:[%s349 + $0x64] sm:$0xf]
      %v5058 = vld [vmem:[%s349 + $0x68] sm:$0xf]
      %v5059 = vld [vmem:[%s349 + $0x6c] sm:$0xf]
      %v5060 = vld [vmem:[%s349 + $0x70] sm:$0xf]
      %v5061 = vld [vmem:[%s349 + $0x74] sm:$0xf]
      %v5062 = vld [vmem:[%s349 + $0x78] sm:$0xf]
      %v5063 = vld [vmem:[%s349 + $0x7c] sm:$0xf]
      %v5064 = vld [vmem:[%s349 + $0x80] sm:$0xf]
      %v5065 = vld [vmem:[%s349 + $0x84] sm:$0xf]
      %v5066 = vld [vmem:[%s2533] sm:$0xf]
      %v5067 = vld [vmem:[%s2533 + $0x4] sm:$0xf]
      %v5068 = vld [vmem:[%s2533 + $0x8] sm:$0xf]
      %v5069 = vld [vmem:[%s2533 + $0xc] sm:$0xf]
      %v5070 = vld [vmem:[%s2533 + $0x10] sm:$0xf]
      %v5071 = vld [vmem:[%s2533 + $0x14] sm:$0xf]
      %v5072 = vld [vmem:[%s2533 + $0x18] sm:$0xf]
      %v5073 = vld [vmem:[%s2533 + $0x1c] sm:$0xf]
      %v5074 = vld [vmem:[%s2533 + $0x20] sm:$0xf]
      %v5075 = vld [vmem:[%s2533 + $0x24] sm:$0xf]
      %v5076 = vld [vmem:[%s2533 + $0x28] sm:$0xf]
      %v5077 = vld [vmem:[%s2533 + $0x2c] sm:$0xf]
      %v5078 = vld [vmem:[%s2533 + $0x30] sm:$0xf]
      %v5079 = vld [vmem:[%s2533 + $0x34] sm:$0xf]
      %v5080 = vld [vmem:[%s2533 + $0x38] sm:$0xf]
      %v5081 = vld [vmem:[%s2533 + $0x3c] sm:$0xf]
      %v5098 = vunpack.c.l.b16 %v5050
      %v5099 = vunpack.c.l.b16 %v5051
      %v5100 = vunpack.c.l.b16 %v5052
      %v5101 = vunpack.c.l.b16 %v5053
      %v5102 = vunpack.c.l.b16 %v5054
      %v5103 = vunpack.c.l.b16 %v5055
      %v5104 = vunpack.c.l.b16 %v5056
      %v5105 = vunpack.c.l.b16 %v5057
      %v5106 = vunpack.c.l.b16 %v5058
      %v5107 = vunpack.c.l.b16 %v5059
      %v5108 = vunpack.c.l.b16 %v5060
      %v5109 = vunpack.c.l.b16 %v5061
      %v5110 = vunpack.c.l.b16 %v5062
      %v5111 = vunpack.c.l.b16 %v5063
      %v5112 = vunpack.c.l.b16 %v5064
      %v5113 = vunpack.c.l.b16 %v5065
      %v5114 = vpack.c.b16 %v5099, %v5098
      %v5115 = vpack.c.b16 %v5101, %v5100
      %v5116 = vpack.c.b16 %v5103, %v5102
      %v5117 = vpack.c.b16 %v5105, %v5104
      %v5118 = vpack.c.b16 %v5107, %v5106
      %v5119 = vpack.c.b16 %v5109, %v5108
      %v5120 = vpack.c.b16 %v5111, %v5110
      %v5121 = vpack.c.b16 %v5113, %v5112
      %v5146 = vunpack.c.l.b16 %v5066
      %v5147 = vunpack.c.l.b16 %v5067
      %v5148 = vunpack.c.l.b16 %v5068
      %v5149 = vunpack.c.l.b16 %v5069
      %v5150 = vunpack.c.l.b16 %v5070
      %v5151 = vunpack.c.l.b16 %v5071
      %v5152 = vunpack.c.l.b16 %v5072
      %v5153 = vunpack.c.l.b16 %v5073
      %v5154 = vunpack.c.l.b16 %v5074
      %v5155 = vunpack.c.l.b16 %v5075
      %v5156 = vunpack.c.l.b16 %v5076
      %v5157 = vunpack.c.l.b16 %v5077
      %v5158 = vunpack.c.l.b16 %v5078
      %v5159 = vunpack.c.l.b16 %v5079
      %v5160 = vunpack.c.l.b16 %v5080
      %v5161 = vunpack.c.l.b16 %v5081
      %v5162 = vpack.c.b16 %v5147, %v5146
      %v5163 = vpack.c.b16 %v5149, %v5148
      %v5164 = vpack.c.b16 %v5151, %v5150
      %v5165 = vpack.c.b16 %v5153, %v5152
      %v5166 = vpack.c.b16 %v5155, %v5154
      %v5167 = vpack.c.b16 %v5157, %v5156
      %v5168 = vpack.c.b16 %v5159, %v5158
      %v5169 = vpack.c.b16 %v5161, %v5160
      %5178 = vmatprep.subr.bf16.mxu0 0
      %5179 = vmatpush1.bf16.msra.mxu0 %v5169
      %5180 = vmatprep.subr.bf16.mxu0 0
      %5181 = vmatpush1.bf16.msra.mxu0 %v5168
      %5182 = vmatprep.subr.bf16.mxu0 0
      %5183 = vmatpush1.bf16.msra.mxu0 %v5167
      %5184 = vmatprep.subr.bf16.mxu0 0
      %5185 = vmatpush1.bf16.msra.mxu0 %v5166
      %5186 = vmatprep.subr.bf16.mxu0 0
      %5187 = vmatpush1.bf16.msra.mxu0 %v5165
      %5188 = vmatprep.subr.bf16.mxu0 0
      %5189 = vmatpush1.bf16.msra.mxu0 %v5164
      %5190 = vmatprep.subr.bf16.mxu0 0
      %5191 = vmatpush1.bf16.msra.mxu0 %v5163
      %5192 = vmatprep.subr.bf16.mxu0 0
      %5193 = vmatpush1.bf16.msra.mxu0 %v5162
      %5194 = vmatprep.subr.bf16.mxu0 0
      %5195 = vmatpush2.bf16.msra.mxu0 0
      %5196 = vmatprep.subr.bf16.mxu0 0
      %5197 = vmatpush2.bf16.msra.mxu0 0
      %5198 = vmatprep.subr.bf16.mxu0 0
      %5199 = vmatpush2.bf16.msra.mxu0 0
      %5200 = vmatprep.subr.bf16.mxu0 0
      %5201 = vmatpush2.bf16.msra.mxu0 0
      %5202 = vmatprep.subr.bf16.mxu0 0
      %5203 = vmatpush2.bf16.msra.mxu0 0
      %5204 = vmatprep.subr.bf16.mxu0 0
      %5205 = vmatpush2.bf16.msra.mxu0 0
      %5206 = vmatprep.subr.bf16.mxu0 0
      %5207 = vmatpush2.bf16.msra.mxu0 0
      %5208 = vmatprep.subr.bf16.mxu0 0
      %5209 = vmatpush2.bf16.msra.mxu0 0
      %5210 = vmatprep.mubr.bf16.mxu0 0
      %5211 = vmatmul.mubr.bf16.gmra.mxu0 %v5114
      %v5212 = vpop.f32.mrf.mxu0
      %v5213 = vadd.f32 0.0, %v5212
      %v5214 = vpop.f32.mrf.mxu0
      %v5215 = vpop.f32.mrf.mxu0
      %v5216 = vadd.f32 0.0, %v5215
      %v5217 = vpop.f32.mrf.mxu0
      %5218 = vmatprep.mubr.bf16.mxu0 0
      %5219 = vmatmul.mubr.bf16.gmra.mxu0 %v5115
      %v5220 = vpop.f32.mrf.mxu0
      %v5221 = vadd.f32 0.0, %v5220
      %v5222 = vpop.f32.mrf.mxu0
      %v5223 = vpop.f32.mrf.mxu0
      %v5224 = vadd.f32 0.0, %v5223
      %v5225 = vpop.f32.mrf.mxu0
      %5226 = vmatprep.mubr.bf16.mxu0 0
      %5227 = vmatmul.mubr.bf16.gmra.mxu0 %v5116
      %v5228 = vpop.f32.mrf.mxu0
      %v5229 = vadd.f32 0.0, %v5228
      %v5230 = vpop.f32.mrf.mxu0
      %v5231 = vpop.f32.mrf.mxu0
      %v5232 = vadd.f32 0.0, %v5231
      %v5233 = vpop.f32.mrf.mxu0
      %5234 = vmatprep.mubr.bf16.mxu0 0
      %5235 = vmatmul.mubr.bf16.gmra.mxu0 %v5117
      %v5236 = vpop.f32.mrf.mxu0
      %v5237 = vadd.f32 0.0, %v5236
      %v5238 = vpop.f32.mrf.mxu0
      %v5239 = vpop.f32.mrf.mxu0
      %v5240 = vadd.f32 0.0, %v5239
      %v5241 = vpop.f32.mrf.mxu0
      %5242 = vmatprep.mubr.bf16.mxu0 0
      %5243 = vmatmul.mubr.bf16.gmra.mxu0 %v5118
      %v5244 = vpop.f32.mrf.mxu0
      %v5245 = vadd.f32 0.0, %v5244
      %v5246 = vpop.f32.mrf.mxu0
      %v5247 = vpop.f32.mrf.mxu0
      %v5248 = vadd.f32 0.0, %v5247
      %v5249 = vpop.f32.mrf.mxu0
      %5250 = vmatprep.mubr.bf16.mxu0 0
      %5251 = vmatmul.mubr.bf16.gmra.mxu0 %v5119
      %v5252 = vpop.f32.mrf.mxu0
      %v5253 = vadd.f32 0.0, %v5252
      %v5254 = vpop.f32.mrf.mxu0
      %v5255 = vpop.f32.mrf.mxu0
      %v5256 = vadd.f32 0.0, %v5255
      %v5257 = vpop.f32.mrf.mxu0
      %5258 = vmatprep.mubr.bf16.mxu0 0
      %5259 = vmatmul.mubr.bf16.gmra.mxu0 %v5120
      %v5260 = vpop.f32.mrf.mxu0
      %v5261 = vadd.f32 0.0, %v5260
      %v5262 = vpop.f32.mrf.mxu0
      %v5263 = vpop.f32.mrf.mxu0
      %v5264 = vadd.f32 0.0, %v5263
      %v5265 = vpop.f32.mrf.mxu0
      %5266 = vmatprep.mubr.bf16.mxu0 0
      %5267 = vmatmul.mubr.bf16.gmra.mxu0 %v5121
      %v5268 = vpop.f32.mrf.mxu0
      %v5269 = vadd.f32 0.0, %v5268
      %v5270 = vpop.f32.mrf.mxu0
      %v5271 = vpop.f32.mrf.mxu0
      %v5272 = vadd.f32 0.0, %v5271
      %v5273 = vpop.f32.mrf.mxu0
      %5274 = vdwg.mxu0
      %v5275 = vadd.f32 %v5034, %v5213
      %v5276 = vadd.f32 %v5035, %v5216
      %v5277 = vadd.f32 %v5036, %v5221
      %v5278 = vadd.f32 %v5037, %v5224
      %v5279 = vadd.f32 %v5038, %v5229
      %v5280 = vadd.f32 %v5039, %v5232
      %v5281 = vadd.f32 %v5040, %v5237
      %v5282 = vadd.f32 %v5041, %v5240
      %v5283 = vadd.f32 %v5042, %v5245
      %v5284 = vadd.f32 %v5043, %v5248
      %v5285 = vadd.f32 %v5044, %v5253
      %v5286 = vadd.f32 %v5045, %v5256
      %v5287 = vadd.f32 %v5046, %v5261
      %v5288 = vadd.f32 %v5047, %v5264
      %v5289 = vadd.f32 %v5048, %v5269
      %v5290 = vadd.f32 %v5049, %v5272
      %v5291 = vld [vmem:[%s354 + $0x48] sm:$0xf]
      %v5292 = vld [vmem:[%s354 + $0x4c] sm:$0xf]
      %v5293 = vld [vmem:[%s354 + $0x50] sm:$0xf]
      %v5294 = vld [vmem:[%s354 + $0x54] sm:$0xf]
      %v5295 = vld [vmem:[%s354 + $0x58] sm:$0xf]
      %v5296 = vld [vmem:[%s354 + $0x5c] sm:$0xf]
      %v5297 = vld [vmem:[%s354 + $0x60] sm:$0xf]
      %v5298 = vld [vmem:[%s354 + $0x64] sm:$0xf]
      %v5299 = vld [vmem:[%s354 + $0x68] sm:$0xf]
      %v5300 = vld [vmem:[%s354 + $0x6c] sm:$0xf]
      %v5301 = vld [vmem:[%s354 + $0x70] sm:$0xf]
      %v5302 = vld [vmem:[%s354 + $0x74] sm:$0xf]
      %v5303 = vld [vmem:[%s354 + $0x78] sm:$0xf]
      %v5304 = vld [vmem:[%s354 + $0x7c] sm:$0xf]
      %v5305 = vld [vmem:[%s354 + $0x80] sm:$0xf]
      %v5306 = vld [vmem:[%s354 + $0x84] sm:$0xf]
      %v5307 = vld [vmem:[%s2775] sm:$0xf]
      %v5308 = vld [vmem:[%s2775 + $0x4] sm:$0xf]
      %v5309 = vld [vmem:[%s2775 + $0x8] sm:$0xf]
      %v5310 = vld [vmem:[%s2775 + $0xc] sm:$0xf]
      %v5311 = vld [vmem:[%s2775 + $0x10] sm:$0xf]
      %v5312 = vld [vmem:[%s2775 + $0x14] sm:$0xf]
      %v5313 = vld [vmem:[%s2775 + $0x18] sm:$0xf]
      %v5314 = vld [vmem:[%s2775 + $0x1c] sm:$0xf]
      %v5315 = vld [vmem:[%s2775 + $0x20] sm:$0xf]
      %v5316 = vld [vmem:[%s2775 + $0x24] sm:$0xf]
      %v5317 = vld [vmem:[%s2775 + $0x28] sm:$0xf]
      %v5318 = vld [vmem:[%s2775 + $0x2c] sm:$0xf]
      %v5319 = vld [vmem:[%s2775 + $0x30] sm:$0xf]
      %v5320 = vld [vmem:[%s2775 + $0x34] sm:$0xf]
      %v5321 = vld [vmem:[%s2775 + $0x38] sm:$0xf]
      %v5322 = vld [vmem:[%s2775 + $0x3c] sm:$0xf]
      %v5339 = vunpack.c.l.b16 %v5291
      %v5340 = vunpack.c.l.b16 %v5292
      %v5341 = vunpack.c.l.b16 %v5293
      %v5342 = vunpack.c.l.b16 %v5294
      %v5343 = vunpack.c.l.b16 %v5295
      %v5344 = vunpack.c.l.b16 %v5296
      %v5345 = vunpack.c.l.b16 %v5297
      %v5346 = vunpack.c.l.b16 %v5298
      %v5347 = vunpack.c.l.b16 %v5299
      %v5348 = vunpack.c.l.b16 %v5300
      %v5349 = vunpack.c.l.b16 %v5301
      %v5350 = vunpack.c.l.b16 %v5302
      %v5351 = vunpack.c.l.b16 %v5303
      %v5352 = vunpack.c.l.b16 %v5304
      %v5353 = vunpack.c.l.b16 %v5305
      %v5354 = vunpack.c.l.b16 %v5306
      %v5355 = vpack.c.b16 %v5340, %v5339
      %v5356 = vpack.c.b16 %v5342, %v5341
      %v5357 = vpack.c.b16 %v5344, %v5343
      %v5358 = vpack.c.b16 %v5346, %v5345
      %v5359 = vpack.c.b16 %v5348, %v5347
      %v5360 = vpack.c.b16 %v5350, %v5349
      %v5361 = vpack.c.b16 %v5352, %v5351
      %v5362 = vpack.c.b16 %v5354, %v5353
      %v5387 = vunpack.c.l.b16 %v5307
      %v5388 = vunpack.c.l.b16 %v5308
      %v5389 = vunpack.c.l.b16 %v5309
      %v5390 = vunpack.c.l.b16 %v5310
      %v5391 = vunpack.c.l.b16 %v5311
      %v5392 = vunpack.c.l.b16 %v5312
      %v5393 = vunpack.c.l.b16 %v5313
      %v5394 = vunpack.c.l.b16 %v5314
      %v5395 = vunpack.c.l.b16 %v5315
      %v5396 = vunpack.c.l.b16 %v5316
      %v5397 = vunpack.c.l.b16 %v5317
      %v5398 = vunpack.c.l.b16 %v5318
      %v5399 = vunpack.c.l.b16 %v5319
      %v5400 = vunpack.c.l.b16 %v5320
      %v5401 = vunpack.c.l.b16 %v5321
      %v5402 = vunpack.c.l.b16 %v5322
      %v5403 = vpack.c.b16 %v5388, %v5387
      %v5404 = vpack.c.b16 %v5390, %v5389
      %v5405 = vpack.c.b16 %v5392, %v5391
      %v5406 = vpack.c.b16 %v5394, %v5393
      %v5407 = vpack.c.b16 %v5396, %v5395
      %v5408 = vpack.c.b16 %v5398, %v5397
      %v5409 = vpack.c.b16 %v5400, %v5399
      %v5410 = vpack.c.b16 %v5402, %v5401
      %5419 = vmatprep.subr.bf16.mxu0 0
      %5420 = vmatpush1.bf16.msra.mxu0 %v5410
      %5421 = vmatprep.subr.bf16.mxu0 0
      %5422 = vmatpush1.bf16.msra.mxu0 %v5409
      %5423 = vmatprep.subr.bf16.mxu0 0
      %5424 = vmatpush1.bf16.msra.mxu0 %v5408
      %5425 = vmatprep.subr.bf16.mxu0 0
      %5426 = vmatpush1.bf16.msra.mxu0 %v5407
      %5427 = vmatprep.subr.bf16.mxu0 0
      %5428 = vmatpush1.bf16.msra.mxu0 %v5406
      %5429 = vmatprep.subr.bf16.mxu0 0
      %5430 = vmatpush1.bf16.msra.mxu0 %v5405
      %5431 = vmatprep.subr.bf16.mxu0 0
      %5432 = vmatpush1.bf16.msra.mxu0 %v5404
      %5433 = vmatprep.subr.bf16.mxu0 0
      %5434 = vmatpush1.bf16.msra.mxu0 %v5403
      %5435 = vmatprep.subr.bf16.mxu0 0
      %5436 = vmatpush2.bf16.msra.mxu0 0
      %5437 = vmatprep.subr.bf16.mxu0 0
      %5438 = vmatpush2.bf16.msra.mxu0 0
      %5439 = vmatprep.subr.bf16.mxu0 0
      %5440 = vmatpush2.bf16.msra.mxu0 0
      %5441 = vmatprep.subr.bf16.mxu0 0
      %5442 = vmatpush2.bf16.msra.mxu0 0
      %5443 = vmatprep.subr.bf16.mxu0 0
      %5444 = vmatpush2.bf16.msra.mxu0 0
      %5445 = vmatprep.subr.bf16.mxu0 0
      %5446 = vmatpush2.bf16.msra.mxu0 0
      %5447 = vmatprep.subr.bf16.mxu0 0
      %5448 = vmatpush2.bf16.msra.mxu0 0
      %5449 = vmatprep.subr.bf16.mxu0 0
      %5450 = vmatpush2.bf16.msra.mxu0 0
      %5451 = vmatprep.mubr.bf16.mxu0 0
      %5452 = vmatmul.mubr.bf16.gmra.mxu0 %v5355
      %v5453 = vpop.f32.mrf.mxu0
      %v5454 = vadd.f32 0.0, %v5453
      %v5455 = vpop.f32.mrf.mxu0
      %v5456 = vpop.f32.mrf.mxu0
      %v5457 = vadd.f32 0.0, %v5456
      %v5458 = vpop.f32.mrf.mxu0
      %5459 = vmatprep.mubr.bf16.mxu0 0
      %5460 = vmatmul.mubr.bf16.gmra.mxu0 %v5356
      %v5461 = vpop.f32.mrf.mxu0
      %v5462 = vadd.f32 0.0, %v5461
      %v5463 = vpop.f32.mrf.mxu0
      %v5464 = vpop.f32.mrf.mxu0
      %v5465 = vadd.f32 0.0, %v5464
      %v5466 = vpop.f32.mrf.mxu0
      %5467 = vmatprep.mubr.bf16.mxu0 0
      %5468 = vmatmul.mubr.bf16.gmra.mxu0 %v5357
      %v5469 = vpop.f32.mrf.mxu0
      %v5470 = vadd.f32 0.0, %v5469
      %v5471 = vpop.f32.mrf.mxu0
      %v5472 = vpop.f32.mrf.mxu0
      %v5473 = vadd.f32 0.0, %v5472
      %v5474 = vpop.f32.mrf.mxu0
      %5475 = vmatprep.mubr.bf16.mxu0 0
      %5476 = vmatmul.mubr.bf16.gmra.mxu0 %v5358
      %v5477 = vpop.f32.mrf.mxu0
      %v5478 = vadd.f32 0.0, %v5477
      %v5479 = vpop.f32.mrf.mxu0
      %v5480 = vpop.f32.mrf.mxu0
      %v5481 = vadd.f32 0.0, %v5480
      %v5482 = vpop.f32.mrf.mxu0
      %5483 = vmatprep.mubr.bf16.mxu0 0
      %5484 = vmatmul.mubr.bf16.gmra.mxu0 %v5359
      %v5485 = vpop.f32.mrf.mxu0
      %v5486 = vadd.f32 0.0, %v5485
      %v5487 = vpop.f32.mrf.mxu0
      %v5488 = vpop.f32.mrf.mxu0
      %v5489 = vadd.f32 0.0, %v5488
      %v5490 = vpop.f32.mrf.mxu0
      %5491 = vmatprep.mubr.bf16.mxu0 0
      %5492 = vmatmul.mubr.bf16.gmra.mxu0 %v5360
      %v5493 = vpop.f32.mrf.mxu0
      %v5494 = vadd.f32 0.0, %v5493
      %v5495 = vpop.f32.mrf.mxu0
      %v5496 = vpop.f32.mrf.mxu0
      %v5497 = vadd.f32 0.0, %v5496
      %v5498 = vpop.f32.mrf.mxu0
      %5499 = vmatprep.mubr.bf16.mxu0 0
      %5500 = vmatmul.mubr.bf16.gmra.mxu0 %v5361
      %v5501 = vpop.f32.mrf.mxu0
      %v5502 = vadd.f32 0.0, %v5501
      %v5503 = vpop.f32.mrf.mxu0
      %v5504 = vpop.f32.mrf.mxu0
      %v5505 = vadd.f32 0.0, %v5504
      %v5506 = vpop.f32.mrf.mxu0
      %5507 = vmatprep.mubr.bf16.mxu0 0
      %5508 = vmatmul.mubr.bf16.gmra.mxu0 %v5362
      %v5509 = vpop.f32.mrf.mxu0
      %v5510 = vadd.f32 0.0, %v5509
      %v5511 = vpop.f32.mrf.mxu0
      %v5512 = vpop.f32.mrf.mxu0
      %v5513 = vadd.f32 0.0, %v5512
      %v5514 = vpop.f32.mrf.mxu0
      %5515 = vdwg.mxu0
      %v5516 = vadd.f32 %v5275, %v5454
      %v5517 = vadd.f32 %v5276, %v5457
      %v5518 = vadd.f32 %v5277, %v5462
      %v5519 = vadd.f32 %v5278, %v5465
      %v5520 = vadd.f32 %v5279, %v5470
      %v5521 = vadd.f32 %v5280, %v5473
      %v5522 = vadd.f32 %v5281, %v5478
      %v5523 = vadd.f32 %v5282, %v5481
      %v5524 = vadd.f32 %v5283, %v5486
      %v5525 = vadd.f32 %v5284, %v5489
      %v5526 = vadd.f32 %v5285, %v5494
      %v5527 = vadd.f32 %v5286, %v5497
      %v5528 = vadd.f32 %v5287, %v5502
      %v5529 = vadd.f32 %v5288, %v5505
      %v5530 = vadd.f32 %v5289, %v5510
      %v5531 = vadd.f32 %v5290, %v5513
      %v5532 = vld [vmem:[#allocation2 + $0x50] sm:$0xf]
      %v5533 = vld [vmem:[#allocation2 + $0x54] sm:$0xf]
      %v5534 = vld [vmem:[#allocation2 + $0x58] sm:$0xf]
      %v5535 = vld [vmem:[#allocation2 + $0x5c] sm:$0xf]
      %v5536 = vld [vmem:[#allocation2 + $0x60] sm:$0xf]
      %v5537 = vld [vmem:[#allocation2 + $0x64] sm:$0xf]
      %v5538 = vld [vmem:[#allocation2 + $0x68] sm:$0xf]
      %v5539 = vld [vmem:[#allocation2 + $0x6c] sm:$0xf]
      %v5540 = vld [vmem:[#allocation2 + $0x70] sm:$0xf]
      %v5541 = vld [vmem:[#allocation2 + $0x74] sm:$0xf]
      %v5542 = vld [vmem:[#allocation2 + $0x78] sm:$0xf]
      %v5543 = vld [vmem:[#allocation2 + $0x7c] sm:$0xf]
      %v5544 = vld [vmem:[#allocation2 + $0x80] sm:$0xf]
      %v5545 = vld [vmem:[#allocation2 + $0x84] sm:$0xf]
      %v5546 = vld [vmem:[#allocation2 + $0x88] sm:$0xf]
      %v5547 = vld [vmem:[#allocation2 + $0x8c] sm:$0xf]
      %v5548 = vld [vmem:[%s3017] sm:$0xf]
      %v5549 = vld [vmem:[%s3017 + $0x4] sm:$0xf]
      %v5550 = vld [vmem:[%s3017 + $0x8] sm:$0xf]
      %v5551 = vld [vmem:[%s3017 + $0xc] sm:$0xf]
      %v5552 = vld [vmem:[%s3017 + $0x10] sm:$0xf]
      %v5553 = vld [vmem:[%s3017 + $0x14] sm:$0xf]
      %v5554 = vld [vmem:[%s3017 + $0x18] sm:$0xf]
      %v5555 = vld [vmem:[%s3017 + $0x1c] sm:$0xf]
      %v5556 = vld [vmem:[%s3017 + $0x20] sm:$0xf]
      %v5557 = vld [vmem:[%s3017 + $0x24] sm:$0xf]
      %v5558 = vld [vmem:[%s3017 + $0x28] sm:$0xf]
      %v5559 = vld [vmem:[%s3017 + $0x2c] sm:$0xf]
      %v5560 = vld [vmem:[%s3017 + $0x30] sm:$0xf]
      %v5561 = vld [vmem:[%s3017 + $0x34] sm:$0xf]
      %v5562 = vld [vmem:[%s3017 + $0x38] sm:$0xf]
      %v5563 = vld [vmem:[%s3017 + $0x3c] sm:$0xf]
      %v5580 = vunpack.c.l.b16 %v5532
      %v5581 = vunpack.c.l.b16 %v5533
      %v5582 = vunpack.c.l.b16 %v5534
      %v5583 = vunpack.c.l.b16 %v5535
      %v5584 = vunpack.c.l.b16 %v5536
      %v5585 = vunpack.c.l.b16 %v5537
      %v5586 = vunpack.c.l.b16 %v5538
      %v5587 = vunpack.c.l.b16 %v5539
      %v5588 = vunpack.c.l.b16 %v5540
      %v5589 = vunpack.c.l.b16 %v5541
      %v5590 = vunpack.c.l.b16 %v5542
      %v5591 = vunpack.c.l.b16 %v5543
      %v5592 = vunpack.c.l.b16 %v5544
      %v5593 = vunpack.c.l.b16 %v5545
      %v5594 = vunpack.c.l.b16 %v5546
      %v5595 = vunpack.c.l.b16 %v5547
      %v5596 = vpack.c.b16 %v5581, %v5580
      %v5597 = vpack.c.b16 %v5583, %v5582
      %v5598 = vpack.c.b16 %v5585, %v5584
      %v5599 = vpack.c.b16 %v5587, %v5586
      %v5600 = vpack.c.b16 %v5589, %v5588
      %v5601 = vpack.c.b16 %v5591, %v5590
      %v5602 = vpack.c.b16 %v5593, %v5592
      %v5603 = vpack.c.b16 %v5595, %v5594
      %v5628 = vunpack.c.l.b16 %v5548
      %v5629 = vunpack.c.l.b16 %v5549
      %v5630 = vunpack.c.l.b16 %v5550
      %v5631 = vunpack.c.l.b16 %v5551
      %v5632 = vunpack.c.l.b16 %v5552
      %v5633 = vunpack.c.l.b16 %v5553
      %v5634 = vunpack.c.l.b16 %v5554
      %v5635 = vunpack.c.l.b16 %v5555
      %v5636 = vunpack.c.l.b16 %v5556
      %v5637 = vunpack.c.l.b16 %v5557
      %v5638 = vunpack.c.l.b16 %v5558
      %v5639 = vunpack.c.l.b16 %v5559
      %v5640 = vunpack.c.l.b16 %v5560
      %v5641 = vunpack.c.l.b16 %v5561
      %v5642 = vunpack.c.l.b16 %v5562
      %v5643 = vunpack.c.l.b16 %v5563
      %v5644 = vpack.c.b16 %v5629, %v5628
      %v5645 = vpack.c.b16 %v5631, %v5630
      %v5646 = vpack.c.b16 %v5633, %v5632
      %v5647 = vpack.c.b16 %v5635, %v5634
      %v5648 = vpack.c.b16 %v5637, %v5636
      %v5649 = vpack.c.b16 %v5639, %v5638
      %v5650 = vpack.c.b16 %v5641, %v5640
      %v5651 = vpack.c.b16 %v5643, %v5642
      %5660 = vmatprep.subr.bf16.mxu0 0
      %5661 = vmatpush1.bf16.msra.mxu0 %v5651
      %5662 = vmatprep.subr.bf16.mxu0 0
      %5663 = vmatpush1.bf16.msra.mxu0 %v5650
      %5664 = vmatprep.subr.bf16.mxu0 0
      %5665 = vmatpush1.bf16.msra.mxu0 %v5649
      %5666 = vmatprep.subr.bf16.mxu0 0
      %5667 = vmatpush1.bf16.msra.mxu0 %v5648
      %5668 = vmatprep.subr.bf16.mxu0 0
      %5669 = vmatpush1.bf16.msra.mxu0 %v5647
      %5670 = vmatprep.subr.bf16.mxu0 0
      %5671 = vmatpush1.bf16.msra.mxu0 %v5646
      %5672 = vmatprep.subr.bf16.mxu0 0
      %5673 = vmatpush1.bf16.msra.mxu0 %v5645
      %5674 = vmatprep.subr.bf16.mxu0 0
      %5675 = vmatpush1.bf16.msra.mxu0 %v5644
      %5676 = vmatprep.subr.bf16.mxu0 0
      %5677 = vmatpush2.bf16.msra.mxu0 0
      %5678 = vmatprep.subr.bf16.mxu0 0
      %5679 = vmatpush2.bf16.msra.mxu0 0
      %5680 = vmatprep.subr.bf16.mxu0 0
      %5681 = vmatpush2.bf16.msra.mxu0 0
      %5682 = vmatprep.subr.bf16.mxu0 0
      %5683 = vmatpush2.bf16.msra.mxu0 0
      %5684 = vmatprep.subr.bf16.mxu0 0
      %5685 = vmatpush2.bf16.msra.mxu0 0
      %5686 = vmatprep.subr.bf16.mxu0 0
      %5687 = vmatpush2.bf16.msra.mxu0 0
      %5688 = vmatprep.subr.bf16.mxu0 0
      %5689 = vmatpush2.bf16.msra.mxu0 0
      %5690 = vmatprep.subr.bf16.mxu0 0
      %5691 = vmatpush2.bf16.msra.mxu0 0
      %5692 = vmatprep.mubr.bf16.mxu0 0
      %5693 = vmatmul.mubr.bf16.gmra.mxu0 %v5596
      %v5694 = vpop.f32.mrf.mxu0
      %v5695 = vadd.f32 0.0, %v5694
      %v5696 = vpop.f32.mrf.mxu0
      %v5697 = vpop.f32.mrf.mxu0
      %v5698 = vadd.f32 0.0, %v5697
      %v5699 = vpop.f32.mrf.mxu0
      %5700 = vmatprep.mubr.bf16.mxu0 0
      %5701 = vmatmul.mubr.bf16.gmra.mxu0 %v5597
      %v5702 = vpop.f32.mrf.mxu0
      %v5703 = vadd.f32 0.0, %v5702
      %v5704 = vpop.f32.mrf.mxu0
      %v5705 = vpop.f32.mrf.mxu0
      %v5706 = vadd.f32 0.0, %v5705
      %v5707 = vpop.f32.mrf.mxu0
      %5708 = vmatprep.mubr.bf16.mxu0 0
      %5709 = vmatmul.mubr.bf16.gmra.mxu0 %v5598
      %v5710 = vpop.f32.mrf.mxu0
      %v5711 = vadd.f32 0.0, %v5710
      %v5712 = vpop.f32.mrf.mxu0
      %v5713 = vpop.f32.mrf.mxu0
      %v5714 = vadd.f32 0.0, %v5713
      %v5715 = vpop.f32.mrf.mxu0
      %5716 = vmatprep.mubr.bf16.mxu0 0
      %5717 = vmatmul.mubr.bf16.gmra.mxu0 %v5599
      %v5718 = vpop.f32.mrf.mxu0
      %v5719 = vadd.f32 0.0, %v5718
      %v5720 = vpop.f32.mrf.mxu0
      %v5721 = vpop.f32.mrf.mxu0
      %v5722 = vadd.f32 0.0, %v5721
      %v5723 = vpop.f32.mrf.mxu0
      %5724 = vmatprep.mubr.bf16.mxu0 0
      %5725 = vmatmul.mubr.bf16.gmra.mxu0 %v5600
      %v5726 = vpop.f32.mrf.mxu0
      %v5727 = vadd.f32 0.0, %v5726
      %v5728 = vpop.f32.mrf.mxu0
      %v5729 = vpop.f32.mrf.mxu0
      %v5730 = vadd.f32 0.0, %v5729
      %v5731 = vpop.f32.mrf.mxu0
      %5732 = vmatprep.mubr.bf16.mxu0 0
      %5733 = vmatmul.mubr.bf16.gmra.mxu0 %v5601
      %v5734 = vpop.f32.mrf.mxu0
      %v5735 = vadd.f32 0.0, %v5734
      %v5736 = vpop.f32.mrf.mxu0
      %v5737 = vpop.f32.mrf.mxu0
      %v5738 = vadd.f32 0.0, %v5737
      %v5739 = vpop.f32.mrf.mxu0
      %5740 = vmatprep.mubr.bf16.mxu0 0
      %5741 = vmatmul.mubr.bf16.gmra.mxu0 %v5602
      %v5742 = vpop.f32.mrf.mxu0
      %v5743 = vadd.f32 0.0, %v5742
      %v5744 = vpop.f32.mrf.mxu0
      %v5745 = vpop.f32.mrf.mxu0
      %v5746 = vadd.f32 0.0, %v5745
      %v5747 = vpop.f32.mrf.mxu0
      %5748 = vmatprep.mubr.bf16.mxu0 0
      %5749 = vmatmul.mubr.bf16.gmra.mxu0 %v5603
      %v5750 = vpop.f32.mrf.mxu0
      %v5751 = vadd.f32 0.0, %v5750
      %v5752 = vpop.f32.mrf.mxu0
      %v5753 = vpop.f32.mrf.mxu0
      %v5754 = vadd.f32 0.0, %v5753
      %v5755 = vpop.f32.mrf.mxu0
      %5756 = vdwg.mxu0
      %v5757 = vadd.f32 %v5516, %v5695
      %v5758 = vadd.f32 %v5517, %v5698
      %v5759 = vadd.f32 %v5518, %v5703
      %v5760 = vadd.f32 %v5519, %v5706
      %v5761 = vadd.f32 %v5520, %v5711
      %v5762 = vadd.f32 %v5521, %v5714
      %v5763 = vadd.f32 %v5522, %v5719
      %v5764 = vadd.f32 %v5523, %v5722
      %v5765 = vadd.f32 %v5524, %v5727
      %v5766 = vadd.f32 %v5525, %v5730
      %v5767 = vadd.f32 %v5526, %v5735
      %v5768 = vadd.f32 %v5527, %v5738
      %v5769 = vadd.f32 %v5528, %v5743
      %v5770 = vadd.f32 %v5529, %v5746
      %v5771 = vadd.f32 %v5530, %v5751
      %v5772 = vadd.f32 %v5531, %v5754
      %v5773 = vld [vmem:[%s349 + $0x50] sm:$0xf]
      %v5774 = vld [vmem:[%s349 + $0x54] sm:$0xf]
      %v5775 = vld [vmem:[%s349 + $0x58] sm:$0xf]
      %v5776 = vld [vmem:[%s349 + $0x5c] sm:$0xf]
      %v5777 = vld [vmem:[%s349 + $0x60] sm:$0xf]
      %v5778 = vld [vmem:[%s349 + $0x64] sm:$0xf]
      %v5779 = vld [vmem:[%s349 + $0x68] sm:$0xf]
      %v5780 = vld [vmem:[%s349 + $0x6c] sm:$0xf]
      %v5781 = vld [vmem:[%s349 + $0x70] sm:$0xf]
      %v5782 = vld [vmem:[%s349 + $0x74] sm:$0xf]
      %v5783 = vld [vmem:[%s349 + $0x78] sm:$0xf]
      %v5784 = vld [vmem:[%s349 + $0x7c] sm:$0xf]
      %v5785 = vld [vmem:[%s349 + $0x80] sm:$0xf]
      %v5786 = vld [vmem:[%s349 + $0x84] sm:$0xf]
      %v5787 = vld [vmem:[%s349 + $0x88] sm:$0xf]
      %v5788 = vld [vmem:[%s349 + $0x8c] sm:$0xf]
      %v5789 = vld [vmem:[%s3259] sm:$0xf]
      %v5790 = vld [vmem:[%s3259 + $0x4] sm:$0xf]
      %v5791 = vld [vmem:[%s3259 + $0x8] sm:$0xf]
      %v5792 = vld [vmem:[%s3259 + $0xc] sm:$0xf]
      %v5793 = vld [vmem:[%s3259 + $0x10] sm:$0xf]
      %v5794 = vld [vmem:[%s3259 + $0x14] sm:$0xf]
      %v5795 = vld [vmem:[%s3259 + $0x18] sm:$0xf]
      %v5796 = vld [vmem:[%s3259 + $0x1c] sm:$0xf]
      %v5797 = vld [vmem:[%s3259 + $0x20] sm:$0xf]
      %v5798 = vld [vmem:[%s3259 + $0x24] sm:$0xf]
      %v5799 = vld [vmem:[%s3259 + $0x28] sm:$0xf]
      %v5800 = vld [vmem:[%s3259 + $0x2c] sm:$0xf]
      %v5801 = vld [vmem:[%s3259 + $0x30] sm:$0xf]
      %v5802 = vld [vmem:[%s3259 + $0x34] sm:$0xf]
      %v5803 = vld [vmem:[%s3259 + $0x38] sm:$0xf]
      %v5804 = vld [vmem:[%s3259 + $0x3c] sm:$0xf]
      %v5821 = vunpack.c.l.b16 %v5773
      %v5822 = vunpack.c.l.b16 %v5774
      %v5823 = vunpack.c.l.b16 %v5775
      %v5824 = vunpack.c.l.b16 %v5776
      %v5825 = vunpack.c.l.b16 %v5777
      %v5826 = vunpack.c.l.b16 %v5778
      %v5827 = vunpack.c.l.b16 %v5779
      %v5828 = vunpack.c.l.b16 %v5780
      %v5829 = vunpack.c.l.b16 %v5781
      %v5830 = vunpack.c.l.b16 %v5782
      %v5831 = vunpack.c.l.b16 %v5783
      %v5832 = vunpack.c.l.b16 %v5784
      %v5833 = vunpack.c.l.b16 %v5785
      %v5834 = vunpack.c.l.b16 %v5786
      %v5835 = vunpack.c.l.b16 %v5787
      %v5836 = vunpack.c.l.b16 %v5788
      %v5837 = vpack.c.b16 %v5822, %v5821
      %v5838 = vpack.c.b16 %v5824, %v5823
      %v5839 = vpack.c.b16 %v5826, %v5825
      %v5840 = vpack.c.b16 %v5828, %v5827
      %v5841 = vpack.c.b16 %v5830, %v5829
      %v5842 = vpack.c.b16 %v5832, %v5831
      %v5843 = vpack.c.b16 %v5834, %v5833
      %v5844 = vpack.c.b16 %v5836, %v5835
      %v5869 = vunpack.c.l.b16 %v5789
      %v5870 = vunpack.c.l.b16 %v5790
      %v5871 = vunpack.c.l.b16 %v5791
      %v5872 = vunpack.c.l.b16 %v5792
      %v5873 = vunpack.c.l.b16 %v5793
      %v5874 = vunpack.c.l.b16 %v5794
      %v5875 = vunpack.c.l.b16 %v5795
      %v5876 = vunpack.c.l.b16 %v5796
      %v5877 = vunpack.c.l.b16 %v5797
      %v5878 = vunpack.c.l.b16 %v5798
      %v5879 = vunpack.c.l.b16 %v5799
      %v5880 = vunpack.c.l.b16 %v5800
      %v5881 = vunpack.c.l.b16 %v5801
      %v5882 = vunpack.c.l.b16 %v5802
      %v5883 = vunpack.c.l.b16 %v5803
      %v5884 = vunpack.c.l.b16 %v5804
      %v5885 = vpack.c.b16 %v5870, %v5869
      %v5886 = vpack.c.b16 %v5872, %v5871
      %v5887 = vpack.c.b16 %v5874, %v5873
      %v5888 = vpack.c.b16 %v5876, %v5875
      %v5889 = vpack.c.b16 %v5878, %v5877
      %v5890 = vpack.c.b16 %v5880, %v5879
      %v5891 = vpack.c.b16 %v5882, %v5881
      %v5892 = vpack.c.b16 %v5884, %v5883
      %5901 = vmatprep.subr.bf16.mxu0 0
      %5902 = vmatpush1.bf16.msra.mxu0 %v5892
      %5903 = vmatprep.subr.bf16.mxu0 0
      %5904 = vmatpush1.bf16.msra.mxu0 %v5891
      %5905 = vmatprep.subr.bf16.mxu0 0
      %5906 = vmatpush1.bf16.msra.mxu0 %v5890
      %5907 = vmatprep.subr.bf16.mxu0 0
      %5908 = vmatpush1.bf16.msra.mxu0 %v5889
      %5909 = vmatprep.subr.bf16.mxu0 0
      %5910 = vmatpush1.bf16.msra.mxu0 %v5888
      %5911 = vmatprep.subr.bf16.mxu0 0
      %5912 = vmatpush1.bf16.msra.mxu0 %v5887
      %5913 = vmatprep.subr.bf16.mxu0 0
      %5914 = vmatpush1.bf16.msra.mxu0 %v5886
      %5915 = vmatprep.subr.bf16.mxu0 0
      %5916 = vmatpush1.bf16.msra.mxu0 %v5885
      %5917 = vmatprep.subr.bf16.mxu0 0
      %5918 = vmatpush2.bf16.msra.mxu0 0
      %5919 = vmatprep.subr.bf16.mxu0 0
      %5920 = vmatpush2.bf16.msra.mxu0 0
      %5921 = vmatprep.subr.bf16.mxu0 0
      %5922 = vmatpush2.bf16.msra.mxu0 0
      %5923 = vmatprep.subr.bf16.mxu0 0
      %5924 = vmatpush2.bf16.msra.mxu0 0
      %5925 = vmatprep.subr.bf16.mxu0 0
      %5926 = vmatpush2.bf16.msra.mxu0 0
      %5927 = vmatprep.subr.bf16.mxu0 0
      %5928 = vmatpush2.bf16.msra.mxu0 0
      %5929 = vmatprep.subr.bf16.mxu0 0
      %5930 = vmatpush2.bf16.msra.mxu0 0
      %5931 = vmatprep.subr.bf16.mxu0 0
      %5932 = vmatpush2.bf16.msra.mxu0 0
      %5933 = vmatprep.mubr.bf16.mxu0 0
      %5934 = vmatmul.mubr.bf16.gmra.mxu0 %v5837
      %v5935 = vpop.f32.mrf.mxu0
      %v5936 = vadd.f32 0.0, %v5935
      %v5937 = vpop.f32.mrf.mxu0
      %v5938 = vpop.f32.mrf.mxu0
      %v5939 = vadd.f32 0.0, %v5938
      %v5940 = vpop.f32.mrf.mxu0
      %5941 = vmatprep.mubr.bf16.mxu0 0
      %5942 = vmatmul.mubr.bf16.gmra.mxu0 %v5838
      %v5943 = vpop.f32.mrf.mxu0
      %v5944 = vadd.f32 0.0, %v5943
      %v5945 = vpop.f32.mrf.mxu0
      %v5946 = vpop.f32.mrf.mxu0
      %v5947 = vadd.f32 0.0, %v5946
      %v5948 = vpop.f32.mrf.mxu0
      %5949 = vmatprep.mubr.bf16.mxu0 0
      %5950 = vmatmul.mubr.bf16.gmra.mxu0 %v5839
      %v5951 = vpop.f32.mrf.mxu0
      %v5952 = vadd.f32 0.0, %v5951
      %v5953 = vpop.f32.mrf.mxu0
      %v5954 = vpop.f32.mrf.mxu0
      %v5955 = vadd.f32 0.0, %v5954
      %v5956 = vpop.f32.mrf.mxu0
      %5957 = vmatprep.mubr.bf16.mxu0 0
      %5958 = vmatmul.mubr.bf16.gmra.mxu0 %v5840
      %v5959 = vpop.f32.mrf.mxu0
      %v5960 = vadd.f32 0.0, %v5959
      %v5961 = vpop.f32.mrf.mxu0
      %v5962 = vpop.f32.mrf.mxu0
      %v5963 = vadd.f32 0.0, %v5962
      %v5964 = vpop.f32.mrf.mxu0
      %5965 = vmatprep.mubr.bf16.mxu0 0
      %5966 = vmatmul.mubr.bf16.gmra.mxu0 %v5841
      %v5967 = vpop.f32.mrf.mxu0
      %v5968 = vadd.f32 0.0, %v5967
      %v5969 = vpop.f32.mrf.mxu0
      %v5970 = vpop.f32.mrf.mxu0
      %v5971 = vadd.f32 0.0, %v5970
      %v5972 = vpop.f32.mrf.mxu0
      %5973 = vmatprep.mubr.bf16.mxu0 0
      %5974 = vmatmul.mubr.bf16.gmra.mxu0 %v5842
      %v5975 = vpop.f32.mrf.mxu0
      %v5976 = vadd.f32 0.0, %v5975
      %v5977 = vpop.f32.mrf.mxu0
      %v5978 = vpop.f32.mrf.mxu0
      %v5979 = vadd.f32 0.0, %v5978
      %v5980 = vpop.f32.mrf.mxu0
      %5981 = vmatprep.mubr.bf16.mxu0 0
      %5982 = vmatmul.mubr.bf16.gmra.mxu0 %v5843
      %v5983 = vpop.f32.mrf.mxu0
      %v5984 = vadd.f32 0.0, %v5983
      %v5985 = vpop.f32.mrf.mxu0
      %v5986 = vpop.f32.mrf.mxu0
      %v5987 = vadd.f32 0.0, %v5986
      %v5988 = vpop.f32.mrf.mxu0
      %5989 = vmatprep.mubr.bf16.mxu0 0
      %5990 = vmatmul.mubr.bf16.gmra.mxu0 %v5844
      %v5991 = vpop.f32.mrf.mxu0
      %v5992 = vadd.f32 0.0, %v5991
      %v5993 = vpop.f32.mrf.mxu0
      %v5994 = vpop.f32.mrf.mxu0
      %v5995 = vadd.f32 0.0, %v5994
      %v5996 = vpop.f32.mrf.mxu0
      %5997 = vdwg.mxu0
      %v5998 = vadd.f32 %v5757, %v5936
      %v5999 = vadd.f32 %v5758, %v5939
      %v6000 = vadd.f32 %v5759, %v5944
      %v6001 = vadd.f32 %v5760, %v5947
      %v6002 = vadd.f32 %v5761, %v5952
      %v6003 = vadd.f32 %v5762, %v5955
      %v6004 = vadd.f32 %v5763, %v5960
      %v6005 = vadd.f32 %v5764, %v5963
      %v6006 = vadd.f32 %v5765, %v5968
      %v6007 = vadd.f32 %v5766, %v5971
      %v6008 = vadd.f32 %v5767, %v5976
      %v6009 = vadd.f32 %v5768, %v5979
      %v6010 = vadd.f32 %v5769, %v5984
      %v6011 = vadd.f32 %v5770, %v5987
      %v6012 = vadd.f32 %v5771, %v5992
      %v6013 = vadd.f32 %v5772, %v5995
      %v6014 = vld [vmem:[%s354 + $0x50] sm:$0xf]
      %v6015 = vld [vmem:[%s354 + $0x54] sm:$0xf]
      %v6016 = vld [vmem:[%s354 + $0x58] sm:$0xf]
      %v6017 = vld [vmem:[%s354 + $0x5c] sm:$0xf]
      %v6018 = vld [vmem:[%s354 + $0x60] sm:$0xf]
      %v6019 = vld [vmem:[%s354 + $0x64] sm:$0xf]
      %v6020 = vld [vmem:[%s354 + $0x68] sm:$0xf]
      %v6021 = vld [vmem:[%s354 + $0x6c] sm:$0xf]
      %v6022 = vld [vmem:[%s354 + $0x70] sm:$0xf]
      %v6023 = vld [vmem:[%s354 + $0x74] sm:$0xf]
      %v6024 = vld [vmem:[%s354 + $0x78] sm:$0xf]
      %v6025 = vld [vmem:[%s354 + $0x7c] sm:$0xf]
      %v6026 = vld [vmem:[%s354 + $0x80] sm:$0xf]
      %v6027 = vld [vmem:[%s354 + $0x84] sm:$0xf]
      %v6028 = vld [vmem:[%s354 + $0x88] sm:$0xf]
      %v6029 = vld [vmem:[%s354 + $0x8c] sm:$0xf]
      %v6030 = vld [vmem:[%s3501] sm:$0xf]
      %v6031 = vld [vmem:[%s3501 + $0x4] sm:$0xf]
      %v6032 = vld [vmem:[%s3501 + $0x8] sm:$0xf]
      %v6033 = vld [vmem:[%s3501 + $0xc] sm:$0xf]
      %v6034 = vld [vmem:[%s3501 + $0x10] sm:$0xf]
      %v6035 = vld [vmem:[%s3501 + $0x14] sm:$0xf]
      %v6036 = vld [vmem:[%s3501 + $0x18] sm:$0xf]
      %v6037 = vld [vmem:[%s3501 + $0x1c] sm:$0xf]
      %v6038 = vld [vmem:[%s3501 + $0x20] sm:$0xf]
      %v6039 = vld [vmem:[%s3501 + $0x24] sm:$0xf]
      %v6040 = vld [vmem:[%s3501 + $0x28] sm:$0xf]
      %v6041 = vld [vmem:[%s3501 + $0x2c] sm:$0xf]
      %v6042 = vld [vmem:[%s3501 + $0x30] sm:$0xf]
      %v6043 = vld [vmem:[%s3501 + $0x34] sm:$0xf]
      %v6044 = vld [vmem:[%s3501 + $0x38] sm:$0xf]
      %v6045 = vld [vmem:[%s3501 + $0x3c] sm:$0xf]
      %v6062 = vunpack.c.l.b16 %v6014
      %v6063 = vunpack.c.l.b16 %v6015
      %v6064 = vunpack.c.l.b16 %v6016
      %v6065 = vunpack.c.l.b16 %v6017
      %v6066 = vunpack.c.l.b16 %v6018
      %v6067 = vunpack.c.l.b16 %v6019
      %v6068 = vunpack.c.l.b16 %v6020
      %v6069 = vunpack.c.l.b16 %v6021
      %v6070 = vunpack.c.l.b16 %v6022
      %v6071 = vunpack.c.l.b16 %v6023
      %v6072 = vunpack.c.l.b16 %v6024
      %v6073 = vunpack.c.l.b16 %v6025
      %v6074 = vunpack.c.l.b16 %v6026
      %v6075 = vunpack.c.l.b16 %v6027
      %v6076 = vunpack.c.l.b16 %v6028
      %v6077 = vunpack.c.l.b16 %v6029
      %v6078 = vpack.c.b16 %v6063, %v6062
      %v6079 = vpack.c.b16 %v6065, %v6064
      %v6080 = vpack.c.b16 %v6067, %v6066
      %v6081 = vpack.c.b16 %v6069, %v6068
      %v6082 = vpack.c.b16 %v6071, %v6070
      %v6083 = vpack.c.b16 %v6073, %v6072
      %v6084 = vpack.c.b16 %v6075, %v6074
      %v6085 = vpack.c.b16 %v6077, %v6076
      %v6110 = vunpack.c.l.b16 %v6030
      %v6111 = vunpack.c.l.b16 %v6031
      %v6112 = vunpack.c.l.b16 %v6032
      %v6113 = vunpack.c.l.b16 %v6033
      %v6114 = vunpack.c.l.b16 %v6034
      %v6115 = vunpack.c.l.b16 %v6035
      %v6116 = vunpack.c.l.b16 %v6036
      %v6117 = vunpack.c.l.b16 %v6037
      %v6118 = vunpack.c.l.b16 %v6038
      %v6119 = vunpack.c.l.b16 %v6039
      %v6120 = vunpack.c.l.b16 %v6040
      %v6121 = vunpack.c.l.b16 %v6041
      %v6122 = vunpack.c.l.b16 %v6042
      %v6123 = vunpack.c.l.b16 %v6043
      %v6124 = vunpack.c.l.b16 %v6044
      %v6125 = vunpack.c.l.b16 %v6045
      %v6126 = vpack.c.b16 %v6111, %v6110
      %v6127 = vpack.c.b16 %v6113, %v6112
      %v6128 = vpack.c.b16 %v6115, %v6114
      %v6129 = vpack.c.b16 %v6117, %v6116
      %v6130 = vpack.c.b16 %v6119, %v6118
      %v6131 = vpack.c.b16 %v6121, %v6120
      %v6132 = vpack.c.b16 %v6123, %v6122
      %v6133 = vpack.c.b16 %v6125, %v6124
      %6142 = vmatprep.subr.bf16.mxu0 0
      %6143 = vmatpush1.bf16.msra.mxu0 %v6133
      %6144 = vmatprep.subr.bf16.mxu0 0
      %6145 = vmatpush1.bf16.msra.mxu0 %v6132
      %6146 = vmatprep.subr.bf16.mxu0 0
      %6147 = vmatpush1.bf16.msra.mxu0 %v6131
      %6148 = vmatprep.subr.bf16.mxu0 0
      %6149 = vmatpush1.bf16.msra.mxu0 %v6130
      %6150 = vmatprep.subr.bf16.mxu0 0
      %6151 = vmatpush1.bf16.msra.mxu0 %v6129
      %6152 = vmatprep.subr.bf16.mxu0 0
      %6153 = vmatpush1.bf16.msra.mxu0 %v6128
      %6154 = vmatprep.subr.bf16.mxu0 0
      %6155 = vmatpush1.bf16.msra.mxu0 %v6127
      %6156 = vmatprep.subr.bf16.mxu0 0
      %6157 = vmatpush1.bf16.msra.mxu0 %v6126
      %6158 = vmatprep.subr.bf16.mxu0 0
      %6159 = vmatpush2.bf16.msra.mxu0 0
      %6160 = vmatprep.subr.bf16.mxu0 0
      %6161 = vmatpush2.bf16.msra.mxu0 0
      %6162 = vmatprep.subr.bf16.mxu0 0
      %6163 = vmatpush2.bf16.msra.mxu0 0
      %6164 = vmatprep.subr.bf16.mxu0 0
      %6165 = vmatpush2.bf16.msra.mxu0 0
      %6166 = vmatprep.subr.bf16.mxu0 0
      %6167 = vmatpush2.bf16.msra.mxu0 0
      %6168 = vmatprep.subr.bf16.mxu0 0
      %6169 = vmatpush2.bf16.msra.mxu0 0
      %6170 = vmatprep.subr.bf16.mxu0 0
      %6171 = vmatpush2.bf16.msra.mxu0 0
      %6172 = vmatprep.subr.bf16.mxu0 0
      %6173 = vmatpush2.bf16.msra.mxu0 0
      %6174 = vmatprep.mubr.bf16.mxu0 0
      %6175 = vmatmul.mubr.bf16.gmra.mxu0 %v6078
      %v6176 = vpop.f32.mrf.mxu0
      %v6177 = vadd.f32 0.0, %v6176
      %v6178 = vpop.f32.mrf.mxu0
      %v6179 = vpop.f32.mrf.mxu0
      %v6180 = vadd.f32 0.0, %v6179
      %v6181 = vpop.f32.mrf.mxu0
      %6182 = vmatprep.mubr.bf16.mxu0 0
      %6183 = vmatmul.mubr.bf16.gmra.mxu0 %v6079
      %v6184 = vpop.f32.mrf.mxu0
      %v6185 = vadd.f32 0.0, %v6184
      %v6186 = vpop.f32.mrf.mxu0
      %v6187 = vpop.f32.mrf.mxu0
      %v6188 = vadd.f32 0.0, %v6187
      %v6189 = vpop.f32.mrf.mxu0
      %6190 = vmatprep.mubr.bf16.mxu0 0
      %6191 = vmatmul.mubr.bf16.gmra.mxu0 %v6080
      %v6192 = vpop.f32.mrf.mxu0
      %v6193 = vadd.f32 0.0, %v6192
      %v6194 = vpop.f32.mrf.mxu0
      %v6195 = vpop.f32.mrf.mxu0
      %v6196 = vadd.f32 0.0, %v6195
      %v6197 = vpop.f32.mrf.mxu0
      %6198 = vmatprep.mubr.bf16.mxu0 0
      %6199 = vmatmul.mubr.bf16.gmra.mxu0 %v6081
      %v6200 = vpop.f32.mrf.mxu0
      %v6201 = vadd.f32 0.0, %v6200
      %v6202 = vpop.f32.mrf.mxu0
      %v6203 = vpop.f32.mrf.mxu0
      %v6204 = vadd.f32 0.0, %v6203
      %v6205 = vpop.f32.mrf.mxu0
      %6206 = vmatprep.mubr.bf16.mxu0 0
      %6207 = vmatmul.mubr.bf16.gmra.mxu0 %v6082
      %v6208 = vpop.f32.mrf.mxu0
      %v6209 = vadd.f32 0.0, %v6208
      %v6210 = vpop.f32.mrf.mxu0
      %v6211 = vpop.f32.mrf.mxu0
      %v6212 = vadd.f32 0.0, %v6211
      %v6213 = vpop.f32.mrf.mxu0
      %6214 = vmatprep.mubr.bf16.mxu0 0
      %6215 = vmatmul.mubr.bf16.gmra.mxu0 %v6083
      %v6216 = vpop.f32.mrf.mxu0
      %v6217 = vadd.f32 0.0, %v6216
      %v6218 = vpop.f32.mrf.mxu0
      %v6219 = vpop.f32.mrf.mxu0
      %v6220 = vadd.f32 0.0, %v6219
      %v6221 = vpop.f32.mrf.mxu0
      %6222 = vmatprep.mubr.bf16.mxu0 0
      %6223 = vmatmul.mubr.bf16.gmra.mxu0 %v6084
      %v6224 = vpop.f32.mrf.mxu0
      %v6225 = vadd.f32 0.0, %v6224
      %v6226 = vpop.f32.mrf.mxu0
      %v6227 = vpop.f32.mrf.mxu0
      %v6228 = vadd.f32 0.0, %v6227
      %v6229 = vpop.f32.mrf.mxu0
      %6230 = vmatprep.mubr.bf16.mxu0 0
      %6231 = vmatmul.mubr.bf16.gmra.mxu0 %v6085
      %v6232 = vpop.f32.mrf.mxu0
      %v6233 = vadd.f32 0.0, %v6232
      %v6234 = vpop.f32.mrf.mxu0
      %v6235 = vpop.f32.mrf.mxu0
      %v6236 = vadd.f32 0.0, %v6235
      %v6237 = vpop.f32.mrf.mxu0
      %6238 = vdwg.mxu0
      %v6239 = vadd.f32 %v5998, %v6177
      %v6240 = vadd.f32 %v5999, %v6180
      %v6241 = vadd.f32 %v6000, %v6185
      %v6242 = vadd.f32 %v6001, %v6188
      %v6243 = vadd.f32 %v6002, %v6193
      %v6244 = vadd.f32 %v6003, %v6196
      %v6245 = vadd.f32 %v6004, %v6201
      %v6246 = vadd.f32 %v6005, %v6204
      %v6247 = vadd.f32 %v6006, %v6209
      %v6248 = vadd.f32 %v6007, %v6212
      %v6249 = vadd.f32 %v6008, %v6217
      %v6250 = vadd.f32 %v6009, %v6220
      %v6251 = vadd.f32 %v6010, %v6225
      %v6252 = vadd.f32 %v6011, %v6228
      %v6253 = vadd.f32 %v6012, %v6233
      %v6254 = vadd.f32 %v6013, %v6236
      %v6255 = vmax.f32 %v6239, 0.0
      %v6256 = vmax.f32 %v6240, 0.0
      %v6257 = vmax.f32 %v6241, 0.0
      %v6258 = vmax.f32 %v6242, 0.0
      %v6259 = vmax.f32 %v6243, 0.0
      %v6260 = vmax.f32 %v6244, 0.0
      %v6261 = vmax.f32 %v6245, 0.0
      %v6262 = vmax.f32 %v6246, 0.0
      %v6263 = vmax.f32 %v6247, 0.0
      %v6264 = vmax.f32 %v6248, 0.0
      %v6265 = vmax.f32 %v6249, 0.0
      %v6266 = vmax.f32 %v6250, 0.0
      %v6267 = vmax.f32 %v6251, 0.0
      %v6268 = vmax.f32 %v6252, 0.0
      %v6269 = vmax.f32 %v6253, 0.0
      %v6270 = vmax.f32 %v6254, 0.0
      %v6271 = vrot.slane %v6255, 7
      %v6272 = vrot.slane %v6256, 7
      %v6273 = vrot.slane %v6257, 7
      %v6274 = vrot.slane %v6258, 7
      %v6275 = vrot.slane %v6259, 7
      %v6276 = vrot.slane %v6260, 7
      %v6277 = vrot.slane %v6261, 7
      %v6278 = vrot.slane %v6262, 7
      %v6279 = vrot.slane %v6263, 7
      %v6280 = vrot.slane %v6264, 7
      %v6281 = vrot.slane %v6265, 7
      %v6282 = vrot.slane %v6266, 7
      %v6283 = vrot.slane %v6267, 7
      %v6284 = vrot.slane %v6268, 7
      %v6285 = vrot.slane %v6269, 7
      %v6286 = vrot.slane %v6270, 7
      %v6287 = vsel %vm637, %v6285, %v6286
      %v6288 = vsel %vm637, %v6284, %v6285
      %v6289 = vsel %vm637, %v6283, %v6284
      %v6290 = vsel %vm637, %v6282, %v6283
      %v6291 = vsel %vm637, %v6281, %v6282
      %v6292 = vsel %vm637, %v6280, %v6281
      %v6293 = vsel %vm637, %v6279, %v6280
      %v6294 = vsel %vm637, %v6278, %v6279
      %v6295 = vsel %vm637, %v6277, %v6278
      %v6296 = vsel %vm637, %v6276, %v6277
      %v6297 = vsel %vm637, %v6275, %v6276
      %v6298 = vsel %vm637, %v6274, %v6275
      %v6299 = vsel %vm637, %v6273, %v6274
      %v6300 = vsel %vm637, %v6272, %v6273
      %v6301 = vsel %vm637, %v6271, %v6272
      %v6302 = vsel %vm637, %v6286, %v6271
      %v6303 = vsel %vm313, 0.0, %v6302
      %v6304 = vsel %vm314, 0.0, %v6301
      %v6305 = vsel %vm315, 0.0, %v6300
      %v6306 = vsel %vm316, 0.0, %v6299
      %v6307 = vsel %vm317, 0.0, %v6298
      %v6308 = vsel %vm318, 0.0, %v6297
      %v6309 = vsel %vm319, 0.0, %v6296
      %v6310 = vsel %vm320, 0.0, %v6295
      %v6311 = vsel %vm321, 0.0, %v6294
      %v6312 = vsel %vm322, 0.0, %v6293
      %v6313 = vsel %vm323, 0.0, %v6292
      %v6314 = vsel %vm324, 0.0, %v6291
      %v6315 = vsel %vm325, 0.0, %v6290
      %v6316 = vsel %vm326, 0.0, %v6289
      %v6317 = vsel %vm327, 0.0, %v6288
      %v6318 = vsel %vm328, 0.0, %v6287
      %v6319 = vrot.slane %v6255, 1
      %v6320 = vrot.slane %v6256, 1
      %v6321 = vrot.slane %v6257, 1
      %v6322 = vrot.slane %v6258, 1
      %v6323 = vrot.slane %v6259, 1
      %v6324 = vrot.slane %v6260, 1
      %v6325 = vrot.slane %v6261, 1
      %v6326 = vrot.slane %v6262, 1
      %v6327 = vrot.slane %v6263, 1
      %v6328 = vrot.slane %v6264, 1
      %v6329 = vrot.slane %v6265, 1
      %v6330 = vrot.slane %v6266, 1
      %v6331 = vrot.slane %v6267, 1
      %v6332 = vrot.slane %v6268, 1
      %v6333 = vrot.slane %v6269, 1
      %v6334 = vrot.slane %v6270, 1
      %v6335 = vsel %vm686, %v6333, %v6334
      %v6336 = vsel %vm686, %v6332, %v6333
      %v6337 = vsel %vm686, %v6331, %v6332
      %v6338 = vsel %vm686, %v6330, %v6331
      %v6339 = vsel %vm686, %v6329, %v6330
      %v6340 = vsel %vm686, %v6328, %v6329
      %v6341 = vsel %vm686, %v6327, %v6328
      %v6342 = vsel %vm686, %v6326, %v6327
      %v6343 = vsel %vm686, %v6325, %v6326
      %v6344 = vsel %vm686, %v6324, %v6325
      %v6345 = vsel %vm686, %v6323, %v6324
      %v6346 = vsel %vm686, %v6322, %v6323
      %v6347 = vsel %vm686, %v6321, %v6322
      %v6348 = vsel %vm686, %v6320, %v6321
      %v6349 = vsel %vm686, %v6319, %v6320
      %v6350 = vsel %vm686, %v6334, %v6319
      %v6351 = vsel %vm329, 0.0, %v6349
      %v6352 = vsel %vm330, 0.0, %v6348
      %v6353 = vsel %vm331, 0.0, %v6347
      %v6354 = vsel %vm332, 0.0, %v6346
      %v6355 = vsel %vm333, 0.0, %v6345
      %v6356 = vsel %vm334, 0.0, %v6344
      %v6357 = vsel %vm335, 0.0, %v6343
      %v6358 = vsel %vm336, 0.0, %v6342
      %v6359 = vsel %vm337, 0.0, %v6341
      %v6360 = vsel %vm338, 0.0, %v6340
      %v6361 = vsel %vm339, 0.0, %v6339
      %v6362 = vsel %vm340, 0.0, %v6338
      %v6363 = vsel %vm341, 0.0, %v6337
      %v6364 = vsel %vm342, 0.0, %v6336
      %v6365 = vsel %vm343, 0.0, %v6335
      %v6366 = vsel %vm344, 0.0, %v6350
      %v6367 = vpack.c.bf16 %v6256, %v6255
      %v6368 = vpack.c.bf16 %v6258, %v6257
      %v6369 = vpack.c.bf16 %v6260, %v6259
      %v6370 = vpack.c.bf16 %v6262, %v6261
      %v6371 = vpack.c.bf16 %v6264, %v6263
      %v6372 = vpack.c.bf16 %v6266, %v6265
      %v6373 = vpack.c.bf16 %v6268, %v6267
      %v6374 = vpack.c.bf16 %v6270, %v6269
      %v6383 = vunpack.c.l.b16 %v6367
      %v6384 = vunpack.c.h.b16 %v6367
      %v6385 = vunpack.c.l.b16 %v6368
      %v6386 = vunpack.c.h.b16 %v6368
      %v6387 = vunpack.c.l.b16 %v6369
      %v6388 = vunpack.c.h.b16 %v6369
      %v6389 = vunpack.c.l.b16 %v6370
      %v6390 = vunpack.c.h.b16 %v6370
      %v6391 = vunpack.c.l.b16 %v6371
      %v6392 = vunpack.c.h.b16 %v6371
      %v6393 = vunpack.c.l.b16 %v6372
      %v6394 = vunpack.c.h.b16 %v6372
      %v6395 = vunpack.c.l.b16 %v6373
      %v6396 = vunpack.c.h.b16 %v6373
      %v6397 = vunpack.c.l.b16 %v6374
      %v6398 = vunpack.c.h.b16 %v6374
      %v6399 = vpack.c.b16 %v6383, %v6383
      %v6400 = vpack.c.b16 %v6384, %v6384
      %v6401 = vpack.c.b16 %v6385, %v6385
      %v6402 = vpack.c.b16 %v6386, %v6386
      %v6403 = vpack.c.b16 %v6387, %v6387
      %v6404 = vpack.c.b16 %v6388, %v6388
      %v6405 = vpack.c.b16 %v6389, %v6389
      %v6406 = vpack.c.b16 %v6390, %v6390
      %v6407 = vpack.c.b16 %v6391, %v6391
      %v6408 = vpack.c.b16 %v6392, %v6392
      %v6409 = vpack.c.b16 %v6393, %v6393
      %v6410 = vpack.c.b16 %v6394, %v6394
      %v6411 = vpack.c.b16 %v6395, %v6395
      %v6412 = vpack.c.b16 %v6396, %v6396
      %v6413 = vpack.c.b16 %v6397, %v6397
      %v6414 = vpack.c.b16 %v6398, %v6398
      %6431 = vst [vmem:[%s363 + $0x48] sm:$0xf] %v6399
      %6432 = vst [vmem:[%s363 + $0x4c] sm:$0xf] %v6400
      %6433 = vst [vmem:[%s363 + $0x50] sm:$0xf] %v6401
      %6434 = vst [vmem:[%s363 + $0x54] sm:$0xf] %v6402
      %6435 = vst [vmem:[%s363 + $0x58] sm:$0xf] %v6403
      %6436 = vst [vmem:[%s363 + $0x5c] sm:$0xf] %v6404
      %6437 = vst [vmem:[%s363 + $0x60] sm:$0xf] %v6405
      %6438 = vst [vmem:[%s363 + $0x64] sm:$0xf] %v6406
      %6439 = vst [vmem:[%s363 + $0x68] sm:$0xf] %v6407
      %6440 = vst [vmem:[%s363 + $0x6c] sm:$0xf] %v6408
      %6441 = vst [vmem:[%s363 + $0x70] sm:$0xf] %v6409
      %6442 = vst [vmem:[%s363 + $0x74] sm:$0xf] %v6410
      %6443 = vst [vmem:[%s363 + $0x78] sm:$0xf] %v6411
      %6444 = vst [vmem:[%s363 + $0x7c] sm:$0xf] %v6412
      %6445 = vst [vmem:[%s363 + $0x80] sm:$0xf] %v6413
      %6446 = vst [vmem:[%s363 + $0x84] sm:$0xf] %v6414
      %v6447 = vpack.c.bf16 %v6304, %v6303
      %v6448 = vpack.c.bf16 %v6306, %v6305
      %v6449 = vpack.c.bf16 %v6308, %v6307
      %v6450 = vpack.c.bf16 %v6310, %v6309
      %v6451 = vpack.c.bf16 %v6312, %v6311
      %v6452 = vpack.c.bf16 %v6314, %v6313
      %v6453 = vpack.c.bf16 %v6316, %v6315
      %v6454 = vpack.c.bf16 %v6318, %v6317
      %v6463 = vunpack.c.l.b16 %v6447
      %v6464 = vunpack.c.h.b16 %v6447
      %v6465 = vunpack.c.l.b16 %v6448
      %v6466 = vunpack.c.h.b16 %v6448
      %v6467 = vunpack.c.l.b16 %v6449
      %v6468 = vunpack.c.h.b16 %v6449
      %v6469 = vunpack.c.l.b16 %v6450
      %v6470 = vunpack.c.h.b16 %v6450
      %v6471 = vunpack.c.l.b16 %v6451
      %v6472 = vunpack.c.h.b16 %v6451
      %v6473 = vunpack.c.l.b16 %v6452
      %v6474 = vunpack.c.h.b16 %v6452
      %v6475 = vunpack.c.l.b16 %v6453
      %v6476 = vunpack.c.h.b16 %v6453
      %v6477 = vunpack.c.l.b16 %v6454
      %v6478 = vunpack.c.h.b16 %v6454
      %v6479 = vpack.c.b16 %v6463, %v6463
      %v6480 = vpack.c.b16 %v6464, %v6464
      %v6481 = vpack.c.b16 %v6465, %v6465
      %v6482 = vpack.c.b16 %v6466, %v6466
      %v6483 = vpack.c.b16 %v6467, %v6467
      %v6484 = vpack.c.b16 %v6468, %v6468
      %v6485 = vpack.c.b16 %v6469, %v6469
      %v6486 = vpack.c.b16 %v6470, %v6470
      %v6487 = vpack.c.b16 %v6471, %v6471
      %v6488 = vpack.c.b16 %v6472, %v6472
      %v6489 = vpack.c.b16 %v6473, %v6473
      %v6490 = vpack.c.b16 %v6474, %v6474
      %v6491 = vpack.c.b16 %v6475, %v6475
      %v6492 = vpack.c.b16 %v6476, %v6476
      %v6493 = vpack.c.b16 %v6477, %v6477
      %v6494 = vpack.c.b16 %v6478, %v6478
      %6511 = vst [vmem:[#allocation3 + $0x48] sm:$0xf] %v6479
      %6512 = vst [vmem:[#allocation3 + $0x4c] sm:$0xf] %v6480
      %6513 = vst [vmem:[#allocation3 + $0x50] sm:$0xf] %v6481
      %6514 = vst [vmem:[#allocation3 + $0x54] sm:$0xf] %v6482
      %6515 = vst [vmem:[#allocation3 + $0x58] sm:$0xf] %v6483
      %6516 = vst [vmem:[#allocation3 + $0x5c] sm:$0xf] %v6484
      %6517 = vst [vmem:[#allocation3 + $0x60] sm:$0xf] %v6485
      %6518 = vst [vmem:[#allocation3 + $0x64] sm:$0xf] %v6486
      %6519 = vst [vmem:[#allocation3 + $0x68] sm:$0xf] %v6487
      %6520 = vst [vmem:[#allocation3 + $0x6c] sm:$0xf] %v6488
      %6521 = vst [vmem:[#allocation3 + $0x70] sm:$0xf] %v6489
      %6522 = vst [vmem:[#allocation3 + $0x74] sm:$0xf] %v6490
      %6523 = vst [vmem:[#allocation3 + $0x78] sm:$0xf] %v6491
      %6524 = vst [vmem:[#allocation3 + $0x7c] sm:$0xf] %v6492
      %6525 = vst [vmem:[#allocation3 + $0x80] sm:$0xf] %v6493
      %6526 = vst [vmem:[#allocation3 + $0x84] sm:$0xf] %v6494
      %v6527 = vpack.c.bf16 %v6352, %v6351
      %v6528 = vpack.c.bf16 %v6354, %v6353
      %v6529 = vpack.c.bf16 %v6356, %v6355
      %v6530 = vpack.c.bf16 %v6358, %v6357
      %v6531 = vpack.c.bf16 %v6360, %v6359
      %v6532 = vpack.c.bf16 %v6362, %v6361
      %v6533 = vpack.c.bf16 %v6364, %v6363
      %v6534 = vpack.c.bf16 %v6366, %v6365
      %v6543 = vunpack.c.l.b16 %v6527
      %v6544 = vunpack.c.h.b16 %v6527
      %v6545 = vunpack.c.l.b16 %v6528
      %v6546 = vunpack.c.h.b16 %v6528
      %v6547 = vunpack.c.l.b16 %v6529
      %v6548 = vunpack.c.h.b16 %v6529
      %v6549 = vunpack.c.l.b16 %v6530
      %v6550 = vunpack.c.h.b16 %v6530
      %v6551 = vunpack.c.l.b16 %v6531
      %v6552 = vunpack.c.h.b16 %v6531
      %v6553 = vunpack.c.l.b16 %v6532
      %v6554 = vunpack.c.h.b16 %v6532
      %v6555 = vunpack.c.l.b16 %v6533
      %v6556 = vunpack.c.h.b16 %v6533
      %v6557 = vunpack.c.l.b16 %v6534
      %v6558 = vunpack.c.h.b16 %v6534
      %v6559 = vpack.c.b16 %v6543, %v6543
      %v6560 = vpack.c.b16 %v6544, %v6544
      %v6561 = vpack.c.b16 %v6545, %v6545
      %v6562 = vpack.c.b16 %v6546, %v6546
      %v6563 = vpack.c.b16 %v6547, %v6547
      %v6564 = vpack.c.b16 %v6548, %v6548
      %v6565 = vpack.c.b16 %v6549, %v6549
      %v6566 = vpack.c.b16 %v6550, %v6550
      %v6567 = vpack.c.b16 %v6551, %v6551
      %v6568 = vpack.c.b16 %v6552, %v6552
      %v6569 = vpack.c.b16 %v6553, %v6553
      %v6570 = vpack.c.b16 %v6554, %v6554
      %v6571 = vpack.c.b16 %v6555, %v6555
      %v6572 = vpack.c.b16 %v6556, %v6556
      %v6573 = vpack.c.b16 %v6557, %v6557
      %v6574 = vpack.c.b16 %v6558, %v6558
      %6591 = vst [vmem:[%s368 + $0x48] sm:$0xf] %v6559
      %6592 = vst [vmem:[%s368 + $0x4c] sm:$0xf] %v6560
      %6593 = vst [vmem:[%s368 + $0x50] sm:$0xf] %v6561
      %6594 = vst [vmem:[%s368 + $0x54] sm:$0xf] %v6562
      %6595 = vst [vmem:[%s368 + $0x58] sm:$0xf] %v6563
      %6596 = vst [vmem:[%s368 + $0x5c] sm:$0xf] %v6564
      %6597 = vst [vmem:[%s368 + $0x60] sm:$0xf] %v6565
      %6598 = vst [vmem:[%s368 + $0x64] sm:$0xf] %v6566
      %6599 = vst [vmem:[%s368 + $0x68] sm:$0xf] %v6567
      %6600 = vst [vmem:[%s368 + $0x6c] sm:$0xf] %v6568
      %6601 = vst [vmem:[%s368 + $0x70] sm:$0xf] %v6569
      %6602 = vst [vmem:[%s368 + $0x74] sm:$0xf] %v6570
      %6603 = vst [vmem:[%s368 + $0x78] sm:$0xf] %v6571
      %6604 = vst [vmem:[%s368 + $0x7c] sm:$0xf] %v6572
      %6605 = vst [vmem:[%s368 + $0x80] sm:$0xf] %v6573
      %6606 = vst [vmem:[%s368 + $0x84] sm:$0xf] %v6574
      %v6607 = vld [vmem:[%s6] sm:$0x1]
      %v6609 = vlaneseq
      %v6610 = vshrl.u32 %v6609, 7
      %v6611 = vsub.s32 0, %v6610
      %v6612 = vrot.slane %v6607, %v6611
      %v6614 = vld [vmem:[#allocation3] sm:$0xf]
      %v6615 = vld [vmem:[#allocation3 + $0x4] sm:$0xf]
      %v6616 = vld [vmem:[#allocation3 + $0x8] sm:$0xf]
      %v6617 = vld [vmem:[#allocation3 + $0xc] sm:$0xf]
      %v6618 = vld [vmem:[#allocation3 + $0x10] sm:$0xf]
      %v6619 = vld [vmem:[#allocation3 + $0x14] sm:$0xf]
      %v6620 = vld [vmem:[#allocation3 + $0x18] sm:$0xf]
      %v6621 = vld [vmem:[#allocation3 + $0x1c] sm:$0xf]
      %v6622 = vld [vmem:[#allocation3 + $0x20] sm:$0xf]
      %v6623 = vld [vmem:[#allocation3 + $0x24] sm:$0xf]
      %v6624 = vld [vmem:[#allocation3 + $0x28] sm:$0xf]
      %v6625 = vld [vmem:[#allocation3 + $0x2c] sm:$0xf]
      %v6626 = vld [vmem:[#allocation3 + $0x30] sm:$0xf]
      %v6627 = vld [vmem:[#allocation3 + $0x34] sm:$0xf]
      %v6628 = vld [vmem:[#allocation3 + $0x38] sm:$0xf]
      %v6629 = vld [vmem:[#allocation3 + $0x3c] sm:$0xf]
      %v6630 = vld [vmem:[%s5] sm:$0xf]
      %v6631 = vld [vmem:[%s5 + $0x4] sm:$0xf]
      %v6632 = vld [vmem:[%s5 + $0x8] sm:$0xf]
      %v6633 = vld [vmem:[%s5 + $0xc] sm:$0xf]
      %v6634 = vld [vmem:[%s5 + $0x10] sm:$0xf]
      %v6635 = vld [vmem:[%s5 + $0x14] sm:$0xf]
      %v6636 = vld [vmem:[%s5 + $0x18] sm:$0xf]
      %v6637 = vld [vmem:[%s5 + $0x1c] sm:$0xf]
      %v6638 = vld [vmem:[%s5 + $0x20] sm:$0xf]
      %v6639 = vld [vmem:[%s5 + $0x24] sm:$0xf]
      %v6640 = vld [vmem:[%s5 + $0x28] sm:$0xf]
      %v6641 = vld [vmem:[%s5 + $0x2c] sm:$0xf]
      %v6642 = vld [vmem:[%s5 + $0x30] sm:$0xf]
      %v6643 = vld [vmem:[%s5 + $0x34] sm:$0xf]
      %v6644 = vld [vmem:[%s5 + $0x38] sm:$0xf]
      %v6645 = vld [vmem:[%s5 + $0x3c] sm:$0xf]
      %v6662 = vunpack.c.l.b16 %v6614
      %v6663 = vunpack.c.l.b16 %v6615
      %v6664 = vunpack.c.l.b16 %v6616
      %v6665 = vunpack.c.l.b16 %v6617
      %v6666 = vunpack.c.l.b16 %v6618
      %v6667 = vunpack.c.l.b16 %v6619
      %v6668 = vunpack.c.l.b16 %v6620
      %v6669 = vunpack.c.l.b16 %v6621
      %v6670 = vunpack.c.l.b16 %v6622
      %v6671 = vunpack.c.l.b16 %v6623
      %v6672 = vunpack.c.l.b16 %v6624
      %v6673 = vunpack.c.l.b16 %v6625
      %v6674 = vunpack.c.l.b16 %v6626
      %v6675 = vunpack.c.l.b16 %v6627
      %v6676 = vunpack.c.l.b16 %v6628
      %v6677 = vunpack.c.l.b16 %v6629
      %v6678 = vpack.c.b16 %v6663, %v6662
      %v6679 = vpack.c.b16 %v6665, %v6664
      %v6680 = vpack.c.b16 %v6667, %v6666
      %v6681 = vpack.c.b16 %v6669, %v6668
      %v6682 = vpack.c.b16 %v6671, %v6670
      %v6683 = vpack.c.b16 %v6673, %v6672
      %v6684 = vpack.c.b16 %v6675, %v6674
      %v6685 = vpack.c.b16 %v6677, %v6676
      %v6710 = vunpack.c.l.b16 %v6630
      %v6711 = vunpack.c.l.b16 %v6631
      %v6712 = vunpack.c.l.b16 %v6632
      %v6713 = vunpack.c.l.b16 %v6633
      %v6714 = vunpack.c.l.b16 %v6634
      %v6715 = vunpack.c.l.b16 %v6635
      %v6716 = vunpack.c.l.b16 %v6636
      %v6717 = vunpack.c.l.b16 %v6637
      %v6718 = vunpack.c.l.b16 %v6638
      %v6719 = vunpack.c.l.b16 %v6639
      %v6720 = vunpack.c.l.b16 %v6640
      %v6721 = vunpack.c.l.b16 %v6641
      %v6722 = vunpack.c.l.b16 %v6642
      %v6723 = vunpack.c.l.b16 %v6643
      %v6724 = vunpack.c.l.b16 %v6644
      %v6725 = vunpack.c.l.b16 %v6645
      %v6726 = vpack.c.b16 %v6711, %v6710
      %v6727 = vpack.c.b16 %v6713, %v6712
      %v6728 = vpack.c.b16 %v6715, %v6714
      %v6729 = vpack.c.b16 %v6717, %v6716
      %v6730 = vpack.c.b16 %v6719, %v6718
      %v6731 = vpack.c.b16 %v6721, %v6720
      %v6732 = vpack.c.b16 %v6723, %v6722
      %v6733 = vpack.c.b16 %v6725, %v6724
      %6742 = vmatprep.subr.bf16.mxu0 0
      %6743 = vmatpush1.bf16.msra.mxu0 %v6733
      %6744 = vmatprep.subr.bf16.mxu0 0
      %6745 = vmatpush1.bf16.msra.mxu0 %v6732
      %6746 = vmatprep.subr.bf16.mxu0 0
      %6747 = vmatpush1.bf16.msra.mxu0 %v6731
      %6748 = vmatprep.subr.bf16.mxu0 0
      %6749 = vmatpush1.bf16.msra.mxu0 %v6730
      %6750 = vmatprep.subr.bf16.mxu0 0
      %6751 = vmatpush1.bf16.msra.mxu0 %v6729
      %6752 = vmatprep.subr.bf16.mxu0 0
      %6753 = vmatpush1.bf16.msra.mxu0 %v6728
      %6754 = vmatprep.subr.bf16.mxu0 0
      %6755 = vmatpush1.bf16.msra.mxu0 %v6727
      %6756 = vmatprep.subr.bf16.mxu0 0
      %6757 = vmatpush1.bf16.msra.mxu0 %v6726
      %6758 = vmatprep.subr.bf16.mxu0 0
      %6759 = vmatpush2.bf16.msra.mxu0 0
      %6760 = vmatprep.subr.bf16.mxu0 0
      %6761 = vmatpush2.bf16.msra.mxu0 0
      %6762 = vmatprep.subr.bf16.mxu0 0
      %6763 = vmatpush2.bf16.msra.mxu0 0
      %6764 = vmatprep.subr.bf16.mxu0 0
      %6765 = vmatpush2.bf16.msra.mxu0 0
      %6766 = vmatprep.subr.bf16.mxu0 0
      %6767 = vmatpush2.bf16.msra.mxu0 0
      %6768 = vmatprep.subr.bf16.mxu0 0
      %6769 = vmatpush2.bf16.msra.mxu0 0
      %6770 = vmatprep.subr.bf16.mxu0 0
      %6771 = vmatpush2.bf16.msra.mxu0 0
      %6772 = vmatprep.subr.bf16.mxu0 0
      %6773 = vmatpush2.bf16.msra.mxu0 0
      %6774 = vmatprep.mubr.bf16.mxu0 0
      %6775 = vmatmul.mubr.bf16.gmra.mxu0 %v6678
      %v6776 = vpop.f32.mrf.mxu0
      %v6777 = vadd.f32 0.0, %v6776
      %v6778 = vpop.f32.mrf.mxu0
      %v6779 = vpop.f32.mrf.mxu0
      %v6780 = vadd.f32 0.0, %v6779
      %v6781 = vpop.f32.mrf.mxu0
      %6782 = vmatprep.mubr.bf16.mxu0 0
      %6783 = vmatmul.mubr.bf16.gmra.mxu0 %v6679
      %v6784 = vpop.f32.mrf.mxu0
      %v6785 = vadd.f32 0.0, %v6784
      %v6786 = vpop.f32.mrf.mxu0
      %v6787 = vpop.f32.mrf.mxu0
      %v6788 = vadd.f32 0.0, %v6787
      %v6789 = vpop.f32.mrf.mxu0
      %6790 = vmatprep.mubr.bf16.mxu0 0
      %6791 = vmatmul.mubr.bf16.gmra.mxu0 %v6680
      %v6792 = vpop.f32.mrf.mxu0
      %v6793 = vadd.f32 0.0, %v6792
      %v6794 = vpop.f32.mrf.mxu0
      %v6795 = vpop.f32.mrf.mxu0
      %v6796 = vadd.f32 0.0, %v6795
      %v6797 = vpop.f32.mrf.mxu0
      %6798 = vmatprep.mubr.bf16.mxu0 0
      %6799 = vmatmul.mubr.bf16.gmra.mxu0 %v6681
      %v6800 = vpop.f32.mrf.mxu0
      %v6801 = vadd.f32 0.0, %v6800
      %v6802 = vpop.f32.mrf.mxu0
      %v6803 = vpop.f32.mrf.mxu0
      %v6804 = vadd.f32 0.0, %v6803
      %v6805 = vpop.f32.mrf.mxu0
      %6806 = vmatprep.mubr.bf16.mxu0 0
      %6807 = vmatmul.mubr.bf16.gmra.mxu0 %v6682
      %v6808 = vpop.f32.mrf.mxu0
      %v6809 = vadd.f32 0.0, %v6808
      %v6810 = vpop.f32.mrf.mxu0
      %v6811 = vpop.f32.mrf.mxu0
      %v6812 = vadd.f32 0.0, %v6811
      %v6813 = vpop.f32.mrf.mxu0
      %6814 = vmatprep.mubr.bf16.mxu0 0
      %6815 = vmatmul.mubr.bf16.gmra.mxu0 %v6683
      %v6816 = vpop.f32.mrf.mxu0
      %v6817 = vadd.f32 0.0, %v6816
      %v6818 = vpop.f32.mrf.mxu0
      %v6819 = vpop.f32.mrf.mxu0
      %v6820 = vadd.f32 0.0, %v6819
      %v6821 = vpop.f32.mrf.mxu0
      %6822 = vmatprep.mubr.bf16.mxu0 0
      %6823 = vmatmul.mubr.bf16.gmra.mxu0 %v6684
      %v6824 = vpop.f32.mrf.mxu0
      %v6825 = vadd.f32 0.0, %v6824
      %v6826 = vpop.f32.mrf.mxu0
      %v6827 = vpop.f32.mrf.mxu0
      %v6828 = vadd.f32 0.0, %v6827
      %v6829 = vpop.f32.mrf.mxu0
      %6830 = vmatprep.mubr.bf16.mxu0 0
      %6831 = vmatmul.mubr.bf16.gmra.mxu0 %v6685
      %v6832 = vpop.f32.mrf.mxu0
      %v6833 = vadd.f32 0.0, %v6832
      %v6834 = vpop.f32.mrf.mxu0
      %v6835 = vpop.f32.mrf.mxu0
      %v6836 = vadd.f32 0.0, %v6835
      %v6837 = vpop.f32.mrf.mxu0
      %6838 = vdwg.mxu0
      %v6839 = vadd.f32 %v6612, %v6777
      %v6840 = vadd.f32 %v6612, %v6780
      %v6841 = vadd.f32 %v6612, %v6785
      %v6842 = vadd.f32 %v6612, %v6788
      %v6843 = vadd.f32 %v6612, %v6793
      %v6844 = vadd.f32 %v6612, %v6796
      %v6845 = vadd.f32 %v6612, %v6801
      %v6846 = vadd.f32 %v6612, %v6804
      %v6847 = vadd.f32 %v6612, %v6809
      %v6848 = vadd.f32 %v6612, %v6812
      %v6849 = vadd.f32 %v6612, %v6817
      %v6850 = vadd.f32 %v6612, %v6820
      %v6851 = vadd.f32 %v6612, %v6825
      %v6852 = vadd.f32 %v6612, %v6828
      %v6853 = vadd.f32 %v6612, %v6833
      %v6854 = vadd.f32 %v6612, %v6836
      %v6855 = vld [vmem:[%s363] sm:$0xf]
      %v6856 = vld [vmem:[%s363 + $0x4] sm:$0xf]
      %v6857 = vld [vmem:[%s363 + $0x8] sm:$0xf]
      %v6858 = vld [vmem:[%s363 + $0xc] sm:$0xf]
      %v6859 = vld [vmem:[%s363 + $0x10] sm:$0xf]
      %v6860 = vld [vmem:[%s363 + $0x14] sm:$0xf]
      %v6861 = vld [vmem:[%s363 + $0x18] sm:$0xf]
      %v6862 = vld [vmem:[%s363 + $0x1c] sm:$0xf]
      %v6863 = vld [vmem:[%s363 + $0x20] sm:$0xf]
      %v6864 = vld [vmem:[%s363 + $0x24] sm:$0xf]
      %v6865 = vld [vmem:[%s363 + $0x28] sm:$0xf]
      %v6866 = vld [vmem:[%s363 + $0x2c] sm:$0xf]
      %v6867 = vld [vmem:[%s363 + $0x30] sm:$0xf]
      %v6868 = vld [vmem:[%s363 + $0x34] sm:$0xf]
      %v6869 = vld [vmem:[%s363 + $0x38] sm:$0xf]
      %v6870 = vld [vmem:[%s363 + $0x3c] sm:$0xf]
      %s6871 = scalar_lea.vmem %s5, 64
      %v6872 = vld [vmem:[%s6871] sm:$0xf]
      %v6873 = vld [vmem:[%s6871 + $0x4] sm:$0xf]
      %v6874 = vld [vmem:[%s6871 + $0x8] sm:$0xf]
      %v6875 = vld [vmem:[%s6871 + $0xc] sm:$0xf]
      %v6876 = vld [vmem:[%s6871 + $0x10] sm:$0xf]
      %v6877 = vld [vmem:[%s6871 + $0x14] sm:$0xf]
      %v6878 = vld [vmem:[%s6871 + $0x18] sm:$0xf]
      %v6879 = vld [vmem:[%s6871 + $0x1c] sm:$0xf]
      %v6880 = vld [vmem:[%s6871 + $0x20] sm:$0xf]
      %v6881 = vld [vmem:[%s6871 + $0x24] sm:$0xf]
      %v6882 = vld [vmem:[%s6871 + $0x28] sm:$0xf]
      %v6883 = vld [vmem:[%s6871 + $0x2c] sm:$0xf]
      %v6884 = vld [vmem:[%s6871 + $0x30] sm:$0xf]
      %v6885 = vld [vmem:[%s6871 + $0x34] sm:$0xf]
      %v6886 = vld [vmem:[%s6871 + $0x38] sm:$0xf]
      %v6887 = vld [vmem:[%s6871 + $0x3c] sm:$0xf]
      %v6904 = vunpack.c.l.b16 %v6855
      %v6905 = vunpack.c.l.b16 %v6856
      %v6906 = vunpack.c.l.b16 %v6857
      %v6907 = vunpack.c.l.b16 %v6858
      %v6908 = vunpack.c.l.b16 %v6859
      %v6909 = vunpack.c.l.b16 %v6860
      %v6910 = vunpack.c.l.b16 %v6861
      %v6911 = vunpack.c.l.b16 %v6862
      %v6912 = vunpack.c.l.b16 %v6863
      %v6913 = vunpack.c.l.b16 %v6864
      %v6914 = vunpack.c.l.b16 %v6865
      %v6915 = vunpack.c.l.b16 %v6866
      %v6916 = vunpack.c.l.b16 %v6867
      %v6917 = vunpack.c.l.b16 %v6868
      %v6918 = vunpack.c.l.b16 %v6869
      %v6919 = vunpack.c.l.b16 %v6870
      %v6920 = vpack.c.b16 %v6905, %v6904
      %v6921 = vpack.c.b16 %v6907, %v6906
      %v6922 = vpack.c.b16 %v6909, %v6908
      %v6923 = vpack.c.b16 %v6911, %v6910
      %v6924 = vpack.c.b16 %v6913, %v6912
      %v6925 = vpack.c.b16 %v6915, %v6914
      %v6926 = vpack.c.b16 %v6917, %v6916
      %v6927 = vpack.c.b16 %v6919, %v6918
      %v6952 = vunpack.c.l.b16 %v6872
      %v6953 = vunpack.c.l.b16 %v6873
      %v6954 = vunpack.c.l.b16 %v6874
      %v6955 = vunpack.c.l.b16 %v6875
      %v6956 = vunpack.c.l.b16 %v6876
      %v6957 = vunpack.c.l.b16 %v6877
      %v6958 = vunpack.c.l.b16 %v6878
      %v6959 = vunpack.c.l.b16 %v6879
      %v6960 = vunpack.c.l.b16 %v6880
      %v6961 = vunpack.c.l.b16 %v6881
      %v6962 = vunpack.c.l.b16 %v6882
      %v6963 = vunpack.c.l.b16 %v6883
      %v6964 = vunpack.c.l.b16 %v6884
      %v6965 = vunpack.c.l.b16 %v6885
      %v6966 = vunpack.c.l.b16 %v6886
      %v6967 = vunpack.c.l.b16 %v6887
      %v6968 = vpack.c.b16 %v6953, %v6952
      %v6969 = vpack.c.b16 %v6955, %v6954
      %v6970 = vpack.c.b16 %v6957, %v6956
      %v6971 = vpack.c.b16 %v6959, %v6958
      %v6972 = vpack.c.b16 %v6961, %v6960
      %v6973 = vpack.c.b16 %v6963, %v6962
      %v6974 = vpack.c.b16 %v6965, %v6964
      %v6975 = vpack.c.b16 %v6967, %v6966
      %6984 = vmatprep.subr.bf16.mxu0 0
      %6985 = vmatpush1.bf16.msra.mxu0 %v6975
      %6986 = vmatprep.subr.bf16.mxu0 0
      %6987 = vmatpush1.bf16.msra.mxu0 %v6974
      %6988 = vmatprep.subr.bf16.mxu0 0
      %6989 = vmatpush1.bf16.msra.mxu0 %v6973
      %6990 = vmatprep.subr.bf16.mxu0 0
      %6991 = vmatpush1.bf16.msra.mxu0 %v6972
      %6992 = vmatprep.subr.bf16.mxu0 0
      %6993 = vmatpush1.bf16.msra.mxu0 %v6971
      %6994 = vmatprep.subr.bf16.mxu0 0
      %6995 = vmatpush1.bf16.msra.mxu0 %v6970
      %6996 = vmatprep.subr.bf16.mxu0 0
      %6997 = vmatpush1.bf16.msra.mxu0 %v6969
      %6998 = vmatprep.subr.bf16.mxu0 0
      %6999 = vmatpush1.bf16.msra.mxu0 %v6968
      %7000 = vmatprep.subr.bf16.mxu0 0
      %7001 = vmatpush2.bf16.msra.mxu0 0
      %7002 = vmatprep.subr.bf16.mxu0 0
      %7003 = vmatpush2.bf16.msra.mxu0 0
      %7004 = vmatprep.subr.bf16.mxu0 0
      %7005 = vmatpush2.bf16.msra.mxu0 0
      %7006 = vmatprep.subr.bf16.mxu0 0
      %7007 = vmatpush2.bf16.msra.mxu0 0
      %7008 = vmatprep.subr.bf16.mxu0 0
      %7009 = vmatpush2.bf16.msra.mxu0 0
      %7010 = vmatprep.subr.bf16.mxu0 0
      %7011 = vmatpush2.bf16.msra.mxu0 0
      %7012 = vmatprep.subr.bf16.mxu0 0
      %7013 = vmatpush2.bf16.msra.mxu0 0
      %7014 = vmatprep.subr.bf16.mxu0 0
      %7015 = vmatpush2.bf16.msra.mxu0 0
      %7016 = vmatprep.mubr.bf16.mxu0 0
      %7017 = vmatmul.mubr.bf16.gmra.mxu0 %v6920
      %v7018 = vpop.f32.mrf.mxu0
      %v7019 = vadd.f32 0.0, %v7018
      %v7020 = vpop.f32.mrf.mxu0
      %v7021 = vpop.f32.mrf.mxu0
      %v7022 = vadd.f32 0.0, %v7021
      %v7023 = vpop.f32.mrf.mxu0
      %7024 = vmatprep.mubr.bf16.mxu0 0
      %7025 = vmatmul.mubr.bf16.gmra.mxu0 %v6921
      %v7026 = vpop.f32.mrf.mxu0
      %v7027 = vadd.f32 0.0, %v7026
      %v7028 = vpop.f32.mrf.mxu0
      %v7029 = vpop.f32.mrf.mxu0
      %v7030 = vadd.f32 0.0, %v7029
      %v7031 = vpop.f32.mrf.mxu0
      %7032 = vmatprep.mubr.bf16.mxu0 0
      %7033 = vmatmul.mubr.bf16.gmra.mxu0 %v6922
      %v7034 = vpop.f32.mrf.mxu0
      %v7035 = vadd.f32 0.0, %v7034
      %v7036 = vpop.f32.mrf.mxu0
      %v7037 = vpop.f32.mrf.mxu0
      %v7038 = vadd.f32 0.0, %v7037
      %v7039 = vpop.f32.mrf.mxu0
      %7040 = vmatprep.mubr.bf16.mxu0 0
      %7041 = vmatmul.mubr.bf16.gmra.mxu0 %v6923
      %v7042 = vpop.f32.mrf.mxu0
      %v7043 = vadd.f32 0.0, %v7042
      %v7044 = vpop.f32.mrf.mxu0
      %v7045 = vpop.f32.mrf.mxu0
      %v7046 = vadd.f32 0.0, %v7045
      %v7047 = vpop.f32.mrf.mxu0
      %7048 = vmatprep.mubr.bf16.mxu0 0
      %7049 = vmatmul.mubr.bf16.gmra.mxu0 %v6924
      %v7050 = vpop.f32.mrf.mxu0
      %v7051 = vadd.f32 0.0, %v7050
      %v7052 = vpop.f32.mrf.mxu0
      %v7053 = vpop.f32.mrf.mxu0
      %v7054 = vadd.f32 0.0, %v7053
      %v7055 = vpop.f32.mrf.mxu0
      %7056 = vmatprep.mubr.bf16.mxu0 0
      %7057 = vmatmul.mubr.bf16.gmra.mxu0 %v6925
      %v7058 = vpop.f32.mrf.mxu0
      %v7059 = vadd.f32 0.0, %v7058
      %v7060 = vpop.f32.mrf.mxu0
      %v7061 = vpop.f32.mrf.mxu0
      %v7062 = vadd.f32 0.0, %v7061
      %v7063 = vpop.f32.mrf.mxu0
      %7064 = vmatprep.mubr.bf16.mxu0 0
      %7065 = vmatmul.mubr.bf16.gmra.mxu0 %v6926
      %v7066 = vpop.f32.mrf.mxu0
      %v7067 = vadd.f32 0.0, %v7066
      %v7068 = vpop.f32.mrf.mxu0
      %v7069 = vpop.f32.mrf.mxu0
      %v7070 = vadd.f32 0.0, %v7069
      %v7071 = vpop.f32.mrf.mxu0
      %7072 = vmatprep.mubr.bf16.mxu0 0
      %7073 = vmatmul.mubr.bf16.gmra.mxu0 %v6927
      %v7074 = vpop.f32.mrf.mxu0
      %v7075 = vadd.f32 0.0, %v7074
      %v7076 = vpop.f32.mrf.mxu0
      %v7077 = vpop.f32.mrf.mxu0
      %v7078 = vadd.f32 0.0, %v7077
      %v7079 = vpop.f32.mrf.mxu0
      %7080 = vdwg.mxu0
      %v7081 = vadd.f32 %v6839, %v7019
      %v7082 = vadd.f32 %v6840, %v7022
      %v7083 = vadd.f32 %v6841, %v7027
      %v7084 = vadd.f32 %v6842, %v7030
      %v7085 = vadd.f32 %v6843, %v7035
      %v7086 = vadd.f32 %v6844, %v7038
      %v7087 = vadd.f32 %v6845, %v7043
      %v7088 = vadd.f32 %v6846, %v7046
      %v7089 = vadd.f32 %v6847, %v7051
      %v7090 = vadd.f32 %v6848, %v7054
      %v7091 = vadd.f32 %v6849, %v7059
      %v7092 = vadd.f32 %v6850, %v7062
      %v7093 = vadd.f32 %v6851, %v7067
      %v7094 = vadd.f32 %v6852, %v7070
      %v7095 = vadd.f32 %v6853, %v7075
      %v7096 = vadd.f32 %v6854, %v7078
      %v7097 = vld [vmem:[%s368] sm:$0xf]
      %v7098 = vld [vmem:[%s368 + $0x4] sm:$0xf]
      %v7099 = vld [vmem:[%s368 + $0x8] sm:$0xf]
      %v7100 = vld [vmem:[%s368 + $0xc] sm:$0xf]
      %v7101 = vld [vmem:[%s368 + $0x10] sm:$0xf]
      %v7102 = vld [vmem:[%s368 + $0x14] sm:$0xf]
      %v7103 = vld [vmem:[%s368 + $0x18] sm:$0xf]
      %v7104 = vld [vmem:[%s368 + $0x1c] sm:$0xf]
      %v7105 = vld [vmem:[%s368 + $0x20] sm:$0xf]
      %v7106 = vld [vmem:[%s368 + $0x24] sm:$0xf]
      %v7107 = vld [vmem:[%s368 + $0x28] sm:$0xf]
      %v7108 = vld [vmem:[%s368 + $0x2c] sm:$0xf]
      %v7109 = vld [vmem:[%s368 + $0x30] sm:$0xf]
      %v7110 = vld [vmem:[%s368 + $0x34] sm:$0xf]
      %v7111 = vld [vmem:[%s368 + $0x38] sm:$0xf]
      %v7112 = vld [vmem:[%s368 + $0x3c] sm:$0xf]
      %s7113 = scalar_lea.vmem %s5, 128
      %v7114 = vld [vmem:[%s7113] sm:$0xf]
      %v7115 = vld [vmem:[%s7113 + $0x4] sm:$0xf]
      %v7116 = vld [vmem:[%s7113 + $0x8] sm:$0xf]
      %v7117 = vld [vmem:[%s7113 + $0xc] sm:$0xf]
      %v7118 = vld [vmem:[%s7113 + $0x10] sm:$0xf]
      %v7119 = vld [vmem:[%s7113 + $0x14] sm:$0xf]
      %v7120 = vld [vmem:[%s7113 + $0x18] sm:$0xf]
      %v7121 = vld [vmem:[%s7113 + $0x1c] sm:$0xf]
      %v7122 = vld [vmem:[%s7113 + $0x20] sm:$0xf]
      %v7123 = vld [vmem:[%s7113 + $0x24] sm:$0xf]
      %v7124 = vld [vmem:[%s7113 + $0x28] sm:$0xf]
      %v7125 = vld [vmem:[%s7113 + $0x2c] sm:$0xf]
      %v7126 = vld [vmem:[%s7113 + $0x30] sm:$0xf]
      %v7127 = vld [vmem:[%s7113 + $0x34] sm:$0xf]
      %v7128 = vld [vmem:[%s7113 + $0x38] sm:$0xf]
      %v7129 = vld [vmem:[%s7113 + $0x3c] sm:$0xf]
      %v7146 = vunpack.c.l.b16 %v7097
      %v7147 = vunpack.c.l.b16 %v7098
      %v7148 = vunpack.c.l.b16 %v7099
      %v7149 = vunpack.c.l.b16 %v7100
      %v7150 = vunpack.c.l.b16 %v7101
      %v7151 = vunpack.c.l.b16 %v7102
      %v7152 = vunpack.c.l.b16 %v7103
      %v7153 = vunpack.c.l.b16 %v7104
      %v7154 = vunpack.c.l.b16 %v7105
      %v7155 = vunpack.c.l.b16 %v7106
      %v7156 = vunpack.c.l.b16 %v7107
      %v7157 = vunpack.c.l.b16 %v7108
      %v7158 = vunpack.c.l.b16 %v7109
      %v7159 = vunpack.c.l.b16 %v7110
      %v7160 = vunpack.c.l.b16 %v7111
      %v7161 = vunpack.c.l.b16 %v7112
      %v7162 = vpack.c.b16 %v7147, %v7146
      %v7163 = vpack.c.b16 %v7149, %v7148
      %v7164 = vpack.c.b16 %v7151, %v7150
      %v7165 = vpack.c.b16 %v7153, %v7152
      %v7166 = vpack.c.b16 %v7155, %v7154
      %v7167 = vpack.c.b16 %v7157, %v7156
      %v7168 = vpack.c.b16 %v7159, %v7158
      %v7169 = vpack.c.b16 %v7161, %v7160
      %v7194 = vunpack.c.l.b16 %v7114
      %v7195 = vunpack.c.l.b16 %v7115
      %v7196 = vunpack.c.l.b16 %v7116
      %v7197 = vunpack.c.l.b16 %v7117
      %v7198 = vunpack.c.l.b16 %v7118
      %v7199 = vunpack.c.l.b16 %v7119
      %v7200 = vunpack.c.l.b16 %v7120
      %v7201 = vunpack.c.l.b16 %v7121
      %v7202 = vunpack.c.l.b16 %v7122
      %v7203 = vunpack.c.l.b16 %v7123
      %v7204 = vunpack.c.l.b16 %v7124
      %v7205 = vunpack.c.l.b16 %v7125
      %v7206 = vunpack.c.l.b16 %v7126
      %v7207 = vunpack.c.l.b16 %v7127
      %v7208 = vunpack.c.l.b16 %v7128
      %v7209 = vunpack.c.l.b16 %v7129
      %v7210 = vpack.c.b16 %v7195, %v7194
      %v7211 = vpack.c.b16 %v7197, %v7196
      %v7212 = vpack.c.b16 %v7199, %v7198
      %v7213 = vpack.c.b16 %v7201, %v7200
      %v7214 = vpack.c.b16 %v7203, %v7202
      %v7215 = vpack.c.b16 %v7205, %v7204
      %v7216 = vpack.c.b16 %v7207, %v7206
      %v7217 = vpack.c.b16 %v7209, %v7208
      %7226 = vmatprep.subr.bf16.mxu0 0
      %7227 = vmatpush1.bf16.msra.mxu0 %v7217
      %7228 = vmatprep.subr.bf16.mxu0 0
      %7229 = vmatpush1.bf16.msra.mxu0 %v7216
      %7230 = vmatprep.subr.bf16.mxu0 0
      %7231 = vmatpush1.bf16.msra.mxu0 %v7215
      %7232 = vmatprep.subr.bf16.mxu0 0
      %7233 = vmatpush1.bf16.msra.mxu0 %v7214
      %7234 = vmatprep.subr.bf16.mxu0 0
      %7235 = vmatpush1.bf16.msra.mxu0 %v7213
      %7236 = vmatprep.subr.bf16.mxu0 0
      %7237 = vmatpush1.bf16.msra.mxu0 %v7212
      %7238 = vmatprep.subr.bf16.mxu0 0
      %7239 = vmatpush1.bf16.msra.mxu0 %v7211
      %7240 = vmatprep.subr.bf16.mxu0 0
      %7241 = vmatpush1.bf16.msra.mxu0 %v7210
      %7242 = vmatprep.subr.bf16.mxu0 0
      %7243 = vmatpush2.bf16.msra.mxu0 0
      %7244 = vmatprep.subr.bf16.mxu0 0
      %7245 = vmatpush2.bf16.msra.mxu0 0
      %7246 = vmatprep.subr.bf16.mxu0 0
      %7247 = vmatpush2.bf16.msra.mxu0 0
      %7248 = vmatprep.subr.bf16.mxu0 0
      %7249 = vmatpush2.bf16.msra.mxu0 0
      %7250 = vmatprep.subr.bf16.mxu0 0
      %7251 = vmatpush2.bf16.msra.mxu0 0
      %7252 = vmatprep.subr.bf16.mxu0 0
      %7253 = vmatpush2.bf16.msra.mxu0 0
      %7254 = vmatprep.subr.bf16.mxu0 0
      %7255 = vmatpush2.bf16.msra.mxu0 0
      %7256 = vmatprep.subr.bf16.mxu0 0
      %7257 = vmatpush2.bf16.msra.mxu0 0
      %7258 = vmatprep.mubr.bf16.mxu0 0
      %7259 = vmatmul.mubr.bf16.gmra.mxu0 %v7162
      %v7260 = vpop.f32.mrf.mxu0
      %v7261 = vadd.f32 0.0, %v7260
      %v7262 = vpop.f32.mrf.mxu0
      %v7263 = vpop.f32.mrf.mxu0
      %v7264 = vadd.f32 0.0, %v7263
      %v7265 = vpop.f32.mrf.mxu0
      %7266 = vmatprep.mubr.bf16.mxu0 0
      %7267 = vmatmul.mubr.bf16.gmra.mxu0 %v7163
      %v7268 = vpop.f32.mrf.mxu0
      %v7269 = vadd.f32 0.0, %v7268
      %v7270 = vpop.f32.mrf.mxu0
      %v7271 = vpop.f32.mrf.mxu0
      %v7272 = vadd.f32 0.0, %v7271
      %v7273 = vpop.f32.mrf.mxu0
      %7274 = vmatprep.mubr.bf16.mxu0 0
      %7275 = vmatmul.mubr.bf16.gmra.mxu0 %v7164
      %v7276 = vpop.f32.mrf.mxu0
      %v7277 = vadd.f32 0.0, %v7276
      %v7278 = vpop.f32.mrf.mxu0
      %v7279 = vpop.f32.mrf.mxu0
      %v7280 = vadd.f32 0.0, %v7279
      %v7281 = vpop.f32.mrf.mxu0
      %7282 = vmatprep.mubr.bf16.mxu0 0
      %7283 = vmatmul.mubr.bf16.gmra.mxu0 %v7165
      %v7284 = vpop.f32.mrf.mxu0
      %v7285 = vadd.f32 0.0, %v7284
      %v7286 = vpop.f32.mrf.mxu0
      %v7287 = vpop.f32.mrf.mxu0
      %v7288 = vadd.f32 0.0, %v7287
      %v7289 = vpop.f32.mrf.mxu0
      %7290 = vmatprep.mubr.bf16.mxu0 0
      %7291 = vmatmul.mubr.bf16.gmra.mxu0 %v7166
      %v7292 = vpop.f32.mrf.mxu0
      %v7293 = vadd.f32 0.0, %v7292
      %v7294 = vpop.f32.mrf.mxu0
      %v7295 = vpop.f32.mrf.mxu0
      %v7296 = vadd.f32 0.0, %v7295
      %v7297 = vpop.f32.mrf.mxu0
      %7298 = vmatprep.mubr.bf16.mxu0 0
      %7299 = vmatmul.mubr.bf16.gmra.mxu0 %v7167
      %v7300 = vpop.f32.mrf.mxu0
      %v7301 = vadd.f32 0.0, %v7300
      %v7302 = vpop.f32.mrf.mxu0
      %v7303 = vpop.f32.mrf.mxu0
      %v7304 = vadd.f32 0.0, %v7303
      %v7305 = vpop.f32.mrf.mxu0
      %7306 = vmatprep.mubr.bf16.mxu0 0
      %7307 = vmatmul.mubr.bf16.gmra.mxu0 %v7168
      %v7308 = vpop.f32.mrf.mxu0
      %v7309 = vadd.f32 0.0, %v7308
      %v7310 = vpop.f32.mrf.mxu0
      %v7311 = vpop.f32.mrf.mxu0
      %v7312 = vadd.f32 0.0, %v7311
      %v7313 = vpop.f32.mrf.mxu0
      %7314 = vmatprep.mubr.bf16.mxu0 0
      %7315 = vmatmul.mubr.bf16.gmra.mxu0 %v7169
      %v7316 = vpop.f32.mrf.mxu0
      %v7317 = vadd.f32 0.0, %v7316
      %v7318 = vpop.f32.mrf.mxu0
      %v7319 = vpop.f32.mrf.mxu0
      %v7320 = vadd.f32 0.0, %v7319
      %v7321 = vpop.f32.mrf.mxu0
      %7322 = vdwg.mxu0
      %v7323 = vadd.f32 %v7081, %v7261
      %v7324 = vadd.f32 %v7082, %v7264
      %v7325 = vadd.f32 %v7083, %v7269
      %v7326 = vadd.f32 %v7084, %v7272
      %v7327 = vadd.f32 %v7085, %v7277
      %v7328 = vadd.f32 %v7086, %v7280
      %v7329 = vadd.f32 %v7087, %v7285
      %v7330 = vadd.f32 %v7088, %v7288
      %v7331 = vadd.f32 %v7089, %v7293
      %v7332 = vadd.f32 %v7090, %v7296
      %v7333 = vadd.f32 %v7091, %v7301
      %v7334 = vadd.f32 %v7092, %v7304
      %v7335 = vadd.f32 %v7093, %v7309
      %v7336 = vadd.f32 %v7094, %v7312
      %v7337 = vadd.f32 %v7095, %v7317
      %v7338 = vadd.f32 %v7096, %v7320
      %v7339 = vld [vmem:[#allocation3 + $0x8] sm:$0xf]
      %v7340 = vld [vmem:[#allocation3 + $0xc] sm:$0xf]
      %v7341 = vld [vmem:[#allocation3 + $0x10] sm:$0xf]
      %v7342 = vld [vmem:[#allocation3 + $0x14] sm:$0xf]
      %v7343 = vld [vmem:[#allocation3 + $0x18] sm:$0xf]
      %v7344 = vld [vmem:[#allocation3 + $0x1c] sm:$0xf]
      %v7345 = vld [vmem:[#allocation3 + $0x20] sm:$0xf]
      %v7346 = vld [vmem:[#allocation3 + $0x24] sm:$0xf]
      %v7347 = vld [vmem:[#allocation3 + $0x28] sm:$0xf]
      %v7348 = vld [vmem:[#allocation3 + $0x2c] sm:$0xf]
      %v7349 = vld [vmem:[#allocation3 + $0x30] sm:$0xf]
      %v7350 = vld [vmem:[#allocation3 + $0x34] sm:$0xf]
      %v7351 = vld [vmem:[#allocation3 + $0x38] sm:$0xf]
      %v7352 = vld [vmem:[#allocation3 + $0x3c] sm:$0xf]
      %v7353 = vld [vmem:[#allocation3 + $0x40] sm:$0xf]
      %v7354 = vld [vmem:[#allocation3 + $0x44] sm:$0xf]
      %s7355 = scalar_lea.vmem %s5, 192
      %v7356 = vld [vmem:[%s7355] sm:$0xf]
      %v7357 = vld [vmem:[%s7355 + $0x4] sm:$0xf]
      %v7358 = vld [vmem:[%s7355 + $0x8] sm:$0xf]
      %v7359 = vld [vmem:[%s7355 + $0xc] sm:$0xf]
      %v7360 = vld [vmem:[%s7355 + $0x10] sm:$0xf]
      %v7361 = vld [vmem:[%s7355 + $0x14] sm:$0xf]
      %v7362 = vld [vmem:[%s7355 + $0x18] sm:$0xf]
      %v7363 = vld [vmem:[%s7355 + $0x1c] sm:$0xf]
      %v7364 = vld [vmem:[%s7355 + $0x20] sm:$0xf]
      %v7365 = vld [vmem:[%s7355 + $0x24] sm:$0xf]
      %v7366 = vld [vmem:[%s7355 + $0x28] sm:$0xf]
      %v7367 = vld [vmem:[%s7355 + $0x2c] sm:$0xf]
      %v7368 = vld [vmem:[%s7355 + $0x30] sm:$0xf]
      %v7369 = vld [vmem:[%s7355 + $0x34] sm:$0xf]
      %v7370 = vld [vmem:[%s7355 + $0x38] sm:$0xf]
      %v7371 = vld [vmem:[%s7355 + $0x3c] sm:$0xf]
      %v7388 = vunpack.c.l.b16 %v7339
      %v7389 = vunpack.c.l.b16 %v7340
      %v7390 = vunpack.c.l.b16 %v7341
      %v7391 = vunpack.c.l.b16 %v7342
      %v7392 = vunpack.c.l.b16 %v7343
      %v7393 = vunpack.c.l.b16 %v7344
      %v7394 = vunpack.c.l.b16 %v7345
      %v7395 = vunpack.c.l.b16 %v7346
      %v7396 = vunpack.c.l.b16 %v7347
      %v7397 = vunpack.c.l.b16 %v7348
      %v7398 = vunpack.c.l.b16 %v7349
      %v7399 = vunpack.c.l.b16 %v7350
      %v7400 = vunpack.c.l.b16 %v7351
      %v7401 = vunpack.c.l.b16 %v7352
      %v7402 = vunpack.c.l.b16 %v7353
      %v7403 = vunpack.c.l.b16 %v7354
      %v7404 = vpack.c.b16 %v7389, %v7388
      %v7405 = vpack.c.b16 %v7391, %v7390
      %v7406 = vpack.c.b16 %v7393, %v7392
      %v7407 = vpack.c.b16 %v7395, %v7394
      %v7408 = vpack.c.b16 %v7397, %v7396
      %v7409 = vpack.c.b16 %v7399, %v7398
      %v7410 = vpack.c.b16 %v7401, %v7400
      %v7411 = vpack.c.b16 %v7403, %v7402
      %v7436 = vunpack.c.l.b16 %v7356
      %v7437 = vunpack.c.l.b16 %v7357
      %v7438 = vunpack.c.l.b16 %v7358
      %v7439 = vunpack.c.l.b16 %v7359
      %v7440 = vunpack.c.l.b16 %v7360
      %v7441 = vunpack.c.l.b16 %v7361
      %v7442 = vunpack.c.l.b16 %v7362
      %v7443 = vunpack.c.l.b16 %v7363
      %v7444 = vunpack.c.l.b16 %v7364
      %v7445 = vunpack.c.l.b16 %v7365
      %v7446 = vunpack.c.l.b16 %v7366
      %v7447 = vunpack.c.l.b16 %v7367
      %v7448 = vunpack.c.l.b16 %v7368
      %v7449 = vunpack.c.l.b16 %v7369
      %v7450 = vunpack.c.l.b16 %v7370
      %v7451 = vunpack.c.l.b16 %v7371
      %v7452 = vpack.c.b16 %v7437, %v7436
      %v7453 = vpack.c.b16 %v7439, %v7438
      %v7454 = vpack.c.b16 %v7441, %v7440
      %v7455 = vpack.c.b16 %v7443, %v7442
      %v7456 = vpack.c.b16 %v7445, %v7444
      %v7457 = vpack.c.b16 %v7447, %v7446
      %v7458 = vpack.c.b16 %v7449, %v7448
      %v7459 = vpack.c.b16 %v7451, %v7450
      %7468 = vmatprep.subr.bf16.mxu0 0
      %7469 = vmatpush1.bf16.msra.mxu0 %v7459
      %7470 = vmatprep.subr.bf16.mxu0 0
      %7471 = vmatpush1.bf16.msra.mxu0 %v7458
      %7472 = vmatprep.subr.bf16.mxu0 0
      %7473 = vmatpush1.bf16.msra.mxu0 %v7457
      %7474 = vmatprep.subr.bf16.mxu0 0
      %7475 = vmatpush1.bf16.msra.mxu0 %v7456
      %7476 = vmatprep.subr.bf16.mxu0 0
      %7477 = vmatpush1.bf16.msra.mxu0 %v7455
      %7478 = vmatprep.subr.bf16.mxu0 0
      %7479 = vmatpush1.bf16.msra.mxu0 %v7454
      %7480 = vmatprep.subr.bf16.mxu0 0
      %7481 = vmatpush1.bf16.msra.mxu0 %v7453
      %7482 = vmatprep.subr.bf16.mxu0 0
      %7483 = vmatpush1.bf16.msra.mxu0 %v7452
      %7484 = vmatprep.subr.bf16.mxu0 0
      %7485 = vmatpush2.bf16.msra.mxu0 0
      %7486 = vmatprep.subr.bf16.mxu0 0
      %7487 = vmatpush2.bf16.msra.mxu0 0
      %7488 = vmatprep.subr.bf16.mxu0 0
      %7489 = vmatpush2.bf16.msra.mxu0 0
      %7490 = vmatprep.subr.bf16.mxu0 0
      %7491 = vmatpush2.bf16.msra.mxu0 0
      %7492 = vmatprep.subr.bf16.mxu0 0
      %7493 = vmatpush2.bf16.msra.mxu0 0
      %7494 = vmatprep.subr.bf16.mxu0 0
      %7495 = vmatpush2.bf16.msra.mxu0 0
      %7496 = vmatprep.subr.bf16.mxu0 0
      %7497 = vmatpush2.bf16.msra.mxu0 0
      %7498 = vmatprep.subr.bf16.mxu0 0
      %7499 = vmatpush2.bf16.msra.mxu0 0
      %7500 = vmatprep.mubr.bf16.mxu0 0
      %7501 = vmatmul.mubr.bf16.gmra.mxu0 %v7404
      %v7502 = vpop.f32.mrf.mxu0
      %v7503 = vadd.f32 0.0, %v7502
      %v7504 = vpop.f32.mrf.mxu0
      %v7505 = vpop.f32.mrf.mxu0
      %v7506 = vadd.f32 0.0, %v7505
      %v7507 = vpop.f32.mrf.mxu0
      %7508 = vmatprep.mubr.bf16.mxu0 0
      %7509 = vmatmul.mubr.bf16.gmra.mxu0 %v7405
      %v7510 = vpop.f32.mrf.mxu0
      %v7511 = vadd.f32 0.0, %v7510
      %v7512 = vpop.f32.mrf.mxu0
      %v7513 = vpop.f32.mrf.mxu0
      %v7514 = vadd.f32 0.0, %v7513
      %v7515 = vpop.f32.mrf.mxu0
      %7516 = vmatprep.mubr.bf16.mxu0 0
      %7517 = vmatmul.mubr.bf16.gmra.mxu0 %v7406
      %v7518 = vpop.f32.mrf.mxu0
      %v7519 = vadd.f32 0.0, %v7518
      %v7520 = vpop.f32.mrf.mxu0
      %v7521 = vpop.f32.mrf.mxu0
      %v7522 = vadd.f32 0.0, %v7521
      %v7523 = vpop.f32.mrf.mxu0
      %7524 = vmatprep.mubr.bf16.mxu0 0
      %7525 = vmatmul.mubr.bf16.gmra.mxu0 %v7407
      %v7526 = vpop.f32.mrf.mxu0
      %v7527 = vadd.f32 0.0, %v7526
      %v7528 = vpop.f32.mrf.mxu0
      %v7529 = vpop.f32.mrf.mxu0
      %v7530 = vadd.f32 0.0, %v7529
      %v7531 = vpop.f32.mrf.mxu0
      %7532 = vmatprep.mubr.bf16.mxu0 0
      %7533 = vmatmul.mubr.bf16.gmra.mxu0 %v7408
      %v7534 = vpop.f32.mrf.mxu0
      %v7535 = vadd.f32 0.0, %v7534
      %v7536 = vpop.f32.mrf.mxu0
      %v7537 = vpop.f32.mrf.mxu0
      %v7538 = vadd.f32 0.0, %v7537
      %v7539 = vpop.f32.mrf.mxu0
      %7540 = vmatprep.mubr.bf16.mxu0 0
      %7541 = vmatmul.mubr.bf16.gmra.mxu0 %v7409
      %v7542 = vpop.f32.mrf.mxu0
      %v7543 = vadd.f32 0.0, %v7542
      %v7544 = vpop.f32.mrf.mxu0
      %v7545 = vpop.f32.mrf.mxu0
      %v7546 = vadd.f32 0.0, %v7545
      %v7547 = vpop.f32.mrf.mxu0
      %7548 = vmatprep.mubr.bf16.mxu0 0
      %7549 = vmatmul.mubr.bf16.gmra.mxu0 %v7410
      %v7550 = vpop.f32.mrf.mxu0
      %v7551 = vadd.f32 0.0, %v7550
      %v7552 = vpop.f32.mrf.mxu0
      %v7553 = vpop.f32.mrf.mxu0
      %v7554 = vadd.f32 0.0, %v7553
      %v7555 = vpop.f32.mrf.mxu0
      %7556 = vmatprep.mubr.bf16.mxu0 0
      %7557 = vmatmul.mubr.bf16.gmra.mxu0 %v7411
      %v7558 = vpop.f32.mrf.mxu0
      %v7559 = vadd.f32 0.0, %v7558
      %v7560 = vpop.f32.mrf.mxu0
      %v7561 = vpop.f32.mrf.mxu0
      %v7562 = vadd.f32 0.0, %v7561
      %v7563 = vpop.f32.mrf.mxu0
      %7564 = vdwg.mxu0
      %v7565 = vadd.f32 %v7323, %v7503
      %v7566 = vadd.f32 %v7324, %v7506
      %v7567 = vadd.f32 %v7325, %v7511
      %v7568 = vadd.f32 %v7326, %v7514
      %v7569 = vadd.f32 %v7327, %v7519
      %v7570 = vadd.f32 %v7328, %v7522
      %v7571 = vadd.f32 %v7329, %v7527
      %v7572 = vadd.f32 %v7330, %v7530
      %v7573 = vadd.f32 %v7331, %v7535
      %v7574 = vadd.f32 %v7332, %v7538
      %v7575 = vadd.f32 %v7333, %v7543
      %v7576 = vadd.f32 %v7334, %v7546
      %v7577 = vadd.f32 %v7335, %v7551
      %v7578 = vadd.f32 %v7336, %v7554
      %v7579 = vadd.f32 %v7337, %v7559
      %v7580 = vadd.f32 %v7338, %v7562
      %v7581 = vld [vmem:[%s363 + $0x8] sm:$0xf]
      %v7582 = vld [vmem:[%s363 + $0xc] sm:$0xf]
      %v7583 = vld [vmem:[%s363 + $0x10] sm:$0xf]
      %v7584 = vld [vmem:[%s363 + $0x14] sm:$0xf]
      %v7585 = vld [vmem:[%s363 + $0x18] sm:$0xf]
      %v7586 = vld [vmem:[%s363 + $0x1c] sm:$0xf]
      %v7587 = vld [vmem:[%s363 + $0x20] sm:$0xf]
      %v7588 = vld [vmem:[%s363 + $0x24] sm:$0xf]
      %v7589 = vld [vmem:[%s363 + $0x28] sm:$0xf]
      %v7590 = vld [vmem:[%s363 + $0x2c] sm:$0xf]
      %v7591 = vld [vmem:[%s363 + $0x30] sm:$0xf]
      %v7592 = vld [vmem:[%s363 + $0x34] sm:$0xf]
      %v7593 = vld [vmem:[%s363 + $0x38] sm:$0xf]
      %v7594 = vld [vmem:[%s363 + $0x3c] sm:$0xf]
      %v7595 = vld [vmem:[%s363 + $0x40] sm:$0xf]
      %v7596 = vld [vmem:[%s363 + $0x44] sm:$0xf]
      %s7597 = scalar_lea.vmem %s5, 256
      %v7598 = vld [vmem:[%s7597] sm:$0xf]
      %v7599 = vld [vmem:[%s7597 + $0x4] sm:$0xf]
      %v7600 = vld [vmem:[%s7597 + $0x8] sm:$0xf]
      %v7601 = vld [vmem:[%s7597 + $0xc] sm:$0xf]
      %v7602 = vld [vmem:[%s7597 + $0x10] sm:$0xf]
      %v7603 = vld [vmem:[%s7597 + $0x14] sm:$0xf]
      %v7604 = vld [vmem:[%s7597 + $0x18] sm:$0xf]
      %v7605 = vld [vmem:[%s7597 + $0x1c] sm:$0xf]
      %v7606 = vld [vmem:[%s7597 + $0x20] sm:$0xf]
      %v7607 = vld [vmem:[%s7597 + $0x24] sm:$0xf]
      %v7608 = vld [vmem:[%s7597 + $0x28] sm:$0xf]
      %v7609 = vld [vmem:[%s7597 + $0x2c] sm:$0xf]
      %v7610 = vld [vmem:[%s7597 + $0x30] sm:$0xf]
      %v7611 = vld [vmem:[%s7597 + $0x34] sm:$0xf]
      %v7612 = vld [vmem:[%s7597 + $0x38] sm:$0xf]
      %v7613 = vld [vmem:[%s7597 + $0x3c] sm:$0xf]
      %v7630 = vunpack.c.l.b16 %v7581
      %v7631 = vunpack.c.l.b16 %v7582
      %v7632 = vunpack.c.l.b16 %v7583
      %v7633 = vunpack.c.l.b16 %v7584
      %v7634 = vunpack.c.l.b16 %v7585
      %v7635 = vunpack.c.l.b16 %v7586
      %v7636 = vunpack.c.l.b16 %v7587
      %v7637 = vunpack.c.l.b16 %v7588
      %v7638 = vunpack.c.l.b16 %v7589
      %v7639 = vunpack.c.l.b16 %v7590
      %v7640 = vunpack.c.l.b16 %v7591
      %v7641 = vunpack.c.l.b16 %v7592
      %v7642 = vunpack.c.l.b16 %v7593
      %v7643 = vunpack.c.l.b16 %v7594
      %v7644 = vunpack.c.l.b16 %v7595
      %v7645 = vunpack.c.l.b16 %v7596
      %v7646 = vpack.c.b16 %v7631, %v7630
      %v7647 = vpack.c.b16 %v7633, %v7632
      %v7648 = vpack.c.b16 %v7635, %v7634
      %v7649 = vpack.c.b16 %v7637, %v7636
      %v7650 = vpack.c.b16 %v7639, %v7638
      %v7651 = vpack.c.b16 %v7641, %v7640
      %v7652 = vpack.c.b16 %v7643, %v7642
      %v7653 = vpack.c.b16 %v7645, %v7644
      %v7678 = vunpack.c.l.b16 %v7598
      %v7679 = vunpack.c.l.b16 %v7599
      %v7680 = vunpack.c.l.b16 %v7600
      %v7681 = vunpack.c.l.b16 %v7601
      %v7682 = vunpack.c.l.b16 %v7602
      %v7683 = vunpack.c.l.b16 %v7603
      %v7684 = vunpack.c.l.b16 %v7604
      %v7685 = vunpack.c.l.b16 %v7605
      %v7686 = vunpack.c.l.b16 %v7606
      %v7687 = vunpack.c.l.b16 %v7607
      %v7688 = vunpack.c.l.b16 %v7608
      %v7689 = vunpack.c.l.b16 %v7609
      %v7690 = vunpack.c.l.b16 %v7610
      %v7691 = vunpack.c.l.b16 %v7611
      %v7692 = vunpack.c.l.b16 %v7612
      %v7693 = vunpack.c.l.b16 %v7613
      %v7694 = vpack.c.b16 %v7679, %v7678
      %v7695 = vpack.c.b16 %v7681, %v7680
      %v7696 = vpack.c.b16 %v7683, %v7682
      %v7697 = vpack.c.b16 %v7685, %v7684
      %v7698 = vpack.c.b16 %v7687, %v7686
      %v7699 = vpack.c.b16 %v7689, %v7688
      %v7700 = vpack.c.b16 %v7691, %v7690
      %v7701 = vpack.c.b16 %v7693, %v7692
      %7710 = vmatprep.subr.bf16.mxu0 0
      %7711 = vmatpush1.bf16.msra.mxu0 %v7701
      %7712 = vmatprep.subr.bf16.mxu0 0
      %7713 = vmatpush1.bf16.msra.mxu0 %v7700
      %7714 = vmatprep.subr.bf16.mxu0 0
      %7715 = vmatpush1.bf16.msra.mxu0 %v7699
      %7716 = vmatprep.subr.bf16.mxu0 0
      %7717 = vmatpush1.bf16.msra.mxu0 %v7698
      %7718 = vmatprep.subr.bf16.mxu0 0
      %7719 = vmatpush1.bf16.msra.mxu0 %v7697
      %7720 = vmatprep.subr.bf16.mxu0 0
      %7721 = vmatpush1.bf16.msra.mxu0 %v7696
      %7722 = vmatprep.subr.bf16.mxu0 0
      %7723 = vmatpush1.bf16.msra.mxu0 %v7695
      %7724 = vmatprep.subr.bf16.mxu0 0
      %7725 = vmatpush1.bf16.msra.mxu0 %v7694
      %7726 = vmatprep.subr.bf16.mxu0 0
      %7727 = vmatpush2.bf16.msra.mxu0 0
      %7728 = vmatprep.subr.bf16.mxu0 0
      %7729 = vmatpush2.bf16.msra.mxu0 0
      %7730 = vmatprep.subr.bf16.mxu0 0
      %7731 = vmatpush2.bf16.msra.mxu0 0
      %7732 = vmatprep.subr.bf16.mxu0 0
      %7733 = vmatpush2.bf16.msra.mxu0 0
      %7734 = vmatprep.subr.bf16.mxu0 0
      %7735 = vmatpush2.bf16.msra.mxu0 0
      %7736 = vmatprep.subr.bf16.mxu0 0
      %7737 = vmatpush2.bf16.msra.mxu0 0
      %7738 = vmatprep.subr.bf16.mxu0 0
      %7739 = vmatpush2.bf16.msra.mxu0 0
      %7740 = vmatprep.subr.bf16.mxu0 0
      %7741 = vmatpush2.bf16.msra.mxu0 0
      %7742 = vmatprep.mubr.bf16.mxu0 0
      %7743 = vmatmul.mubr.bf16.gmra.mxu0 %v7646
      %v7744 = vpop.f32.mrf.mxu0
      %v7745 = vadd.f32 0.0, %v7744
      %v7746 = vpop.f32.mrf.mxu0
      %v7747 = vpop.f32.mrf.mxu0
      %v7748 = vadd.f32 0.0, %v7747
      %v7749 = vpop.f32.mrf.mxu0
      %7750 = vmatprep.mubr.bf16.mxu0 0
      %7751 = vmatmul.mubr.bf16.gmra.mxu0 %v7647
      %v7752 = vpop.f32.mrf.mxu0
      %v7753 = vadd.f32 0.0, %v7752
      %v7754 = vpop.f32.mrf.mxu0
      %v7755 = vpop.f32.mrf.mxu0
      %v7756 = vadd.f32 0.0, %v7755
      %v7757 = vpop.f32.mrf.mxu0
      %7758 = vmatprep.mubr.bf16.mxu0 0
      %7759 = vmatmul.mubr.bf16.gmra.mxu0 %v7648
      %v7760 = vpop.f32.mrf.mxu0
      %v7761 = vadd.f32 0.0, %v7760
      %v7762 = vpop.f32.mrf.mxu0
      %v7763 = vpop.f32.mrf.mxu0
      %v7764 = vadd.f32 0.0, %v7763
      %v7765 = vpop.f32.mrf.mxu0
      %7766 = vmatprep.mubr.bf16.mxu0 0
      %7767 = vmatmul.mubr.bf16.gmra.mxu0 %v7649
      %v7768 = vpop.f32.mrf.mxu0
      %v7769 = vadd.f32 0.0, %v7768
      %v7770 = vpop.f32.mrf.mxu0
      %v7771 = vpop.f32.mrf.mxu0
      %v7772 = vadd.f32 0.0, %v7771
      %v7773 = vpop.f32.mrf.mxu0
      %7774 = vmatprep.mubr.bf16.mxu0 0
      %7775 = vmatmul.mubr.bf16.gmra.mxu0 %v7650
      %v7776 = vpop.f32.mrf.mxu0
      %v7777 = vadd.f32 0.0, %v7776
      %v7778 = vpop.f32.mrf.mxu0
      %v7779 = vpop.f32.mrf.mxu0
      %v7780 = vadd.f32 0.0, %v7779
      %v7781 = vpop.f32.mrf.mxu0
      %7782 = vmatprep.mubr.bf16.mxu0 0
      %7783 = vmatmul.mubr.bf16.gmra.mxu0 %v7651
      %v7784 = vpop.f32.mrf.mxu0
      %v7785 = vadd.f32 0.0, %v7784
      %v7786 = vpop.f32.mrf.mxu0
      %v7787 = vpop.f32.mrf.mxu0
      %v7788 = vadd.f32 0.0, %v7787
      %v7789 = vpop.f32.mrf.mxu0
      %7790 = vmatprep.mubr.bf16.mxu0 0
      %7791 = vmatmul.mubr.bf16.gmra.mxu0 %v7652
      %v7792 = vpop.f32.mrf.mxu0
      %v7793 = vadd.f32 0.0, %v7792
      %v7794 = vpop.f32.mrf.mxu0
      %v7795 = vpop.f32.mrf.mxu0
      %v7796 = vadd.f32 0.0, %v7795
      %v7797 = vpop.f32.mrf.mxu0
      %7798 = vmatprep.mubr.bf16.mxu0 0
      %7799 = vmatmul.mubr.bf16.gmra.mxu0 %v7653
      %v7800 = vpop.f32.mrf.mxu0
      %v7801 = vadd.f32 0.0, %v7800
      %v7802 = vpop.f32.mrf.mxu0
      %v7803 = vpop.f32.mrf.mxu0
      %v7804 = vadd.f32 0.0, %v7803
      %v7805 = vpop.f32.mrf.mxu0
      %7806 = vdwg.mxu0
      %v7807 = vadd.f32 %v7565, %v7745
      %v7808 = vadd.f32 %v7566, %v7748
      %v7809 = vadd.f32 %v7567, %v7753
      %v7810 = vadd.f32 %v7568, %v7756
      %v7811 = vadd.f32 %v7569, %v7761
      %v7812 = vadd.f32 %v7570, %v7764
      %v7813 = vadd.f32 %v7571, %v7769
      %v7814 = vadd.f32 %v7572, %v7772
      %v7815 = vadd.f32 %v7573, %v7777
      %v7816 = vadd.f32 %v7574, %v7780
      %v7817 = vadd.f32 %v7575, %v7785
      %v7818 = vadd.f32 %v7576, %v7788
      %v7819 = vadd.f32 %v7577, %v7793
      %v7820 = vadd.f32 %v7578, %v7796
      %v7821 = vadd.f32 %v7579, %v7801
      %v7822 = vadd.f32 %v7580, %v7804
      %v7823 = vld [vmem:[%s368 + $0x8] sm:$0xf]
      %v7824 = vld [vmem:[%s368 + $0xc] sm:$0xf]
      %v7825 = vld [vmem:[%s368 + $0x10] sm:$0xf]
      %v7826 = vld [vmem:[%s368 + $0x14] sm:$0xf]
      %v7827 = vld [vmem:[%s368 + $0x18] sm:$0xf]
      %v7828 = vld [vmem:[%s368 + $0x1c] sm:$0xf]
      %v7829 = vld [vmem:[%s368 + $0x20] sm:$0xf]
      %v7830 = vld [vmem:[%s368 + $0x24] sm:$0xf]
      %v7831 = vld [vmem:[%s368 + $0x28] sm:$0xf]
      %v7832 = vld [vmem:[%s368 + $0x2c] sm:$0xf]
      %v7833 = vld [vmem:[%s368 + $0x30] sm:$0xf]
      %v7834 = vld [vmem:[%s368 + $0x34] sm:$0xf]
      %v7835 = vld [vmem:[%s368 + $0x38] sm:$0xf]
      %v7836 = vld [vmem:[%s368 + $0x3c] sm:$0xf]
      %v7837 = vld [vmem:[%s368 + $0x40] sm:$0xf]
      %v7838 = vld [vmem:[%s368 + $0x44] sm:$0xf]
      %s7839 = scalar_lea.vmem %s5, 320
      %v7840 = vld [vmem:[%s7839] sm:$0xf]
      %v7841 = vld [vmem:[%s7839 + $0x4] sm:$0xf]
      %v7842 = vld [vmem:[%s7839 + $0x8] sm:$0xf]
      %v7843 = vld [vmem:[%s7839 + $0xc] sm:$0xf]
      %v7844 = vld [vmem:[%s7839 + $0x10] sm:$0xf]
      %v7845 = vld [vmem:[%s7839 + $0x14] sm:$0xf]
      %v7846 = vld [vmem:[%s7839 + $0x18] sm:$0xf]
      %v7847 = vld [vmem:[%s7839 + $0x1c] sm:$0xf]
      %v7848 = vld [vmem:[%s7839 + $0x20] sm:$0xf]
      %v7849 = vld [vmem:[%s7839 + $0x24] sm:$0xf]
      %v7850 = vld [vmem:[%s7839 + $0x28] sm:$0xf]
      %v7851 = vld [vmem:[%s7839 + $0x2c] sm:$0xf]
      %v7852 = vld [vmem:[%s7839 + $0x30] sm:$0xf]
      %v7853 = vld [vmem:[%s7839 + $0x34] sm:$0xf]
      %v7854 = vld [vmem:[%s7839 + $0x38] sm:$0xf]
      %v7855 = vld [vmem:[%s7839 + $0x3c] sm:$0xf]
      %v7872 = vunpack.c.l.b16 %v7823
      %v7873 = vunpack.c.l.b16 %v7824
      %v7874 = vunpack.c.l.b16 %v7825
      %v7875 = vunpack.c.l.b16 %v7826
      %v7876 = vunpack.c.l.b16 %v7827
      %v7877 = vunpack.c.l.b16 %v7828
      %v7878 = vunpack.c.l.b16 %v7829
      %v7879 = vunpack.c.l.b16 %v7830
      %v7880 = vunpack.c.l.b16 %v7831
      %v7881 = vunpack.c.l.b16 %v7832
      %v7882 = vunpack.c.l.b16 %v7833
      %v7883 = vunpack.c.l.b16 %v7834
      %v7884 = vunpack.c.l.b16 %v7835
      %v7885 = vunpack.c.l.b16 %v7836
      %v7886 = vunpack.c.l.b16 %v7837
      %v7887 = vunpack.c.l.b16 %v7838
      %v7888 = vpack.c.b16 %v7873, %v7872
      %v7889 = vpack.c.b16 %v7875, %v7874
      %v7890 = vpack.c.b16 %v7877, %v7876
      %v7891 = vpack.c.b16 %v7879, %v7878
      %v7892 = vpack.c.b16 %v7881, %v7880
      %v7893 = vpack.c.b16 %v7883, %v7882
      %v7894 = vpack.c.b16 %v7885, %v7884
      %v7895 = vpack.c.b16 %v7887, %v7886
      %v7920 = vunpack.c.l.b16 %v7840
      %v7921 = vunpack.c.l.b16 %v7841
      %v7922 = vunpack.c.l.b16 %v7842
      %v7923 = vunpack.c.l.b16 %v7843
      %v7924 = vunpack.c.l.b16 %v7844
      %v7925 = vunpack.c.l.b16 %v7845
      %v7926 = vunpack.c.l.b16 %v7846
      %v7927 = vunpack.c.l.b16 %v7847
      %v7928 = vunpack.c.l.b16 %v7848
      %v7929 = vunpack.c.l.b16 %v7849
      %v7930 = vunpack.c.l.b16 %v7850
      %v7931 = vunpack.c.l.b16 %v7851
      %v7932 = vunpack.c.l.b16 %v7852
      %v7933 = vunpack.c.l.b16 %v7853
      %v7934 = vunpack.c.l.b16 %v7854
      %v7935 = vunpack.c.l.b16 %v7855
      %v7936 = vpack.c.b16 %v7921, %v7920
      %v7937 = vpack.c.b16 %v7923, %v7922
      %v7938 = vpack.c.b16 %v7925, %v7924
      %v7939 = vpack.c.b16 %v7927, %v7926
      %v7940 = vpack.c.b16 %v7929, %v7928
      %v7941 = vpack.c.b16 %v7931, %v7930
      %v7942 = vpack.c.b16 %v7933, %v7932
      %v7943 = vpack.c.b16 %v7935, %v7934
      %7952 = vmatprep.subr.bf16.mxu0 0
      %7953 = vmatpush1.bf16.msra.mxu0 %v7943
      %7954 = vmatprep.subr.bf16.mxu0 0
      %7955 = vmatpush1.bf16.msra.mxu0 %v7942
      %7956 = vmatprep.subr.bf16.mxu0 0
      %7957 = vmatpush1.bf16.msra.mxu0 %v7941
      %7958 = vmatprep.subr.bf16.mxu0 0
      %7959 = vmatpush1.bf16.msra.mxu0 %v7940
      %7960 = vmatprep.subr.bf16.mxu0 0
      %7961 = vmatpush1.bf16.msra.mxu0 %v7939
      %7962 = vmatprep.subr.bf16.mxu0 0
      %7963 = vmatpush1.bf16.msra.mxu0 %v7938
      %7964 = vmatprep.subr.bf16.mxu0 0
      %7965 = vmatpush1.bf16.msra.mxu0 %v7937
      %7966 = vmatprep.subr.bf16.mxu0 0
      %7967 = vmatpush1.bf16.msra.mxu0 %v7936
      %7968 = vmatprep.subr.bf16.mxu0 0
      %7969 = vmatpush2.bf16.msra.mxu0 0
      %7970 = vmatprep.subr.bf16.mxu0 0
      %7971 = vmatpush2.bf16.msra.mxu0 0
      %7972 = vmatprep.subr.bf16.mxu0 0
      %7973 = vmatpush2.bf16.msra.mxu0 0
      %7974 = vmatprep.subr.bf16.mxu0 0
      %7975 = vmatpush2.bf16.msra.mxu0 0
      %7976 = vmatprep.subr.bf16.mxu0 0
      %7977 = vmatpush2.bf16.msra.mxu0 0
      %7978 = vmatprep.subr.bf16.mxu0 0
      %7979 = vmatpush2.bf16.msra.mxu0 0
      %7980 = vmatprep.subr.bf16.mxu0 0
      %7981 = vmatpush2.bf16.msra.mxu0 0
      %7982 = vmatprep.subr.bf16.mxu0 0
      %7983 = vmatpush2.bf16.msra.mxu0 0
      %7984 = vmatprep.mubr.bf16.mxu0 0
      %7985 = vmatmul.mubr.bf16.gmra.mxu0 %v7888
      %v7986 = vpop.f32.mrf.mxu0
      %v7987 = vadd.f32 0.0, %v7986
      %v7988 = vpop.f32.mrf.mxu0
      %v7989 = vpop.f32.mrf.mxu0
      %v7990 = vadd.f32 0.0, %v7989
      %v7991 = vpop.f32.mrf.mxu0
      %7992 = vmatprep.mubr.bf16.mxu0 0
      %7993 = vmatmul.mubr.bf16.gmra.mxu0 %v7889
      %v7994 = vpop.f32.mrf.mxu0
      %v7995 = vadd.f32 0.0, %v7994
      %v7996 = vpop.f32.mrf.mxu0
      %v7997 = vpop.f32.mrf.mxu0
      %v7998 = vadd.f32 0.0, %v7997
      %v7999 = vpop.f32.mrf.mxu0
      %8000 = vmatprep.mubr.bf16.mxu0 0
      %8001 = vmatmul.mubr.bf16.gmra.mxu0 %v7890
      %v8002 = vpop.f32.mrf.mxu0
      %v8003 = vadd.f32 0.0, %v8002
      %v8004 = vpop.f32.mrf.mxu0
      %v8005 = vpop.f32.mrf.mxu0
      %v8006 = vadd.f32 0.0, %v8005
      %v8007 = vpop.f32.mrf.mxu0
      %8008 = vmatprep.mubr.bf16.mxu0 0
      %8009 = vmatmul.mubr.bf16.gmra.mxu0 %v7891
      %v8010 = vpop.f32.mrf.mxu0
      %v8011 = vadd.f32 0.0, %v8010
      %v8012 = vpop.f32.mrf.mxu0
      %v8013 = vpop.f32.mrf.mxu0
      %v8014 = vadd.f32 0.0, %v8013
      %v8015 = vpop.f32.mrf.mxu0
      %8016 = vmatprep.mubr.bf16.mxu0 0
      %8017 = vmatmul.mubr.bf16.gmra.mxu0 %v7892
      %v8018 = vpop.f32.mrf.mxu0
      %v8019 = vadd.f32 0.0, %v8018
      %v8020 = vpop.f32.mrf.mxu0
      %v8021 = vpop.f32.mrf.mxu0
      %v8022 = vadd.f32 0.0, %v8021
      %v8023 = vpop.f32.mrf.mxu0
      %8024 = vmatprep.mubr.bf16.mxu0 0
      %8025 = vmatmul.mubr.bf16.gmra.mxu0 %v7893
      %v8026 = vpop.f32.mrf.mxu0
      %v8027 = vadd.f32 0.0, %v8026
      %v8028 = vpop.f32.mrf.mxu0
      %v8029 = vpop.f32.mrf.mxu0
      %v8030 = vadd.f32 0.0, %v8029
      %v8031 = vpop.f32.mrf.mxu0
      %8032 = vmatprep.mubr.bf16.mxu0 0
      %8033 = vmatmul.mubr.bf16.gmra.mxu0 %v7894
      %v8034 = vpop.f32.mrf.mxu0
      %v8035 = vadd.f32 0.0, %v8034
      %v8036 = vpop.f32.mrf.mxu0
      %v8037 = vpop.f32.mrf.mxu0
      %v8038 = vadd.f32 0.0, %v8037
      %v8039 = vpop.f32.mrf.mxu0
      %8040 = vmatprep.mubr.bf16.mxu0 0
      %8041 = vmatmul.mubr.bf16.gmra.mxu0 %v7895
      %v8042 = vpop.f32.mrf.mxu0
      %v8043 = vadd.f32 0.0, %v8042
      %v8044 = vpop.f32.mrf.mxu0
      %v8045 = vpop.f32.mrf.mxu0
      %v8046 = vadd.f32 0.0, %v8045
      %v8047 = vpop.f32.mrf.mxu0
      %8048 = vdwg.mxu0
      %v8049 = vadd.f32 %v7807, %v7987
      %v8050 = vadd.f32 %v7808, %v7990
      %v8051 = vadd.f32 %v7809, %v7995
      %v8052 = vadd.f32 %v7810, %v7998
      %v8053 = vadd.f32 %v7811, %v8003
      %v8054 = vadd.f32 %v7812, %v8006
      %v8055 = vadd.f32 %v7813, %v8011
      %v8056 = vadd.f32 %v7814, %v8014
      %v8057 = vadd.f32 %v7815, %v8019
      %v8058 = vadd.f32 %v7816, %v8022
      %v8059 = vadd.f32 %v7817, %v8027
      %v8060 = vadd.f32 %v7818, %v8030
      %v8061 = vadd.f32 %v7819, %v8035
      %v8062 = vadd.f32 %v7820, %v8038
      %v8063 = vadd.f32 %v7821, %v8043
      %v8064 = vadd.f32 %v7822, %v8046
      %v8065 = vld [vmem:[#allocation3 + $0x10] sm:$0xf]
      %v8066 = vld [vmem:[#allocation3 + $0x14] sm:$0xf]
      %v8067 = vld [vmem:[#allocation3 + $0x18] sm:$0xf]
      %v8068 = vld [vmem:[#allocation3 + $0x1c] sm:$0xf]
      %v8069 = vld [vmem:[#allocation3 + $0x20] sm:$0xf]
      %v8070 = vld [vmem:[#allocation3 + $0x24] sm:$0xf]
      %v8071 = vld [vmem:[#allocation3 + $0x28] sm:$0xf]
      %v8072 = vld [vmem:[#allocation3 + $0x2c] sm:$0xf]
      %v8073 = vld [vmem:[#allocation3 + $0x30] sm:$0xf]
      %v8074 = vld [vmem:[#allocation3 + $0x34] sm:$0xf]
      %v8075 = vld [vmem:[#allocation3 + $0x38] sm:$0xf]
      %v8076 = vld [vmem:[#allocation3 + $0x3c] sm:$0xf]
      %v8077 = vld [vmem:[#allocation3 + $0x40] sm:$0xf]
      %v8078 = vld [vmem:[#allocation3 + $0x44] sm:$0xf]
      %v8079 = vld [vmem:[#allocation3 + $0x48] sm:$0xf]
      %v8080 = vld [vmem:[#allocation3 + $0x4c] sm:$0xf]
      %s8081 = scalar_lea.vmem %s5, 384
      %v8082 = vld [vmem:[%s8081] sm:$0xf]
      %v8083 = vld [vmem:[%s8081 + $0x4] sm:$0xf]
      %v8084 = vld [vmem:[%s8081 + $0x8] sm:$0xf]
      %v8085 = vld [vmem:[%s8081 + $0xc] sm:$0xf]
      %v8086 = vld [vmem:[%s8081 + $0x10] sm:$0xf]
      %v8087 = vld [vmem:[%s8081 + $0x14] sm:$0xf]
      %v8088 = vld [vmem:[%s8081 + $0x18] sm:$0xf]
      %v8089 = vld [vmem:[%s8081 + $0x1c] sm:$0xf]
      %v8090 = vld [vmem:[%s8081 + $0x20] sm:$0xf]
      %v8091 = vld [vmem:[%s8081 + $0x24] sm:$0xf]
      %v8092 = vld [vmem:[%s8081 + $0x28] sm:$0xf]
      %v8093 = vld [vmem:[%s8081 + $0x2c] sm:$0xf]
      %v8094 = vld [vmem:[%s8081 + $0x30] sm:$0xf]
      %v8095 = vld [vmem:[%s8081 + $0x34] sm:$0xf]
      %v8096 = vld [vmem:[%s8081 + $0x38] sm:$0xf]
      %v8097 = vld [vmem:[%s8081 + $0x3c] sm:$0xf]
      %v8114 = vunpack.c.l.b16 %v8065
      %v8115 = vunpack.c.l.b16 %v8066
      %v8116 = vunpack.c.l.b16 %v8067
      %v8117 = vunpack.c.l.b16 %v8068
      %v8118 = vunpack.c.l.b16 %v8069
      %v8119 = vunpack.c.l.b16 %v8070
      %v8120 = vunpack.c.l.b16 %v8071
      %v8121 = vunpack.c.l.b16 %v8072
      %v8122 = vunpack.c.l.b16 %v8073
      %v8123 = vunpack.c.l.b16 %v8074
      %v8124 = vunpack.c.l.b16 %v8075
      %v8125 = vunpack.c.l.b16 %v8076
      %v8126 = vunpack.c.l.b16 %v8077
      %v8127 = vunpack.c.l.b16 %v8078
      %v8128 = vunpack.c.l.b16 %v8079
      %v8129 = vunpack.c.l.b16 %v8080
      %v8130 = vpack.c.b16 %v8115, %v8114
      %v8131 = vpack.c.b16 %v8117, %v8116
      %v8132 = vpack.c.b16 %v8119, %v8118
      %v8133 = vpack.c.b16 %v8121, %v8120
      %v8134 = vpack.c.b16 %v8123, %v8122
      %v8135 = vpack.c.b16 %v8125, %v8124
      %v8136 = vpack.c.b16 %v8127, %v8126
      %v8137 = vpack.c.b16 %v8129, %v8128
      %v8162 = vunpack.c.l.b16 %v8082
      %v8163 = vunpack.c.l.b16 %v8083
      %v8164 = vunpack.c.l.b16 %v8084
      %v8165 = vunpack.c.l.b16 %v8085
      %v8166 = vunpack.c.l.b16 %v8086
      %v8167 = vunpack.c.l.b16 %v8087
      %v8168 = vunpack.c.l.b16 %v8088
      %v8169 = vunpack.c.l.b16 %v8089
      %v8170 = vunpack.c.l.b16 %v8090
      %v8171 = vunpack.c.l.b16 %v8091
      %v8172 = vunpack.c.l.b16 %v8092
      %v8173 = vunpack.c.l.b16 %v8093
      %v8174 = vunpack.c.l.b16 %v8094
      %v8175 = vunpack.c.l.b16 %v8095
      %v8176 = vunpack.c.l.b16 %v8096
      %v8177 = vunpack.c.l.b16 %v8097
      %v8178 = vpack.c.b16 %v8163, %v8162
      %v8179 = vpack.c.b16 %v8165, %v8164
      %v8180 = vpack.c.b16 %v8167, %v8166
      %v8181 = vpack.c.b16 %v8169, %v8168
      %v8182 = vpack.c.b16 %v8171, %v8170
      %v8183 = vpack.c.b16 %v8173, %v8172
      %v8184 = vpack.c.b16 %v8175, %v8174
      %v8185 = vpack.c.b16 %v8177, %v8176
      %8194 = vmatprep.subr.bf16.mxu0 0
      %8195 = vmatpush1.bf16.msra.mxu0 %v8185
      %8196 = vmatprep.subr.bf16.mxu0 0
      %8197 = vmatpush1.bf16.msra.mxu0 %v8184
      %8198 = vmatprep.subr.bf16.mxu0 0
      %8199 = vmatpush1.bf16.msra.mxu0 %v8183
      %8200 = vmatprep.subr.bf16.mxu0 0
      %8201 = vmatpush1.bf16.msra.mxu0 %v8182
      %8202 = vmatprep.subr.bf16.mxu0 0
      %8203 = vmatpush1.bf16.msra.mxu0 %v8181
      %8204 = vmatprep.subr.bf16.mxu0 0
      %8205 = vmatpush1.bf16.msra.mxu0 %v8180
      %8206 = vmatprep.subr.bf16.mxu0 0
      %8207 = vmatpush1.bf16.msra.mxu0 %v8179
      %8208 = vmatprep.subr.bf16.mxu0 0
      %8209 = vmatpush1.bf16.msra.mxu0 %v8178
      %8210 = vmatprep.subr.bf16.mxu0 0
      %8211 = vmatpush2.bf16.msra.mxu0 0
      %8212 = vmatprep.subr.bf16.mxu0 0
      %8213 = vmatpush2.bf16.msra.mxu0 0
      %8214 = vmatprep.subr.bf16.mxu0 0
      %8215 = vmatpush2.bf16.msra.mxu0 0
      %8216 = vmatprep.subr.bf16.mxu0 0
      %8217 = vmatpush2.bf16.msra.mxu0 0
      %8218 = vmatprep.subr.bf16.mxu0 0
      %8219 = vmatpush2.bf16.msra.mxu0 0
      %8220 = vmatprep.subr.bf16.mxu0 0
      %8221 = vmatpush2.bf16.msra.mxu0 0
      %8222 = vmatprep.subr.bf16.mxu0 0
      %8223 = vmatpush2.bf16.msra.mxu0 0
      %8224 = vmatprep.subr.bf16.mxu0 0
      %8225 = vmatpush2.bf16.msra.mxu0 0
      %8226 = vmatprep.mubr.bf16.mxu0 0
      %8227 = vmatmul.mubr.bf16.gmra.mxu0 %v8130
      %v8228 = vpop.f32.mrf.mxu0
      %v8229 = vadd.f32 0.0, %v8228
      %v8230 = vpop.f32.mrf.mxu0
      %v8231 = vpop.f32.mrf.mxu0
      %v8232 = vadd.f32 0.0, %v8231
      %v8233 = vpop.f32.mrf.mxu0
      %8234 = vmatprep.mubr.bf16.mxu0 0
      %8235 = vmatmul.mubr.bf16.gmra.mxu0 %v8131
      %v8236 = vpop.f32.mrf.mxu0
      %v8237 = vadd.f32 0.0, %v8236
      %v8238 = vpop.f32.mrf.mxu0
      %v8239 = vpop.f32.mrf.mxu0
      %v8240 = vadd.f32 0.0, %v8239
      %v8241 = vpop.f32.mrf.mxu0
      %8242 = vmatprep.mubr.bf16.mxu0 0
      %8243 = vmatmul.mubr.bf16.gmra.mxu0 %v8132
      %v8244 = vpop.f32.mrf.mxu0
      %v8245 = vadd.f32 0.0, %v8244
      %v8246 = vpop.f32.mrf.mxu0
      %v8247 = vpop.f32.mrf.mxu0
      %v8248 = vadd.f32 0.0, %v8247
      %v8249 = vpop.f32.mrf.mxu0
      %8250 = vmatprep.mubr.bf16.mxu0 0
      %8251 = vmatmul.mubr.bf16.gmra.mxu0 %v8133
      %v8252 = vpop.f32.mrf.mxu0
      %v8253 = vadd.f32 0.0, %v8252
      %v8254 = vpop.f32.mrf.mxu0
      %v8255 = vpop.f32.mrf.mxu0
      %v8256 = vadd.f32 0.0, %v8255
      %v8257 = vpop.f32.mrf.mxu0
      %8258 = vmatprep.mubr.bf16.mxu0 0
      %8259 = vmatmul.mubr.bf16.gmra.mxu0 %v8134
      %v8260 = vpop.f32.mrf.mxu0
      %v8261 = vadd.f32 0.0, %v8260
      %v8262 = vpop.f32.mrf.mxu0
      %v8263 = vpop.f32.mrf.mxu0
      %v8264 = vadd.f32 0.0, %v8263
      %v8265 = vpop.f32.mrf.mxu0
      %8266 = vmatprep.mubr.bf16.mxu0 0
      %8267 = vmatmul.mubr.bf16.gmra.mxu0 %v8135
      %v8268 = vpop.f32.mrf.mxu0
      %v8269 = vadd.f32 0.0, %v8268
      %v8270 = vpop.f32.mrf.mxu0
      %v8271 = vpop.f32.mrf.mxu0
      %v8272 = vadd.f32 0.0, %v8271
      %v8273 = vpop.f32.mrf.mxu0
      %8274 = vmatprep.mubr.bf16.mxu0 0
      %8275 = vmatmul.mubr.bf16.gmra.mxu0 %v8136
      %v8276 = vpop.f32.mrf.mxu0
      %v8277 = vadd.f32 0.0, %v8276
      %v8278 = vpop.f32.mrf.mxu0
      %v8279 = vpop.f32.mrf.mxu0
      %v8280 = vadd.f32 0.0, %v8279
      %v8281 = vpop.f32.mrf.mxu0
      %8282 = vmatprep.mubr.bf16.mxu0 0
      %8283 = vmatmul.mubr.bf16.gmra.mxu0 %v8137
      %v8284 = vpop.f32.mrf.mxu0
      %v8285 = vadd.f32 0.0, %v8284
      %v8286 = vpop.f32.mrf.mxu0
      %v8287 = vpop.f32.mrf.mxu0
      %v8288 = vadd.f32 0.0, %v8287
      %v8289 = vpop.f32.mrf.mxu0
      %8290 = vdwg.mxu0
      %v8291 = vadd.f32 %v8049, %v8229
      %v8292 = vadd.f32 %v8050, %v8232
      %v8293 = vadd.f32 %v8051, %v8237
      %v8294 = vadd.f32 %v8052, %v8240
      %v8295 = vadd.f32 %v8053, %v8245
      %v8296 = vadd.f32 %v8054, %v8248
      %v8297 = vadd.f32 %v8055, %v8253
      %v8298 = vadd.f32 %v8056, %v8256
      %v8299 = vadd.f32 %v8057, %v8261
      %v8300 = vadd.f32 %v8058, %v8264
      %v8301 = vadd.f32 %v8059, %v8269
      %v8302 = vadd.f32 %v8060, %v8272
      %v8303 = vadd.f32 %v8061, %v8277
      %v8304 = vadd.f32 %v8062, %v8280
      %v8305 = vadd.f32 %v8063, %v8285
      %v8306 = vadd.f32 %v8064, %v8288
      %v8307 = vld [vmem:[%s363 + $0x10] sm:$0xf]
      %v8308 = vld [vmem:[%s363 + $0x14] sm:$0xf]
      %v8309 = vld [vmem:[%s363 + $0x18] sm:$0xf]
      %v8310 = vld [vmem:[%s363 + $0x1c] sm:$0xf]
      %v8311 = vld [vmem:[%s363 + $0x20] sm:$0xf]
      %v8312 = vld [vmem:[%s363 + $0x24] sm:$0xf]
      %v8313 = vld [vmem:[%s363 + $0x28] sm:$0xf]
      %v8314 = vld [vmem:[%s363 + $0x2c] sm:$0xf]
      %v8315 = vld [vmem:[%s363 + $0x30] sm:$0xf]
      %v8316 = vld [vmem:[%s363 + $0x34] sm:$0xf]
      %v8317 = vld [vmem:[%s363 + $0x38] sm:$0xf]
      %v8318 = vld [vmem:[%s363 + $0x3c] sm:$0xf]
      %v8319 = vld [vmem:[%s363 + $0x40] sm:$0xf]
      %v8320 = vld [vmem:[%s363 + $0x44] sm:$0xf]
      %v8321 = vld [vmem:[%s363 + $0x48] sm:$0xf]
      %v8322 = vld [vmem:[%s363 + $0x4c] sm:$0xf]
      %s8323 = scalar_lea.vmem %s5, 448
      %v8324 = vld [vmem:[%s8323] sm:$0xf]
      %v8325 = vld [vmem:[%s8323 + $0x4] sm:$0xf]
      %v8326 = vld [vmem:[%s8323 + $0x8] sm:$0xf]
      %v8327 = vld [vmem:[%s8323 + $0xc] sm:$0xf]
      %v8328 = vld [vmem:[%s8323 + $0x10] sm:$0xf]
      %v8329 = vld [vmem:[%s8323 + $0x14] sm:$0xf]
      %v8330 = vld [vmem:[%s8323 + $0x18] sm:$0xf]
      %v8331 = vld [vmem:[%s8323 + $0x1c] sm:$0xf]
      %v8332 = vld [vmem:[%s8323 + $0x20] sm:$0xf]
      %v8333 = vld [vmem:[%s8323 + $0x24] sm:$0xf]
      %v8334 = vld [vmem:[%s8323 + $0x28] sm:$0xf]
      %v8335 = vld [vmem:[%s8323 + $0x2c] sm:$0xf]
      %v8336 = vld [vmem:[%s8323 + $0x30] sm:$0xf]
      %v8337 = vld [vmem:[%s8323 + $0x34] sm:$0xf]
      %v8338 = vld [vmem:[%s8323 + $0x38] sm:$0xf]
      %v8339 = vld [vmem:[%s8323 + $0x3c] sm:$0xf]
      %v8356 = vunpack.c.l.b16 %v8307
      %v8357 = vunpack.c.l.b16 %v8308
      %v8358 = vunpack.c.l.b16 %v8309
      %v8359 = vunpack.c.l.b16 %v8310
      %v8360 = vunpack.c.l.b16 %v8311
      %v8361 = vunpack.c.l.b16 %v8312
      %v8362 = vunpack.c.l.b16 %v8313
      %v8363 = vunpack.c.l.b16 %v8314
      %v8364 = vunpack.c.l.b16 %v8315
      %v8365 = vunpack.c.l.b16 %v8316
      %v8366 = vunpack.c.l.b16 %v8317
      %v8367 = vunpack.c.l.b16 %v8318
      %v8368 = vunpack.c.l.b16 %v8319
      %v8369 = vunpack.c.l.b16 %v8320
      %v8370 = vunpack.c.l.b16 %v8321
      %v8371 = vunpack.c.l.b16 %v8322
      %v8372 = vpack.c.b16 %v8357, %v8356
      %v8373 = vpack.c.b16 %v8359, %v8358
      %v8374 = vpack.c.b16 %v8361, %v8360
      %v8375 = vpack.c.b16 %v8363, %v8362
      %v8376 = vpack.c.b16 %v8365, %v8364
      %v8377 = vpack.c.b16 %v8367, %v8366
      %v8378 = vpack.c.b16 %v8369, %v8368
      %v8379 = vpack.c.b16 %v8371, %v8370
      %v8404 = vunpack.c.l.b16 %v8324
      %v8405 = vunpack.c.l.b16 %v8325
      %v8406 = vunpack.c.l.b16 %v8326
      %v8407 = vunpack.c.l.b16 %v8327
      %v8408 = vunpack.c.l.b16 %v8328
      %v8409 = vunpack.c.l.b16 %v8329
      %v8410 = vunpack.c.l.b16 %v8330
      %v8411 = vunpack.c.l.b16 %v8331
      %v8412 = vunpack.c.l.b16 %v8332
      %v8413 = vunpack.c.l.b16 %v8333
      %v8414 = vunpack.c.l.b16 %v8334
      %v8415 = vunpack.c.l.b16 %v8335
      %v8416 = vunpack.c.l.b16 %v8336
      %v8417 = vunpack.c.l.b16 %v8337
      %v8418 = vunpack.c.l.b16 %v8338
      %v8419 = vunpack.c.l.b16 %v8339
      %v8420 = vpack.c.b16 %v8405, %v8404
      %v8421 = vpack.c.b16 %v8407, %v8406
      %v8422 = vpack.c.b16 %v8409, %v8408
      %v8423 = vpack.c.b16 %v8411, %v8410
      %v8424 = vpack.c.b16 %v8413, %v8412
      %v8425 = vpack.c.b16 %v8415, %v8414
      %v8426 = vpack.c.b16 %v8417, %v8416
      %v8427 = vpack.c.b16 %v8419, %v8418
      %8436 = vmatprep.subr.bf16.mxu0 0
      %8437 = vmatpush1.bf16.msra.mxu0 %v8427
      %8438 = vmatprep.subr.bf16.mxu0 0
      %8439 = vmatpush1.bf16.msra.mxu0 %v8426
      %8440 = vmatprep.subr.bf16.mxu0 0
      %8441 = vmatpush1.bf16.msra.mxu0 %v8425
      %8442 = vmatprep.subr.bf16.mxu0 0
      %8443 = vmatpush1.bf16.msra.mxu0 %v8424
      %8444 = vmatprep.subr.bf16.mxu0 0
      %8445 = vmatpush1.bf16.msra.mxu0 %v8423
      %8446 = vmatprep.subr.bf16.mxu0 0
      %8447 = vmatpush1.bf16.msra.mxu0 %v8422
      %8448 = vmatprep.subr.bf16.mxu0 0
      %8449 = vmatpush1.bf16.msra.mxu0 %v8421
      %8450 = vmatprep.subr.bf16.mxu0 0
      %8451 = vmatpush1.bf16.msra.mxu0 %v8420
      %8452 = vmatprep.subr.bf16.mxu0 0
      %8453 = vmatpush2.bf16.msra.mxu0 0
      %8454 = vmatprep.subr.bf16.mxu0 0
      %8455 = vmatpush2.bf16.msra.mxu0 0
      %8456 = vmatprep.subr.bf16.mxu0 0
      %8457 = vmatpush2.bf16.msra.mxu0 0
      %8458 = vmatprep.subr.bf16.mxu0 0
      %8459 = vmatpush2.bf16.msra.mxu0 0
      %8460 = vmatprep.subr.bf16.mxu0 0
      %8461 = vmatpush2.bf16.msra.mxu0 0
      %8462 = vmatprep.subr.bf16.mxu0 0
      %8463 = vmatpush2.bf16.msra.mxu0 0
      %8464 = vmatprep.subr.bf16.mxu0 0
      %8465 = vmatpush2.bf16.msra.mxu0 0
      %8466 = vmatprep.subr.bf16.mxu0 0
      %8467 = vmatpush2.bf16.msra.mxu0 0
      %8468 = vmatprep.mubr.bf16.mxu0 0
      %8469 = vmatmul.mubr.bf16.gmra.mxu0 %v8372
      %v8470 = vpop.f32.mrf.mxu0
      %v8471 = vadd.f32 0.0, %v8470
      %v8472 = vpop.f32.mrf.mxu0
      %v8473 = vpop.f32.mrf.mxu0
      %v8474 = vadd.f32 0.0, %v8473
      %v8475 = vpop.f32.mrf.mxu0
      %8476 = vmatprep.mubr.bf16.mxu0 0
      %8477 = vmatmul.mubr.bf16.gmra.mxu0 %v8373
      %v8478 = vpop.f32.mrf.mxu0
      %v8479 = vadd.f32 0.0, %v8478
      %v8480 = vpop.f32.mrf.mxu0
      %v8481 = vpop.f32.mrf.mxu0
      %v8482 = vadd.f32 0.0, %v8481
      %v8483 = vpop.f32.mrf.mxu0
      %8484 = vmatprep.mubr.bf16.mxu0 0
      %8485 = vmatmul.mubr.bf16.gmra.mxu0 %v8374
      %v8486 = vpop.f32.mrf.mxu0
      %v8487 = vadd.f32 0.0, %v8486
      %v8488 = vpop.f32.mrf.mxu0
      %v8489 = vpop.f32.mrf.mxu0
      %v8490 = vadd.f32 0.0, %v8489
      %v8491 = vpop.f32.mrf.mxu0
      %8492 = vmatprep.mubr.bf16.mxu0 0
      %8493 = vmatmul.mubr.bf16.gmra.mxu0 %v8375
      %v8494 = vpop.f32.mrf.mxu0
      %v8495 = vadd.f32 0.0, %v8494
      %v8496 = vpop.f32.mrf.mxu0
      %v8497 = vpop.f32.mrf.mxu0
      %v8498 = vadd.f32 0.0, %v8497
      %v8499 = vpop.f32.mrf.mxu0
      %8500 = vmatprep.mubr.bf16.mxu0 0
      %8501 = vmatmul.mubr.bf16.gmra.mxu0 %v8376
      %v8502 = vpop.f32.mrf.mxu0
      %v8503 = vadd.f32 0.0, %v8502
      %v8504 = vpop.f32.mrf.mxu0
      %v8505 = vpop.f32.mrf.mxu0
      %v8506 = vadd.f32 0.0, %v8505
      %v8507 = vpop.f32.mrf.mxu0
      %8508 = vmatprep.mubr.bf16.mxu0 0
      %8509 = vmatmul.mubr.bf16.gmra.mxu0 %v8377
      %v8510 = vpop.f32.mrf.mxu0
      %v8511 = vadd.f32 0.0, %v8510
      %v8512 = vpop.f32.mrf.mxu0
      %v8513 = vpop.f32.mrf.mxu0
      %v8514 = vadd.f32 0.0, %v8513
      %v8515 = vpop.f32.mrf.mxu0
      %8516 = vmatprep.mubr.bf16.mxu0 0
      %8517 = vmatmul.mubr.bf16.gmra.mxu0 %v8378
      %v8518 = vpop.f32.mrf.mxu0
      %v8519 = vadd.f32 0.0, %v8518
      %v8520 = vpop.f32.mrf.mxu0
      %v8521 = vpop.f32.mrf.mxu0
      %v8522 = vadd.f32 0.0, %v8521
      %v8523 = vpop.f32.mrf.mxu0
      %8524 = vmatprep.mubr.bf16.mxu0 0
      %8525 = vmatmul.mubr.bf16.gmra.mxu0 %v8379
      %v8526 = vpop.f32.mrf.mxu0
      %v8527 = vadd.f32 0.0, %v8526
      %v8528 = vpop.f32.mrf.mxu0
      %v8529 = vpop.f32.mrf.mxu0
      %v8530 = vadd.f32 0.0, %v8529
      %v8531 = vpop.f32.mrf.mxu0
      %8532 = vdwg.mxu0
      %v8533 = vadd.f32 %v8291, %v8471
      %v8534 = vadd.f32 %v8292, %v8474
      %v8535 = vadd.f32 %v8293, %v8479
      %v8536 = vadd.f32 %v8294, %v8482
      %v8537 = vadd.f32 %v8295, %v8487
      %v8538 = vadd.f32 %v8296, %v8490
      %v8539 = vadd.f32 %v8297, %v8495
      %v8540 = vadd.f32 %v8298, %v8498
      %v8541 = vadd.f32 %v8299, %v8503
      %v8542 = vadd.f32 %v8300, %v8506
      %v8543 = vadd.f32 %v8301, %v8511
      %v8544 = vadd.f32 %v8302, %v8514
      %v8545 = vadd.f32 %v8303, %v8519
      %v8546 = vadd.f32 %v8304, %v8522
      %v8547 = vadd.f32 %v8305, %v8527
      %v8548 = vadd.f32 %v8306, %v8530
      %v8549 = vld [vmem:[%s368 + $0x10] sm:$0xf]
      %v8550 = vld [vmem:[%s368 + $0x14] sm:$0xf]
      %v8551 = vld [vmem:[%s368 + $0x18] sm:$0xf]
      %v8552 = vld [vmem:[%s368 + $0x1c] sm:$0xf]
      %v8553 = vld [vmem:[%s368 + $0x20] sm:$0xf]
      %v8554 = vld [vmem:[%s368 + $0x24] sm:$0xf]
      %v8555 = vld [vmem:[%s368 + $0x28] sm:$0xf]
      %v8556 = vld [vmem:[%s368 + $0x2c] sm:$0xf]
      %v8557 = vld [vmem:[%s368 + $0x30] sm:$0xf]
      %v8558 = vld [vmem:[%s368 + $0x34] sm:$0xf]
      %v8559 = vld [vmem:[%s368 + $0x38] sm:$0xf]
      %v8560 = vld [vmem:[%s368 + $0x3c] sm:$0xf]
      %v8561 = vld [vmem:[%s368 + $0x40] sm:$0xf]
      %v8562 = vld [vmem:[%s368 + $0x44] sm:$0xf]
      %v8563 = vld [vmem:[%s368 + $0x48] sm:$0xf]
      %v8564 = vld [vmem:[%s368 + $0x4c] sm:$0xf]
      %s8565 = scalar_lea.vmem %s5, 512
      %v8566 = vld [vmem:[%s8565] sm:$0xf]
      %v8567 = vld [vmem:[%s8565 + $0x4] sm:$0xf]
      %v8568 = vld [vmem:[%s8565 + $0x8] sm:$0xf]
      %v8569 = vld [vmem:[%s8565 + $0xc] sm:$0xf]
      %v8570 = vld [vmem:[%s8565 + $0x10] sm:$0xf]
      %v8571 = vld [vmem:[%s8565 + $0x14] sm:$0xf]
      %v8572 = vld [vmem:[%s8565 + $0x18] sm:$0xf]
      %v8573 = vld [vmem:[%s8565 + $0x1c] sm:$0xf]
      %v8574 = vld [vmem:[%s8565 + $0x20] sm:$0xf]
      %v8575 = vld [vmem:[%s8565 + $0x24] sm:$0xf]
      %v8576 = vld [vmem:[%s8565 + $0x28] sm:$0xf]
      %v8577 = vld [vmem:[%s8565 + $0x2c] sm:$0xf]
      %v8578 = vld [vmem:[%s8565 + $0x30] sm:$0xf]
      %v8579 = vld [vmem:[%s8565 + $0x34] sm:$0xf]
      %v8580 = vld [vmem:[%s8565 + $0x38] sm:$0xf]
      %v8581 = vld [vmem:[%s8565 + $0x3c] sm:$0xf]
      %v8598 = vunpack.c.l.b16 %v8549
      %v8599 = vunpack.c.l.b16 %v8550
      %v8600 = vunpack.c.l.b16 %v8551
      %v8601 = vunpack.c.l.b16 %v8552
      %v8602 = vunpack.c.l.b16 %v8553
      %v8603 = vunpack.c.l.b16 %v8554
      %v8604 = vunpack.c.l.b16 %v8555
      %v8605 = vunpack.c.l.b16 %v8556
      %v8606 = vunpack.c.l.b16 %v8557
      %v8607 = vunpack.c.l.b16 %v8558
      %v8608 = vunpack.c.l.b16 %v8559
      %v8609 = vunpack.c.l.b16 %v8560
      %v8610 = vunpack.c.l.b16 %v8561
      %v8611 = vunpack.c.l.b16 %v8562
      %v8612 = vunpack.c.l.b16 %v8563
      %v8613 = vunpack.c.l.b16 %v8564
      %v8614 = vpack.c.b16 %v8599, %v8598
      %v8615 = vpack.c.b16 %v8601, %v8600
      %v8616 = vpack.c.b16 %v8603, %v8602
      %v8617 = vpack.c.b16 %v8605, %v8604
      %v8618 = vpack.c.b16 %v8607, %v8606
      %v8619 = vpack.c.b16 %v8609, %v8608
      %v8620 = vpack.c.b16 %v8611, %v8610
      %v8621 = vpack.c.b16 %v8613, %v8612
      %v8646 = vunpack.c.l.b16 %v8566
      %v8647 = vunpack.c.l.b16 %v8567
      %v8648 = vunpack.c.l.b16 %v8568
      %v8649 = vunpack.c.l.b16 %v8569
      %v8650 = vunpack.c.l.b16 %v8570
      %v8651 = vunpack.c.l.b16 %v8571
      %v8652 = vunpack.c.l.b16 %v8572
      %v8653 = vunpack.c.l.b16 %v8573
      %v8654 = vunpack.c.l.b16 %v8574
      %v8655 = vunpack.c.l.b16 %v8575
      %v8656 = vunpack.c.l.b16 %v8576
      %v8657 = vunpack.c.l.b16 %v8577
      %v8658 = vunpack.c.l.b16 %v8578
      %v8659 = vunpack.c.l.b16 %v8579
      %v8660 = vunpack.c.l.b16 %v8580
      %v8661 = vunpack.c.l.b16 %v8581
      %v8662 = vpack.c.b16 %v8647, %v8646
      %v8663 = vpack.c.b16 %v8649, %v8648
      %v8664 = vpack.c.b16 %v8651, %v8650
      %v8665 = vpack.c.b16 %v8653, %v8652
      %v8666 = vpack.c.b16 %v8655, %v8654
      %v8667 = vpack.c.b16 %v8657, %v8656
      %v8668 = vpack.c.b16 %v8659, %v8658
      %v8669 = vpack.c.b16 %v8661, %v8660
      %8678 = vmatprep.subr.bf16.mxu0 0
      %8679 = vmatpush1.bf16.msra.mxu0 %v8669
      %8680 = vmatprep.subr.bf16.mxu0 0
      %8681 = vmatpush1.bf16.msra.mxu0 %v8668
      %8682 = vmatprep.subr.bf16.mxu0 0
      %8683 = vmatpush1.bf16.msra.mxu0 %v8667
      %8684 = vmatprep.subr.bf16.mxu0 0
      %8685 = vmatpush1.bf16.msra.mxu0 %v8666
      %8686 = vmatprep.subr.bf16.mxu0 0
      %8687 = vmatpush1.bf16.msra.mxu0 %v8665
      %8688 = vmatprep.subr.bf16.mxu0 0
      %8689 = vmatpush1.bf16.msra.mxu0 %v8664
      %8690 = vmatprep.subr.bf16.mxu0 0
      %8691 = vmatpush1.bf16.msra.mxu0 %v8663
      %8692 = vmatprep.subr.bf16.mxu0 0
      %8693 = vmatpush1.bf16.msra.mxu0 %v8662
      %8694 = vmatprep.subr.bf16.mxu0 0
      %8695 = vmatpush2.bf16.msra.mxu0 0
      %8696 = vmatprep.subr.bf16.mxu0 0
      %8697 = vmatpush2.bf16.msra.mxu0 0
      %8698 = vmatprep.subr.bf16.mxu0 0
      %8699 = vmatpush2.bf16.msra.mxu0 0
      %8700 = vmatprep.subr.bf16.mxu0 0
      %8701 = vmatpush2.bf16.msra.mxu0 0
      %8702 = vmatprep.subr.bf16.mxu0 0
      %8703 = vmatpush2.bf16.msra.mxu0 0
      %8704 = vmatprep.subr.bf16.mxu0 0
      %8705 = vmatpush2.bf16.msra.mxu0 0
      %8706 = vmatprep.subr.bf16.mxu0 0
      %8707 = vmatpush2.bf16.msra.mxu0 0
      %8708 = vmatprep.subr.bf16.mxu0 0
      %8709 = vmatpush2.bf16.msra.mxu0 0
      %8710 = vmatprep.mubr.bf16.mxu0 0
      %8711 = vmatmul.mubr.bf16.gmra.mxu0 %v8614
      %v8712 = vpop.f32.mrf.mxu0
      %v8713 = vadd.f32 0.0, %v8712
      %v8714 = vpop.f32.mrf.mxu0
      %v8715 = vpop.f32.mrf.mxu0
      %v8716 = vadd.f32 0.0, %v8715
      %v8717 = vpop.f32.mrf.mxu0
      %8718 = vmatprep.mubr.bf16.mxu0 0
      %8719 = vmatmul.mubr.bf16.gmra.mxu0 %v8615
      %v8720 = vpop.f32.mrf.mxu0
      %v8721 = vadd.f32 0.0, %v8720
      %v8722 = vpop.f32.mrf.mxu0
      %v8723 = vpop.f32.mrf.mxu0
      %v8724 = vadd.f32 0.0, %v8723
      %v8725 = vpop.f32.mrf.mxu0
      %8726 = vmatprep.mubr.bf16.mxu0 0
      %8727 = vmatmul.mubr.bf16.gmra.mxu0 %v8616
      %v8728 = vpop.f32.mrf.mxu0
      %v8729 = vadd.f32 0.0, %v8728
      %v8730 = vpop.f32.mrf.mxu0
      %v8731 = vpop.f32.mrf.mxu0
      %v8732 = vadd.f32 0.0, %v8731
      %v8733 = vpop.f32.mrf.mxu0
      %8734 = vmatprep.mubr.bf16.mxu0 0
      %8735 = vmatmul.mubr.bf16.gmra.mxu0 %v8617
      %v8736 = vpop.f32.mrf.mxu0
      %v8737 = vadd.f32 0.0, %v8736
      %v8738 = vpop.f32.mrf.mxu0
      %v8739 = vpop.f32.mrf.mxu0
      %v8740 = vadd.f32 0.0, %v8739
      %v8741 = vpop.f32.mrf.mxu0
      %8742 = vmatprep.mubr.bf16.mxu0 0
      %8743 = vmatmul.mubr.bf16.gmra.mxu0 %v8618
      %v8744 = vpop.f32.mrf.mxu0
      %v8745 = vadd.f32 0.0, %v8744
      %v8746 = vpop.f32.mrf.mxu0
      %v8747 = vpop.f32.mrf.mxu0
      %v8748 = vadd.f32 0.0, %v8747
      %v8749 = vpop.f32.mrf.mxu0
      %8750 = vmatprep.mubr.bf16.mxu0 0
      %8751 = vmatmul.mubr.bf16.gmra.mxu0 %v8619
      %v8752 = vpop.f32.mrf.mxu0
      %v8753 = vadd.f32 0.0, %v8752
      %v8754 = vpop.f32.mrf.mxu0
      %v8755 = vpop.f32.mrf.mxu0
      %v8756 = vadd.f32 0.0, %v8755
      %v8757 = vpop.f32.mrf.mxu0
      %8758 = vmatprep.mubr.bf16.mxu0 0
      %8759 = vmatmul.mubr.bf16.gmra.mxu0 %v8620
      %v8760 = vpop.f32.mrf.mxu0
      %v8761 = vadd.f32 0.0, %v8760
      %v8762 = vpop.f32.mrf.mxu0
      %v8763 = vpop.f32.mrf.mxu0
      %v8764 = vadd.f32 0.0, %v8763
      %v8765 = vpop.f32.mrf.mxu0
      %8766 = vmatprep.mubr.bf16.mxu0 0
      %8767 = vmatmul.mubr.bf16.gmra.mxu0 %v8621
      %v8768 = vpop.f32.mrf.mxu0
      %v8769 = vadd.f32 0.0, %v8768
      %v8770 = vpop.f32.mrf.mxu0
      %v8771 = vpop.f32.mrf.mxu0
      %v8772 = vadd.f32 0.0, %v8771
      %v8773 = vpop.f32.mrf.mxu0
      %8774 = vdwg.mxu0
      %v8775 = vadd.f32 %v8533, %v8713
      %v8776 = vadd.f32 %v8534, %v8716
      %v8777 = vadd.f32 %v8535, %v8721
      %v8778 = vadd.f32 %v8536, %v8724
      %v8779 = vadd.f32 %v8537, %v8729
      %v8780 = vadd.f32 %v8538, %v8732
      %v8781 = vadd.f32 %v8539, %v8737
      %v8782 = vadd.f32 %v8540, %v8740
      %v8783 = vadd.f32 %v8541, %v8745
      %v8784 = vadd.f32 %v8542, %v8748
      %v8785 = vadd.f32 %v8543, %v8753
      %v8786 = vadd.f32 %v8544, %v8756
      %v8787 = vadd.f32 %v8545, %v8761
      %v8788 = vadd.f32 %v8546, %v8764
      %v8789 = vadd.f32 %v8547, %v8769
      %v8790 = vadd.f32 %v8548, %v8772
      %8791 = vst [vmem:[%s278] sm:$0xff] %v8775
      %8792 = vst [vmem:[%s278 + $0x8] sm:$0xff] %v8776
      %8793 = vst [vmem:[%s278 + $0x10] sm:$0xff] %v8777
      %8794 = vst [vmem:[%s278 + $0x18] sm:$0xff] %v8778
      %8795 = vst [vmem:[%s278 + $0x20] sm:$0xff] %v8779
      %8796 = vst [vmem:[%s278 + $0x28] sm:$0xff] %v8780
      %8797 = vst [vmem:[%s278 + $0x30] sm:$0xff] %v8781
      %8798 = vst [vmem:[%s278 + $0x38] sm:$0xff] %v8782
      %8799 = vst [vmem:[%s278 + $0x40] sm:$0xff] %v8783
      %8800 = vst [vmem:[%s278 + $0x48] sm:$0xff] %v8784
      %8801 = vst [vmem:[%s278 + $0x50] sm:$0xff] %v8785
      %8802 = vst [vmem:[%s278 + $0x58] sm:$0xff] %v8786
      %8803 = vst [vmem:[%s278 + $0x60] sm:$0xff] %v8787
      %8804 = vst [vmem:[%s278 + $0x68] sm:$0xff] %v8788
      %8805 = vst [vmem:[%s278 + $0x70] sm:$0xff] %v8789
      %8806 = vst [vmem:[%s278 + $0x78] sm:$0xff] %v8790
      %v8807 = vld [vmem:[%s6] sm:$0x1]
      %v8809 = vlaneseq
      %v8810 = vshrl.u32 %v8809, 7
      %v8811 = vsub.s32 0, %v8810
      %v8812 = vrot.slane %v8807, %v8811
      %v8814 = vld [vmem:[#allocation3 + $0x40] sm:$0xf]
      %v8815 = vld [vmem:[#allocation3 + $0x44] sm:$0xf]
      %v8816 = vld [vmem:[#allocation3 + $0x48] sm:$0xf]
      %v8817 = vld [vmem:[#allocation3 + $0x4c] sm:$0xf]
      %v8818 = vld [vmem:[#allocation3 + $0x50] sm:$0xf]
      %v8819 = vld [vmem:[#allocation3 + $0x54] sm:$0xf]
      %v8820 = vld [vmem:[#allocation3 + $0x58] sm:$0xf]
      %v8821 = vld [vmem:[#allocation3 + $0x5c] sm:$0xf]
      %v8822 = vld [vmem:[#allocation3 + $0x60] sm:$0xf]
      %v8823 = vld [vmem:[#allocation3 + $0x64] sm:$0xf]
      %v8824 = vld [vmem:[#allocation3 + $0x68] sm:$0xf]
      %v8825 = vld [vmem:[#allocation3 + $0x6c] sm:$0xf]
      %v8826 = vld [vmem:[#allocation3 + $0x70] sm:$0xf]
      %v8827 = vld [vmem:[#allocation3 + $0x74] sm:$0xf]
      %v8828 = vld [vmem:[#allocation3 + $0x78] sm:$0xf]
      %v8829 = vld [vmem:[#allocation3 + $0x7c] sm:$0xf]
      %v8830 = vld [vmem:[%s5] sm:$0xf]
      %v8831 = vld [vmem:[%s5 + $0x4] sm:$0xf]
      %v8832 = vld [vmem:[%s5 + $0x8] sm:$0xf]
      %v8833 = vld [vmem:[%s5 + $0xc] sm:$0xf]
      %v8834 = vld [vmem:[%s5 + $0x10] sm:$0xf]
      %v8835 = vld [vmem:[%s5 + $0x14] sm:$0xf]
      %v8836 = vld [vmem:[%s5 + $0x18] sm:$0xf]
      %v8837 = vld [vmem:[%s5 + $0x1c] sm:$0xf]
      %v8838 = vld [vmem:[%s5 + $0x20] sm:$0xf]
      %v8839 = vld [vmem:[%s5 + $0x24] sm:$0xf]
      %v8840 = vld [vmem:[%s5 + $0x28] sm:$0xf]
      %v8841 = vld [vmem:[%s5 + $0x2c] sm:$0xf]
      %v8842 = vld [vmem:[%s5 + $0x30] sm:$0xf]
      %v8843 = vld [vmem:[%s5 + $0x34] sm:$0xf]
      %v8844 = vld [vmem:[%s5 + $0x38] sm:$0xf]
      %v8845 = vld [vmem:[%s5 + $0x3c] sm:$0xf]
      %v8862 = vunpack.c.l.b16 %v8814
      %v8863 = vunpack.c.l.b16 %v8815
      %v8864 = vunpack.c.l.b16 %v8816
      %v8865 = vunpack.c.l.b16 %v8817
      %v8866 = vunpack.c.l.b16 %v8818
      %v8867 = vunpack.c.l.b16 %v8819
      %v8868 = vunpack.c.l.b16 %v8820
      %v8869 = vunpack.c.l.b16 %v8821
      %v8870 = vunpack.c.l.b16 %v8822
      %v8871 = vunpack.c.l.b16 %v8823
      %v8872 = vunpack.c.l.b16 %v8824
      %v8873 = vunpack.c.l.b16 %v8825
      %v8874 = vunpack.c.l.b16 %v8826
      %v8875 = vunpack.c.l.b16 %v8827
      %v8876 = vunpack.c.l.b16 %v8828
      %v8877 = vunpack.c.l.b16 %v8829
      %v8878 = vpack.c.b16 %v8863, %v8862
      %v8879 = vpack.c.b16 %v8865, %v8864
      %v8880 = vpack.c.b16 %v8867, %v8866
      %v8881 = vpack.c.b16 %v8869, %v8868
      %v8882 = vpack.c.b16 %v8871, %v8870
      %v8883 = vpack.c.b16 %v8873, %v8872
      %v8884 = vpack.c.b16 %v8875, %v8874
      %v8885 = vpack.c.b16 %v8877, %v8876
      %v8910 = vunpack.c.l.b16 %v8830
      %v8911 = vunpack.c.l.b16 %v8831
      %v8912 = vunpack.c.l.b16 %v8832
      %v8913 = vunpack.c.l.b16 %v8833
      %v8914 = vunpack.c.l.b16 %v8834
      %v8915 = vunpack.c.l.b16 %v8835
      %v8916 = vunpack.c.l.b16 %v8836
      %v8917 = vunpack.c.l.b16 %v8837
      %v8918 = vunpack.c.l.b16 %v8838
      %v8919 = vunpack.c.l.b16 %v8839
      %v8920 = vunpack.c.l.b16 %v8840
      %v8921 = vunpack.c.l.b16 %v8841
      %v8922 = vunpack.c.l.b16 %v8842
      %v8923 = vunpack.c.l.b16 %v8843
      %v8924 = vunpack.c.l.b16 %v8844
      %v8925 = vunpack.c.l.b16 %v8845
      %v8926 = vpack.c.b16 %v8911, %v8910
      %v8927 = vpack.c.b16 %v8913, %v8912
      %v8928 = vpack.c.b16 %v8915, %v8914
      %v8929 = vpack.c.b16 %v8917, %v8916
      %v8930 = vpack.c.b16 %v8919, %v8918
      %v8931 = vpack.c.b16 %v8921, %v8920
      %v8932 = vpack.c.b16 %v8923, %v8922
      %v8933 = vpack.c.b16 %v8925, %v8924
      %8942 = vmatprep.subr.bf16.mxu0 0
      %8943 = vmatpush1.bf16.msra.mxu0 %v8933
      %8944 = vmatprep.subr.bf16.mxu0 0
      %8945 = vmatpush1.bf16.msra.mxu0 %v8932
      %8946 = vmatprep.subr.bf16.mxu0 0
      %8947 = vmatpush1.bf16.msra.mxu0 %v8931
      %8948 = vmatprep.subr.bf16.mxu0 0
      %8949 = vmatpush1.bf16.msra.mxu0 %v8930
      %8950 = vmatprep.subr.bf16.mxu0 0
      %8951 = vmatpush1.bf16.msra.mxu0 %v8929
      %8952 = vmatprep.subr.bf16.mxu0 0
      %8953 = vmatpush1.bf16.msra.mxu0 %v8928
      %8954 = vmatprep.subr.bf16.mxu0 0
      %8955 = vmatpush1.bf16.msra.mxu0 %v8927
      %8956 = vmatprep.subr.bf16.mxu0 0
      %8957 = vmatpush1.bf16.msra.mxu0 %v8926
      %8958 = vmatprep.subr.bf16.mxu0 0
      %8959 = vmatpush2.bf16.msra.mxu0 0
      %8960 = vmatprep.subr.bf16.mxu0 0
      %8961 = vmatpush2.bf16.msra.mxu0 0
      %8962 = vmatprep.subr.bf16.mxu0 0
      %8963 = vmatpush2.bf16.msra.mxu0 0
      %8964 = vmatprep.subr.bf16.mxu0 0
      %8965 = vmatpush2.bf16.msra.mxu0 0
      %8966 = vmatprep.subr.bf16.mxu0 0
      %8967 = vmatpush2.bf16.msra.mxu0 0
      %8968 = vmatprep.subr.bf16.mxu0 0
      %8969 = vmatpush2.bf16.msra.mxu0 0
      %8970 = vmatprep.subr.bf16.mxu0 0
      %8971 = vmatpush2.bf16.msra.mxu0 0
      %8972 = vmatprep.subr.bf16.mxu0 0
      %8973 = vmatpush2.bf16.msra.mxu0 0
      %8974 = vmatprep.mubr.bf16.mxu0 0
      %8975 = vmatmul.mubr.bf16.gmra.mxu0 %v8878
      %v8976 = vpop.f32.mrf.mxu0
      %v8977 = vadd.f32 0.0, %v8976
      %v8978 = vpop.f32.mrf.mxu0
      %v8979 = vpop.f32.mrf.mxu0
      %v8980 = vadd.f32 0.0, %v8979
      %v8981 = vpop.f32.mrf.mxu0
      %8982 = vmatprep.mubr.bf16.mxu0 0
      %8983 = vmatmul.mubr.bf16.gmra.mxu0 %v8879
      %v8984 = vpop.f32.mrf.mxu0
      %v8985 = vadd.f32 0.0, %v8984
      %v8986 = vpop.f32.mrf.mxu0
      %v8987 = vpop.f32.mrf.mxu0
      %v8988 = vadd.f32 0.0, %v8987
      %v8989 = vpop.f32.mrf.mxu0
      %8990 = vmatprep.mubr.bf16.mxu0 0
      %8991 = vmatmul.mubr.bf16.gmra.mxu0 %v8880
      %v8992 = vpop.f32.mrf.mxu0
      %v8993 = vadd.f32 0.0, %v8992
      %v8994 = vpop.f32.mrf.mxu0
      %v8995 = vpop.f32.mrf.mxu0
      %v8996 = vadd.f32 0.0, %v8995
      %v8997 = vpop.f32.mrf.mxu0
      %8998 = vmatprep.mubr.bf16.mxu0 0
      %8999 = vmatmul.mubr.bf16.gmra.mxu0 %v8881
      %v9000 = vpop.f32.mrf.mxu0
      %v9001 = vadd.f32 0.0, %v9000
      %v9002 = vpop.f32.mrf.mxu0
      %v9003 = vpop.f32.mrf.mxu0
      %v9004 = vadd.f32 0.0, %v9003
      %v9005 = vpop.f32.mrf.mxu0
      %9006 = vmatprep.mubr.bf16.mxu0 0
      %9007 = vmatmul.mubr.bf16.gmra.mxu0 %v8882
      %v9008 = vpop.f32.mrf.mxu0
      %v9009 = vadd.f32 0.0, %v9008
      %v9010 = vpop.f32.mrf.mxu0
      %v9011 = vpop.f32.mrf.mxu0
      %v9012 = vadd.f32 0.0, %v9011
      %v9013 = vpop.f32.mrf.mxu0
      %9014 = vmatprep.mubr.bf16.mxu0 0
      %9015 = vmatmul.mubr.bf16.gmra.mxu0 %v8883
      %v9016 = vpop.f32.mrf.mxu0
      %v9017 = vadd.f32 0.0, %v9016
      %v9018 = vpop.f32.mrf.mxu0
      %v9019 = vpop.f32.mrf.mxu0
      %v9020 = vadd.f32 0.0, %v9019
      %v9021 = vpop.f32.mrf.mxu0
      %9022 = vmatprep.mubr.bf16.mxu0 0
      %9023 = vmatmul.mubr.bf16.gmra.mxu0 %v8884
      %v9024 = vpop.f32.mrf.mxu0
      %v9025 = vadd.f32 0.0, %v9024
      %v9026 = vpop.f32.mrf.mxu0
      %v9027 = vpop.f32.mrf.mxu0
      %v9028 = vadd.f32 0.0, %v9027
      %v9029 = vpop.f32.mrf.mxu0
      %9030 = vmatprep.mubr.bf16.mxu0 0
      %9031 = vmatmul.mubr.bf16.gmra.mxu0 %v8885
      %v9032 = vpop.f32.mrf.mxu0
      %v9033 = vadd.f32 0.0, %v9032
      %v9034 = vpop.f32.mrf.mxu0
      %v9035 = vpop.f32.mrf.mxu0
      %v9036 = vadd.f32 0.0, %v9035
      %v9037 = vpop.f32.mrf.mxu0
      %9038 = vdwg.mxu0
      %v9039 = vadd.f32 %v8812, %v8977
      %v9040 = vadd.f32 %v8812, %v8980
      %v9041 = vadd.f32 %v8812, %v8985
      %v9042 = vadd.f32 %v8812, %v8988
      %v9043 = vadd.f32 %v8812, %v8993
      %v9044 = vadd.f32 %v8812, %v8996
      %v9045 = vadd.f32 %v8812, %v9001
      %v9046 = vadd.f32 %v8812, %v9004
      %v9047 = vadd.f32 %v8812, %v9009
      %v9048 = vadd.f32 %v8812, %v9012
      %v9049 = vadd.f32 %v8812, %v9017
      %v9050 = vadd.f32 %v8812, %v9020
      %v9051 = vadd.f32 %v8812, %v9025
      %v9052 = vadd.f32 %v8812, %v9028
      %v9053 = vadd.f32 %v8812, %v9033
      %v9054 = vadd.f32 %v8812, %v9036
      %v9055 = vld [vmem:[%s363 + $0x40] sm:$0xf]
      %v9056 = vld [vmem:[%s363 + $0x44] sm:$0xf]
      %v9057 = vld [vmem:[%s363 + $0x48] sm:$0xf]
      %v9058 = vld [vmem:[%s363 + $0x4c] sm:$0xf]
      %v9059 = vld [vmem:[%s363 + $0x50] sm:$0xf]
      %v9060 = vld [vmem:[%s363 + $0x54] sm:$0xf]
      %v9061 = vld [vmem:[%s363 + $0x58] sm:$0xf]
      %v9062 = vld [vmem:[%s363 + $0x5c] sm:$0xf]
      %v9063 = vld [vmem:[%s363 + $0x60] sm:$0xf]
      %v9064 = vld [vmem:[%s363 + $0x64] sm:$0xf]
      %v9065 = vld [vmem:[%s363 + $0x68] sm:$0xf]
      %v9066 = vld [vmem:[%s363 + $0x6c] sm:$0xf]
      %v9067 = vld [vmem:[%s363 + $0x70] sm:$0xf]
      %v9068 = vld [vmem:[%s363 + $0x74] sm:$0xf]
      %v9069 = vld [vmem:[%s363 + $0x78] sm:$0xf]
      %v9070 = vld [vmem:[%s363 + $0x7c] sm:$0xf]
      %v9071 = vld [vmem:[%s6871] sm:$0xf]
      %v9072 = vld [vmem:[%s6871 + $0x4] sm:$0xf]
      %v9073 = vld [vmem:[%s6871 + $0x8] sm:$0xf]
      %v9074 = vld [vmem:[%s6871 + $0xc] sm:$0xf]
      %v9075 = vld [vmem:[%s6871 + $0x10] sm:$0xf]
      %v9076 = vld [vmem:[%s6871 + $0x14] sm:$0xf]
      %v9077 = vld [vmem:[%s6871 + $0x18] sm:$0xf]
      %v9078 = vld [vmem:[%s6871 + $0x1c] sm:$0xf]
      %v9079 = vld [vmem:[%s6871 + $0x20] sm:$0xf]
      %v9080 = vld [vmem:[%s6871 + $0x24] sm:$0xf]
      %v9081 = vld [vmem:[%s6871 + $0x28] sm:$0xf]
      %v9082 = vld [vmem:[%s6871 + $0x2c] sm:$0xf]
      %v9083 = vld [vmem:[%s6871 + $0x30] sm:$0xf]
      %v9084 = vld [vmem:[%s6871 + $0x34] sm:$0xf]
      %v9085 = vld [vmem:[%s6871 + $0x38] sm:$0xf]
      %v9086 = vld [vmem:[%s6871 + $0x3c] sm:$0xf]
      %v9103 = vunpack.c.l.b16 %v9055
      %v9104 = vunpack.c.l.b16 %v9056
      %v9105 = vunpack.c.l.b16 %v9057
      %v9106 = vunpack.c.l.b16 %v9058
      %v9107 = vunpack.c.l.b16 %v9059
      %v9108 = vunpack.c.l.b16 %v9060
      %v9109 = vunpack.c.l.b16 %v9061
      %v9110 = vunpack.c.l.b16 %v9062
      %v9111 = vunpack.c.l.b16 %v9063
      %v9112 = vunpack.c.l.b16 %v9064
      %v9113 = vunpack.c.l.b16 %v9065
      %v9114 = vunpack.c.l.b16 %v9066
      %v9115 = vunpack.c.l.b16 %v9067
      %v9116 = vunpack.c.l.b16 %v9068
      %v9117 = vunpack.c.l.b16 %v9069
      %v9118 = vunpack.c.l.b16 %v9070
      %v9119 = vpack.c.b16 %v9104, %v9103
      %v9120 = vpack.c.b16 %v9106, %v9105
      %v9121 = vpack.c.b16 %v9108, %v9107
      %v9122 = vpack.c.b16 %v9110, %v9109
      %v9123 = vpack.c.b16 %v9112, %v9111
      %v9124 = vpack.c.b16 %v9114, %v9113
      %v9125 = vpack.c.b16 %v9116, %v9115
      %v9126 = vpack.c.b16 %v9118, %v9117
      %v9151 = vunpack.c.l.b16 %v9071
      %v9152 = vunpack.c.l.b16 %v9072
      %v9153 = vunpack.c.l.b16 %v9073
      %v9154 = vunpack.c.l.b16 %v9074
      %v9155 = vunpack.c.l.b16 %v9075
      %v9156 = vunpack.c.l.b16 %v9076
      %v9157 = vunpack.c.l.b16 %v9077
      %v9158 = vunpack.c.l.b16 %v9078
      %v9159 = vunpack.c.l.b16 %v9079
      %v9160 = vunpack.c.l.b16 %v9080
      %v9161 = vunpack.c.l.b16 %v9081
      %v9162 = vunpack.c.l.b16 %v9082
      %v9163 = vunpack.c.l.b16 %v9083
      %v9164 = vunpack.c.l.b16 %v9084
      %v9165 = vunpack.c.l.b16 %v9085
      %v9166 = vunpack.c.l.b16 %v9086
      %v9167 = vpack.c.b16 %v9152, %v9151
      %v9168 = vpack.c.b16 %v9154, %v9153
      %v9169 = vpack.c.b16 %v9156, %v9155
      %v9170 = vpack.c.b16 %v9158, %v9157
      %v9171 = vpack.c.b16 %v9160, %v9159
      %v9172 = vpack.c.b16 %v9162, %v9161
      %v9173 = vpack.c.b16 %v9164, %v9163
      %v9174 = vpack.c.b16 %v9166, %v9165
      %9183 = vmatprep.subr.bf16.mxu0 0
      %9184 = vmatpush1.bf16.msra.mxu0 %v9174
      %9185 = vmatprep.subr.bf16.mxu0 0
      %9186 = vmatpush1.bf16.msra.mxu0 %v9173
      %9187 = vmatprep.subr.bf16.mxu0 0
      %9188 = vmatpush1.bf16.msra.mxu0 %v9172
      %9189 = vmatprep.subr.bf16.mxu0 0
      %9190 = vmatpush1.bf16.msra.mxu0 %v9171
      %9191 = vmatprep.subr.bf16.mxu0 0
      %9192 = vmatpush1.bf16.msra.mxu0 %v9170
      %9193 = vmatprep.subr.bf16.mxu0 0
      %9194 = vmatpush1.bf16.msra.mxu0 %v9169
      %9195 = vmatprep.subr.bf16.mxu0 0
      %9196 = vmatpush1.bf16.msra.mxu0 %v9168
      %9197 = vmatprep.subr.bf16.mxu0 0
      %9198 = vmatpush1.bf16.msra.mxu0 %v9167
      %9199 = vmatprep.subr.bf16.mxu0 0
      %9200 = vmatpush2.bf16.msra.mxu0 0
      %9201 = vmatprep.subr.bf16.mxu0 0
      %9202 = vmatpush2.bf16.msra.mxu0 0
      %9203 = vmatprep.subr.bf16.mxu0 0
      %9204 = vmatpush2.bf16.msra.mxu0 0
      %9205 = vmatprep.subr.bf16.mxu0 0
      %9206 = vmatpush2.bf16.msra.mxu0 0
      %9207 = vmatprep.subr.bf16.mxu0 0
      %9208 = vmatpush2.bf16.msra.mxu0 0
      %9209 = vmatprep.subr.bf16.mxu0 0
      %9210 = vmatpush2.bf16.msra.mxu0 0
      %9211 = vmatprep.subr.bf16.mxu0 0
      %9212 = vmatpush2.bf16.msra.mxu0 0
      %9213 = vmatprep.subr.bf16.mxu0 0
      %9214 = vmatpush2.bf16.msra.mxu0 0
      %9215 = vmatprep.mubr.bf16.mxu0 0
      %9216 = vmatmul.mubr.bf16.gmra.mxu0 %v9119
      %v9217 = vpop.f32.mrf.mxu0
      %v9218 = vadd.f32 0.0, %v9217
      %v9219 = vpop.f32.mrf.mxu0
      %v9220 = vpop.f32.mrf.mxu0
      %v9221 = vadd.f32 0.0, %v9220
      %v9222 = vpop.f32.mrf.mxu0
      %9223 = vmatprep.mubr.bf16.mxu0 0
      %9224 = vmatmul.mubr.bf16.gmra.mxu0 %v9120
      %v9225 = vpop.f32.mrf.mxu0
      %v9226 = vadd.f32 0.0, %v9225
      %v9227 = vpop.f32.mrf.mxu0
      %v9228 = vpop.f32.mrf.mxu0
      %v9229 = vadd.f32 0.0, %v9228
      %v9230 = vpop.f32.mrf.mxu0
      %9231 = vmatprep.mubr.bf16.mxu0 0
      %9232 = vmatmul.mubr.bf16.gmra.mxu0 %v9121
      %v9233 = vpop.f32.mrf.mxu0
      %v9234 = vadd.f32 0.0, %v9233
      %v9235 = vpop.f32.mrf.mxu0
      %v9236 = vpop.f32.mrf.mxu0
      %v9237 = vadd.f32 0.0, %v9236
      %v9238 = vpop.f32.mrf.mxu0
      %9239 = vmatprep.mubr.bf16.mxu0 0
      %9240 = vmatmul.mubr.bf16.gmra.mxu0 %v9122
      %v9241 = vpop.f32.mrf.mxu0
      %v9242 = vadd.f32 0.0, %v9241
      %v9243 = vpop.f32.mrf.mxu0
      %v9244 = vpop.f32.mrf.mxu0
      %v9245 = vadd.f32 0.0, %v9244
      %v9246 = vpop.f32.mrf.mxu0
      %9247 = vmatprep.mubr.bf16.mxu0 0
      %9248 = vmatmul.mubr.bf16.gmra.mxu0 %v9123
      %v9249 = vpop.f32.mrf.mxu0
      %v9250 = vadd.f32 0.0, %v9249
      %v9251 = vpop.f32.mrf.mxu0
      %v9252 = vpop.f32.mrf.mxu0
      %v9253 = vadd.f32 0.0, %v9252
      %v9254 = vpop.f32.mrf.mxu0
      %9255 = vmatprep.mubr.bf16.mxu0 0
      %9256 = vmatmul.mubr.bf16.gmra.mxu0 %v9124
      %v9257 = vpop.f32.mrf.mxu0
      %v9258 = vadd.f32 0.0, %v9257
      %v9259 = vpop.f32.mrf.mxu0
      %v9260 = vpop.f32.mrf.mxu0
      %v9261 = vadd.f32 0.0, %v9260
      %v9262 = vpop.f32.mrf.mxu0
      %9263 = vmatprep.mubr.bf16.mxu0 0
      %9264 = vmatmul.mubr.bf16.gmra.mxu0 %v9125
      %v9265 = vpop.f32.mrf.mxu0
      %v9266 = vadd.f32 0.0, %v9265
      %v9267 = vpop.f32.mrf.mxu0
      %v9268 = vpop.f32.mrf.mxu0
      %v9269 = vadd.f32 0.0, %v9268
      %v9270 = vpop.f32.mrf.mxu0
      %9271 = vmatprep.mubr.bf16.mxu0 0
      %9272 = vmatmul.mubr.bf16.gmra.mxu0 %v9126
      %v9273 = vpop.f32.mrf.mxu0
      %v9274 = vadd.f32 0.0, %v9273
      %v9275 = vpop.f32.mrf.mxu0
      %v9276 = vpop.f32.mrf.mxu0
      %v9277 = vadd.f32 0.0, %v9276
      %v9278 = vpop.f32.mrf.mxu0
      %9279 = vdwg.mxu0
      %v9280 = vadd.f32 %v9039, %v9218
      %v9281 = vadd.f32 %v9040, %v9221
      %v9282 = vadd.f32 %v9041, %v9226
      %v9283 = vadd.f32 %v9042, %v9229
      %v9284 = vadd.f32 %v9043, %v9234
      %v9285 = vadd.f32 %v9044, %v9237
      %v9286 = vadd.f32 %v9045, %v9242
      %v9287 = vadd.f32 %v9046, %v9245
      %v9288 = vadd.f32 %v9047, %v9250
      %v9289 = vadd.f32 %v9048, %v9253
      %v9290 = vadd.f32 %v9049, %v9258
      %v9291 = vadd.f32 %v9050, %v9261
      %v9292 = vadd.f32 %v9051, %v9266
      %v9293 = vadd.f32 %v9052, %v9269
      %v9294 = vadd.f32 %v9053, %v9274
      %v9295 = vadd.f32 %v9054, %v9277
      %v9296 = vld [vmem:[%s368 + $0x40] sm:$0xf]
      %v9297 = vld [vmem:[%s368 + $0x44] sm:$0xf]
      %v9298 = vld [vmem:[%s368 + $0x48] sm:$0xf]
      %v9299 = vld [vmem:[%s368 + $0x4c] sm:$0xf]
      %v9300 = vld [vmem:[%s368 + $0x50] sm:$0xf]
      %v9301 = vld [vmem:[%s368 + $0x54] sm:$0xf]
      %v9302 = vld [vmem:[%s368 + $0x58] sm:$0xf]
      %v9303 = vld [vmem:[%s368 + $0x5c] sm:$0xf]
      %v9304 = vld [vmem:[%s368 + $0x60] sm:$0xf]
      %v9305 = vld [vmem:[%s368 + $0x64] sm:$0xf]
      %v9306 = vld [vmem:[%s368 + $0x68] sm:$0xf]
      %v9307 = vld [vmem:[%s368 + $0x6c] sm:$0xf]
      %v9308 = vld [vmem:[%s368 + $0x70] sm:$0xf]
      %v9309 = vld [vmem:[%s368 + $0x74] sm:$0xf]
      %v9310 = vld [vmem:[%s368 + $0x78] sm:$0xf]
      %v9311 = vld [vmem:[%s368 + $0x7c] sm:$0xf]
      %v9312 = vld [vmem:[%s7113] sm:$0xf]
      %v9313 = vld [vmem:[%s7113 + $0x4] sm:$0xf]
      %v9314 = vld [vmem:[%s7113 + $0x8] sm:$0xf]
      %v9315 = vld [vmem:[%s7113 + $0xc] sm:$0xf]
      %v9316 = vld [vmem:[%s7113 + $0x10] sm:$0xf]
      %v9317 = vld [vmem:[%s7113 + $0x14] sm:$0xf]
      %v9318 = vld [vmem:[%s7113 + $0x18] sm:$0xf]
      %v9319 = vld [vmem:[%s7113 + $0x1c] sm:$0xf]
      %v9320 = vld [vmem:[%s7113 + $0x20] sm:$0xf]
      %v9321 = vld [vmem:[%s7113 + $0x24] sm:$0xf]
      %v9322 = vld [vmem:[%s7113 + $0x28] sm:$0xf]
      %v9323 = vld [vmem:[%s7113 + $0x2c] sm:$0xf]
      %v9324 = vld [vmem:[%s7113 + $0x30] sm:$0xf]
      %v9325 = vld [vmem:[%s7113 + $0x34] sm:$0xf]
      %v9326 = vld [vmem:[%s7113 + $0x38] sm:$0xf]
      %v9327 = vld [vmem:[%s7113 + $0x3c] sm:$0xf]
      %v9344 = vunpack.c.l.b16 %v9296
      %v9345 = vunpack.c.l.b16 %v9297
      %v9346 = vunpack.c.l.b16 %v9298
      %v9347 = vunpack.c.l.b16 %v9299
      %v9348 = vunpack.c.l.b16 %v9300
      %v9349 = vunpack.c.l.b16 %v9301
      %v9350 = vunpack.c.l.b16 %v9302
      %v9351 = vunpack.c.l.b16 %v9303
      %v9352 = vunpack.c.l.b16 %v9304
      %v9353 = vunpack.c.l.b16 %v9305
      %v9354 = vunpack.c.l.b16 %v9306
      %v9355 = vunpack.c.l.b16 %v9307
      %v9356 = vunpack.c.l.b16 %v9308
      %v9357 = vunpack.c.l.b16 %v9309
      %v9358 = vunpack.c.l.b16 %v9310
      %v9359 = vunpack.c.l.b16 %v9311
      %v9360 = vpack.c.b16 %v9345, %v9344
      %v9361 = vpack.c.b16 %v9347, %v9346
      %v9362 = vpack.c.b16 %v9349, %v9348
      %v9363 = vpack.c.b16 %v9351, %v9350
      %v9364 = vpack.c.b16 %v9353, %v9352
      %v9365 = vpack.c.b16 %v9355, %v9354
      %v9366 = vpack.c.b16 %v9357, %v9356
      %v9367 = vpack.c.b16 %v9359, %v9358
      %v9392 = vunpack.c.l.b16 %v9312
      %v9393 = vunpack.c.l.b16 %v9313
      %v9394 = vunpack.c.l.b16 %v9314
      %v9395 = vunpack.c.l.b16 %v9315
      %v9396 = vunpack.c.l.b16 %v9316
      %v9397 = vunpack.c.l.b16 %v9317
      %v9398 = vunpack.c.l.b16 %v9318
      %v9399 = vunpack.c.l.b16 %v9319
      %v9400 = vunpack.c.l.b16 %v9320
      %v9401 = vunpack.c.l.b16 %v9321
      %v9402 = vunpack.c.l.b16 %v9322
      %v9403 = vunpack.c.l.b16 %v9323
      %v9404 = vunpack.c.l.b16 %v9324
      %v9405 = vunpack.c.l.b16 %v9325
      %v9406 = vunpack.c.l.b16 %v9326
      %v9407 = vunpack.c.l.b16 %v9327
      %v9408 = vpack.c.b16 %v9393, %v9392
      %v9409 = vpack.c.b16 %v9395, %v9394
      %v9410 = vpack.c.b16 %v9397, %v9396
      %v9411 = vpack.c.b16 %v9399, %v9398
      %v9412 = vpack.c.b16 %v9401, %v9400
      %v9413 = vpack.c.b16 %v9403, %v9402
      %v9414 = vpack.c.b16 %v9405, %v9404
      %v9415 = vpack.c.b16 %v9407, %v9406
      %9424 = vmatprep.subr.bf16.mxu0 0
      %9425 = vmatpush1.bf16.msra.mxu0 %v9415
      %9426 = vmatprep.subr.bf16.mxu0 0
      %9427 = vmatpush1.bf16.msra.mxu0 %v9414
      %9428 = vmatprep.subr.bf16.mxu0 0
      %9429 = vmatpush1.bf16.msra.mxu0 %v9413
      %9430 = vmatprep.subr.bf16.mxu0 0
      %9431 = vmatpush1.bf16.msra.mxu0 %v9412
      %9432 = vmatprep.subr.bf16.mxu0 0
      %9433 = vmatpush1.bf16.msra.mxu0 %v9411
      %9434 = vmatprep.subr.bf16.mxu0 0
      %9435 = vmatpush1.bf16.msra.mxu0 %v9410
      %9436 = vmatprep.subr.bf16.mxu0 0
      %9437 = vmatpush1.bf16.msra.mxu0 %v9409
      %9438 = vmatprep.subr.bf16.mxu0 0
      %9439 = vmatpush1.bf16.msra.mxu0 %v9408
      %9440 = vmatprep.subr.bf16.mxu0 0
      %9441 = vmatpush2.bf16.msra.mxu0 0
      %9442 = vmatprep.subr.bf16.mxu0 0
      %9443 = vmatpush2.bf16.msra.mxu0 0
      %9444 = vmatprep.subr.bf16.mxu0 0
      %9445 = vmatpush2.bf16.msra.mxu0 0
      %9446 = vmatprep.subr.bf16.mxu0 0
      %9447 = vmatpush2.bf16.msra.mxu0 0
      %9448 = vmatprep.subr.bf16.mxu0 0
      %9449 = vmatpush2.bf16.msra.mxu0 0
      %9450 = vmatprep.subr.bf16.mxu0 0
      %9451 = vmatpush2.bf16.msra.mxu0 0
      %9452 = vmatprep.subr.bf16.mxu0 0
      %9453 = vmatpush2.bf16.msra.mxu0 0
      %9454 = vmatprep.subr.bf16.mxu0 0
      %9455 = vmatpush2.bf16.msra.mxu0 0
      %9456 = vmatprep.mubr.bf16.mxu0 0
      %9457 = vmatmul.mubr.bf16.gmra.mxu0 %v9360
      %v9458 = vpop.f32.mrf.mxu0
      %v9459 = vadd.f32 0.0, %v9458
      %v9460 = vpop.f32.mrf.mxu0
      %v9461 = vpop.f32.mrf.mxu0
      %v9462 = vadd.f32 0.0, %v9461
      %v9463 = vpop.f32.mrf.mxu0
      %9464 = vmatprep.mubr.bf16.mxu0 0
      %9465 = vmatmul.mubr.bf16.gmra.mxu0 %v9361
      %v9466 = vpop.f32.mrf.mxu0
      %v9467 = vadd.f32 0.0, %v9466
      %v9468 = vpop.f32.mrf.mxu0
      %v9469 = vpop.f32.mrf.mxu0
      %v9470 = vadd.f32 0.0, %v9469
      %v9471 = vpop.f32.mrf.mxu0
      %9472 = vmatprep.mubr.bf16.mxu0 0
      %9473 = vmatmul.mubr.bf16.gmra.mxu0 %v9362
      %v9474 = vpop.f32.mrf.mxu0
      %v9475 = vadd.f32 0.0, %v9474
      %v9476 = vpop.f32.mrf.mxu0
      %v9477 = vpop.f32.mrf.mxu0
      %v9478 = vadd.f32 0.0, %v9477
      %v9479 = vpop.f32.mrf.mxu0
      %9480 = vmatprep.mubr.bf16.mxu0 0
      %9481 = vmatmul.mubr.bf16.gmra.mxu0 %v9363
      %v9482 = vpop.f32.mrf.mxu0
      %v9483 = vadd.f32 0.0, %v9482
      %v9484 = vpop.f32.mrf.mxu0
      %v9485 = vpop.f32.mrf.mxu0
      %v9486 = vadd.f32 0.0, %v9485
      %v9487 = vpop.f32.mrf.mxu0
      %9488 = vmatprep.mubr.bf16.mxu0 0
      %9489 = vmatmul.mubr.bf16.gmra.mxu0 %v9364
      %v9490 = vpop.f32.mrf.mxu0
      %v9491 = vadd.f32 0.0, %v9490
      %v9492 = vpop.f32.mrf.mxu0
      %v9493 = vpop.f32.mrf.mxu0
      %v9494 = vadd.f32 0.0, %v9493
      %v9495 = vpop.f32.mrf.mxu0
      %9496 = vmatprep.mubr.bf16.mxu0 0
      %9497 = vmatmul.mubr.bf16.gmra.mxu0 %v9365
      %v9498 = vpop.f32.mrf.mxu0
      %v9499 = vadd.f32 0.0, %v9498
      %v9500 = vpop.f32.mrf.mxu0
      %v9501 = vpop.f32.mrf.mxu0
      %v9502 = vadd.f32 0.0, %v9501
      %v9503 = vpop.f32.mrf.mxu0
      %9504 = vmatprep.mubr.bf16.mxu0 0
      %9505 = vmatmul.mubr.bf16.gmra.mxu0 %v9366
      %v9506 = vpop.f32.mrf.mxu0
      %v9507 = vadd.f32 0.0, %v9506
      %v9508 = vpop.f32.mrf.mxu0
      %v9509 = vpop.f32.mrf.mxu0
      %v9510 = vadd.f32 0.0, %v9509
      %v9511 = vpop.f32.mrf.mxu0
      %9512 = vmatprep.mubr.bf16.mxu0 0
      %9513 = vmatmul.mubr.bf16.gmra.mxu0 %v9367
      %v9514 = vpop.f32.mrf.mxu0
      %v9515 = vadd.f32 0.0, %v9514
      %v9516 = vpop.f32.mrf.mxu0
      %v9517 = vpop.f32.mrf.mxu0
      %v9518 = vadd.f32 0.0, %v9517
      %v9519 = vpop.f32.mrf.mxu0
      %9520 = vdwg.mxu0
      %v9521 = vadd.f32 %v9280, %v9459
      %v9522 = vadd.f32 %v9281, %v9462
      %v9523 = vadd.f32 %v9282, %v9467
      %v9524 = vadd.f32 %v9283, %v9470
      %v9525 = vadd.f32 %v9284, %v9475
      %v9526 = vadd.f32 %v9285, %v9478
      %v9527 = vadd.f32 %v9286, %v9483
      %v9528 = vadd.f32 %v9287, %v9486
      %v9529 = vadd.f32 %v9288, %v9491
      %v9530 = vadd.f32 %v9289, %v9494
      %v9531 = vadd.f32 %v9290, %v9499
      %v9532 = vadd.f32 %v9291, %v9502
      %v9533 = vadd.f32 %v9292, %v9507
      %v9534 = vadd.f32 %v9293, %v9510
      %v9535 = vadd.f32 %v9294, %v9515
      %v9536 = vadd.f32 %v9295, %v9518
      %v9537 = vld [vmem:[#allocation3 + $0x48] sm:$0xf]
      %v9538 = vld [vmem:[#allocation3 + $0x4c] sm:$0xf]
      %v9539 = vld [vmem:[#allocation3 + $0x50] sm:$0xf]
      %v9540 = vld [vmem:[#allocation3 + $0x54] sm:$0xf]
      %v9541 = vld [vmem:[#allocation3 + $0x58] sm:$0xf]
      %v9542 = vld [vmem:[#allocation3 + $0x5c] sm:$0xf]
      %v9543 = vld [vmem:[#allocation3 + $0x60] sm:$0xf]
      %v9544 = vld [vmem:[#allocation3 + $0x64] sm:$0xf]
      %v9545 = vld [vmem:[#allocation3 + $0x68] sm:$0xf]
      %v9546 = vld [vmem:[#allocation3 + $0x6c] sm:$0xf]
      %v9547 = vld [vmem:[#allocation3 + $0x70] sm:$0xf]
      %v9548 = vld [vmem:[#allocation3 + $0x74] sm:$0xf]
      %v9549 = vld [vmem:[#allocation3 + $0x78] sm:$0xf]
      %v9550 = vld [vmem:[#allocation3 + $0x7c] sm:$0xf]
      %v9551 = vld [vmem:[#allocation3 + $0x80] sm:$0xf]
      %v9552 = vld [vmem:[#allocation3 + $0x84] sm:$0xf]
      %v9553 = vld [vmem:[%s7355] sm:$0xf]
      %v9554 = vld [vmem:[%s7355 + $0x4] sm:$0xf]
      %v9555 = vld [vmem:[%s7355 + $0x8] sm:$0xf]
      %v9556 = vld [vmem:[%s7355 + $0xc] sm:$0xf]
      %v9557 = vld [vmem:[%s7355 + $0x10] sm:$0xf]
      %v9558 = vld [vmem:[%s7355 + $0x14] sm:$0xf]
      %v9559 = vld [vmem:[%s7355 + $0x18] sm:$0xf]
      %v9560 = vld [vmem:[%s7355 + $0x1c] sm:$0xf]
      %v9561 = vld [vmem:[%s7355 + $0x20] sm:$0xf]
      %v9562 = vld [vmem:[%s7355 + $0x24] sm:$0xf]
      %v9563 = vld [vmem:[%s7355 + $0x28] sm:$0xf]
      %v9564 = vld [vmem:[%s7355 + $0x2c] sm:$0xf]
      %v9565 = vld [vmem:[%s7355 + $0x30] sm:$0xf]
      %v9566 = vld [vmem:[%s7355 + $0x34] sm:$0xf]
      %v9567 = vld [vmem:[%s7355 + $0x38] sm:$0xf]
      %v9568 = vld [vmem:[%s7355 + $0x3c] sm:$0xf]
      %v9585 = vunpack.c.l.b16 %v9537
      %v9586 = vunpack.c.l.b16 %v9538
      %v9587 = vunpack.c.l.b16 %v9539
      %v9588 = vunpack.c.l.b16 %v9540
      %v9589 = vunpack.c.l.b16 %v9541
      %v9590 = vunpack.c.l.b16 %v9542
      %v9591 = vunpack.c.l.b16 %v9543
      %v9592 = vunpack.c.l.b16 %v9544
      %v9593 = vunpack.c.l.b16 %v9545
      %v9594 = vunpack.c.l.b16 %v9546
      %v9595 = vunpack.c.l.b16 %v9547
      %v9596 = vunpack.c.l.b16 %v9548
      %v9597 = vunpack.c.l.b16 %v9549
      %v9598 = vunpack.c.l.b16 %v9550
      %v9599 = vunpack.c.l.b16 %v9551
      %v9600 = vunpack.c.l.b16 %v9552
      %v9601 = vpack.c.b16 %v9586, %v9585
      %v9602 = vpack.c.b16 %v9588, %v9587
      %v9603 = vpack.c.b16 %v9590, %v9589
      %v9604 = vpack.c.b16 %v9592, %v9591
      %v9605 = vpack.c.b16 %v9594, %v9593
      %v9606 = vpack.c.b16 %v9596, %v9595
      %v9607 = vpack.c.b16 %v9598, %v9597
      %v9608 = vpack.c.b16 %v9600, %v9599
      %v9633 = vunpack.c.l.b16 %v9553
      %v9634 = vunpack.c.l.b16 %v9554
      %v9635 = vunpack.c.l.b16 %v9555
      %v9636 = vunpack.c.l.b16 %v9556
      %v9637 = vunpack.c.l.b16 %v9557
      %v9638 = vunpack.c.l.b16 %v9558
      %v9639 = vunpack.c.l.b16 %v9559
      %v9640 = vunpack.c.l.b16 %v9560
      %v9641 = vunpack.c.l.b16 %v9561
      %v9642 = vunpack.c.l.b16 %v9562
      %v9643 = vunpack.c.l.b16 %v9563
      %v9644 = vunpack.c.l.b16 %v9564
      %v9645 = vunpack.c.l.b16 %v9565
      %v9646 = vunpack.c.l.b16 %v9566
      %v9647 = vunpack.c.l.b16 %v9567
      %v9648 = vunpack.c.l.b16 %v9568
      %v9649 = vpack.c.b16 %v9634, %v9633
      %v9650 = vpack.c.b16 %v9636, %v9635
      %v9651 = vpack.c.b16 %v9638, %v9637
      %v9652 = vpack.c.b16 %v9640, %v9639
      %v9653 = vpack.c.b16 %v9642, %v9641
      %v9654 = vpack.c.b16 %v9644, %v9643
      %v9655 = vpack.c.b16 %v9646, %v9645
      %v9656 = vpack.c.b16 %v9648, %v9647
      %9665 = vmatprep.subr.bf16.mxu0 0
      %9666 = vmatpush1.bf16.msra.mxu0 %v9656
      %9667 = vmatprep.subr.bf16.mxu0 0
      %9668 = vmatpush1.bf16.msra.mxu0 %v9655
      %9669 = vmatprep.subr.bf16.mxu0 0
      %9670 = vmatpush1.bf16.msra.mxu0 %v9654
      %9671 = vmatprep.subr.bf16.mxu0 0
      %9672 = vmatpush1.bf16.msra.mxu0 %v9653
      %9673 = vmatprep.subr.bf16.mxu0 0
      %9674 = vmatpush1.bf16.msra.mxu0 %v9652
      %9675 = vmatprep.subr.bf16.mxu0 0
      %9676 = vmatpush1.bf16.msra.mxu0 %v9651
      %9677 = vmatprep.subr.bf16.mxu0 0
      %9678 = vmatpush1.bf16.msra.mxu0 %v9650
      %9679 = vmatprep.subr.bf16.mxu0 0
      %9680 = vmatpush1.bf16.msra.mxu0 %v9649
      %9681 = vmatprep.subr.bf16.mxu0 0
      %9682 = vmatpush2.bf16.msra.mxu0 0
      %9683 = vmatprep.subr.bf16.mxu0 0
      %9684 = vmatpush2.bf16.msra.mxu0 0
      %9685 = vmatprep.subr.bf16.mxu0 0
      %9686 = vmatpush2.bf16.msra.mxu0 0
      %9687 = vmatprep.subr.bf16.mxu0 0
      %9688 = vmatpush2.bf16.msra.mxu0 0
      %9689 = vmatprep.subr.bf16.mxu0 0
      %9690 = vmatpush2.bf16.msra.mxu0 0
      %9691 = vmatprep.subr.bf16.mxu0 0
      %9692 = vmatpush2.bf16.msra.mxu0 0
      %9693 = vmatprep.subr.bf16.mxu0 0
      %9694 = vmatpush2.bf16.msra.mxu0 0
      %9695 = vmatprep.subr.bf16.mxu0 0
      %9696 = vmatpush2.bf16.msra.mxu0 0
      %9697 = vmatprep.mubr.bf16.mxu0 0
      %9698 = vmatmul.mubr.bf16.gmra.mxu0 %v9601
      %v9699 = vpop.f32.mrf.mxu0
      %v9700 = vadd.f32 0.0, %v9699
      %v9701 = vpop.f32.mrf.mxu0
      %v9702 = vpop.f32.mrf.mxu0
      %v9703 = vadd.f32 0.0, %v9702
      %v9704 = vpop.f32.mrf.mxu0
      %9705 = vmatprep.mubr.bf16.mxu0 0
      %9706 = vmatmul.mubr.bf16.gmra.mxu0 %v9602
      %v9707 = vpop.f32.mrf.mxu0
      %v9708 = vadd.f32 0.0, %v9707
      %v9709 = vpop.f32.mrf.mxu0
      %v9710 = vpop.f32.mrf.mxu0
      %v9711 = vadd.f32 0.0, %v9710
      %v9712 = vpop.f32.mrf.mxu0
      %9713 = vmatprep.mubr.bf16.mxu0 0
      %9714 = vmatmul.mubr.bf16.gmra.mxu0 %v9603
      %v9715 = vpop.f32.mrf.mxu0
      %v9716 = vadd.f32 0.0, %v9715
      %v9717 = vpop.f32.mrf.mxu0
      %v9718 = vpop.f32.mrf.mxu0
      %v9719 = vadd.f32 0.0, %v9718
      %v9720 = vpop.f32.mrf.mxu0
      %9721 = vmatprep.mubr.bf16.mxu0 0
      %9722 = vmatmul.mubr.bf16.gmra.mxu0 %v9604
      %v9723 = vpop.f32.mrf.mxu0
      %v9724 = vadd.f32 0.0, %v9723
      %v9725 = vpop.f32.mrf.mxu0
      %v9726 = vpop.f32.mrf.mxu0
      %v9727 = vadd.f32 0.0, %v9726
      %v9728 = vpop.f32.mrf.mxu0
      %9729 = vmatprep.mubr.bf16.mxu0 0
      %9730 = vmatmul.mubr.bf16.gmra.mxu0 %v9605
      %v9731 = vpop.f32.mrf.mxu0
      %v9732 = vadd.f32 0.0, %v9731
      %v9733 = vpop.f32.mrf.mxu0
      %v9734 = vpop.f32.mrf.mxu0
      %v9735 = vadd.f32 0.0, %v9734
      %v9736 = vpop.f32.mrf.mxu0
      %9737 = vmatprep.mubr.bf16.mxu0 0
      %9738 = vmatmul.mubr.bf16.gmra.mxu0 %v9606
      %v9739 = vpop.f32.mrf.mxu0
      %v9740 = vadd.f32 0.0, %v9739
      %v9741 = vpop.f32.mrf.mxu0
      %v9742 = vpop.f32.mrf.mxu0
      %v9743 = vadd.f32 0.0, %v9742
      %v9744 = vpop.f32.mrf.mxu0
      %9745 = vmatprep.mubr.bf16.mxu0 0
      %9746 = vmatmul.mubr.bf16.gmra.mxu0 %v9607
      %v9747 = vpop.f32.mrf.mxu0
      %v9748 = vadd.f32 0.0, %v9747
      %v9749 = vpop.f32.mrf.mxu0
      %v9750 = vpop.f32.mrf.mxu0
      %v9751 = vadd.f32 0.0, %v9750
      %v9752 = vpop.f32.mrf.mxu0
      %9753 = vmatprep.mubr.bf16.mxu0 0
      %9754 = vmatmul.mubr.bf16.gmra.mxu0 %v9608
      %v9755 = vpop.f32.mrf.mxu0
      %v9756 = vadd.f32 0.0, %v9755
      %v9757 = vpop.f32.mrf.mxu0
      %v9758 = vpop.f32.mrf.mxu0
      %v9759 = vadd.f32 0.0, %v9758
      %v9760 = vpop.f32.mrf.mxu0
      %9761 = vdwg.mxu0
      %v9762 = vadd.f32 %v9521, %v9700
      %v9763 = vadd.f32 %v9522, %v9703
      %v9764 = vadd.f32 %v9523, %v9708
      %v9765 = vadd.f32 %v9524, %v9711
      %v9766 = vadd.f32 %v9525, %v9716
      %v9767 = vadd.f32 %v9526, %v9719
      %v9768 = vadd.f32 %v9527, %v9724
      %v9769 = vadd.f32 %v9528, %v9727
      %v9770 = vadd.f32 %v9529, %v9732
      %v9771 = vadd.f32 %v9530, %v9735
      %v9772 = vadd.f32 %v9531, %v9740
      %v9773 = vadd.f32 %v9532, %v9743
      %v9774 = vadd.f32 %v9533, %v9748
      %v9775 = vadd.f32 %v9534, %v9751
      %v9776 = vadd.f32 %v9535, %v9756
      %v9777 = vadd.f32 %v9536, %v9759
      %v9778 = vld [vmem:[%s363 + $0x48] sm:$0xf]
      %v9779 = vld [vmem:[%s363 + $0x4c] sm:$0xf]
      %v9780 = vld [vmem:[%s363 + $0x50] sm:$0xf]
      %v9781 = vld [vmem:[%s363 + $0x54] sm:$0xf]
      %v9782 = vld [vmem:[%s363 + $0x58] sm:$0xf]
      %v9783 = vld [vmem:[%s363 + $0x5c] sm:$0xf]
      %v9784 = vld [vmem:[%s363 + $0x60] sm:$0xf]
      %v9785 = vld [vmem:[%s363 + $0x64] sm:$0xf]
      %v9786 = vld [vmem:[%s363 + $0x68] sm:$0xf]
      %v9787 = vld [vmem:[%s363 + $0x6c] sm:$0xf]
      %v9788 = vld [vmem:[%s363 + $0x70] sm:$0xf]
      %v9789 = vld [vmem:[%s363 + $0x74] sm:$0xf]
      %v9790 = vld [vmem:[%s363 + $0x78] sm:$0xf]
      %v9791 = vld [vmem:[%s363 + $0x7c] sm:$0xf]
      %v9792 = vld [vmem:[%s363 + $0x80] sm:$0xf]
      %v9793 = vld [vmem:[%s363 + $0x84] sm:$0xf]
      %v9794 = vld [vmem:[%s7597] sm:$0xf]
      %v9795 = vld [vmem:[%s7597 + $0x4] sm:$0xf]
      %v9796 = vld [vmem:[%s7597 + $0x8] sm:$0xf]
      %v9797 = vld [vmem:[%s7597 + $0xc] sm:$0xf]
      %v9798 = vld [vmem:[%s7597 + $0x10] sm:$0xf]
      %v9799 = vld [vmem:[%s7597 + $0x14] sm:$0xf]
      %v9800 = vld [vmem:[%s7597 + $0x18] sm:$0xf]
      %v9801 = vld [vmem:[%s7597 + $0x1c] sm:$0xf]
      %v9802 = vld [vmem:[%s7597 + $0x20] sm:$0xf]
      %v9803 = vld [vmem:[%s7597 + $0x24] sm:$0xf]
      %v9804 = vld [vmem:[%s7597 + $0x28] sm:$0xf]
      %v9805 = vld [vmem:[%s7597 + $0x2c] sm:$0xf]
      %v9806 = vld [vmem:[%s7597 + $0x30] sm:$0xf]
      %v9807 = vld [vmem:[%s7597 + $0x34] sm:$0xf]
      %v9808 = vld [vmem:[%s7597 + $0x38] sm:$0xf]
      %v9809 = vld [vmem:[%s7597 + $0x3c] sm:$0xf]
      %v9826 = vunpack.c.l.b16 %v9778
      %v9827 = vunpack.c.l.b16 %v9779
      %v9828 = vunpack.c.l.b16 %v9780
      %v9829 = vunpack.c.l.b16 %v9781
      %v9830 = vunpack.c.l.b16 %v9782
      %v9831 = vunpack.c.l.b16 %v9783
      %v9832 = vunpack.c.l.b16 %v9784
      %v9833 = vunpack.c.l.b16 %v9785
      %v9834 = vunpack.c.l.b16 %v9786
      %v9835 = vunpack.c.l.b16 %v9787
      %v9836 = vunpack.c.l.b16 %v9788
      %v9837 = vunpack.c.l.b16 %v9789
      %v9838 = vunpack.c.l.b16 %v9790
      %v9839 = vunpack.c.l.b16 %v9791
      %v9840 = vunpack.c.l.b16 %v9792
      %v9841 = vunpack.c.l.b16 %v9793
      %v9842 = vpack.c.b16 %v9827, %v9826
      %v9843 = vpack.c.b16 %v9829, %v9828
      %v9844 = vpack.c.b16 %v9831, %v9830
      %v9845 = vpack.c.b16 %v9833, %v9832
      %v9846 = vpack.c.b16 %v9835, %v9834
      %v9847 = vpack.c.b16 %v9837, %v9836
      %v9848 = vpack.c.b16 %v9839, %v9838
      %v9849 = vpack.c.b16 %v9841, %v9840
      %v9874 = vunpack.c.l.b16 %v9794
      %v9875 = vunpack.c.l.b16 %v9795
      %v9876 = vunpack.c.l.b16 %v9796
      %v9877 = vunpack.c.l.b16 %v9797
      %v9878 = vunpack.c.l.b16 %v9798
      %v9879 = vunpack.c.l.b16 %v9799
      %v9880 = vunpack.c.l.b16 %v9800
      %v9881 = vunpack.c.l.b16 %v9801
      %v9882 = vunpack.c.l.b16 %v9802
      %v9883 = vunpack.c.l.b16 %v9803
      %v9884 = vunpack.c.l.b16 %v9804
      %v9885 = vunpack.c.l.b16 %v9805
      %v9886 = vunpack.c.l.b16 %v9806
      %v9887 = vunpack.c.l.b16 %v9807
      %v9888 = vunpack.c.l.b16 %v9808
      %v9889 = vunpack.c.l.b16 %v9809
      %v9890 = vpack.c.b16 %v9875, %v9874
      %v9891 = vpack.c.b16 %v9877, %v9876
      %v9892 = vpack.c.b16 %v9879, %v9878
      %v9893 = vpack.c.b16 %v9881, %v9880
      %v9894 = vpack.c.b16 %v9883, %v9882
      %v9895 = vpack.c.b16 %v9885, %v9884
      %v9896 = vpack.c.b16 %v9887, %v9886
      %v9897 = vpack.c.b16 %v9889, %v9888
      %9906 = vmatprep.subr.bf16.mxu0 0
      %9907 = vmatpush1.bf16.msra.mxu0 %v9897
      %9908 = vmatprep.subr.bf16.mxu0 0
      %9909 = vmatpush1.bf16.msra.mxu0 %v9896
      %9910 = vmatprep.subr.bf16.mxu0 0
      %9911 = vmatpush1.bf16.msra.mxu0 %v9895
      %9912 = vmatprep.subr.bf16.mxu0 0
      %9913 = vmatpush1.bf16.msra.mxu0 %v9894
      %9914 = vmatprep.subr.bf16.mxu0 0
      %9915 = vmatpush1.bf16.msra.mxu0 %v9893
      %9916 = vmatprep.subr.bf16.mxu0 0
      %9917 = vmatpush1.bf16.msra.mxu0 %v9892
      %9918 = vmatprep.subr.bf16.mxu0 0
      %9919 = vmatpush1.bf16.msra.mxu0 %v9891
      %9920 = vmatprep.subr.bf16.mxu0 0
      %9921 = vmatpush1.bf16.msra.mxu0 %v9890
      %9922 = vmatprep.subr.bf16.mxu0 0
      %9923 = vmatpush2.bf16.msra.mxu0 0
      %9924 = vmatprep.subr.bf16.mxu0 0
      %9925 = vmatpush2.bf16.msra.mxu0 0
      %9926 = vmatprep.subr.bf16.mxu0 0
      %9927 = vmatpush2.bf16.msra.mxu0 0
      %9928 = vmatprep.subr.bf16.mxu0 0
      %9929 = vmatpush2.bf16.msra.mxu0 0
      %9930 = vmatprep.subr.bf16.mxu0 0
      %9931 = vmatpush2.bf16.msra.mxu0 0
      %9932 = vmatprep.subr.bf16.mxu0 0
      %9933 = vmatpush2.bf16.msra.mxu0 0
      %9934 = vmatprep.subr.bf16.mxu0 0
      %9935 = vmatpush2.bf16.msra.mxu0 0
      %9936 = vmatprep.subr.bf16.mxu0 0
      %9937 = vmatpush2.bf16.msra.mxu0 0
      %9938 = vmatprep.mubr.bf16.mxu0 0
      %9939 = vmatmul.mubr.bf16.gmra.mxu0 %v9842
      %v9940 = vpop.f32.mrf.mxu0
      %v9941 = vadd.f32 0.0, %v9940
      %v9942 = vpop.f32.mrf.mxu0
      %v9943 = vpop.f32.mrf.mxu0
      %v9944 = vadd.f32 0.0, %v9943
      %v9945 = vpop.f32.mrf.mxu0
      %9946 = vmatprep.mubr.bf16.mxu0 0
      %9947 = vmatmul.mubr.bf16.gmra.mxu0 %v9843
      %v9948 = vpop.f32.mrf.mxu0
      %v9949 = vadd.f32 0.0, %v9948
      %v9950 = vpop.f32.mrf.mxu0
      %v9951 = vpop.f32.mrf.mxu0
      %v9952 = vadd.f32 0.0, %v9951
      %v9953 = vpop.f32.mrf.mxu0
      %9954 = vmatprep.mubr.bf16.mxu0 0
      %9955 = vmatmul.mubr.bf16.gmra.mxu0 %v9844
      %v9956 = vpop.f32.mrf.mxu0
      %v9957 = vadd.f32 0.0, %v9956
      %v9958 = vpop.f32.mrf.mxu0
      %v9959 = vpop.f32.mrf.mxu0
      %v9960 = vadd.f32 0.0, %v9959
      %v9961 = vpop.f32.mrf.mxu0
      %9962 = vmatprep.mubr.bf16.mxu0 0
      %9963 = vmatmul.mubr.bf16.gmra.mxu0 %v9845
      %v9964 = vpop.f32.mrf.mxu0
      %v9965 = vadd.f32 0.0, %v9964
      %v9966 = vpop.f32.mrf.mxu0
      %v9967 = vpop.f32.mrf.mxu0
      %v9968 = vadd.f32 0.0, %v9967
      %v9969 = vpop.f32.mrf.mxu0
      %9970 = vmatprep.mubr.bf16.mxu0 0
      %9971 = vmatmul.mubr.bf16.gmra.mxu0 %v9846
      %v9972 = vpop.f32.mrf.mxu0
      %v9973 = vadd.f32 0.0, %v9972
      %v9974 = vpop.f32.mrf.mxu0
      %v9975 = vpop.f32.mrf.mxu0
      %v9976 = vadd.f32 0.0, %v9975
      %v9977 = vpop.f32.mrf.mxu0
      %9978 = vmatprep.mubr.bf16.mxu0 0
      %9979 = vmatmul.mubr.bf16.gmra.mxu0 %v9847
      %v9980 = vpop.f32.mrf.mxu0
      %v9981 = vadd.f32 0.0, %v9980
      %v9982 = vpop.f32.mrf.mxu0
      %v9983 = vpop.f32.mrf.mxu0
      %v9984 = vadd.f32 0.0, %v9983
      %v9985 = vpop.f32.mrf.mxu0
      %9986 = vmatprep.mubr.bf16.mxu0 0
      %9987 = vmatmul.mubr.bf16.gmra.mxu0 %v9848
      %v9988 = vpop.f32.mrf.mxu0
      %v9989 = vadd.f32 0.0, %v9988
      %v9990 = vpop.f32.mrf.mxu0
      %v9991 = vpop.f32.mrf.mxu0
      %v9992 = vadd.f32 0.0, %v9991
      %v9993 = vpop.f32.mrf.mxu0
      %9994 = vmatprep.mubr.bf16.mxu0 0
      %9995 = vmatmul.mubr.bf16.gmra.mxu0 %v9849
      %v9996 = vpop.f32.mrf.mxu0
      %v9997 = vadd.f32 0.0, %v9996
      %v9998 = vpop.f32.mrf.mxu0
      %v9999 = vpop.f32.mrf.mxu0
      %v10000 = vadd.f32 0.0, %v9999
      %v10001 = vpop.f32.mrf.mxu0
      %10002 = vdwg.mxu0
      %v10003 = vadd.f32 %v9762, %v9941
      %v10004 = vadd.f32 %v9763, %v9944
      %v10005 = vadd.f32 %v9764, %v9949
      %v10006 = vadd.f32 %v9765, %v9952
      %v10007 = vadd.f32 %v9766, %v9957
      %v10008 = vadd.f32 %v9767, %v9960
      %v10009 = vadd.f32 %v9768, %v9965
      %v10010 = vadd.f32 %v9769, %v9968
      %v10011 = vadd.f32 %v9770, %v9973
      %v10012 = vadd.f32 %v9771, %v9976
      %v10013 = vadd.f32 %v9772, %v9981
      %v10014 = vadd.f32 %v9773, %v9984
      %v10015 = vadd.f32 %v9774, %v9989
      %v10016 = vadd.f32 %v9775, %v9992
      %v10017 = vadd.f32 %v9776, %v9997
      %v10018 = vadd.f32 %v9777, %v10000
      %v10019 = vld [vmem:[%s368 + $0x48] sm:$0xf]
      %v10020 = vld [vmem:[%s368 + $0x4c] sm:$0xf]
      %v10021 = vld [vmem:[%s368 + $0x50] sm:$0xf]
      %v10022 = vld [vmem:[%s368 + $0x54] sm:$0xf]
      %v10023 = vld [vmem:[%s368 + $0x58] sm:$0xf]
      %v10024 = vld [vmem:[%s368 + $0x5c] sm:$0xf]
      %v10025 = vld [vmem:[%s368 + $0x60] sm:$0xf]
      %v10026 = vld [vmem:[%s368 + $0x64] sm:$0xf]
      %v10027 = vld [vmem:[%s368 + $0x68] sm:$0xf]
      %v10028 = vld [vmem:[%s368 + $0x6c] sm:$0xf]
      %v10029 = vld [vmem:[%s368 + $0x70] sm:$0xf]
      %v10030 = vld [vmem:[%s368 + $0x74] sm:$0xf]
      %v10031 = vld [vmem:[%s368 + $0x78] sm:$0xf]
      %v10032 = vld [vmem:[%s368 + $0x7c] sm:$0xf]
      %v10033 = vld [vmem:[%s368 + $0x80] sm:$0xf]
      %v10034 = vld [vmem:[%s368 + $0x84] sm:$0xf]
      %v10035 = vld [vmem:[%s7839] sm:$0xf]
      %v10036 = vld [vmem:[%s7839 + $0x4] sm:$0xf]
      %v10037 = vld [vmem:[%s7839 + $0x8] sm:$0xf]
      %v10038 = vld [vmem:[%s7839 + $0xc] sm:$0xf]
      %v10039 = vld [vmem:[%s7839 + $0x10] sm:$0xf]
      %v10040 = vld [vmem:[%s7839 + $0x14] sm:$0xf]
      %v10041 = vld [vmem:[%s7839 + $0x18] sm:$0xf]
      %v10042 = vld [vmem:[%s7839 + $0x1c] sm:$0xf]
      %v10043 = vld [vmem:[%s7839 + $0x20] sm:$0xf]
      %v10044 = vld [vmem:[%s7839 + $0x24] sm:$0xf]
      %v10045 = vld [vmem:[%s7839 + $0x28] sm:$0xf]
      %v10046 = vld [vmem:[%s7839 + $0x2c] sm:$0xf]
      %v10047 = vld [vmem:[%s7839 + $0x30] sm:$0xf]
      %v10048 = vld [vmem:[%s7839 + $0x34] sm:$0xf]
      %v10049 = vld [vmem:[%s7839 + $0x38] sm:$0xf]
      %v10050 = vld [vmem:[%s7839 + $0x3c] sm:$0xf]
      %v10067 = vunpack.c.l.b16 %v10019
      %v10068 = vunpack.c.l.b16 %v10020
      %v10069 = vunpack.c.l.b16 %v10021
      %v10070 = vunpack.c.l.b16 %v10022
      %v10071 = vunpack.c.l.b16 %v10023
      %v10072 = vunpack.c.l.b16 %v10024
      %v10073 = vunpack.c.l.b16 %v10025
      %v10074 = vunpack.c.l.b16 %v10026
      %v10075 = vunpack.c.l.b16 %v10027
      %v10076 = vunpack.c.l.b16 %v10028
      %v10077 = vunpack.c.l.b16 %v10029
      %v10078 = vunpack.c.l.b16 %v10030
      %v10079 = vunpack.c.l.b16 %v10031
      %v10080 = vunpack.c.l.b16 %v10032
      %v10081 = vunpack.c.l.b16 %v10033
      %v10082 = vunpack.c.l.b16 %v10034
      %v10083 = vpack.c.b16 %v10068, %v10067
      %v10084 = vpack.c.b16 %v10070, %v10069
      %v10085 = vpack.c.b16 %v10072, %v10071
      %v10086 = vpack.c.b16 %v10074, %v10073
      %v10087 = vpack.c.b16 %v10076, %v10075
      %v10088 = vpack.c.b16 %v10078, %v10077
      %v10089 = vpack.c.b16 %v10080, %v10079
      %v10090 = vpack.c.b16 %v10082, %v10081
      %v10115 = vunpack.c.l.b16 %v10035
      %v10116 = vunpack.c.l.b16 %v10036
      %v10117 = vunpack.c.l.b16 %v10037
      %v10118 = vunpack.c.l.b16 %v10038
      %v10119 = vunpack.c.l.b16 %v10039
      %v10120 = vunpack.c.l.b16 %v10040
      %v10121 = vunpack.c.l.b16 %v10041
      %v10122 = vunpack.c.l.b16 %v10042
      %v10123 = vunpack.c.l.b16 %v10043
      %v10124 = vunpack.c.l.b16 %v10044
      %v10125 = vunpack.c.l.b16 %v10045
      %v10126 = vunpack.c.l.b16 %v10046
      %v10127 = vunpack.c.l.b16 %v10047
      %v10128 = vunpack.c.l.b16 %v10048
      %v10129 = vunpack.c.l.b16 %v10049
      %v10130 = vunpack.c.l.b16 %v10050
      %v10131 = vpack.c.b16 %v10116, %v10115
      %v10132 = vpack.c.b16 %v10118, %v10117
      %v10133 = vpack.c.b16 %v10120, %v10119
      %v10134 = vpack.c.b16 %v10122, %v10121
      %v10135 = vpack.c.b16 %v10124, %v10123
      %v10136 = vpack.c.b16 %v10126, %v10125
      %v10137 = vpack.c.b16 %v10128, %v10127
      %v10138 = vpack.c.b16 %v10130, %v10129
      %10147 = vmatprep.subr.bf16.mxu0 0
      %10148 = vmatpush1.bf16.msra.mxu0 %v10138
      %10149 = vmatprep.subr.bf16.mxu0 0
      %10150 = vmatpush1.bf16.msra.mxu0 %v10137
      %10151 = vmatprep.subr.bf16.mxu0 0
      %10152 = vmatpush1.bf16.msra.mxu0 %v10136
      %10153 = vmatprep.subr.bf16.mxu0 0
      %10154 = vmatpush1.bf16.msra.mxu0 %v10135
      %10155 = vmatprep.subr.bf16.mxu0 0
      %10156 = vmatpush1.bf16.msra.mxu0 %v10134
      %10157 = vmatprep.subr.bf16.mxu0 0
      %10158 = vmatpush1.bf16.msra.mxu0 %v10133
      %10159 = vmatprep.subr.bf16.mxu0 0
      %10160 = vmatpush1.bf16.msra.mxu0 %v10132
      %10161 = vmatprep.subr.bf16.mxu0 0
      %10162 = vmatpush1.bf16.msra.mxu0 %v10131
      %10163 = vmatprep.subr.bf16.mxu0 0
      %10164 = vmatpush2.bf16.msra.mxu0 0
      %10165 = vmatprep.subr.bf16.mxu0 0
      %10166 = vmatpush2.bf16.msra.mxu0 0
      %10167 = vmatprep.subr.bf16.mxu0 0
      %10168 = vmatpush2.bf16.msra.mxu0 0
      %10169 = vmatprep.subr.bf16.mxu0 0
      %10170 = vmatpush2.bf16.msra.mxu0 0
      %10171 = vmatprep.subr.bf16.mxu0 0
      %10172 = vmatpush2.bf16.msra.mxu0 0
      %10173 = vmatprep.subr.bf16.mxu0 0
      %10174 = vmatpush2.bf16.msra.mxu0 0
      %10175 = vmatprep.subr.bf16.mxu0 0
      %10176 = vmatpush2.bf16.msra.mxu0 0
      %10177 = vmatprep.subr.bf16.mxu0 0
      %10178 = vmatpush2.bf16.msra.mxu0 0
      %10179 = vmatprep.mubr.bf16.mxu0 0
      %10180 = vmatmul.mubr.bf16.gmra.mxu0 %v10083
      %v10181 = vpop.f32.mrf.mxu0
      %v10182 = vadd.f32 0.0, %v10181
      %v10183 = vpop.f32.mrf.mxu0
      %v10184 = vpop.f32.mrf.mxu0
      %v10185 = vadd.f32 0.0, %v10184
      %v10186 = vpop.f32.mrf.mxu0
      %10187 = vmatprep.mubr.bf16.mxu0 0
      %10188 = vmatmul.mubr.bf16.gmra.mxu0 %v10084
      %v10189 = vpop.f32.mrf.mxu0
      %v10190 = vadd.f32 0.0, %v10189
      %v10191 = vpop.f32.mrf.mxu0
      %v10192 = vpop.f32.mrf.mxu0
      %v10193 = vadd.f32 0.0, %v10192
      %v10194 = vpop.f32.mrf.mxu0
      %10195 = vmatprep.mubr.bf16.mxu0 0
      %10196 = vmatmul.mubr.bf16.gmra.mxu0 %v10085
      %v10197 = vpop.f32.mrf.mxu0
      %v10198 = vadd.f32 0.0, %v10197
      %v10199 = vpop.f32.mrf.mxu0
      %v10200 = vpop.f32.mrf.mxu0
      %v10201 = vadd.f32 0.0, %v10200
      %v10202 = vpop.f32.mrf.mxu0
      %10203 = vmatprep.mubr.bf16.mxu0 0
      %10204 = vmatmul.mubr.bf16.gmra.mxu0 %v10086
      %v10205 = vpop.f32.mrf.mxu0
      %v10206 = vadd.f32 0.0, %v10205
      %v10207 = vpop.f32.mrf.mxu0
      %v10208 = vpop.f32.mrf.mxu0
      %v10209 = vadd.f32 0.0, %v10208
      %v10210 = vpop.f32.mrf.mxu0
      %10211 = vmatprep.mubr.bf16.mxu0 0
      %10212 = vmatmul.mubr.bf16.gmra.mxu0 %v10087
      %v10213 = vpop.f32.mrf.mxu0
      %v10214 = vadd.f32 0.0, %v10213
      %v10215 = vpop.f32.mrf.mxu0
      %v10216 = vpop.f32.mrf.mxu0
      %v10217 = vadd.f32 0.0, %v10216
      %v10218 = vpop.f32.mrf.mxu0
      %10219 = vmatprep.mubr.bf16.mxu0 0
      %10220 = vmatmul.mubr.bf16.gmra.mxu0 %v10088
      %v10221 = vpop.f32.mrf.mxu0
      %v10222 = vadd.f32 0.0, %v10221
      %v10223 = vpop.f32.mrf.mxu0
      %v10224 = vpop.f32.mrf.mxu0
      %v10225 = vadd.f32 0.0, %v10224
      %v10226 = vpop.f32.mrf.mxu0
      %10227 = vmatprep.mubr.bf16.mxu0 0
      %10228 = vmatmul.mubr.bf16.gmra.mxu0 %v10089
      %v10229 = vpop.f32.mrf.mxu0
      %v10230 = vadd.f32 0.0, %v10229
      %v10231 = vpop.f32.mrf.mxu0
      %v10232 = vpop.f32.mrf.mxu0
      %v10233 = vadd.f32 0.0, %v10232
      %v10234 = vpop.f32.mrf.mxu0
      %10235 = vmatprep.mubr.bf16.mxu0 0
      %10236 = vmatmul.mubr.bf16.gmra.mxu0 %v10090
      %v10237 = vpop.f32.mrf.mxu0
      %v10238 = vadd.f32 0.0, %v10237
      %v10239 = vpop.f32.mrf.mxu0
      %v10240 = vpop.f32.mrf.mxu0
      %v10241 = vadd.f32 0.0, %v10240
      %v10242 = vpop.f32.mrf.mxu0
      %10243 = vdwg.mxu0
      %v10244 = vadd.f32 %v10003, %v10182
      %v10245 = vadd.f32 %v10004, %v10185
      %v10246 = vadd.f32 %v10005, %v10190
      %v10247 = vadd.f32 %v10006, %v10193
      %v10248 = vadd.f32 %v10007, %v10198
      %v10249 = vadd.f32 %v10008, %v10201
      %v10250 = vadd.f32 %v10009, %v10206
      %v10251 = vadd.f32 %v10010, %v10209
      %v10252 = vadd.f32 %v10011, %v10214
      %v10253 = vadd.f32 %v10012, %v10217
      %v10254 = vadd.f32 %v10013, %v10222
      %v10255 = vadd.f32 %v10014, %v10225
      %v10256 = vadd.f32 %v10015, %v10230
      %v10257 = vadd.f32 %v10016, %v10233
      %v10258 = vadd.f32 %v10017, %v10238
      %v10259 = vadd.f32 %v10018, %v10241
      %v10260 = vld [vmem:[#allocation3 + $0x50] sm:$0xf]
      %v10261 = vld [vmem:[#allocation3 + $0x54] sm:$0xf]
      %v10262 = vld [vmem:[#allocation3 + $0x58] sm:$0xf]
      %v10263 = vld [vmem:[#allocation3 + $0x5c] sm:$0xf]
      %v10264 = vld [vmem:[#allocation3 + $0x60] sm:$0xf]
      %v10265 = vld [vmem:[#allocation3 + $0x64] sm:$0xf]
      %v10266 = vld [vmem:[#allocation3 + $0x68] sm:$0xf]
      %v10267 = vld [vmem:[#allocation3 + $0x6c] sm:$0xf]
      %v10268 = vld [vmem:[#allocation3 + $0x70] sm:$0xf]
      %v10269 = vld [vmem:[#allocation3 + $0x74] sm:$0xf]
      %v10270 = vld [vmem:[#allocation3 + $0x78] sm:$0xf]
      %v10271 = vld [vmem:[#allocation3 + $0x7c] sm:$0xf]
      %v10272 = vld [vmem:[#allocation3 + $0x80] sm:$0xf]
      %v10273 = vld [vmem:[#allocation3 + $0x84] sm:$0xf]
      %v10274 = vld [vmem:[#allocation3 + $0x88] sm:$0xf]
      %v10275 = vld [vmem:[#allocation3 + $0x8c] sm:$0xf]
      %v10276 = vld [vmem:[%s8081] sm:$0xf]
      %v10277 = vld [vmem:[%s8081 + $0x4] sm:$0xf]
      %v10278 = vld [vmem:[%s8081 + $0x8] sm:$0xf]
      %v10279 = vld [vmem:[%s8081 + $0xc] sm:$0xf]
      %v10280 = vld [vmem:[%s8081 + $0x10] sm:$0xf]
      %v10281 = vld [vmem:[%s8081 + $0x14] sm:$0xf]
      %v10282 = vld [vmem:[%s8081 + $0x18] sm:$0xf]
      %v10283 = vld [vmem:[%s8081 + $0x1c] sm:$0xf]
      %v10284 = vld [vmem:[%s8081 + $0x20] sm:$0xf]
      %v10285 = vld [vmem:[%s8081 + $0x24] sm:$0xf]
      %v10286 = vld [vmem:[%s8081 + $0x28] sm:$0xf]
      %v10287 = vld [vmem:[%s8081 + $0x2c] sm:$0xf]
      %v10288 = vld [vmem:[%s8081 + $0x30] sm:$0xf]
      %v10289 = vld [vmem:[%s8081 + $0x34] sm:$0xf]
      %v10290 = vld [vmem:[%s8081 + $0x38] sm:$0xf]
      %v10291 = vld [vmem:[%s8081 + $0x3c] sm:$0xf]
      %v10308 = vunpack.c.l.b16 %v10260
      %v10309 = vunpack.c.l.b16 %v10261
      %v10310 = vunpack.c.l.b16 %v10262
      %v10311 = vunpack.c.l.b16 %v10263
      %v10312 = vunpack.c.l.b16 %v10264
      %v10313 = vunpack.c.l.b16 %v10265
      %v10314 = vunpack.c.l.b16 %v10266
      %v10315 = vunpack.c.l.b16 %v10267
      %v10316 = vunpack.c.l.b16 %v10268
      %v10317 = vunpack.c.l.b16 %v10269
      %v10318 = vunpack.c.l.b16 %v10270
      %v10319 = vunpack.c.l.b16 %v10271
      %v10320 = vunpack.c.l.b16 %v10272
      %v10321 = vunpack.c.l.b16 %v10273
      %v10322 = vunpack.c.l.b16 %v10274
      %v10323 = vunpack.c.l.b16 %v10275
      %v10324 = vpack.c.b16 %v10309, %v10308
      %v10325 = vpack.c.b16 %v10311, %v10310
      %v10326 = vpack.c.b16 %v10313, %v10312
      %v10327 = vpack.c.b16 %v10315, %v10314
      %v10328 = vpack.c.b16 %v10317, %v10316
      %v10329 = vpack.c.b16 %v10319, %v10318
      %v10330 = vpack.c.b16 %v10321, %v10320
      %v10331 = vpack.c.b16 %v10323, %v10322
      %v10356 = vunpack.c.l.b16 %v10276
      %v10357 = vunpack.c.l.b16 %v10277
      %v10358 = vunpack.c.l.b16 %v10278
      %v10359 = vunpack.c.l.b16 %v10279
      %v10360 = vunpack.c.l.b16 %v10280
      %v10361 = vunpack.c.l.b16 %v10281
      %v10362 = vunpack.c.l.b16 %v10282
      %v10363 = vunpack.c.l.b16 %v10283
      %v10364 = vunpack.c.l.b16 %v10284
      %v10365 = vunpack.c.l.b16 %v10285
      %v10366 = vunpack.c.l.b16 %v10286
      %v10367 = vunpack.c.l.b16 %v10287
      %v10368 = vunpack.c.l.b16 %v10288
      %v10369 = vunpack.c.l.b16 %v10289
      %v10370 = vunpack.c.l.b16 %v10290
      %v10371 = vunpack.c.l.b16 %v10291
      %v10372 = vpack.c.b16 %v10357, %v10356
      %v10373 = vpack.c.b16 %v10359, %v10358
      %v10374 = vpack.c.b16 %v10361, %v10360
      %v10375 = vpack.c.b16 %v10363, %v10362
      %v10376 = vpack.c.b16 %v10365, %v10364
      %v10377 = vpack.c.b16 %v10367, %v10366
      %v10378 = vpack.c.b16 %v10369, %v10368
      %v10379 = vpack.c.b16 %v10371, %v10370
      %10388 = vmatprep.subr.bf16.mxu0 0
      %10389 = vmatpush1.bf16.msra.mxu0 %v10379
      %10390 = vmatprep.subr.bf16.mxu0 0
      %10391 = vmatpush1.bf16.msra.mxu0 %v10378
      %10392 = vmatprep.subr.bf16.mxu0 0
      %10393 = vmatpush1.bf16.msra.mxu0 %v10377
      %10394 = vmatprep.subr.bf16.mxu0 0
      %10395 = vmatpush1.bf16.msra.mxu0 %v10376
      %10396 = vmatprep.subr.bf16.mxu0 0
      %10397 = vmatpush1.bf16.msra.mxu0 %v10375
      %10398 = vmatprep.subr.bf16.mxu0 0
      %10399 = vmatpush1.bf16.msra.mxu0 %v10374
      %10400 = vmatprep.subr.bf16.mxu0 0
      %10401 = vmatpush1.bf16.msra.mxu0 %v10373
      %10402 = vmatprep.subr.bf16.mxu0 0
      %10403 = vmatpush1.bf16.msra.mxu0 %v10372
      %10404 = vmatprep.subr.bf16.mxu0 0
      %10405 = vmatpush2.bf16.msra.mxu0 0
      %10406 = vmatprep.subr.bf16.mxu0 0
      %10407 = vmatpush2.bf16.msra.mxu0 0
      %10408 = vmatprep.subr.bf16.mxu0 0
      %10409 = vmatpush2.bf16.msra.mxu0 0
      %10410 = vmatprep.subr.bf16.mxu0 0
      %10411 = vmatpush2.bf16.msra.mxu0 0
      %10412 = vmatprep.subr.bf16.mxu0 0
      %10413 = vmatpush2.bf16.msra.mxu0 0
      %10414 = vmatprep.subr.bf16.mxu0 0
      %10415 = vmatpush2.bf16.msra.mxu0 0
      %10416 = vmatprep.subr.bf16.mxu0 0
      %10417 = vmatpush2.bf16.msra.mxu0 0
      %10418 = vmatprep.subr.bf16.mxu0 0
      %10419 = vmatpush2.bf16.msra.mxu0 0
      %10420 = vmatprep.mubr.bf16.mxu0 0
      %10421 = vmatmul.mubr.bf16.gmra.mxu0 %v10324
      %v10422 = vpop.f32.mrf.mxu0
      %v10423 = vadd.f32 0.0, %v10422
      %v10424 = vpop.f32.mrf.mxu0
      %v10425 = vpop.f32.mrf.mxu0
      %v10426 = vadd.f32 0.0, %v10425
      %v10427 = vpop.f32.mrf.mxu0
      %10428 = vmatprep.mubr.bf16.mxu0 0
      %10429 = vmatmul.mubr.bf16.gmra.mxu0 %v10325
      %v10430 = vpop.f32.mrf.mxu0
      %v10431 = vadd.f32 0.0, %v10430
      %v10432 = vpop.f32.mrf.mxu0
      %v10433 = vpop.f32.mrf.mxu0
      %v10434 = vadd.f32 0.0, %v10433
      %v10435 = vpop.f32.mrf.mxu0
      %10436 = vmatprep.mubr.bf16.mxu0 0
      %10437 = vmatmul.mubr.bf16.gmra.mxu0 %v10326
      %v10438 = vpop.f32.mrf.mxu0
      %v10439 = vadd.f32 0.0, %v10438
      %v10440 = vpop.f32.mrf.mxu0
      %v10441 = vpop.f32.mrf.mxu0
      %v10442 = vadd.f32 0.0, %v10441
      %v10443 = vpop.f32.mrf.mxu0
      %10444 = vmatprep.mubr.bf16.mxu0 0
      %10445 = vmatmul.mubr.bf16.gmra.mxu0 %v10327
      %v10446 = vpop.f32.mrf.mxu0
      %v10447 = vadd.f32 0.0, %v10446
      %v10448 = vpop.f32.mrf.mxu0
      %v10449 = vpop.f32.mrf.mxu0
      %v10450 = vadd.f32 0.0, %v10449
      %v10451 = vpop.f32.mrf.mxu0
      %10452 = vmatprep.mubr.bf16.mxu0 0
      %10453 = vmatmul.mubr.bf16.gmra.mxu0 %v10328
      %v10454 = vpop.f32.mrf.mxu0
      %v10455 = vadd.f32 0.0, %v10454
      %v10456 = vpop.f32.mrf.mxu0
      %v10457 = vpop.f32.mrf.mxu0
      %v10458 = vadd.f32 0.0, %v10457
      %v10459 = vpop.f32.mrf.mxu0
      %10460 = vmatprep.mubr.bf16.mxu0 0
      %10461 = vmatmul.mubr.bf16.gmra.mxu0 %v10329
      %v10462 = vpop.f32.mrf.mxu0
      %v10463 = vadd.f32 0.0, %v10462
      %v10464 = vpop.f32.mrf.mxu0
      %v10465 = vpop.f32.mrf.mxu0
      %v10466 = vadd.f32 0.0, %v10465
      %v10467 = vpop.f32.mrf.mxu0
      %10468 = vmatprep.mubr.bf16.mxu0 0
      %10469 = vmatmul.mubr.bf16.gmra.mxu0 %v10330
      %v10470 = vpop.f32.mrf.mxu0
      %v10471 = vadd.f32 0.0, %v10470
      %v10472 = vpop.f32.mrf.mxu0
      %v10473 = vpop.f32.mrf.mxu0
      %v10474 = vadd.f32 0.0, %v10473
      %v10475 = vpop.f32.mrf.mxu0
      %10476 = vmatprep.mubr.bf16.mxu0 0
      %10477 = vmatmul.mubr.bf16.gmra.mxu0 %v10331
      %v10478 = vpop.f32.mrf.mxu0
      %v10479 = vadd.f32 0.0, %v10478
      %v10480 = vpop.f32.mrf.mxu0
      %v10481 = vpop.f32.mrf.mxu0
      %v10482 = vadd.f32 0.0, %v10481
      %v10483 = vpop.f32.mrf.mxu0
      %10484 = vdwg.mxu0
      %v10485 = vadd.f32 %v10244, %v10423
      %v10486 = vadd.f32 %v10245, %v10426
      %v10487 = vadd.f32 %v10246, %v10431
      %v10488 = vadd.f32 %v10247, %v10434
      %v10489 = vadd.f32 %v10248, %v10439
      %v10490 = vadd.f32 %v10249, %v10442
      %v10491 = vadd.f32 %v10250, %v10447
      %v10492 = vadd.f32 %v10251, %v10450
      %v10493 = vadd.f32 %v10252, %v10455
      %v10494 = vadd.f32 %v10253, %v10458
      %v10495 = vadd.f32 %v10254, %v10463
      %v10496 = vadd.f32 %v10255, %v10466
      %v10497 = vadd.f32 %v10256, %v10471
      %v10498 = vadd.f32 %v10257, %v10474
      %v10499 = vadd.f32 %v10258, %v10479
      %v10500 = vadd.f32 %v10259, %v10482
      %v10501 = vld [vmem:[%s363 + $0x50] sm:$0xf]
      %v10502 = vld [vmem:[%s363 + $0x54] sm:$0xf]
      %v10503 = vld [vmem:[%s363 + $0x58] sm:$0xf]
      %v10504 = vld [vmem:[%s363 + $0x5c] sm:$0xf]
      %v10505 = vld [vmem:[%s363 + $0x60] sm:$0xf]
      %v10506 = vld [vmem:[%s363 + $0x64] sm:$0xf]
      %v10507 = vld [vmem:[%s363 + $0x68] sm:$0xf]
      %v10508 = vld [vmem:[%s363 + $0x6c] sm:$0xf]
      %v10509 = vld [vmem:[%s363 + $0x70] sm:$0xf]
      %v10510 = vld [vmem:[%s363 + $0x74] sm:$0xf]
      %v10511 = vld [vmem:[%s363 + $0x78] sm:$0xf]
      %v10512 = vld [vmem:[%s363 + $0x7c] sm:$0xf]
      %v10513 = vld [vmem:[%s363 + $0x80] sm:$0xf]
      %v10514 = vld [vmem:[%s363 + $0x84] sm:$0xf]
      %v10515 = vld [vmem:[%s363 + $0x88] sm:$0xf]
      %v10516 = vld [vmem:[%s363 + $0x8c] sm:$0xf]
      %v10517 = vld [vmem:[%s8323] sm:$0xf]
      %v10518 = vld [vmem:[%s8323 + $0x4] sm:$0xf]
      %v10519 = vld [vmem:[%s8323 + $0x8] sm:$0xf]
      %v10520 = vld [vmem:[%s8323 + $0xc] sm:$0xf]
      %v10521 = vld [vmem:[%s8323 + $0x10] sm:$0xf]
      %v10522 = vld [vmem:[%s8323 + $0x14] sm:$0xf]
      %v10523 = vld [vmem:[%s8323 + $0x18] sm:$0xf]
      %v10524 = vld [vmem:[%s8323 + $0x1c] sm:$0xf]
      %v10525 = vld [vmem:[%s8323 + $0x20] sm:$0xf]
      %v10526 = vld [vmem:[%s8323 + $0x24] sm:$0xf]
      %v10527 = vld [vmem:[%s8323 + $0x28] sm:$0xf]
      %v10528 = vld [vmem:[%s8323 + $0x2c] sm:$0xf]
      %v10529 = vld [vmem:[%s8323 + $0x30] sm:$0xf]
      %v10530 = vld [vmem:[%s8323 + $0x34] sm:$0xf]
      %v10531 = vld [vmem:[%s8323 + $0x38] sm:$0xf]
      %v10532 = vld [vmem:[%s8323 + $0x3c] sm:$0xf]
      %v10549 = vunpack.c.l.b16 %v10501
      %v10550 = vunpack.c.l.b16 %v10502
      %v10551 = vunpack.c.l.b16 %v10503
      %v10552 = vunpack.c.l.b16 %v10504
      %v10553 = vunpack.c.l.b16 %v10505
      %v10554 = vunpack.c.l.b16 %v10506
      %v10555 = vunpack.c.l.b16 %v10507
      %v10556 = vunpack.c.l.b16 %v10508
      %v10557 = vunpack.c.l.b16 %v10509
      %v10558 = vunpack.c.l.b16 %v10510
      %v10559 = vunpack.c.l.b16 %v10511
      %v10560 = vunpack.c.l.b16 %v10512
      %v10561 = vunpack.c.l.b16 %v10513
      %v10562 = vunpack.c.l.b16 %v10514
      %v10563 = vunpack.c.l.b16 %v10515
      %v10564 = vunpack.c.l.b16 %v10516
      %v10565 = vpack.c.b16 %v10550, %v10549
      %v10566 = vpack.c.b16 %v10552, %v10551
      %v10567 = vpack.c.b16 %v10554, %v10553
      %v10568 = vpack.c.b16 %v10556, %v10555
      %v10569 = vpack.c.b16 %v10558, %v10557
      %v10570 = vpack.c.b16 %v10560, %v10559
      %v10571 = vpack.c.b16 %v10562, %v10561
      %v10572 = vpack.c.b16 %v10564, %v10563
      %v10597 = vunpack.c.l.b16 %v10517
      %v10598 = vunpack.c.l.b16 %v10518
      %v10599 = vunpack.c.l.b16 %v10519
      %v10600 = vunpack.c.l.b16 %v10520
      %v10601 = vunpack.c.l.b16 %v10521
      %v10602 = vunpack.c.l.b16 %v10522
      %v10603 = vunpack.c.l.b16 %v10523
      %v10604 = vunpack.c.l.b16 %v10524
      %v10605 = vunpack.c.l.b16 %v10525
      %v10606 = vunpack.c.l.b16 %v10526
      %v10607 = vunpack.c.l.b16 %v10527
      %v10608 = vunpack.c.l.b16 %v10528
      %v10609 = vunpack.c.l.b16 %v10529
      %v10610 = vunpack.c.l.b16 %v10530
      %v10611 = vunpack.c.l.b16 %v10531
      %v10612 = vunpack.c.l.b16 %v10532
      %v10613 = vpack.c.b16 %v10598, %v10597
      %v10614 = vpack.c.b16 %v10600, %v10599
      %v10615 = vpack.c.b16 %v10602, %v10601
      %v10616 = vpack.c.b16 %v10604, %v10603
      %v10617 = vpack.c.b16 %v10606, %v10605
      %v10618 = vpack.c.b16 %v10608, %v10607
      %v10619 = vpack.c.b16 %v10610, %v10609
      %v10620 = vpack.c.b16 %v10612, %v10611
      %10629 = vmatprep.subr.bf16.mxu0 0
      %10630 = vmatpush1.bf16.msra.mxu0 %v10620
      %10631 = vmatprep.subr.bf16.mxu0 0
      %10632 = vmatpush1.bf16.msra.mxu0 %v10619
      %10633 = vmatprep.subr.bf16.mxu0 0
      %10634 = vmatpush1.bf16.msra.mxu0 %v10618
      %10635 = vmatprep.subr.bf16.mxu0 0
      %10636 = vmatpush1.bf16.msra.mxu0 %v10617
      %10637 = vmatprep.subr.bf16.mxu0 0
      %10638 = vmatpush1.bf16.msra.mxu0 %v10616
      %10639 = vmatprep.subr.bf16.mxu0 0
      %10640 = vmatpush1.bf16.msra.mxu0 %v10615
      %10641 = vmatprep.subr.bf16.mxu0 0
      %10642 = vmatpush1.bf16.msra.mxu0 %v10614
      %10643 = vmatprep.subr.bf16.mxu0 0
      %10644 = vmatpush1.bf16.msra.mxu0 %v10613
      %10645 = vmatprep.subr.bf16.mxu0 0
      %10646 = vmatpush2.bf16.msra.mxu0 0
      %10647 = vmatprep.subr.bf16.mxu0 0
      %10648 = vmatpush2.bf16.msra.mxu0 0
      %10649 = vmatprep.subr.bf16.mxu0 0
      %10650 = vmatpush2.bf16.msra.mxu0 0
      %10651 = vmatprep.subr.bf16.mxu0 0
      %10652 = vmatpush2.bf16.msra.mxu0 0
      %10653 = vmatprep.subr.bf16.mxu0 0
      %10654 = vmatpush2.bf16.msra.mxu0 0
      %10655 = vmatprep.subr.bf16.mxu0 0
      %10656 = vmatpush2.bf16.msra.mxu0 0
      %10657 = vmatprep.subr.bf16.mxu0 0
      %10658 = vmatpush2.bf16.msra.mxu0 0
      %10659 = vmatprep.subr.bf16.mxu0 0
      %10660 = vmatpush2.bf16.msra.mxu0 0
      %10661 = vmatprep.mubr.bf16.mxu0 0
      %10662 = vmatmul.mubr.bf16.gmra.mxu0 %v10565
      %v10663 = vpop.f32.mrf.mxu0
      %v10664 = vadd.f32 0.0, %v10663
      %v10665 = vpop.f32.mrf.mxu0
      %v10666 = vpop.f32.mrf.mxu0
      %v10667 = vadd.f32 0.0, %v10666
      %v10668 = vpop.f32.mrf.mxu0
      %10669 = vmatprep.mubr.bf16.mxu0 0
      %10670 = vmatmul.mubr.bf16.gmra.mxu0 %v10566
      %v10671 = vpop.f32.mrf.mxu0
      %v10672 = vadd.f32 0.0, %v10671
      %v10673 = vpop.f32.mrf.mxu0
      %v10674 = vpop.f32.mrf.mxu0
      %v10675 = vadd.f32 0.0, %v10674
      %v10676 = vpop.f32.mrf.mxu0
      %10677 = vmatprep.mubr.bf16.mxu0 0
      %10678 = vmatmul.mubr.bf16.gmra.mxu0 %v10567
      %v10679 = vpop.f32.mrf.mxu0
      %v10680 = vadd.f32 0.0, %v10679
      %v10681 = vpop.f32.mrf.mxu0
      %v10682 = vpop.f32.mrf.mxu0
      %v10683 = vadd.f32 0.0, %v10682
      %v10684 = vpop.f32.mrf.mxu0
      %10685 = vmatprep.mubr.bf16.mxu0 0
      %10686 = vmatmul.mubr.bf16.gmra.mxu0 %v10568
      %v10687 = vpop.f32.mrf.mxu0
      %v10688 = vadd.f32 0.0, %v10687
      %v10689 = vpop.f32.mrf.mxu0
      %v10690 = vpop.f32.mrf.mxu0
      %v10691 = vadd.f32 0.0, %v10690
      %v10692 = vpop.f32.mrf.mxu0
      %10693 = vmatprep.mubr.bf16.mxu0 0
      %10694 = vmatmul.mubr.bf16.gmra.mxu0 %v10569
      %v10695 = vpop.f32.mrf.mxu0
      %v10696 = vadd.f32 0.0, %v10695
      %v10697 = vpop.f32.mrf.mxu0
      %v10698 = vpop.f32.mrf.mxu0
      %v10699 = vadd.f32 0.0, %v10698
      %v10700 = vpop.f32.mrf.mxu0
      %10701 = vmatprep.mubr.bf16.mxu0 0
      %10702 = vmatmul.mubr.bf16.gmra.mxu0 %v10570
      %v10703 = vpop.f32.mrf.mxu0
      %v10704 = vadd.f32 0.0, %v10703
      %v10705 = vpop.f32.mrf.mxu0
      %v10706 = vpop.f32.mrf.mxu0
      %v10707 = vadd.f32 0.0, %v10706
      %v10708 = vpop.f32.mrf.mxu0
      %10709 = vmatprep.mubr.bf16.mxu0 0
      %10710 = vmatmul.mubr.bf16.gmra.mxu0 %v10571
      %v10711 = vpop.f32.mrf.mxu0
      %v10712 = vadd.f32 0.0, %v10711
      %v10713 = vpop.f32.mrf.mxu0
      %v10714 = vpop.f32.mrf.mxu0
      %v10715 = vadd.f32 0.0, %v10714
      %v10716 = vpop.f32.mrf.mxu0
      %10717 = vmatprep.mubr.bf16.mxu0 0
      %10718 = vmatmul.mubr.bf16.gmra.mxu0 %v10572
      %v10719 = vpop.f32.mrf.mxu0
      %v10720 = vadd.f32 0.0, %v10719
      %v10721 = vpop.f32.mrf.mxu0
      %v10722 = vpop.f32.mrf.mxu0
      %v10723 = vadd.f32 0.0, %v10722
      %v10724 = vpop.f32.mrf.mxu0
      %10725 = vdwg.mxu0
      %v10726 = vadd.f32 %v10485, %v10664
      %v10727 = vadd.f32 %v10486, %v10667
      %v10728 = vadd.f32 %v10487, %v10672
      %v10729 = vadd.f32 %v10488, %v10675
      %v10730 = vadd.f32 %v10489, %v10680
      %v10731 = vadd.f32 %v10490, %v10683
      %v10732 = vadd.f32 %v10491, %v10688
      %v10733 = vadd.f32 %v10492, %v10691
      %v10734 = vadd.f32 %v10493, %v10696
      %v10735 = vadd.f32 %v10494, %v10699
      %v10736 = vadd.f32 %v10495, %v10704
      %v10737 = vadd.f32 %v10496, %v10707
      %v10738 = vadd.f32 %v10497, %v10712
      %v10739 = vadd.f32 %v10498, %v10715
      %v10740 = vadd.f32 %v10499, %v10720
      %v10741 = vadd.f32 %v10500, %v10723
      %v10742 = vld [vmem:[%s368 + $0x50] sm:$0xf]
      %v10743 = vld [vmem:[%s368 + $0x54] sm:$0xf]
      %v10744 = vld [vmem:[%s368 + $0x58] sm:$0xf]
      %v10745 = vld [vmem:[%s368 + $0x5c] sm:$0xf]
      %v10746 = vld [vmem:[%s368 + $0x60] sm:$0xf]
      %v10747 = vld [vmem:[%s368 + $0x64] sm:$0xf]
      %v10748 = vld [vmem:[%s368 + $0x68] sm:$0xf]
      %v10749 = vld [vmem:[%s368 + $0x6c] sm:$0xf]
      %v10750 = vld [vmem:[%s368 + $0x70] sm:$0xf]
      %v10751 = vld [vmem:[%s368 + $0x74] sm:$0xf]
      %v10752 = vld [vmem:[%s368 + $0x78] sm:$0xf]
      %v10753 = vld [vmem:[%s368 + $0x7c] sm:$0xf]
      %v10754 = vld [vmem:[%s368 + $0x80] sm:$0xf]
      %v10755 = vld [vmem:[%s368 + $0x84] sm:$0xf]
      %v10756 = vld [vmem:[%s368 + $0x88] sm:$0xf]
      %v10757 = vld [vmem:[%s368 + $0x8c] sm:$0xf]
      %v10758 = vld [vmem:[%s8565] sm:$0xf]
      %v10759 = vld [vmem:[%s8565 + $0x4] sm:$0xf]
      %v10760 = vld [vmem:[%s8565 + $0x8] sm:$0xf]
      %v10761 = vld [vmem:[%s8565 + $0xc] sm:$0xf]
      %v10762 = vld [vmem:[%s8565 + $0x10] sm:$0xf]
      %v10763 = vld [vmem:[%s8565 + $0x14] sm:$0xf]
      %v10764 = vld [vmem:[%s8565 + $0x18] sm:$0xf]
      %v10765 = vld [vmem:[%s8565 + $0x1c] sm:$0xf]
      %v10766 = vld [vmem:[%s8565 + $0x20] sm:$0xf]
      %v10767 = vld [vmem:[%s8565 + $0x24] sm:$0xf]
      %v10768 = vld [vmem:[%s8565 + $0x28] sm:$0xf]
      %v10769 = vld [vmem:[%s8565 + $0x2c] sm:$0xf]
      %v10770 = vld [vmem:[%s8565 + $0x30] sm:$0xf]
      %v10771 = vld [vmem:[%s8565 + $0x34] sm:$0xf]
      %v10772 = vld [vmem:[%s8565 + $0x38] sm:$0xf]
      %v10773 = vld [vmem:[%s8565 + $0x3c] sm:$0xf]
      %v10790 = vunpack.c.l.b16 %v10742
      %v10791 = vunpack.c.l.b16 %v10743
      %v10792 = vunpack.c.l.b16 %v10744
      %v10793 = vunpack.c.l.b16 %v10745
      %v10794 = vunpack.c.l.b16 %v10746
      %v10795 = vunpack.c.l.b16 %v10747
      %v10796 = vunpack.c.l.b16 %v10748
      %v10797 = vunpack.c.l.b16 %v10749
      %v10798 = vunpack.c.l.b16 %v10750
      %v10799 = vunpack.c.l.b16 %v10751
      %v10800 = vunpack.c.l.b16 %v10752
      %v10801 = vunpack.c.l.b16 %v10753
      %v10802 = vunpack.c.l.b16 %v10754
      %v10803 = vunpack.c.l.b16 %v10755
      %v10804 = vunpack.c.l.b16 %v10756
      %v10805 = vunpack.c.l.b16 %v10757
      %v10806 = vpack.c.b16 %v10791, %v10790
      %v10807 = vpack.c.b16 %v10793, %v10792
      %v10808 = vpack.c.b16 %v10795, %v10794
      %v10809 = vpack.c.b16 %v10797, %v10796
      %v10810 = vpack.c.b16 %v10799, %v10798
      %v10811 = vpack.c.b16 %v10801, %v10800
      %v10812 = vpack.c.b16 %v10803, %v10802
      %v10813 = vpack.c.b16 %v10805, %v10804
      %v10838 = vunpack.c.l.b16 %v10758
      %v10839 = vunpack.c.l.b16 %v10759
      %v10840 = vunpack.c.l.b16 %v10760
      %v10841 = vunpack.c.l.b16 %v10761
      %v10842 = vunpack.c.l.b16 %v10762
      %v10843 = vunpack.c.l.b16 %v10763
      %v10844 = vunpack.c.l.b16 %v10764
      %v10845 = vunpack.c.l.b16 %v10765
      %v10846 = vunpack.c.l.b16 %v10766
      %v10847 = vunpack.c.l.b16 %v10767
      %v10848 = vunpack.c.l.b16 %v10768
      %v10849 = vunpack.c.l.b16 %v10769
      %v10850 = vunpack.c.l.b16 %v10770
      %v10851 = vunpack.c.l.b16 %v10771
      %v10852 = vunpack.c.l.b16 %v10772
      %v10853 = vunpack.c.l.b16 %v10773
      %v10854 = vpack.c.b16 %v10839, %v10838
      %v10855 = vpack.c.b16 %v10841, %v10840
      %v10856 = vpack.c.b16 %v10843, %v10842
      %v10857 = vpack.c.b16 %v10845, %v10844
      %v10858 = vpack.c.b16 %v10847, %v10846
      %v10859 = vpack.c.b16 %v10849, %v10848
      %v10860 = vpack.c.b16 %v10851, %v10850
      %v10861 = vpack.c.b16 %v10853, %v10852
      %10870 = vmatprep.subr.bf16.mxu0 0
      %10871 = vmatpush1.bf16.msra.mxu0 %v10861
      %10872 = vmatprep.subr.bf16.mxu0 0
      %10873 = vmatpush1.bf16.msra.mxu0 %v10860
      %10874 = vmatprep.subr.bf16.mxu0 0
      %10875 = vmatpush1.bf16.msra.mxu0 %v10859
      %10876 = vmatprep.subr.bf16.mxu0 0
      %10877 = vmatpush1.bf16.msra.mxu0 %v10858
      %10878 = vmatprep.subr.bf16.mxu0 0
      %10879 = vmatpush1.bf16.msra.mxu0 %v10857
      %10880 = vmatprep.subr.bf16.mxu0 0
      %10881 = vmatpush1.bf16.msra.mxu0 %v10856
      %10882 = vmatprep.subr.bf16.mxu0 0
      %10883 = vmatpush1.bf16.msra.mxu0 %v10855
      %10884 = vmatprep.subr.bf16.mxu0 0
      %10885 = vmatpush1.bf16.msra.mxu0 %v10854
      %10886 = vmatprep.subr.bf16.mxu0 0
      %10887 = vmatpush2.bf16.msra.mxu0 0
      %10888 = vmatprep.subr.bf16.mxu0 0
      %10889 = vmatpush2.bf16.msra.mxu0 0
      %10890 = vmatprep.subr.bf16.mxu0 0
      %10891 = vmatpush2.bf16.msra.mxu0 0
      %10892 = vmatprep.subr.bf16.mxu0 0
      %10893 = vmatpush2.bf16.msra.mxu0 0
      %10894 = vmatprep.subr.bf16.mxu0 0
      %10895 = vmatpush2.bf16.msra.mxu0 0
      %10896 = vmatprep.subr.bf16.mxu0 0
      %10897 = vmatpush2.bf16.msra.mxu0 0
      %10898 = vmatprep.subr.bf16.mxu0 0
      %10899 = vmatpush2.bf16.msra.mxu0 0
      %10900 = vmatprep.subr.bf16.mxu0 0
      %10901 = vmatpush2.bf16.msra.mxu0 0
      %10902 = vmatprep.mubr.bf16.mxu0 0
      %10903 = vmatmul.mubr.bf16.gmra.mxu0 %v10806
      %v10904 = vpop.f32.mrf.mxu0
      %v10905 = vadd.f32 0.0, %v10904
      %v10906 = vpop.f32.mrf.mxu0
      %v10907 = vpop.f32.mrf.mxu0
      %v10908 = vadd.f32 0.0, %v10907
      %v10909 = vpop.f32.mrf.mxu0
      %10910 = vmatprep.mubr.bf16.mxu0 0
      %10911 = vmatmul.mubr.bf16.gmra.mxu0 %v10807
      %v10912 = vpop.f32.mrf.mxu0
      %v10913 = vadd.f32 0.0, %v10912
      %v10914 = vpop.f32.mrf.mxu0
      %v10915 = vpop.f32.mrf.mxu0
      %v10916 = vadd.f32 0.0, %v10915
      %v10917 = vpop.f32.mrf.mxu0
      %10918 = vmatprep.mubr.bf16.mxu0 0
      %10919 = vmatmul.mubr.bf16.gmra.mxu0 %v10808
      %v10920 = vpop.f32.mrf.mxu0
      %v10921 = vadd.f32 0.0, %v10920
      %v10922 = vpop.f32.mrf.mxu0
      %v10923 = vpop.f32.mrf.mxu0
      %v10924 = vadd.f32 0.0, %v10923
      %v10925 = vpop.f32.mrf.mxu0
      %10926 = vmatprep.mubr.bf16.mxu0 0
      %10927 = vmatmul.mubr.bf16.gmra.mxu0 %v10809
      %v10928 = vpop.f32.mrf.mxu0
      %v10929 = vadd.f32 0.0, %v10928
      %v10930 = vpop.f32.mrf.mxu0
      %v10931 = vpop.f32.mrf.mxu0
      %v10932 = vadd.f32 0.0, %v10931
      %v10933 = vpop.f32.mrf.mxu0
      %10934 = vmatprep.mubr.bf16.mxu0 0
      %10935 = vmatmul.mubr.bf16.gmra.mxu0 %v10810
      %v10936 = vpop.f32.mrf.mxu0
      %v10937 = vadd.f32 0.0, %v10936
      %v10938 = vpop.f32.mrf.mxu0
      %v10939 = vpop.f32.mrf.mxu0
      %v10940 = vadd.f32 0.0, %v10939
      %v10941 = vpop.f32.mrf.mxu0
      %10942 = vmatprep.mubr.bf16.mxu0 0
      %10943 = vmatmul.mubr.bf16.gmra.mxu0 %v10811
      %v10944 = vpop.f32.mrf.mxu0
      %v10945 = vadd.f32 0.0, %v10944
      %v10946 = vpop.f32.mrf.mxu0
      %v10947 = vpop.f32.mrf.mxu0
      %v10948 = vadd.f32 0.0, %v10947
      %v10949 = vpop.f32.mrf.mxu0
      %10950 = vmatprep.mubr.bf16.mxu0 0
      %10951 = vmatmul.mubr.bf16.gmra.mxu0 %v10812
      %v10952 = vpop.f32.mrf.mxu0
      %v10953 = vadd.f32 0.0, %v10952
      %v10954 = vpop.f32.mrf.mxu0
      %v10955 = vpop.f32.mrf.mxu0
      %v10956 = vadd.f32 0.0, %v10955
      %v10957 = vpop.f32.mrf.mxu0
      %10958 = vmatprep.mubr.bf16.mxu0 0
      %10959 = vmatmul.mubr.bf16.gmra.mxu0 %v10813
      %v10960 = vpop.f32.mrf.mxu0
      %v10961 = vadd.f32 0.0, %v10960
      %v10962 = vpop.f32.mrf.mxu0
      %v10963 = vpop.f32.mrf.mxu0
      %v10964 = vadd.f32 0.0, %v10963
      %v10965 = vpop.f32.mrf.mxu0
      %10966 = vdwg.mxu0
      %v10967 = vadd.f32 %v10726, %v10905
      %v10968 = vadd.f32 %v10727, %v10908
      %v10969 = vadd.f32 %v10728, %v10913
      %v10970 = vadd.f32 %v10729, %v10916
      %v10971 = vadd.f32 %v10730, %v10921
      %v10972 = vadd.f32 %v10731, %v10924
      %v10973 = vadd.f32 %v10732, %v10929
      %v10974 = vadd.f32 %v10733, %v10932
      %v10975 = vadd.f32 %v10734, %v10937
      %v10976 = vadd.f32 %v10735, %v10940
      %v10977 = vadd.f32 %v10736, %v10945
      %v10978 = vadd.f32 %v10737, %v10948
      %v10979 = vadd.f32 %v10738, %v10953
      %v10980 = vadd.f32 %v10739, %v10956
      %v10981 = vadd.f32 %v10740, %v10961
      %v10982 = vadd.f32 %v10741, %v10964
      %10983 = vst [vmem:[%s278 + $0x80] sm:$0xff] %v10967
      %10984 = vst [vmem:[%s278 + $0x88] sm:$0xff] %v10968
      %10985 = vst [vmem:[%s278 + $0x90] sm:$0xff] %v10969
      %10986 = vst [vmem:[%s278 + $0x98] sm:$0xff] %v10970
      %10987 = vst [vmem:[%s278 + $0xa0] sm:$0xff] %v10971
      %10988 = vst [vmem:[%s278 + $0xa8] sm:$0xff] %v10972
      %10989 = vst [vmem:[%s278 + $0xb0] sm:$0xff] %v10973
      %10990 = vst [vmem:[%s278 + $0xb8] sm:$0xff] %v10974
      %10991 = vst [vmem:[%s278 + $0xc0] sm:$0xff] %v10975
      %10992 = vst [vmem:[%s278 + $0xc8] sm:$0xff] %v10976
      %10993 = vst [vmem:[%s278 + $0xd0] sm:$0xff] %v10977
      %10994 = vst [vmem:[%s278 + $0xd8] sm:$0xff] %v10978
      %10995 = vst [vmem:[%s278 + $0xe0] sm:$0xff] %v10979
      %10996 = vst [vmem:[%s278 + $0xe8] sm:$0xff] %v10980
      %10997 = vst [vmem:[%s278 + $0xf0] sm:$0xff] %v10981
      %10998 = vst [vmem:[%s278 + $0xf8] sm:$0xff] %v10982
      %p10999 = scmp.lt.s32.totalorder %s18, 1
      %s11000 = scalar_select %p10999, %s18, 1
      %s11001 = smul.addr %s11000, 32
      %s11002 = smul.addr %s11001, 8
      %s11003 = scalar_lea.vmem %s7, %s11002
      // Predicated region
      $region49: #{simple_ddpm_forward.1} parent=47 // pred_check
        %p11004 = pneg %p188
      $region50: #{simple_ddpm_forward.1} parent=47 // pred_check_branch
        %11006 = sbr.rel (%p11004) target = $region52
      $region51: #{simple_ddpm_forward.1} parent=47 // pred_region
        _
      $region52: #{simple_ddpm_forward.1} parent=47 // pred_fallthru
        _
    $region48: #{simple_ddpm_forward.1} parent=5 // pred_fallthru
      _
    %p11007 = scmp.le.s32.totalorder 2, %s13
    // Predicated region
    $region53: #{simple_ddpm_forward.1} parent=5 // pred_check
      %p11008 = pneg %p11007
    $region54: #{simple_ddpm_forward.1} parent=5 // pred_check_branch
      %11010 = sbr.rel (%p11008) target = $region56
    $region55: #{simple_ddpm_forward.1} parent=5 // pred_region
      %s11011 = ssub.s32 %s13, 2
      // Predicated region
      $region57: #{simple_ddpm_forward.1} parent=55 // pred_check
        %p11012 = pneg %p194
      $region58: #{simple_ddpm_forward.1} parent=55 // pred_check_branch
        %11014 = sbr.rel (%p11012) target = $region60
      $region59: #{simple_ddpm_forward.1} parent=55 // pred_region
        %p11015 = scmp.lt.s32.totalorder %s19, 1
        %s11016 = scalar_select %p11015, %s19, 1
        %s11017 = smul.addr %s11016, 32
        %s11018 = smul.addr %s11017, 8
        %s11019 = scalar_lea.vmem %s7, %s11018
      $region60: #{simple_ddpm_forward.1} parent=55 // pred_fallthru
        _
    $region56: #{simple_ddpm_forward.1} parent=5 // pred_fallthru
      _
  $region6: #{simple_ddpm_forward.1} parent=0 // loop_footer
    %s17 = sadd.s32 1, %s13
  $region7: #{simple_ddpm_forward.1} parent=0 // loop_footer_branch
    %12 = sbr.rel target = $region3
  $region8: #{simple_ddpm_forward.1} parent=0 // loop_exit
    _

</llo_original>
